<compile_context>
chip_gen: v7x
topology: tpu7x:2x2x1
jax: 0.10.0
libtpu: 0.0.40
codegen_flags: <defaults>
</compile_context>

<pallas_src>
import jax
import jax.numpy as jnp
from jax.experimental import pallas as pl
from jax.experimental.pallas import tpu as pltpu


# ---------------------------------------------------------------------------
# Layer 1: h1 = relu(x @ W1 + b1), full-K, N-tiled, no accumulation.
# ---------------------------------------------------------------------------
def _linear_relu_kernel(x_ref, w_ref, b_ref, o_ref):
    y = jnp.dot(x_ref[...], w_ref[...], preferred_element_type=jnp.float32)
    y = jnp.maximum(y + b_ref[...], 0.0)
    o_ref[...] = y.astype(o_ref.dtype)


def pallas_linear_relu(x, w, b, *, tn=512):
    """h = relu(x @ w + b);  x: (M, K), w: (K, N), b: (N,)."""
    M, K = x.shape
    K2, N = w.shape
    assert K == K2
    tn = min(tn, N)
    assert N % tn == 0

    b2 = b.reshape(1, N)
    flops = 2 * M * K * N
    bytes_accessed = 4 * (M * K + K * N + N + M * N)

    return pl.pallas_call(
        _linear_relu_kernel,
        out_shape=jax.ShapeDtypeStruct((M, N), x.dtype),
        grid_spec=pltpu.PrefetchScalarGridSpec(
            num_scalar_prefetch=0,
            grid=(N // tn,),
            in_specs=[
                pl.BlockSpec((M, K), lambda j: (0, 0)),    # x: resident, fetched once
                pl.BlockSpec((K, tn), lambda j: (0, j)),   # W N-tile (streamed)
                pl.BlockSpec((1, tn), lambda j: (0, j)),   # bias tile
            ],
            out_specs=pl.BlockSpec((M, tn), lambda j: (0, j)),
        ),
        compiler_params=pltpu.CompilerParams(
            dimension_semantics=("parallel",),             # megacore-splittable
        ),
        cost_estimate=pl.CostEstimate(
            flops=flops, transcendentals=0, bytes_accessed=bytes_accessed
        ),
    )(x, w, b2)


# ---------------------------------------------------------------------------
# Layers 2+3 fused: partials[j] = relu(h1 @ W2[:, Nj] + b2[Nj]) @ W3[Nj, :]
# Each grid step handles one N-tile of W2 and the matching row-tile of W3 and
# writes an independent (M, O) partial -> grid axis stays "parallel".
# ---------------------------------------------------------------------------
def _linear_relu_linear_kernel(h_ref, w2_ref, b2_ref, w3_ref, o_ref):
    h2 = jnp.dot(h_ref[...], w2_ref[...], preferred_element_type=jnp.float32)
    h2 = jnp.maximum(h2 + b2_ref[...], 0.0)
    partial = jnp.dot(h2, w3_ref[...], preferred_element_type=jnp.float32)
    o_ref[...] = partial[None, :, :].astype(o_ref.dtype)


def pallas_linear_relu_linear(h, w2, b2, w3, b3, *, tn=512):
    """y = relu(h @ w2 + b2) @ w3 + b3, fused in one pallas_call."""
    M, K = h.shape
    K2, N = w2.shape
    N2, O = w3.shape
    assert K == K2 and N == N2
    tn = min(tn, N)
    assert N % tn == 0
    nt = N // tn

    b2r = b2.reshape(1, N)
    flops = 2 * M * K * N + 2 * M * N * O
    bytes_accessed = 4 * (M * K + K * N + N + N * O + O + nt * M * O)

    partials = pl.pallas_call(
        _linear_relu_linear_kernel,
        out_shape=jax.ShapeDtypeStruct((nt, M, O), h.dtype),
        grid_spec=pltpu.PrefetchScalarGridSpec(
            num_scalar_prefetch=0,
            grid=(nt,),
            in_specs=[
                pl.BlockSpec((M, K), lambda j: (0, 0)),      # h1: resident
                pl.BlockSpec((K, tn), lambda j: (0, j)),     # W2 N-tile (streamed)
                pl.BlockSpec((1, tn), lambda j: (0, j)),     # b2 tile
                pl.BlockSpec((tn, O), lambda j: (j, 0)),     # W3 row-tile (streamed)
            ],
            out_specs=pl.BlockSpec((1, M, O), lambda j: (j, 0, 0)),  # per-tile partial
        ),
        compiler_params=pltpu.CompilerParams(
            dimension_semantics=("parallel",),               # megacore-splittable
        ),
        cost_estimate=pl.CostEstimate(
            flops=flops, transcendentals=0, bytes_accessed=bytes_accessed
        ),
    )(h, w2, b2r, w3)

    # Tiny (nt, M, O) reduction + bias in XLA: ~1.3 KB, negligible.
    return jnp.sum(partials, axis=0) + b3.reshape(1, O)


# ---------------------------------------------------------------------------
# Parameters / forward / reference
# ---------------------------------------------------------------------------
def init_params(key, in_dim=2048, hidden=2048, out_dim=10):
    """Deterministic synthetic init mimicking nn.Linear default (uniform +/- 1/sqrt(fan_in))."""
    dims = [(in_dim, hidden), (hidden, hidden), (hidden, out_dim)]
    params = []
    for fan_in, fan_out in dims:
        kw, kb, key = jax.random.split(key, 3)
        bound = 1.0 / jnp.sqrt(jnp.float32(fan_in))
        # stored in (in, out) layout == transpose of PyTorch's (out, in)
        w = jax.random.uniform(kw, (fan_in, fan_out), jnp.float32, -bound, bound)
        b = jax.random.uniform(kb, (fan_out,), jnp.float32, -bound, bound)
        params.append((w, b))
    return params


@jax.jit
def attribute_classifier_forward(x, params):
    (w1, b1), (w2, b2), (w3, b3) = params
    h1 = pallas_linear_relu(x, w1, b1)                       # Linear + ReLU
    y = pallas_linear_relu_linear(h1, w2, b2, w3, b3)        # Linear + ReLU + Linear (fused)
    return y


def reference_forward(x, params):
    (w1, b1), (w2, b2), (w3, b3) = params
    h = jnp.maximum(x @ w1 + b1, 0.0)
    h = jnp.maximum(h @ w2 + b2, 0.0)
    return h @ w3 + b3


if __name__ == "__main__":
    key = jax.random.PRNGKey(0)
    kx, kp = jax.random.split(key)

    batch = 8
    x = jax.random.normal(kx, (batch, 2048), jnp.float32)
    params = init_params(kp)

    out = attribute_classifier_forward(x, params)
    out = jax.block_until_ready(out)

    ref = reference_forward(x, params)
    assert out.shape == (batch, 10), out.shape
    assert jnp.allclose(out, ref, atol=1e-4, rtol=1e-4), "mismatch vs reference"

    print("KERNEL_OK")
</pallas_src>

<mosaic_0001>
module attributes {stable_mosaic.version = 11 : i64} {
  func.func @_linear_relu_linear_kernel(%arg0: i32, %arg1: memref<8x2048xf32, #tpu.memory_space<vmem>>, %arg2: memref<2048x512xf32, #tpu.memory_space<vmem>>, %arg3: memref<1x512xf32, #tpu.memory_space<vmem>>, %arg4: memref<512x10xf32, #tpu.memory_space<vmem>>, %arg5: memref<1x8x10xf32, #tpu.memory_space<vmem>>) attributes {dimension_semantics = [#tpu.dimension_semantics<parallel>], iteration_bounds = array<i64: 4>, scalar_prefetch = 0 : i64, scratch_operands = 0 : i64, tpu.core_type = #tpu.core_type<tc>, window_params = [{pipeline_mode = #tpu.pipeline_mode<synchronous>, transform_indices = @transform_0, window_bounds = array<i64: 8, 2048>}, {transform_indices = @transform_1, window_bounds = array<i64: 2048, 512>}, {transform_indices = @transform_2, window_bounds = array<i64: 1, 512>}, {transform_indices = @transform_3, window_bounds = array<i64: 512, 10>}, {transform_indices = @transform_4, window_bounds = array<i64: 1, 8, 10>}]} {
    %c0 = arith.constant 0 : index
    %c0_0 = arith.constant 0 : index
    %0 = vector.load %arg1[%c0, %c0_0] : memref<8x2048xf32, #tpu.memory_space<vmem>>, vector<8x2048xf32>
    %c0_1 = arith.constant 0 : index
    %c0_2 = arith.constant 0 : index
    %1 = vector.load %arg2[%c0_1, %c0_2] : memref<2048x512xf32, #tpu.memory_space<vmem>>, vector<2048x512xf32>
    %cst = arith.constant dense<0.000000e+00> : vector<8x512xf32>
    %2 = tpu.matmul %0, %1, %cst {dimension_numbers = #tpu.dot_dimension_numbers<[1], [0], [0], [1], [0, 0, 1, 1], [], []>} : vector<8x2048xf32>, vector<2048x512xf32>, vector<8x512xf32> -> vector<8x512xf32>
    %c0_3 = arith.constant 0 : index
    %c0_4 = arith.constant 0 : index
    %3 = vector.load %arg3[%c0_3, %c0_4] : memref<1x512xf32, #tpu.memory_space<vmem>>, vector<1x512xf32>
    %4 = vector.broadcast %3 : vector<1x512xf32> to vector<8x512xf32>
    %5 = arith.addf %2, %4 : vector<8x512xf32>
    %cst_5 = arith.constant 0.000000e+00 : f32
    %6 = vector.broadcast %cst_5 : f32 to vector<8x512xf32>
    %7 = arith.maximumf %5, %6 : vector<8x512xf32>
    %c0_6 = arith.constant 0 : index
    %c0_7 = arith.constant 0 : index
    %8 = vector.load %arg4[%c0_6, %c0_7] : memref<512x10xf32, #tpu.memory_space<vmem>>, vector<512x10xf32>
    %cst_8 = arith.constant dense<0.000000e+00> : vector<8x10xf32>
    %9 = tpu.matmul %7, %8, %cst_8 {dimension_numbers = #tpu.dot_dimension_numbers<[1], [0], [0], [1], [0, 0, 1, 1], [], []>} : vector<8x512xf32>, vector<512x10xf32>, vector<8x10xf32> -> vector<8x10xf32>
    %10 = vector.shape_cast %9 : vector<8x10xf32> to vector<1x8x10xf32>
    %c0_9 = arith.constant 0 : index
    %c0_10 = arith.constant 0 : index
    %c0_11 = arith.constant 0 : index
    %11 = vector.load %arg5[%c0_9, %c0_10, %c0_11] : memref<1x8x10xf32, #tpu.memory_space<vmem>>, vector<1x8x10xf32>
    tpu.vector_store %arg5[%c0_9, %c0_10, %c0_11], %10 {strides = array<i32>} : memref<1x8x10xf32, #tpu.memory_space<vmem>>, vector<1x8x10xf32>,
    return
  }
  func.func @transform_0(%arg0: i32) -> (i32, i32) {
    %c0_i32 = arith.constant 0 : i32
    %c0_i32_0 = arith.constant 0 : i32
    %c0_i32_1 = arith.constant 0 : i32
    return %c0_i32, %c0_i32_0 : i32, i32
  }
  func.func @transform_1(%arg0: i32) -> (i32, i32) {
    %c0_i32 = arith.constant 0 : i32
    %c0_i32_0 = arith.constant 0 : i32
    return %c0_i32, %arg0 : i32, i32
  }
  func.func @transform_2(%arg0: i32) -> (i32, i32) {
    %c0_i32 = arith.constant 0 : i32
    %c0_i32_0 = arith.constant 0 : i32
    return %c0_i32, %arg0 : i32, i32
  }
  func.func @transform_3(%arg0: i32) -> (i32, i32) {
    %c0_i32 = arith.constant 0 : i32
    %c0_i32_0 = arith.constant 0 : i32
    return %arg0, %c0_i32 : i32, i32
  }
  func.func @transform_4(%arg0: i32) -> (i32, i32, i32) {
    %c0_i32 = arith.constant 0 : i32
    %c0_i32_0 = arith.constant 0 : i32
    %c0_i32_1 = arith.constant 0 : i32
    return %arg0, %c0_i32, %c0_i32_0 : i32, i32, i32
  }
}

module attributes {stable_mosaic.version = 11 : i64} {
  func.func @_linear_relu_kernel(%arg0: i32, %arg1: memref<8x2048xf32, #tpu.memory_space<vmem>>, %arg2: memref<2048x512xf32, #tpu.memory_space<vmem>>, %arg3: memref<1x512xf32, #tpu.memory_space<vmem>>, %arg4: memref<8x512xf32, #tpu.memory_space<vmem>>) attributes {dimension_semantics = [#tpu.dimension_semantics<parallel>], iteration_bounds = array<i64: 4>, scalar_prefetch = 0 : i64, scratch_operands = 0 : i64, tpu.core_type = #tpu.core_type<tc>, window_params = [{pipeline_mode = #tpu.pipeline_mode<synchronous>, transform_indices = @transform_0, window_bounds = array<i64: 8, 2048>}, {transform_indices = @transform_1, window_bounds = array<i64: 2048, 512>}, {transform_indices = @transform_2, window_bounds = array<i64: 1, 512>}, {transform_indices = @transform_3, window_bounds = array<i64: 8, 512>}]} {
    %c0 = arith.constant 0 : index
    %c0_0 = arith.constant 0 : index
    %0 = vector.load %arg1[%c0, %c0_0] : memref<8x2048xf32, #tpu.memory_space<vmem>>, vector<8x2048xf32>
    %c0_1 = arith.constant 0 : index
    %c0_2 = arith.constant 0 : index
    %1 = vector.load %arg2[%c0_1, %c0_2] : memref<2048x512xf32, #tpu.memory_space<vmem>>, vector<2048x512xf32>
    %cst = arith.constant dense<0.000000e+00> : vector<8x512xf32>
    %2 = tpu.matmul %0, %1, %cst {dimension_numbers = #tpu.dot_dimension_numbers<[1], [0], [0], [1], [0, 0, 1, 1], [], []>} : vector<8x2048xf32>, vector<2048x512xf32>, vector<8x512xf32> -> vector<8x512xf32>
    %c0_3 = arith.constant 0 : index
    %c0_4 = arith.constant 0 : index
    %3 = vector.load %arg3[%c0_3, %c0_4] : memref<1x512xf32, #tpu.memory_space<vmem>>, vector<1x512xf32>
    %4 = vector.broadcast %3 : vector<1x512xf32> to vector<8x512xf32>
    %5 = arith.addf %2, %4 : vector<8x512xf32>
    %cst_5 = arith.constant 0.000000e+00 : f32
    %6 = vector.broadcast %cst_5 : f32 to vector<8x512xf32>
    %7 = arith.maximumf %5, %6 : vector<8x512xf32>
    %c0_6 = arith.constant 0 : index
    %c0_7 = arith.constant 0 : index
    %8 = vector.load %arg4[%c0_6, %c0_7] : memref<8x512xf32, #tpu.memory_space<vmem>>, vector<8x512xf32>
    tpu.vector_store %arg4[%c0_6, %c0_7], %7 {strides = array<i32>} : memref<8x512xf32, #tpu.memory_space<vmem>>, vector<8x512xf32>,
    return
  }
  func.func @transform_0(%arg0: i32) -> (i32, i32) {
    %c0_i32 = arith.constant 0 : i32
    %c0_i32_0 = arith.constant 0 : i32
    %c0_i32_1 = arith.constant 0 : i32
    return %c0_i32, %c0_i32_0 : i32, i32
  }
  func.func @transform_1(%arg0: i32) -> (i32, i32) {
    %c0_i32 = arith.constant 0 : i32
    %c0_i32_0 = arith.constant 0 : i32
    return %c0_i32, %arg0 : i32, i32
  }
  func.func @transform_2(%arg0: i32) -> (i32, i32) {
    %c0_i32 = arith.constant 0 : i32
    %c0_i32_0 = arith.constant 0 : i32
    return %c0_i32, %arg0 : i32, i32
  }
  func.func @transform_3(%arg0: i32) -> (i32, i32) {
    %c0_i32 = arith.constant 0 : i32
    %c0_i32_0 = arith.constant 0 : i32
    return %c0_i32, %arg0 : i32, i32
  }
}

</mosaic_0001>

<llo_original>
// kernel: attribute_classifier_forward.3
$region0: #{attribute_classifier_forward.3}
  #allocation0 [shape = 'u32[]', space=smem, size = 0x4, offset = 0x4, fixed_abs, tag = 'smem constant byte address 0x4 - core index']
  #allocation1 [shape = 'u32[144,128]{1,0:T(1,128)}', space=vmem, size = 0x12000, scoped, tag = 'internal scratch']
  %s0 = inlined_call_operand.vmem [shape: f32[8,2048], index: 0, kind: input, shape index: {}]
  %s1 = inlined_call_operand.vmem [shape: f32[2048,2048], index: 1, kind: input, shape index: {}]
  %s2 = inlined_call_operand.vmem [shape: f32[1,2048], index: 2, kind: input, shape index: {}]
  %s3 = inlined_call_operand.vmem [shape: f32[2048,10], index: 3, kind: input, shape index: {}]
  %s4 = inlined_call_operand.vmem [shape: f32[4,8,10], index: 4, kind: output, shape index: {}]
  %s5 = sld [smem:[#allocation0]]
  $region72: #{attribute_classifier_forward.3} parent=0
    _
  %s7 = ssub.s32 1, %s5
  %s8 = scalar_select 0, %s7, %s5
  $region1: #{attribute_classifier_forward.3} parent=0
    #allocation2 [shape = 'u8[8388608]{0}', space=vmem, size = 0x800000, scoped, tag = 'input window, operand 1']
    loop: start=0, step=1, limit=6
    $region2: #{attribute_classifier_forward.3} parent=1 // loop_pre_header
      _
    $region3: #{attribute_classifier_forward.3} parent=1 // loop_header
      %s10 = sphi 0, %s14
      %p11 = scmp.ge.s32.totalorder %s10, 6
      %s18 = sphi 0, %s18
      %s20 = sphi 0, %s18
      %s21 = sphi 0, %s20
      %s35 = sphi 0, %s21
      %s41 = sphi 0, %s43
      %s44 = sphi 0, %s41
      %s45 = sphi 0, %s44
      %s61 = sphi 0, %s45
      %s67 = sphi 0, %s69
      %s70 = sphi 0, %s67
      %s71 = sphi 0, %s70
      %s87 = sphi 0, %s71
      %s93 = sphi 0, %s95
      %s96 = sphi 0, %s93
      %s97 = sphi 0, %s96
      %s113 = sphi 0, %s97
      %s119 = sphi 0, %s121
      %s122 = sphi 0, %s119
      %s123 = sphi 0, %s122
      %s139 = sphi 0, %s123
    $region4: #{attribute_classifier_forward.3} parent=1 // loop_header_branch
      %13 = sbr.rel (%p11) target = $region8
    $region5: #{attribute_classifier_forward.3} parent=1 // loop_body
      %s15 = ssub.s32 %s10, 1
      %s16 = ssub.s32 %s10, 2
      %s17 = sadd.s32 %s10, 1
      %s19 = sadd.s32 %s18, 1
      %p22 = scmp.eq.s32.totalorder %s10, 3
      %p23 = scmp.ne.s32.totalorder %s18, %s20
      %p24 = scmp.eq.s32.totalorder %s10, 0
      %p25 = por %p23, %p24
      %p26 = scmp.ne.s32.totalorder %s18, %s20
      %p27 = scmp.eq.s32.totalorder %s15, 3
      %p28 = por %p26, %p27
      %p29 = scmp.ne.s32.totalorder %s20, %s21
      %p30 = scmp.eq.s32.totalorder %s15, 0
      %p31 = por %p29, %p30
      %p32 = scmp.ne.s32.totalorder %s20, %s21
      %p33 = scmp.eq.s32.totalorder %s16, 3
      %p34 = por %p32, %p33
      %p36 = scmp.ne.s32.totalorder %s21, %s35
      %p37 = scmp.eq.s32.totalorder %s16, 0
      %p38 = por %p36, %p37
      %s39 = ssub.s32 %s10, %s17
      %p40 = scmp.eq.s32.totalorder %s39, 0
      %s42 = sadd.s32 %s41, 1
      %s43 = scalar_select %p40, %s41, %s42
      %p46 = pneg %p40
      %p47 = scmp.eq.s32.totalorder %s10, 3
      %p48 = por %p46, %p47
      %p49 = scmp.ne.s32.totalorder %s41, %s44
      %p50 = scmp.eq.s32.totalorder %s10, 0
      %p51 = por %p49, %p50
      %p52 = scmp.ne.s32.totalorder %s41, %s44
      %p53 = scmp.eq.s32.totalorder %s15, 3
      %p54 = por %p52, %p53
      %p55 = scmp.ne.s32.totalorder %s44, %s45
      %p56 = scmp.eq.s32.totalorder %s15, 0
      %p57 = por %p55, %p56
      %p58 = scmp.ne.s32.totalorder %s44, %s45
      %p59 = scmp.eq.s32.totalorder %s16, 3
      %p60 = por %p58, %p59
      %p62 = scmp.ne.s32.totalorder %s45, %s61
      %p63 = scmp.eq.s32.totalorder %s16, 0
      %p64 = por %p62, %p63
      %s65 = ssub.s32 %s10, %s17
      %p66 = scmp.eq.s32.totalorder %s65, 0
      %s68 = sadd.s32 %s67, 1
      %s69 = scalar_select %p66, %s67, %s68
      %p72 = pneg %p66
      %p73 = scmp.eq.s32.totalorder %s10, 3
      %p74 = por %p72, %p73
      %p75 = scmp.ne.s32.totalorder %s67, %s70
      %p76 = scmp.eq.s32.totalorder %s10, 0
      %p77 = por %p75, %p76
      %p78 = scmp.ne.s32.totalorder %s67, %s70
      %p79 = scmp.eq.s32.totalorder %s15, 3
      %p80 = por %p78, %p79
      %p81 = scmp.ne.s32.totalorder %s70, %s71
      %p82 = scmp.eq.s32.totalorder %s15, 0
      %p83 = por %p81, %p82
      %p84 = scmp.ne.s32.totalorder %s70, %s71
      %p85 = scmp.eq.s32.totalorder %s16, 3
      %p86 = por %p84, %p85
      %p88 = scmp.ne.s32.totalorder %s71, %s87
      %p89 = scmp.eq.s32.totalorder %s16, 0
      %p90 = por %p88, %p89
      %s91 = ssub.s32 %s10, %s17
      %p92 = scmp.eq.s32.totalorder %s91, 0
      %s94 = sadd.s32 %s93, 1
      %s95 = scalar_select %p92, %s93, %s94
      %p98 = pneg %p92
      %p99 = scmp.eq.s32.totalorder %s10, 3
      %p100 = por %p98, %p99
      %p101 = scmp.ne.s32.totalorder %s93, %s96
      %p102 = scmp.eq.s32.totalorder %s10, 0
      %p103 = por %p101, %p102
      %p104 = scmp.ne.s32.totalorder %s93, %s96
      %p105 = scmp.eq.s32.totalorder %s15, 3
      %p106 = por %p104, %p105
      %p107 = scmp.ne.s32.totalorder %s96, %s97
      %p108 = scmp.eq.s32.totalorder %s15, 0
      %p109 = por %p107, %p108
      %p110 = scmp.ne.s32.totalorder %s96, %s97
      %p111 = scmp.eq.s32.totalorder %s16, 3
      %p112 = por %p110, %p111
      %p114 = scmp.ne.s32.totalorder %s97, %s113
      %p115 = scmp.eq.s32.totalorder %s16, 0
      %p116 = por %p114, %p115
      %s117 = ssub.s32 %s10, %s17
      %p118 = scmp.eq.s32.totalorder %s117, 0
      %s120 = sadd.s32 %s119, 1
      %s121 = scalar_select %p118, %s119, %s120
      %p124 = pneg %p118
      %p125 = scmp.eq.s32.totalorder %s10, 3
      %p126 = por %p124, %p125
      %p127 = scmp.ne.s32.totalorder %s119, %s122
      %p128 = scmp.eq.s32.totalorder %s10, 0
      %p129 = por %p127, %p128
      %p130 = scmp.ne.s32.totalorder %s119, %s122
      %p131 = scmp.eq.s32.totalorder %s15, 3
      %p132 = por %p130, %p131
      %p133 = scmp.ne.s32.totalorder %s122, %s123
      %p134 = scmp.eq.s32.totalorder %s15, 0
      %p135 = por %p133, %p134
      %p136 = scmp.ne.s32.totalorder %s122, %s123
      %p137 = scmp.eq.s32.totalorder %s16, 3
      %p138 = por %p136, %p137
      %p140 = scmp.ne.s32.totalorder %s123, %s139
      %p141 = scmp.eq.s32.totalorder %s16, 0
      %p142 = por %p140, %p141
      %p143 = scmp.le.s32.totalorder 1, %s10
      %p144 = scmp.lt.s32.totalorder %s10, 5
      %p145 = pnand %p143, %p144
      %p146 = pneg %p145
      // Predicated region
      $region9: #{attribute_classifier_forward.3} parent=5 // pred_check
        _
      $region10: #{attribute_classifier_forward.3} parent=5 // pred_check_branch
        %148 = sbr.rel (%p145) target = $region12
      $region11: #{attribute_classifier_forward.3} parent=5 // pred_region
        %s149 = ssub.s32 %s10, 1
        // Predicated region
        $region13: #{attribute_classifier_forward.3} parent=11 // pred_check
          %p150 = pneg %p31
        $region14: #{attribute_classifier_forward.3} parent=11 // pred_check_branch
          %152 = sbr.rel (%p150) target = $region16
        $region15: #{attribute_classifier_forward.3} parent=11 // pred_region
          _
        $region16: #{attribute_classifier_forward.3} parent=11 // pred_fallthru
          _
      $region12: #{attribute_classifier_forward.3} parent=5 // pred_fallthru
        _
      %p153 = scmp.lt.s32.totalorder %s10, 4
      // Predicated region
      $region17: #{attribute_classifier_forward.3} parent=5 // pred_check
        %p154 = pneg %p153
      $region18: #{attribute_classifier_forward.3} parent=5 // pred_check_branch
        %156 = sbr.rel (%p154) target = $region20
      $region19: #{attribute_classifier_forward.3} parent=5 // pred_region
        // Predicated region
        $region21: #{attribute_classifier_forward.3} parent=19 // pred_check
          %p157 = pneg %p51
        $region22: #{attribute_classifier_forward.3} parent=19 // pred_check_branch
          %159 = sbr.rel (%p157) target = $region24
        $region23: #{attribute_classifier_forward.3} parent=19 // pred_region
          %s160 = sand.u32 %s41, 1
          %s161 = sand.u32 %s41, 1
          %s162 = smul.addr %s161, 8192
          %s163 = scalar_lea.vmem [#allocation2], %s162
          %s164 = smul.u32 4, %s10
          %s165 = smul.addr %s164, 8
          %s166 = scalar_lea.vmem %s1, %s165
          // Predicated region
          $region25: #{attribute_classifier_forward.3} parent=23 // pred_check
            _
          $region26: #{attribute_classifier_forward.3} parent=23 // pred_check_branch
            %168 = sbr.rel (0) target = $region28
          $region27: #{attribute_classifier_forward.3} parent=23 // pred_region
            // Predicated region
            $region29: #{attribute_classifier_forward.3} parent=27 // pred_check
              _
            $region30: #{attribute_classifier_forward.3} parent=27 // pred_check_branch
              %170 = sbr.rel (0) target = $region32
            $region31: #{attribute_classifier_forward.3} parent=27 // pred_region
              loop: start=0, step=1, limit=1
              $region33: #{attribute_classifier_forward.3} parent=31 // loop_pre_header
                _
              $region34: #{attribute_classifier_forward.3} parent=31 // loop_header
                %s172 = sphi 0, %s176
                %p173 = scmp.ge.s32.totalorder %s172, 1
                %s177 = sphi %s166, %s166
                %s178 = sphi %s163, %s163
              $region35: #{attribute_classifier_forward.3} parent=31 // loop_header_branch
                %175 = sbr.rel (%p173) target = $region39
              $region36: #{attribute_classifier_forward.3} parent=31 // loop_body
                %v179 = vld [vmem:[%s177] sm:$0xff]
                %180 = vst [vmem:[%s178] sm:$0xff] %v179
                %v181 = vld [vmem:[%s177 + $0x8] sm:$0xff]
                %182 = vst [vmem:[%s178 + $0x8] sm:$0xff] %v181
                %v183 = vld [vmem:[%s177 + $0x10] sm:$0xff]
                %184 = vst [vmem:[%s178 + $0x10] sm:$0xff] %v183
                %v185 = vld [vmem:[%s177 + $0x18] sm:$0xff]
                %186 = vst [vmem:[%s178 + $0x18] sm:$0xff] %v185
                %v187 = vld [vmem:[%s177 + $0x80] sm:$0xff]
                %188 = vst [vmem:[%s178 + $0x20] sm:$0xff] %v187
                %v189 = vld [vmem:[%s177 + $0x88] sm:$0xff]
                %190 = vst [vmem:[%s178 + $0x28] sm:$0xff] %v189
                %v191 = vld [vmem:[%s177 + $0x90] sm:$0xff]
                %192 = vst [vmem:[%s178 + $0x30] sm:$0xff] %v191
                %v193 = vld [vmem:[%s177 + $0x98] sm:$0xff]
                %194 = vst [vmem:[%s178 + $0x38] sm:$0xff] %v193
                %v195 = vld [vmem:[%s177 + $0x100] sm:$0xff]
                %196 = vst [vmem:[%s178 + $0x40] sm:$0xff] %v195
                %v197 = vld [vmem:[%s177 + $0x108] sm:$0xff]
                %198 = vst [vmem:[%s178 + $0x48] sm:$0xff] %v197
                %v199 = vld [vmem:[%s177 + $0x110] sm:$0xff]
                %200 = vst [vmem:[%s178 + $0x50] sm:$0xff] %v199
                %v201 = vld [vmem:[%s177 + $0x118] sm:$0xff]
                %202 = vst [vmem:[%s178 + $0x58] sm:$0xff] %v201
                %v203 = vld [vmem:[%s177 + $0x180] sm:$0xff]
                %204 = vst [vmem:[%s178 + $0x60] sm:$0xff] %v203
                %v205 = vld [vmem:[%s177 + $0x188] sm:$0xff]
                %206 = vst [vmem:[%s178 + $0x68] sm:$0xff] %v205
                %v207 = vld [vmem:[%s177 + $0x190] sm:$0xff]
                %208 = vst [vmem:[%s178 + $0x70] sm:$0xff] %v207
                %v209 = vld [vmem:[%s177 + $0x198] sm:$0xff]
                %210 = vst [vmem:[%s178 + $0x78] sm:$0xff] %v209
                %v211 = vld [vmem:[%s177 + $0x200] sm:$0xff]
                %212 = vst [vmem:[%s178 + $0x80] sm:$0xff] %v211
                %v213 = vld [vmem:[%s177 + $0x208] sm:$0xff]
                %214 = vst [vmem:[%s178 + $0x88] sm:$0xff] %v213
                %v215 = vld [vmem:[%s177 + $0x210] sm:$0xff]
                %216 = vst [vmem:[%s178 + $0x90] sm:$0xff] %v215
                %v217 = vld [vmem:[%s177 + $0x218] sm:$0xff]
                %218 = vst [vmem:[%s178 + $0x98] sm:$0xff] %v217
                %v219 = vld [vmem:[%s177 + $0x280] sm:$0xff]
                %220 = vst [vmem:[%s178 + $0xa0] sm:$0xff] %v219
                %v221 = vld [vmem:[%s177 + $0x288] sm:$0xff]
                %222 = vst [vmem:[%s178 + $0xa8] sm:$0xff] %v221
                %v223 = vld [vmem:[%s177 + $0x290] sm:$0xff]
                %224 = vst [vmem:[%s178 + $0xb0] sm:$0xff] %v223
                %v225 = vld [vmem:[%s177 + $0x298] sm:$0xff]
                %226 = vst [vmem:[%s178 + $0xb8] sm:$0xff] %v225
                %v227 = vld [vmem:[%s177 + $0x300] sm:$0xff]
                %228 = vst [vmem:[%s178 + $0xc0] sm:$0xff] %v227
                %v229 = vld [vmem:[%s177 + $0x308] sm:$0xff]
                %230 = vst [vmem:[%s178 + $0xc8] sm:$0xff] %v229
                %v231 = vld [vmem:[%s177 + $0x310] sm:$0xff]
                %232 = vst [vmem:[%s178 + $0xd0] sm:$0xff] %v231
                %v233 = vld [vmem:[%s177 + $0x318] sm:$0xff]
                %234 = vst [vmem:[%s178 + $0xd8] sm:$0xff] %v233
                %v235 = vld [vmem:[%s177 + $0x380] sm:$0xff]
                %236 = vst [vmem:[%s178 + $0xe0] sm:$0xff] %v235
                %v237 = vld [vmem:[%s177 + $0x388] sm:$0xff]
                %238 = vst [vmem:[%s178 + $0xe8] sm:$0xff] %v237
                %v239 = vld [vmem:[%s177 + $0x390] sm:$0xff]
                %240 = vst [vmem:[%s178 + $0xf0] sm:$0xff] %v239
                %v241 = vld [vmem:[%s177 + $0x398] sm:$0xff]
                %242 = vst [vmem:[%s178 + $0xf8] sm:$0xff] %v241
                %v243 = vld [vmem:[%s177 + $0x400] sm:$0xff]
                %244 = vst [vmem:[%s178 + $0x100] sm:$0xff] %v243
                %v245 = vld [vmem:[%s177 + $0x408] sm:$0xff]
                %246 = vst [vmem:[%s178 + $0x108] sm:$0xff] %v245
                %v247 = vld [vmem:[%s177 + $0x410] sm:$0xff]
                %248 = vst [vmem:[%s178 + $0x110] sm:$0xff] %v247
                %v249 = vld [vmem:[%s177 + $0x418] sm:$0xff]
                %250 = vst [vmem:[%s178 + $0x118] sm:$0xff] %v249
                %v251 = vld [vmem:[%s177 + $0x480] sm:$0xff]
                %252 = vst [vmem:[%s178 + $0x120] sm:$0xff] %v251
                %v253 = vld [vmem:[%s177 + $0x488] sm:$0xff]
                %254 = vst [vmem:[%s178 + $0x128] sm:$0xff] %v253
                %v255 = vld [vmem:[%s177 + $0x490] sm:$0xff]
                %256 = vst [vmem:[%s178 + $0x130] sm:$0xff] %v255
                %v257 = vld [vmem:[%s177 + $0x498] sm:$0xff]
                %258 = vst [vmem:[%s178 + $0x138] sm:$0xff] %v257
                %v259 = vld [vmem:[%s177 + $0x500] sm:$0xff]
                %260 = vst [vmem:[%s178 + $0x140] sm:$0xff] %v259
                %v261 = vld [vmem:[%s177 + $0x508] sm:$0xff]
                %262 = vst [vmem:[%s178 + $0x148] sm:$0xff] %v261
                %v263 = vld [vmem:[%s177 + $0x510] sm:$0xff]
                %264 = vst [vmem:[%s178 + $0x150] sm:$0xff] %v263
                %v265 = vld [vmem:[%s177 + $0x518] sm:$0xff]
                %266 = vst [vmem:[%s178 + $0x158] sm:$0xff] %v265
                %v267 = vld [vmem:[%s177 + $0x580] sm:$0xff]
                %268 = vst [vmem:[%s178 + $0x160] sm:$0xff] %v267
                %v269 = vld [vmem:[%s177 + $0x588] sm:$0xff]
                %270 = vst [vmem:[%s178 + $0x168] sm:$0xff] %v269
                %v271 = vld [vmem:[%s177 + $0x590] sm:$0xff]
                %272 = vst [vmem:[%s178 + $0x170] sm:$0xff] %v271
                %v273 = vld [vmem:[%s177 + $0x598] sm:$0xff]
                %274 = vst [vmem:[%s178 + $0x178] sm:$0xff] %v273
                %v275 = vld [vmem:[%s177 + $0x600] sm:$0xff]
                %276 = vst [vmem:[%s178 + $0x180] sm:$0xff] %v275
                %v277 = vld [vmem:[%s177 + $0x608] sm:$0xff]
                %278 = vst [vmem:[%s178 + $0x188] sm:$0xff] %v277
                %v279 = vld [vmem:[%s177 + $0x610] sm:$0xff]
                %280 = vst [vmem:[%s178 + $0x190] sm:$0xff] %v279
                %v281 = vld [vmem:[%s177 + $0x618] sm:$0xff]
                %282 = vst [vmem:[%s178 + $0x198] sm:$0xff] %v281
                %v283 = vld [vmem:[%s177 + $0x680] sm:$0xff]
                %284 = vst [vmem:[%s178 + $0x1a0] sm:$0xff] %v283
                %v285 = vld [vmem:[%s177 + $0x688] sm:$0xff]
                %286 = vst [vmem:[%s178 + $0x1a8] sm:$0xff] %v285
                %v287 = vld [vmem:[%s177 + $0x690] sm:$0xff]
                %288 = vst [vmem:[%s178 + $0x1b0] sm:$0xff] %v287
                %v289 = vld [vmem:[%s177 + $0x698] sm:$0xff]
                %290 = vst [vmem:[%s178 + $0x1b8] sm:$0xff] %v289
                %v291 = vld [vmem:[%s177 + $0x700] sm:$0xff]
                %292 = vst [vmem:[%s178 + $0x1c0] sm:$0xff] %v291
                %v293 = vld [vmem:[%s177 + $0x708] sm:$0xff]
                %294 = vst [vmem:[%s178 + $0x1c8] sm:$0xff] %v293
                %v295 = vld [vmem:[%s177 + $0x710] sm:$0xff]
                %296 = vst [vmem:[%s178 + $0x1d0] sm:$0xff] %v295
                %v297 = vld [vmem:[%s177 + $0x718] sm:$0xff]
                %298 = vst [vmem:[%s178 + $0x1d8] sm:$0xff] %v297
                %v299 = vld [vmem:[%s177 + $0x780] sm:$0xff]
                %300 = vst [vmem:[%s178 + $0x1e0] sm:$0xff] %v299
                %v301 = vld [vmem:[%s177 + $0x788] sm:$0xff]
                %302 = vst [vmem:[%s178 + $0x1e8] sm:$0xff] %v301
                %v303 = vld [vmem:[%s177 + $0x790] sm:$0xff]
                %304 = vst [vmem:[%s178 + $0x1f0] sm:$0xff] %v303
                %v305 = vld [vmem:[%s177 + $0x798] sm:$0xff]
                %306 = vst [vmem:[%s178 + $0x1f8] sm:$0xff] %v305
                %v307 = vld [vmem:[%s177 + $0x800] sm:$0xff]
                %308 = vst [vmem:[%s178 + $0x200] sm:$0xff] %v307
                %v309 = vld [vmem:[%s177 + $0x808] sm:$0xff]
                %310 = vst [vmem:[%s178 + $0x208] sm:$0xff] %v309
                %v311 = vld [vmem:[%s177 + $0x810] sm:$0xff]
                %312 = vst [vmem:[%s178 + $0x210] sm:$0xff] %v311
                %v313 = vld [vmem:[%s177 + $0x818] sm:$0xff]
                %314 = vst [vmem:[%s178 + $0x218] sm:$0xff] %v313
                %v315 = vld [vmem:[%s177 + $0x880] sm:$0xff]
                %316 = vst [vmem:[%s178 + $0x220] sm:$0xff] %v315
                %v317 = vld [vmem:[%s177 + $0x888] sm:$0xff]
                %318 = vst [vmem:[%s178 + $0x228] sm:$0xff] %v317
                %v319 = vld [vmem:[%s177 + $0x890] sm:$0xff]
                %320 = vst [vmem:[%s178 + $0x230] sm:$0xff] %v319
                %v321 = vld [vmem:[%s177 + $0x898] sm:$0xff]
                %322 = vst [vmem:[%s178 + $0x238] sm:$0xff] %v321
                %v323 = vld [vmem:[%s177 + $0x900] sm:$0xff]
                %324 = vst [vmem:[%s178 + $0x240] sm:$0xff] %v323
                %v325 = vld [vmem:[%s177 + $0x908] sm:$0xff]
                %326 = vst [vmem:[%s178 + $0x248] sm:$0xff] %v325
                %v327 = vld [vmem:[%s177 + $0x910] sm:$0xff]
                %328 = vst [vmem:[%s178 + $0x250] sm:$0xff] %v327
                %v329 = vld [vmem:[%s177 + $0x918] sm:$0xff]
                %330 = vst [vmem:[%s178 + $0x258] sm:$0xff] %v329
                %v331 = vld [vmem:[%s177 + $0x980] sm:$0xff]
                %332 = vst [vmem:[%s178 + $0x260] sm:$0xff] %v331
                %v333 = vld [vmem:[%s177 + $0x988] sm:$0xff]
                %334 = vst [vmem:[%s178 + $0x268] sm:$0xff] %v333
                %v335 = vld [vmem:[%s177 + $0x990] sm:$0xff]
                %336 = vst [vmem:[%s178 + $0x270] sm:$0xff] %v335
                %v337 = vld [vmem:[%s177 + $0x998] sm:$0xff]
                %338 = vst [vmem:[%s178 + $0x278] sm:$0xff] %v337
                %v339 = vld [vmem:[%s177 + $0xa00] sm:$0xff]
                %340 = vst [vmem:[%s178 + $0x280] sm:$0xff] %v339
                %v341 = vld [vmem:[%s177 + $0xa08] sm:$0xff]
                %342 = vst [vmem:[%s178 + $0x288] sm:$0xff] %v341
                %v343 = vld [vmem:[%s177 + $0xa10] sm:$0xff]
                %344 = vst [vmem:[%s178 + $0x290] sm:$0xff] %v343
                %v345 = vld [vmem:[%s177 + $0xa18] sm:$0xff]
                %346 = vst [vmem:[%s178 + $0x298] sm:$0xff] %v345
                %v347 = vld [vmem:[%s177 + $0xa80] sm:$0xff]
                %348 = vst [vmem:[%s178 + $0x2a0] sm:$0xff] %v347
                %v349 = vld [vmem:[%s177 + $0xa88] sm:$0xff]
                %350 = vst [vmem:[%s178 + $0x2a8] sm:$0xff] %v349
                %v351 = vld [vmem:[%s177 + $0xa90] sm:$0xff]
                %352 = vst [vmem:[%s178 + $0x2b0] sm:$0xff] %v351
                %v353 = vld [vmem:[%s177 + $0xa98] sm:$0xff]
                %354 = vst [vmem:[%s178 + $0x2b8] sm:$0xff] %v353
                %v355 = vld [vmem:[%s177 + $0xb00] sm:$0xff]
                %356 = vst [vmem:[%s178 + $0x2c0] sm:$0xff] %v355
                %v357 = vld [vmem:[%s177 + $0xb08] sm:$0xff]
                %358 = vst [vmem:[%s178 + $0x2c8] sm:$0xff] %v357
                %v359 = vld [vmem:[%s177 + $0xb10] sm:$0xff]
                %360 = vst [vmem:[%s178 + $0x2d0] sm:$0xff] %v359
                %v361 = vld [vmem:[%s177 + $0xb18] sm:$0xff]
                %362 = vst [vmem:[%s178 + $0x2d8] sm:$0xff] %v361
                %v363 = vld [vmem:[%s177 + $0xb80] sm:$0xff]
                %364 = vst [vmem:[%s178 + $0x2e0] sm:$0xff] %v363
                %v365 = vld [vmem:[%s177 + $0xb88] sm:$0xff]
                %366 = vst [vmem:[%s178 + $0x2e8] sm:$0xff] %v365
                %v367 = vld [vmem:[%s177 + $0xb90] sm:$0xff]
                %368 = vst [vmem:[%s178 + $0x2f0] sm:$0xff] %v367
                %v369 = vld [vmem:[%s177 + $0xb98] sm:$0xff]
                %370 = vst [vmem:[%s178 + $0x2f8] sm:$0xff] %v369
                %v371 = vld [vmem:[%s177 + $0xc00] sm:$0xff]
                %372 = vst [vmem:[%s178 + $0x300] sm:$0xff] %v371
                %v373 = vld [vmem:[%s177 + $0xc08] sm:$0xff]
                %374 = vst [vmem:[%s178 + $0x308] sm:$0xff] %v373
                %v375 = vld [vmem:[%s177 + $0xc10] sm:$0xff]
                %376 = vst [vmem:[%s178 + $0x310] sm:$0xff] %v375
                %v377 = vld [vmem:[%s177 + $0xc18] sm:$0xff]
                %378 = vst [vmem:[%s178 + $0x318] sm:$0xff] %v377
                %v379 = vld [vmem:[%s177 + $0xc80] sm:$0xff]
                %380 = vst [vmem:[%s178 + $0x320] sm:$0xff] %v379
                %v381 = vld [vmem:[%s177 + $0xc88] sm:$0xff]
                %382 = vst [vmem:[%s178 + $0x328] sm:$0xff] %v381
                %v383 = vld [vmem:[%s177 + $0xc90] sm:$0xff]
                %384 = vst [vmem:[%s178 + $0x330] sm:$0xff] %v383
                %v385 = vld [vmem:[%s177 + $0xc98] sm:$0xff]
                %386 = vst [vmem:[%s178 + $0x338] sm:$0xff] %v385
                %v387 = vld [vmem:[%s177 + $0xd00] sm:$0xff]
                %388 = vst [vmem:[%s178 + $0x340] sm:$0xff] %v387
                %v389 = vld [vmem:[%s177 + $0xd08] sm:$0xff]
                %390 = vst [vmem:[%s178 + $0x348] sm:$0xff] %v389
                %v391 = vld [vmem:[%s177 + $0xd10] sm:$0xff]
                %392 = vst [vmem:[%s178 + $0x350] sm:$0xff] %v391
                %v393 = vld [vmem:[%s177 + $0xd18] sm:$0xff]
                %394 = vst [vmem:[%s178 + $0x358] sm:$0xff] %v393
                %v395 = vld [vmem:[%s177 + $0xd80] sm:$0xff]
                %396 = vst [vmem:[%s178 + $0x360] sm:$0xff] %v395
                %v397 = vld [vmem:[%s177 + $0xd88] sm:$0xff]
                %398 = vst [vmem:[%s178 + $0x368] sm:$0xff] %v397
                %v399 = vld [vmem:[%s177 + $0xd90] sm:$0xff]
                %400 = vst [vmem:[%s178 + $0x370] sm:$0xff] %v399
                %v401 = vld [vmem:[%s177 + $0xd98] sm:$0xff]
                %402 = vst [vmem:[%s178 + $0x378] sm:$0xff] %v401
                %v403 = vld [vmem:[%s177 + $0xe00] sm:$0xff]
                %404 = vst [vmem:[%s178 + $0x380] sm:$0xff] %v403
                %v405 = vld [vmem:[%s177 + $0xe08] sm:$0xff]
                %406 = vst [vmem:[%s178 + $0x388] sm:$0xff] %v405
                %v407 = vld [vmem:[%s177 + $0xe10] sm:$0xff]
                %408 = vst [vmem:[%s178 + $0x390] sm:$0xff] %v407
                %v409 = vld [vmem:[%s177 + $0xe18] sm:$0xff]
                %410 = vst [vmem:[%s178 + $0x398] sm:$0xff] %v409
                %v411 = vld [vmem:[%s177 + $0xe80] sm:$0xff]
                %412 = vst [vmem:[%s178 + $0x3a0] sm:$0xff] %v411
                %v413 = vld [vmem:[%s177 + $0xe88] sm:$0xff]
                %414 = vst [vmem:[%s178 + $0x3a8] sm:$0xff] %v413
                %v415 = vld [vmem:[%s177 + $0xe90] sm:$0xff]
                %416 = vst [vmem:[%s178 + $0x3b0] sm:$0xff] %v415
                %v417 = vld [vmem:[%s177 + $0xe98] sm:$0xff]
                %418 = vst [vmem:[%s178 + $0x3b8] sm:$0xff] %v417
                %v419 = vld [vmem:[%s177 + $0xf00] sm:$0xff]
                %420 = vst [vmem:[%s178 + $0x3c0] sm:$0xff] %v419
                %v421 = vld [vmem:[%s177 + $0xf08] sm:$0xff]
                %422 = vst [vmem:[%s178 + $0x3c8] sm:$0xff] %v421
                %v423 = vld [vmem:[%s177 + $0xf10] sm:$0xff]
                %424 = vst [vmem:[%s178 + $0x3d0] sm:$0xff] %v423
                %v425 = vld [vmem:[%s177 + $0xf18] sm:$0xff]
                %426 = vst [vmem:[%s178 + $0x3d8] sm:$0xff] %v425
                %v427 = vld [vmem:[%s177 + $0xf80] sm:$0xff]
                %428 = vst [vmem:[%s178 + $0x3e0] sm:$0xff] %v427
                %v429 = vld [vmem:[%s177 + $0xf88] sm:$0xff]
                %430 = vst [vmem:[%s178 + $0x3e8] sm:$0xff] %v429
                %v431 = vld [vmem:[%s177 + $0xf90] sm:$0xff]
                %432 = vst [vmem:[%s178 + $0x3f0] sm:$0xff] %v431
                %v433 = vld [vmem:[%s177 + $0xf98] sm:$0xff]
                %434 = vst [vmem:[%s178 + $0x3f8] sm:$0xff] %v433
                %v435 = vld [vmem:[%s177 + $0x1000] sm:$0xff]
                %436 = vst [vmem:[%s178 + $0x400] sm:$0xff] %v435
                %v437 = vld [vmem:[%s177 + $0x1008] sm:$0xff]
                %438 = vst [vmem:[%s178 + $0x408] sm:$0xff] %v437
                %v439 = vld [vmem:[%s177 + $0x1010] sm:$0xff]
                %440 = vst [vmem:[%s178 + $0x410] sm:$0xff] %v439
                %v441 = vld [vmem:[%s177 + $0x1018] sm:$0xff]
                %442 = vst [vmem:[%s178 + $0x418] sm:$0xff] %v441
                %v443 = vld [vmem:[%s177 + $0x1080] sm:$0xff]
                %444 = vst [vmem:[%s178 + $0x420] sm:$0xff] %v443
                %v445 = vld [vmem:[%s177 + $0x1088] sm:$0xff]
                %446 = vst [vmem:[%s178 + $0x428] sm:$0xff] %v445
                %v447 = vld [vmem:[%s177 + $0x1090] sm:$0xff]
                %448 = vst [vmem:[%s178 + $0x430] sm:$0xff] %v447
                %v449 = vld [vmem:[%s177 + $0x1098] sm:$0xff]
                %450 = vst [vmem:[%s178 + $0x438] sm:$0xff] %v449
                %v451 = vld [vmem:[%s177 + $0x1100] sm:$0xff]
                %452 = vst [vmem:[%s178 + $0x440] sm:$0xff] %v451
                %v453 = vld [vmem:[%s177 + $0x1108] sm:$0xff]
                %454 = vst [vmem:[%s178 + $0x448] sm:$0xff] %v453
                %v455 = vld [vmem:[%s177 + $0x1110] sm:$0xff]
                %456 = vst [vmem:[%s178 + $0x450] sm:$0xff] %v455
                %v457 = vld [vmem:[%s177 + $0x1118] sm:$0xff]
                %458 = vst [vmem:[%s178 + $0x458] sm:$0xff] %v457
                %v459 = vld [vmem:[%s177 + $0x1180] sm:$0xff]
                %460 = vst [vmem:[%s178 + $0x460] sm:$0xff] %v459
                %v461 = vld [vmem:[%s177 + $0x1188] sm:$0xff]
                %462 = vst [vmem:[%s178 + $0x468] sm:$0xff] %v461
                %v463 = vld [vmem:[%s177 + $0x1190] sm:$0xff]
                %464 = vst [vmem:[%s178 + $0x470] sm:$0xff] %v463
                %v465 = vld [vmem:[%s177 + $0x1198] sm:$0xff]
                %466 = vst [vmem:[%s178 + $0x478] sm:$0xff] %v465
                %v467 = vld [vmem:[%s177 + $0x1200] sm:$0xff]
                %468 = vst [vmem:[%s178 + $0x480] sm:$0xff] %v467
                %v469 = vld [vmem:[%s177 + $0x1208] sm:$0xff]
                %470 = vst [vmem:[%s178 + $0x488] sm:$0xff] %v469
                %v471 = vld [vmem:[%s177 + $0x1210] sm:$0xff]
                %472 = vst [vmem:[%s178 + $0x490] sm:$0xff] %v471
                %v473 = vld [vmem:[%s177 + $0x1218] sm:$0xff]
                %474 = vst [vmem:[%s178 + $0x498] sm:$0xff] %v473
                %v475 = vld [vmem:[%s177 + $0x1280] sm:$0xff]
                %476 = vst [vmem:[%s178 + $0x4a0] sm:$0xff] %v475
                %v477 = vld [vmem:[%s177 + $0x1288] sm:$0xff]
                %478 = vst [vmem:[%s178 + $0x4a8] sm:$0xff] %v477
                %v479 = vld [vmem:[%s177 + $0x1290] sm:$0xff]
                %480 = vst [vmem:[%s178 + $0x4b0] sm:$0xff] %v479
                %v481 = vld [vmem:[%s177 + $0x1298] sm:$0xff]
                %482 = vst [vmem:[%s178 + $0x4b8] sm:$0xff] %v481
                %v483 = vld [vmem:[%s177 + $0x1300] sm:$0xff]
                %484 = vst [vmem:[%s178 + $0x4c0] sm:$0xff] %v483
                %v485 = vld [vmem:[%s177 + $0x1308] sm:$0xff]
                %486 = vst [vmem:[%s178 + $0x4c8] sm:$0xff] %v485
                %v487 = vld [vmem:[%s177 + $0x1310] sm:$0xff]
                %488 = vst [vmem:[%s178 + $0x4d0] sm:$0xff] %v487
                %v489 = vld [vmem:[%s177 + $0x1318] sm:$0xff]
                %490 = vst [vmem:[%s178 + $0x4d8] sm:$0xff] %v489
                %v491 = vld [vmem:[%s177 + $0x1380] sm:$0xff]
                %492 = vst [vmem:[%s178 + $0x4e0] sm:$0xff] %v491
                %v493 = vld [vmem:[%s177 + $0x1388] sm:$0xff]
                %494 = vst [vmem:[%s178 + $0x4e8] sm:$0xff] %v493
                %v495 = vld [vmem:[%s177 + $0x1390] sm:$0xff]
                %496 = vst [vmem:[%s178 + $0x4f0] sm:$0xff] %v495
                %v497 = vld [vmem:[%s177 + $0x1398] sm:$0xff]
                %498 = vst [vmem:[%s178 + $0x4f8] sm:$0xff] %v497
                %v499 = vld [vmem:[%s177 + $0x1400] sm:$0xff]
                %500 = vst [vmem:[%s178 + $0x500] sm:$0xff] %v499
                %v501 = vld [vmem:[%s177 + $0x1408] sm:$0xff]
                %502 = vst [vmem:[%s178 + $0x508] sm:$0xff] %v501
                %v503 = vld [vmem:[%s177 + $0x1410] sm:$0xff]
                %504 = vst [vmem:[%s178 + $0x510] sm:$0xff] %v503
                %v505 = vld [vmem:[%s177 + $0x1418] sm:$0xff]
                %506 = vst [vmem:[%s178 + $0x518] sm:$0xff] %v505
                %v507 = vld [vmem:[%s177 + $0x1480] sm:$0xff]
                %508 = vst [vmem:[%s178 + $0x520] sm:$0xff] %v507
                %v509 = vld [vmem:[%s177 + $0x1488] sm:$0xff]
                %510 = vst [vmem:[%s178 + $0x528] sm:$0xff] %v509
                %v511 = vld [vmem:[%s177 + $0x1490] sm:$0xff]
                %512 = vst [vmem:[%s178 + $0x530] sm:$0xff] %v511
                %v513 = vld [vmem:[%s177 + $0x1498] sm:$0xff]
                %514 = vst [vmem:[%s178 + $0x538] sm:$0xff] %v513
                %v515 = vld [vmem:[%s177 + $0x1500] sm:$0xff]
                %516 = vst [vmem:[%s178 + $0x540] sm:$0xff] %v515
                %v517 = vld [vmem:[%s177 + $0x1508] sm:$0xff]
                %518 = vst [vmem:[%s178 + $0x548] sm:$0xff] %v517
                %v519 = vld [vmem:[%s177 + $0x1510] sm:$0xff]
                %520 = vst [vmem:[%s178 + $0x550] sm:$0xff] %v519
                %v521 = vld [vmem:[%s177 + $0x1518] sm:$0xff]
                %522 = vst [vmem:[%s178 + $0x558] sm:$0xff] %v521
                %v523 = vld [vmem:[%s177 + $0x1580] sm:$0xff]
                %524 = vst [vmem:[%s178 + $0x560] sm:$0xff] %v523
                %v525 = vld [vmem:[%s177 + $0x1588] sm:$0xff]
                %526 = vst [vmem:[%s178 + $0x568] sm:$0xff] %v525
                %v527 = vld [vmem:[%s177 + $0x1590] sm:$0xff]
                %528 = vst [vmem:[%s178 + $0x570] sm:$0xff] %v527
                %v529 = vld [vmem:[%s177 + $0x1598] sm:$0xff]
                %530 = vst [vmem:[%s178 + $0x578] sm:$0xff] %v529
                %v531 = vld [vmem:[%s177 + $0x1600] sm:$0xff]
                %532 = vst [vmem:[%s178 + $0x580] sm:$0xff] %v531
                %v533 = vld [vmem:[%s177 + $0x1608] sm:$0xff]
                %534 = vst [vmem:[%s178 + $0x588] sm:$0xff] %v533
                %v535 = vld [vmem:[%s177 + $0x1610] sm:$0xff]
                %536 = vst [vmem:[%s178 + $0x590] sm:$0xff] %v535
                %v537 = vld [vmem:[%s177 + $0x1618] sm:$0xff]
                %538 = vst [vmem:[%s178 + $0x598] sm:$0xff] %v537
                %v539 = vld [vmem:[%s177 + $0x1680] sm:$0xff]
                %540 = vst [vmem:[%s178 + $0x5a0] sm:$0xff] %v539
                %v541 = vld [vmem:[%s177 + $0x1688] sm:$0xff]
                %542 = vst [vmem:[%s178 + $0x5a8] sm:$0xff] %v541
                %v543 = vld [vmem:[%s177 + $0x1690] sm:$0xff]
                %544 = vst [vmem:[%s178 + $0x5b0] sm:$0xff] %v543
                %v545 = vld [vmem:[%s177 + $0x1698] sm:$0xff]
                %546 = vst [vmem:[%s178 + $0x5b8] sm:$0xff] %v545
                %v547 = vld [vmem:[%s177 + $0x1700] sm:$0xff]
                %548 = vst [vmem:[%s178 + $0x5c0] sm:$0xff] %v547
                %v549 = vld [vmem:[%s177 + $0x1708] sm:$0xff]
                %550 = vst [vmem:[%s178 + $0x5c8] sm:$0xff] %v549
                %v551 = vld [vmem:[%s177 + $0x1710] sm:$0xff]
                %552 = vst [vmem:[%s178 + $0x5d0] sm:$0xff] %v551
                %v553 = vld [vmem:[%s177 + $0x1718] sm:$0xff]
                %554 = vst [vmem:[%s178 + $0x5d8] sm:$0xff] %v553
                %v555 = vld [vmem:[%s177 + $0x1780] sm:$0xff]
                %556 = vst [vmem:[%s178 + $0x5e0] sm:$0xff] %v555
                %v557 = vld [vmem:[%s177 + $0x1788] sm:$0xff]
                %558 = vst [vmem:[%s178 + $0x5e8] sm:$0xff] %v557
                %v559 = vld [vmem:[%s177 + $0x1790] sm:$0xff]
                %560 = vst [vmem:[%s178 + $0x5f0] sm:$0xff] %v559
                %v561 = vld [vmem:[%s177 + $0x1798] sm:$0xff]
                %562 = vst [vmem:[%s178 + $0x5f8] sm:$0xff] %v561
                %v563 = vld [vmem:[%s177 + $0x1800] sm:$0xff]
                %564 = vst [vmem:[%s178 + $0x600] sm:$0xff] %v563
                %v565 = vld [vmem:[%s177 + $0x1808] sm:$0xff]
                %566 = vst [vmem:[%s178 + $0x608] sm:$0xff] %v565
                %v567 = vld [vmem:[%s177 + $0x1810] sm:$0xff]
                %568 = vst [vmem:[%s178 + $0x610] sm:$0xff] %v567
                %v569 = vld [vmem:[%s177 + $0x1818] sm:$0xff]
                %570 = vst [vmem:[%s178 + $0x618] sm:$0xff] %v569
                %v571 = vld [vmem:[%s177 + $0x1880] sm:$0xff]
                %572 = vst [vmem:[%s178 + $0x620] sm:$0xff] %v571
                %v573 = vld [vmem:[%s177 + $0x1888] sm:$0xff]
                %574 = vst [vmem:[%s178 + $0x628] sm:$0xff] %v573
                %v575 = vld [vmem:[%s177 + $0x1890] sm:$0xff]
                %576 = vst [vmem:[%s178 + $0x630] sm:$0xff] %v575
                %v577 = vld [vmem:[%s177 + $0x1898] sm:$0xff]
                %578 = vst [vmem:[%s178 + $0x638] sm:$0xff] %v577
                %v579 = vld [vmem:[%s177 + $0x1900] sm:$0xff]
                %580 = vst [vmem:[%s178 + $0x640] sm:$0xff] %v579
                %v581 = vld [vmem:[%s177 + $0x1908] sm:$0xff]
                %582 = vst [vmem:[%s178 + $0x648] sm:$0xff] %v581
                %v583 = vld [vmem:[%s177 + $0x1910] sm:$0xff]
                %584 = vst [vmem:[%s178 + $0x650] sm:$0xff] %v583
                %v585 = vld [vmem:[%s177 + $0x1918] sm:$0xff]
                %586 = vst [vmem:[%s178 + $0x658] sm:$0xff] %v585
                %v587 = vld [vmem:[%s177 + $0x1980] sm:$0xff]
                %588 = vst [vmem:[%s178 + $0x660] sm:$0xff] %v587
                %v589 = vld [vmem:[%s177 + $0x1988] sm:$0xff]
                %590 = vst [vmem:[%s178 + $0x668] sm:$0xff] %v589
                %v591 = vld [vmem:[%s177 + $0x1990] sm:$0xff]
                %592 = vst [vmem:[%s178 + $0x670] sm:$0xff] %v591
                %v593 = vld [vmem:[%s177 + $0x1998] sm:$0xff]
                %594 = vst [vmem:[%s178 + $0x678] sm:$0xff] %v593
                %v595 = vld [vmem:[%s177 + $0x1a00] sm:$0xff]
                %596 = vst [vmem:[%s178 + $0x680] sm:$0xff] %v595
                %v597 = vld [vmem:[%s177 + $0x1a08] sm:$0xff]
                %598 = vst [vmem:[%s178 + $0x688] sm:$0xff] %v597
                %v599 = vld [vmem:[%s177 + $0x1a10] sm:$0xff]
                %600 = vst [vmem:[%s178 + $0x690] sm:$0xff] %v599
                %v601 = vld [vmem:[%s177 + $0x1a18] sm:$0xff]
                %602 = vst [vmem:[%s178 + $0x698] sm:$0xff] %v601
                %v603 = vld [vmem:[%s177 + $0x1a80] sm:$0xff]
                %604 = vst [vmem:[%s178 + $0x6a0] sm:$0xff] %v603
                %v605 = vld [vmem:[%s177 + $0x1a88] sm:$0xff]
                %606 = vst [vmem:[%s178 + $0x6a8] sm:$0xff] %v605
                %v607 = vld [vmem:[%s177 + $0x1a90] sm:$0xff]
                %608 = vst [vmem:[%s178 + $0x6b0] sm:$0xff] %v607
                %v609 = vld [vmem:[%s177 + $0x1a98] sm:$0xff]
                %610 = vst [vmem:[%s178 + $0x6b8] sm:$0xff] %v609
                %v611 = vld [vmem:[%s177 + $0x1b00] sm:$0xff]
                %612 = vst [vmem:[%s178 + $0x6c0] sm:$0xff] %v611
                %v613 = vld [vmem:[%s177 + $0x1b08] sm:$0xff]
                %614 = vst [vmem:[%s178 + $0x6c8] sm:$0xff] %v613
                %v615 = vld [vmem:[%s177 + $0x1b10] sm:$0xff]
                %616 = vst [vmem:[%s178 + $0x6d0] sm:$0xff] %v615
                %v617 = vld [vmem:[%s177 + $0x1b18] sm:$0xff]
                %618 = vst [vmem:[%s178 + $0x6d8] sm:$0xff] %v617
                %v619 = vld [vmem:[%s177 + $0x1b80] sm:$0xff]
                %620 = vst [vmem:[%s178 + $0x6e0] sm:$0xff] %v619
                %v621 = vld [vmem:[%s177 + $0x1b88] sm:$0xff]
                %622 = vst [vmem:[%s178 + $0x6e8] sm:$0xff] %v621
                %v623 = vld [vmem:[%s177 + $0x1b90] sm:$0xff]
                %624 = vst [vmem:[%s178 + $0x6f0] sm:$0xff] %v623
                %v625 = vld [vmem:[%s177 + $0x1b98] sm:$0xff]
                %626 = vst [vmem:[%s178 + $0x6f8] sm:$0xff] %v625
                %v627 = vld [vmem:[%s177 + $0x1c00] sm:$0xff]
                %628 = vst [vmem:[%s178 + $0x700] sm:$0xff] %v627
                %v629 = vld [vmem:[%s177 + $0x1c08] sm:$0xff]
                %630 = vst [vmem:[%s178 + $0x708] sm:$0xff] %v629
                %v631 = vld [vmem:[%s177 + $0x1c10] sm:$0xff]
                %632 = vst [vmem:[%s178 + $0x710] sm:$0xff] %v631
                %v633 = vld [vmem:[%s177 + $0x1c18] sm:$0xff]
                %634 = vst [vmem:[%s178 + $0x718] sm:$0xff] %v633
                %v635 = vld [vmem:[%s177 + $0x1c80] sm:$0xff]
                %636 = vst [vmem:[%s178 + $0x720] sm:$0xff] %v635
                %v637 = vld [vmem:[%s177 + $0x1c88] sm:$0xff]
                %638 = vst [vmem:[%s178 + $0x728] sm:$0xff] %v637
                %v639 = vld [vmem:[%s177 + $0x1c90] sm:$0xff]
                %640 = vst [vmem:[%s178 + $0x730] sm:$0xff] %v639
                %v641 = vld [vmem:[%s177 + $0x1c98] sm:$0xff]
                %642 = vst [vmem:[%s178 + $0x738] sm:$0xff] %v641
                %v643 = vld [vmem:[%s177 + $0x1d00] sm:$0xff]
                %644 = vst [vmem:[%s178 + $0x740] sm:$0xff] %v643
                %v645 = vld [vmem:[%s177 + $0x1d08] sm:$0xff]
                %646 = vst [vmem:[%s178 + $0x748] sm:$0xff] %v645
                %v647 = vld [vmem:[%s177 + $0x1d10] sm:$0xff]
                %648 = vst [vmem:[%s178 + $0x750] sm:$0xff] %v647
                %v649 = vld [vmem:[%s177 + $0x1d18] sm:$0xff]
                %650 = vst [vmem:[%s178 + $0x758] sm:$0xff] %v649
                %v651 = vld [vmem:[%s177 + $0x1d80] sm:$0xff]
                %652 = vst [vmem:[%s178 + $0x760] sm:$0xff] %v651
                %v653 = vld [vmem:[%s177 + $0x1d88] sm:$0xff]
                %654 = vst [vmem:[%s178 + $0x768] sm:$0xff] %v653
                %v655 = vld [vmem:[%s177 + $0x1d90] sm:$0xff]
                %656 = vst [vmem:[%s178 + $0x770] sm:$0xff] %v655
                %v657 = vld [vmem:[%s177 + $0x1d98] sm:$0xff]
                %658 = vst [vmem:[%s178 + $0x778] sm:$0xff] %v657
                %v659 = vld [vmem:[%s177 + $0x1e00] sm:$0xff]
                %660 = vst [vmem:[%s178 + $0x780] sm:$0xff] %v659
                %v661 = vld [vmem:[%s177 + $0x1e08] sm:$0xff]
                %662 = vst [vmem:[%s178 + $0x788] sm:$0xff] %v661
                %v663 = vld [vmem:[%s177 + $0x1e10] sm:$0xff]
                %664 = vst [vmem:[%s178 + $0x790] sm:$0xff] %v663
                %v665 = vld [vmem:[%s177 + $0x1e18] sm:$0xff]
                %666 = vst [vmem:[%s178 + $0x798] sm:$0xff] %v665
                %v667 = vld [vmem:[%s177 + $0x1e80] sm:$0xff]
                %668 = vst [vmem:[%s178 + $0x7a0] sm:$0xff] %v667
                %v669 = vld [vmem:[%s177 + $0x1e88] sm:$0xff]
                %670 = vst [vmem:[%s178 + $0x7a8] sm:$0xff] %v669
                %v671 = vld [vmem:[%s177 + $0x1e90] sm:$0xff]
                %672 = vst [vmem:[%s178 + $0x7b0] sm:$0xff] %v671
                %v673 = vld [vmem:[%s177 + $0x1e98] sm:$0xff]
                %674 = vst [vmem:[%s178 + $0x7b8] sm:$0xff] %v673
                %v675 = vld [vmem:[%s177 + $0x1f00] sm:$0xff]
                %676 = vst [vmem:[%s178 + $0x7c0] sm:$0xff] %v675
                %v677 = vld [vmem:[%s177 + $0x1f08] sm:$0xff]
                %678 = vst [vmem:[%s178 + $0x7c8] sm:$0xff] %v677
                %v679 = vld [vmem:[%s177 + $0x1f10] sm:$0xff]
                %680 = vst [vmem:[%s178 + $0x7d0] sm:$0xff] %v679
                %v681 = vld [vmem:[%s177 + $0x1f18] sm:$0xff]
                %682 = vst [vmem:[%s178 + $0x7d8] sm:$0xff] %v681
                %v683 = vld [vmem:[%s177 + $0x1f80] sm:$0xff]
                %684 = vst [vmem:[%s178 + $0x7e0] sm:$0xff] %v683
                %v685 = vld [vmem:[%s177 + $0x1f88] sm:$0xff]
                %686 = vst [vmem:[%s178 + $0x7e8] sm:$0xff] %v685
                %v687 = vld [vmem:[%s177 + $0x1f90] sm:$0xff]
                %688 = vst [vmem:[%s178 + $0x7f0] sm:$0xff] %v687
                %v689 = vld [vmem:[%s177 + $0x1f98] sm:$0xff]
                %690 = vst [vmem:[%s178 + $0x7f8] sm:$0xff] %v689
                %v691 = vld [vmem:[%s177 + $0x2000] sm:$0xff]
                %692 = vst [vmem:[%s178 + $0x800] sm:$0xff] %v691
                %v693 = vld [vmem:[%s177 + $0x2008] sm:$0xff]
                %694 = vst [vmem:[%s178 + $0x808] sm:$0xff] %v693
                %v695 = vld [vmem:[%s177 + $0x2010] sm:$0xff]
                %696 = vst [vmem:[%s178 + $0x810] sm:$0xff] %v695
                %v697 = vld [vmem:[%s177 + $0x2018] sm:$0xff]
                %698 = vst [vmem:[%s178 + $0x818] sm:$0xff] %v697
                %v699 = vld [vmem:[%s177 + $0x2080] sm:$0xff]
                %700 = vst [vmem:[%s178 + $0x820] sm:$0xff] %v699
                %v701 = vld [vmem:[%s177 + $0x2088] sm:$0xff]
                %702 = vst [vmem:[%s178 + $0x828] sm:$0xff] %v701
                %v703 = vld [vmem:[%s177 + $0x2090] sm:$0xff]
                %704 = vst [vmem:[%s178 + $0x830] sm:$0xff] %v703
                %v705 = vld [vmem:[%s177 + $0x2098] sm:$0xff]
                %706 = vst [vmem:[%s178 + $0x838] sm:$0xff] %v705
                %v707 = vld [vmem:[%s177 + $0x2100] sm:$0xff]
                %708 = vst [vmem:[%s178 + $0x840] sm:$0xff] %v707
                %v709 = vld [vmem:[%s177 + $0x2108] sm:$0xff]
                %710 = vst [vmem:[%s178 + $0x848] sm:$0xff] %v709
                %v711 = vld [vmem:[%s177 + $0x2110] sm:$0xff]
                %712 = vst [vmem:[%s178 + $0x850] sm:$0xff] %v711
                %v713 = vld [vmem:[%s177 + $0x2118] sm:$0xff]
                %714 = vst [vmem:[%s178 + $0x858] sm:$0xff] %v713
                %v715 = vld [vmem:[%s177 + $0x2180] sm:$0xff]
                %716 = vst [vmem:[%s178 + $0x860] sm:$0xff] %v715
                %v717 = vld [vmem:[%s177 + $0x2188] sm:$0xff]
                %718 = vst [vmem:[%s178 + $0x868] sm:$0xff] %v717
                %v719 = vld [vmem:[%s177 + $0x2190] sm:$0xff]
                %720 = vst [vmem:[%s178 + $0x870] sm:$0xff] %v719
                %v721 = vld [vmem:[%s177 + $0x2198] sm:$0xff]
                %722 = vst [vmem:[%s178 + $0x878] sm:$0xff] %v721
                %v723 = vld [vmem:[%s177 + $0x2200] sm:$0xff]
                %724 = vst [vmem:[%s178 + $0x880] sm:$0xff] %v723
                %v725 = vld [vmem:[%s177 + $0x2208] sm:$0xff]
                %726 = vst [vmem:[%s178 + $0x888] sm:$0xff] %v725
                %v727 = vld [vmem:[%s177 + $0x2210] sm:$0xff]
                %728 = vst [vmem:[%s178 + $0x890] sm:$0xff] %v727
                %v729 = vld [vmem:[%s177 + $0x2218] sm:$0xff]
                %730 = vst [vmem:[%s178 + $0x898] sm:$0xff] %v729
                %v731 = vld [vmem:[%s177 + $0x2280] sm:$0xff]
                %732 = vst [vmem:[%s178 + $0x8a0] sm:$0xff] %v731
                %v733 = vld [vmem:[%s177 + $0x2288] sm:$0xff]
                %734 = vst [vmem:[%s178 + $0x8a8] sm:$0xff] %v733
                %v735 = vld [vmem:[%s177 + $0x2290] sm:$0xff]
                %736 = vst [vmem:[%s178 + $0x8b0] sm:$0xff] %v735
                %v737 = vld [vmem:[%s177 + $0x2298] sm:$0xff]
                %738 = vst [vmem:[%s178 + $0x8b8] sm:$0xff] %v737
                %v739 = vld [vmem:[%s177 + $0x2300] sm:$0xff]
                %740 = vst [vmem:[%s178 + $0x8c0] sm:$0xff] %v739
                %v741 = vld [vmem:[%s177 + $0x2308] sm:$0xff]
                %742 = vst [vmem:[%s178 + $0x8c8] sm:$0xff] %v741
                %v743 = vld [vmem:[%s177 + $0x2310] sm:$0xff]
                %744 = vst [vmem:[%s178 + $0x8d0] sm:$0xff] %v743
                %v745 = vld [vmem:[%s177 + $0x2318] sm:$0xff]
                %746 = vst [vmem:[%s178 + $0x8d8] sm:$0xff] %v745
                %v747 = vld [vmem:[%s177 + $0x2380] sm:$0xff]
                %748 = vst [vmem:[%s178 + $0x8e0] sm:$0xff] %v747
                %v749 = vld [vmem:[%s177 + $0x2388] sm:$0xff]
                %750 = vst [vmem:[%s178 + $0x8e8] sm:$0xff] %v749
                %v751 = vld [vmem:[%s177 + $0x2390] sm:$0xff]
                %752 = vst [vmem:[%s178 + $0x8f0] sm:$0xff] %v751
                %v753 = vld [vmem:[%s177 + $0x2398] sm:$0xff]
                %754 = vst [vmem:[%s178 + $0x8f8] sm:$0xff] %v753
                %v755 = vld [vmem:[%s177 + $0x2400] sm:$0xff]
                %756 = vst [vmem:[%s178 + $0x900] sm:$0xff] %v755
                %v757 = vld [vmem:[%s177 + $0x2408] sm:$0xff]
                %758 = vst [vmem:[%s178 + $0x908] sm:$0xff] %v757
                %v759 = vld [vmem:[%s177 + $0x2410] sm:$0xff]
                %760 = vst [vmem:[%s178 + $0x910] sm:$0xff] %v759
                %v761 = vld [vmem:[%s177 + $0x2418] sm:$0xff]
                %762 = vst [vmem:[%s178 + $0x918] sm:$0xff] %v761
                %v763 = vld [vmem:[%s177 + $0x2480] sm:$0xff]
                %764 = vst [vmem:[%s178 + $0x920] sm:$0xff] %v763
                %v765 = vld [vmem:[%s177 + $0x2488] sm:$0xff]
                %766 = vst [vmem:[%s178 + $0x928] sm:$0xff] %v765
                %v767 = vld [vmem:[%s177 + $0x2490] sm:$0xff]
                %768 = vst [vmem:[%s178 + $0x930] sm:$0xff] %v767
                %v769 = vld [vmem:[%s177 + $0x2498] sm:$0xff]
                %770 = vst [vmem:[%s178 + $0x938] sm:$0xff] %v769
                %v771 = vld [vmem:[%s177 + $0x2500] sm:$0xff]
                %772 = vst [vmem:[%s178 + $0x940] sm:$0xff] %v771
                %v773 = vld [vmem:[%s177 + $0x2508] sm:$0xff]
                %774 = vst [vmem:[%s178 + $0x948] sm:$0xff] %v773
                %v775 = vld [vmem:[%s177 + $0x2510] sm:$0xff]
                %776 = vst [vmem:[%s178 + $0x950] sm:$0xff] %v775
                %v777 = vld [vmem:[%s177 + $0x2518] sm:$0xff]
                %778 = vst [vmem:[%s178 + $0x958] sm:$0xff] %v777
                %v779 = vld [vmem:[%s177 + $0x2580] sm:$0xff]
                %780 = vst [vmem:[%s178 + $0x960] sm:$0xff] %v779
                %v781 = vld [vmem:[%s177 + $0x2588] sm:$0xff]
                %782 = vst [vmem:[%s178 + $0x968] sm:$0xff] %v781
                %v783 = vld [vmem:[%s177 + $0x2590] sm:$0xff]
                %784 = vst [vmem:[%s178 + $0x970] sm:$0xff] %v783
                %v785 = vld [vmem:[%s177 + $0x2598] sm:$0xff]
                %786 = vst [vmem:[%s178 + $0x978] sm:$0xff] %v785
                %v787 = vld [vmem:[%s177 + $0x2600] sm:$0xff]
                %788 = vst [vmem:[%s178 + $0x980] sm:$0xff] %v787
                %v789 = vld [vmem:[%s177 + $0x2608] sm:$0xff]
                %790 = vst [vmem:[%s178 + $0x988] sm:$0xff] %v789
                %v791 = vld [vmem:[%s177 + $0x2610] sm:$0xff]
                %792 = vst [vmem:[%s178 + $0x990] sm:$0xff] %v791
                %v793 = vld [vmem:[%s177 + $0x2618] sm:$0xff]
                %794 = vst [vmem:[%s178 + $0x998] sm:$0xff] %v793
                %v795 = vld [vmem:[%s177 + $0x2680] sm:$0xff]
                %796 = vst [vmem:[%s178 + $0x9a0] sm:$0xff] %v795
                %v797 = vld [vmem:[%s177 + $0x2688] sm:$0xff]
                %798 = vst [vmem:[%s178 + $0x9a8] sm:$0xff] %v797
                %v799 = vld [vmem:[%s177 + $0x2690] sm:$0xff]
                %800 = vst [vmem:[%s178 + $0x9b0] sm:$0xff] %v799
                %v801 = vld [vmem:[%s177 + $0x2698] sm:$0xff]
                %802 = vst [vmem:[%s178 + $0x9b8] sm:$0xff] %v801
                %v803 = vld [vmem:[%s177 + $0x2700] sm:$0xff]
                %804 = vst [vmem:[%s178 + $0x9c0] sm:$0xff] %v803
                %v805 = vld [vmem:[%s177 + $0x2708] sm:$0xff]
                %806 = vst [vmem:[%s178 + $0x9c8] sm:$0xff] %v805
                %v807 = vld [vmem:[%s177 + $0x2710] sm:$0xff]
                %808 = vst [vmem:[%s178 + $0x9d0] sm:$0xff] %v807
                %v809 = vld [vmem:[%s177 + $0x2718] sm:$0xff]
                %810 = vst [vmem:[%s178 + $0x9d8] sm:$0xff] %v809
                %v811 = vld [vmem:[%s177 + $0x2780] sm:$0xff]
                %812 = vst [vmem:[%s178 + $0x9e0] sm:$0xff] %v811
                %v813 = vld [vmem:[%s177 + $0x2788] sm:$0xff]
                %814 = vst [vmem:[%s178 + $0x9e8] sm:$0xff] %v813
                %v815 = vld [vmem:[%s177 + $0x2790] sm:$0xff]
                %816 = vst [vmem:[%s178 + $0x9f0] sm:$0xff] %v815
                %v817 = vld [vmem:[%s177 + $0x2798] sm:$0xff]
                %818 = vst [vmem:[%s178 + $0x9f8] sm:$0xff] %v817
                %v819 = vld [vmem:[%s177 + $0x2800] sm:$0xff]
                %820 = vst [vmem:[%s178 + $0xa00] sm:$0xff] %v819
                %v821 = vld [vmem:[%s177 + $0x2808] sm:$0xff]
                %822 = vst [vmem:[%s178 + $0xa08] sm:$0xff] %v821
                %v823 = vld [vmem:[%s177 + $0x2810] sm:$0xff]
                %824 = vst [vmem:[%s178 + $0xa10] sm:$0xff] %v823
                %v825 = vld [vmem:[%s177 + $0x2818] sm:$0xff]
                %826 = vst [vmem:[%s178 + $0xa18] sm:$0xff] %v825
                %v827 = vld [vmem:[%s177 + $0x2880] sm:$0xff]
                %828 = vst [vmem:[%s178 + $0xa20] sm:$0xff] %v827
                %v829 = vld [vmem:[%s177 + $0x2888] sm:$0xff]
                %830 = vst [vmem:[%s178 + $0xa28] sm:$0xff] %v829
                %v831 = vld [vmem:[%s177 + $0x2890] sm:$0xff]
                %832 = vst [vmem:[%s178 + $0xa30] sm:$0xff] %v831
                %v833 = vld [vmem:[%s177 + $0x2898] sm:$0xff]
                %834 = vst [vmem:[%s178 + $0xa38] sm:$0xff] %v833
                %v835 = vld [vmem:[%s177 + $0x2900] sm:$0xff]
                %836 = vst [vmem:[%s178 + $0xa40] sm:$0xff] %v835
                %v837 = vld [vmem:[%s177 + $0x2908] sm:$0xff]
                %838 = vst [vmem:[%s178 + $0xa48] sm:$0xff] %v837
                %v839 = vld [vmem:[%s177 + $0x2910] sm:$0xff]
                %840 = vst [vmem:[%s178 + $0xa50] sm:$0xff] %v839
                %v841 = vld [vmem:[%s177 + $0x2918] sm:$0xff]
                %842 = vst [vmem:[%s178 + $0xa58] sm:$0xff] %v841
                %v843 = vld [vmem:[%s177 + $0x2980] sm:$0xff]
                %844 = vst [vmem:[%s178 + $0xa60] sm:$0xff] %v843
                %v845 = vld [vmem:[%s177 + $0x2988] sm:$0xff]
                %846 = vst [vmem:[%s178 + $0xa68] sm:$0xff] %v845
                %v847 = vld [vmem:[%s177 + $0x2990] sm:$0xff]
                %848 = vst [vmem:[%s178 + $0xa70] sm:$0xff] %v847
                %v849 = vld [vmem:[%s177 + $0x2998] sm:$0xff]
                %850 = vst [vmem:[%s178 + $0xa78] sm:$0xff] %v849
                %v851 = vld [vmem:[%s177 + $0x2a00] sm:$0xff]
                %852 = vst [vmem:[%s178 + $0xa80] sm:$0xff] %v851
                %v853 = vld [vmem:[%s177 + $0x2a08] sm:$0xff]
                %854 = vst [vmem:[%s178 + $0xa88] sm:$0xff] %v853
                %v855 = vld [vmem:[%s177 + $0x2a10] sm:$0xff]
                %856 = vst [vmem:[%s178 + $0xa90] sm:$0xff] %v855
                %v857 = vld [vmem:[%s177 + $0x2a18] sm:$0xff]
                %858 = vst [vmem:[%s178 + $0xa98] sm:$0xff] %v857
                %v859 = vld [vmem:[%s177 + $0x2a80] sm:$0xff]
                %860 = vst [vmem:[%s178 + $0xaa0] sm:$0xff] %v859
                %v861 = vld [vmem:[%s177 + $0x2a88] sm:$0xff]
                %862 = vst [vmem:[%s178 + $0xaa8] sm:$0xff] %v861
                %v863 = vld [vmem:[%s177 + $0x2a90] sm:$0xff]
                %864 = vst [vmem:[%s178 + $0xab0] sm:$0xff] %v863
                %v865 = vld [vmem:[%s177 + $0x2a98] sm:$0xff]
                %866 = vst [vmem:[%s178 + $0xab8] sm:$0xff] %v865
                %v867 = vld [vmem:[%s177 + $0x2b00] sm:$0xff]
                %868 = vst [vmem:[%s178 + $0xac0] sm:$0xff] %v867
                %v869 = vld [vmem:[%s177 + $0x2b08] sm:$0xff]
                %870 = vst [vmem:[%s178 + $0xac8] sm:$0xff] %v869
                %v871 = vld [vmem:[%s177 + $0x2b10] sm:$0xff]
                %872 = vst [vmem:[%s178 + $0xad0] sm:$0xff] %v871
                %v873 = vld [vmem:[%s177 + $0x2b18] sm:$0xff]
                %874 = vst [vmem:[%s178 + $0xad8] sm:$0xff] %v873
                %v875 = vld [vmem:[%s177 + $0x2b80] sm:$0xff]
                %876 = vst [vmem:[%s178 + $0xae0] sm:$0xff] %v875
                %v877 = vld [vmem:[%s177 + $0x2b88] sm:$0xff]
                %878 = vst [vmem:[%s178 + $0xae8] sm:$0xff] %v877
                %v879 = vld [vmem:[%s177 + $0x2b90] sm:$0xff]
                %880 = vst [vmem:[%s178 + $0xaf0] sm:$0xff] %v879
                %v881 = vld [vmem:[%s177 + $0x2b98] sm:$0xff]
                %882 = vst [vmem:[%s178 + $0xaf8] sm:$0xff] %v881
                %v883 = vld [vmem:[%s177 + $0x2c00] sm:$0xff]
                %884 = vst [vmem:[%s178 + $0xb00] sm:$0xff] %v883
                %v885 = vld [vmem:[%s177 + $0x2c08] sm:$0xff]
                %886 = vst [vmem:[%s178 + $0xb08] sm:$0xff] %v885
                %v887 = vld [vmem:[%s177 + $0x2c10] sm:$0xff]
                %888 = vst [vmem:[%s178 + $0xb10] sm:$0xff] %v887
                %v889 = vld [vmem:[%s177 + $0x2c18] sm:$0xff]
                %890 = vst [vmem:[%s178 + $0xb18] sm:$0xff] %v889
                %v891 = vld [vmem:[%s177 + $0x2c80] sm:$0xff]
                %892 = vst [vmem:[%s178 + $0xb20] sm:$0xff] %v891
                %v893 = vld [vmem:[%s177 + $0x2c88] sm:$0xff]
                %894 = vst [vmem:[%s178 + $0xb28] sm:$0xff] %v893
                %v895 = vld [vmem:[%s177 + $0x2c90] sm:$0xff]
                %896 = vst [vmem:[%s178 + $0xb30] sm:$0xff] %v895
                %v897 = vld [vmem:[%s177 + $0x2c98] sm:$0xff]
                %898 = vst [vmem:[%s178 + $0xb38] sm:$0xff] %v897
                %v899 = vld [vmem:[%s177 + $0x2d00] sm:$0xff]
                %900 = vst [vmem:[%s178 + $0xb40] sm:$0xff] %v899
                %v901 = vld [vmem:[%s177 + $0x2d08] sm:$0xff]
                %902 = vst [vmem:[%s178 + $0xb48] sm:$0xff] %v901
                %v903 = vld [vmem:[%s177 + $0x2d10] sm:$0xff]
                %904 = vst [vmem:[%s178 + $0xb50] sm:$0xff] %v903
                %v905 = vld [vmem:[%s177 + $0x2d18] sm:$0xff]
                %906 = vst [vmem:[%s178 + $0xb58] sm:$0xff] %v905
                %v907 = vld [vmem:[%s177 + $0x2d80] sm:$0xff]
                %908 = vst [vmem:[%s178 + $0xb60] sm:$0xff] %v907
                %v909 = vld [vmem:[%s177 + $0x2d88] sm:$0xff]
                %910 = vst [vmem:[%s178 + $0xb68] sm:$0xff] %v909
                %v911 = vld [vmem:[%s177 + $0x2d90] sm:$0xff]
                %912 = vst [vmem:[%s178 + $0xb70] sm:$0xff] %v911
                %v913 = vld [vmem:[%s177 + $0x2d98] sm:$0xff]
                %914 = vst [vmem:[%s178 + $0xb78] sm:$0xff] %v913
                %v915 = vld [vmem:[%s177 + $0x2e00] sm:$0xff]
                %916 = vst [vmem:[%s178 + $0xb80] sm:$0xff] %v915
                %v917 = vld [vmem:[%s177 + $0x2e08] sm:$0xff]
                %918 = vst [vmem:[%s178 + $0xb88] sm:$0xff] %v917
                %v919 = vld [vmem:[%s177 + $0x2e10] sm:$0xff]
                %920 = vst [vmem:[%s178 + $0xb90] sm:$0xff] %v919
                %v921 = vld [vmem:[%s177 + $0x2e18] sm:$0xff]
                %922 = vst [vmem:[%s178 + $0xb98] sm:$0xff] %v921
                %v923 = vld [vmem:[%s177 + $0x2e80] sm:$0xff]
                %924 = vst [vmem:[%s178 + $0xba0] sm:$0xff] %v923
                %v925 = vld [vmem:[%s177 + $0x2e88] sm:$0xff]
                %926 = vst [vmem:[%s178 + $0xba8] sm:$0xff] %v925
                %v927 = vld [vmem:[%s177 + $0x2e90] sm:$0xff]
                %928 = vst [vmem:[%s178 + $0xbb0] sm:$0xff] %v927
                %v929 = vld [vmem:[%s177 + $0x2e98] sm:$0xff]
                %930 = vst [vmem:[%s178 + $0xbb8] sm:$0xff] %v929
                %v931 = vld [vmem:[%s177 + $0x2f00] sm:$0xff]
                %932 = vst [vmem:[%s178 + $0xbc0] sm:$0xff] %v931
                %v933 = vld [vmem:[%s177 + $0x2f08] sm:$0xff]
                %934 = vst [vmem:[%s178 + $0xbc8] sm:$0xff] %v933
                %v935 = vld [vmem:[%s177 + $0x2f10] sm:$0xff]
                %936 = vst [vmem:[%s178 + $0xbd0] sm:$0xff] %v935
                %v937 = vld [vmem:[%s177 + $0x2f18] sm:$0xff]
                %938 = vst [vmem:[%s178 + $0xbd8] sm:$0xff] %v937
                %v939 = vld [vmem:[%s177 + $0x2f80] sm:$0xff]
                %940 = vst [vmem:[%s178 + $0xbe0] sm:$0xff] %v939
                %v941 = vld [vmem:[%s177 + $0x2f88] sm:$0xff]
                %942 = vst [vmem:[%s178 + $0xbe8] sm:$0xff] %v941
                %v943 = vld [vmem:[%s177 + $0x2f90] sm:$0xff]
                %944 = vst [vmem:[%s178 + $0xbf0] sm:$0xff] %v943
                %v945 = vld [vmem:[%s177 + $0x2f98] sm:$0xff]
                %946 = vst [vmem:[%s178 + $0xbf8] sm:$0xff] %v945
                %v947 = vld [vmem:[%s177 + $0x3000] sm:$0xff]
                %948 = vst [vmem:[%s178 + $0xc00] sm:$0xff] %v947
                %v949 = vld [vmem:[%s177 + $0x3008] sm:$0xff]
                %950 = vst [vmem:[%s178 + $0xc08] sm:$0xff] %v949
                %v951 = vld [vmem:[%s177 + $0x3010] sm:$0xff]
                %952 = vst [vmem:[%s178 + $0xc10] sm:$0xff] %v951
                %v953 = vld [vmem:[%s177 + $0x3018] sm:$0xff]
                %954 = vst [vmem:[%s178 + $0xc18] sm:$0xff] %v953
                %v955 = vld [vmem:[%s177 + $0x3080] sm:$0xff]
                %956 = vst [vmem:[%s178 + $0xc20] sm:$0xff] %v955
                %v957 = vld [vmem:[%s177 + $0x3088] sm:$0xff]
                %958 = vst [vmem:[%s178 + $0xc28] sm:$0xff] %v957
                %v959 = vld [vmem:[%s177 + $0x3090] sm:$0xff]
                %960 = vst [vmem:[%s178 + $0xc30] sm:$0xff] %v959
                %v961 = vld [vmem:[%s177 + $0x3098] sm:$0xff]
                %962 = vst [vmem:[%s178 + $0xc38] sm:$0xff] %v961
                %v963 = vld [vmem:[%s177 + $0x3100] sm:$0xff]
                %964 = vst [vmem:[%s178 + $0xc40] sm:$0xff] %v963
                %v965 = vld [vmem:[%s177 + $0x3108] sm:$0xff]
                %966 = vst [vmem:[%s178 + $0xc48] sm:$0xff] %v965
                %v967 = vld [vmem:[%s177 + $0x3110] sm:$0xff]
                %968 = vst [vmem:[%s178 + $0xc50] sm:$0xff] %v967
                %v969 = vld [vmem:[%s177 + $0x3118] sm:$0xff]
                %970 = vst [vmem:[%s178 + $0xc58] sm:$0xff] %v969
                %v971 = vld [vmem:[%s177 + $0x3180] sm:$0xff]
                %972 = vst [vmem:[%s178 + $0xc60] sm:$0xff] %v971
                %v973 = vld [vmem:[%s177 + $0x3188] sm:$0xff]
                %974 = vst [vmem:[%s178 + $0xc68] sm:$0xff] %v973
                %v975 = vld [vmem:[%s177 + $0x3190] sm:$0xff]
                %976 = vst [vmem:[%s178 + $0xc70] sm:$0xff] %v975
                %v977 = vld [vmem:[%s177 + $0x3198] sm:$0xff]
                %978 = vst [vmem:[%s178 + $0xc78] sm:$0xff] %v977
                %v979 = vld [vmem:[%s177 + $0x3200] sm:$0xff]
                %980 = vst [vmem:[%s178 + $0xc80] sm:$0xff] %v979
                %v981 = vld [vmem:[%s177 + $0x3208] sm:$0xff]
                %982 = vst [vmem:[%s178 + $0xc88] sm:$0xff] %v981
                %v983 = vld [vmem:[%s177 + $0x3210] sm:$0xff]
                %984 = vst [vmem:[%s178 + $0xc90] sm:$0xff] %v983
                %v985 = vld [vmem:[%s177 + $0x3218] sm:$0xff]
                %986 = vst [vmem:[%s178 + $0xc98] sm:$0xff] %v985
                %v987 = vld [vmem:[%s177 + $0x3280] sm:$0xff]
                %988 = vst [vmem:[%s178 + $0xca0] sm:$0xff] %v987
                %v989 = vld [vmem:[%s177 + $0x3288] sm:$0xff]
                %990 = vst [vmem:[%s178 + $0xca8] sm:$0xff] %v989
                %v991 = vld [vmem:[%s177 + $0x3290] sm:$0xff]
                %992 = vst [vmem:[%s178 + $0xcb0] sm:$0xff] %v991
                %v993 = vld [vmem:[%s177 + $0x3298] sm:$0xff]
                %994 = vst [vmem:[%s178 + $0xcb8] sm:$0xff] %v993
                %v995 = vld [vmem:[%s177 + $0x3300] sm:$0xff]
                %996 = vst [vmem:[%s178 + $0xcc0] sm:$0xff] %v995
                %v997 = vld [vmem:[%s177 + $0x3308] sm:$0xff]
                %998 = vst [vmem:[%s178 + $0xcc8] sm:$0xff] %v997
                %v999 = vld [vmem:[%s177 + $0x3310] sm:$0xff]
                %1000 = vst [vmem:[%s178 + $0xcd0] sm:$0xff] %v999
                %v1001 = vld [vmem:[%s177 + $0x3318] sm:$0xff]
                %1002 = vst [vmem:[%s178 + $0xcd8] sm:$0xff] %v1001
                %v1003 = vld [vmem:[%s177 + $0x3380] sm:$0xff]
                %1004 = vst [vmem:[%s178 + $0xce0] sm:$0xff] %v1003
                %v1005 = vld [vmem:[%s177 + $0x3388] sm:$0xff]
                %1006 = vst [vmem:[%s178 + $0xce8] sm:$0xff] %v1005
                %v1007 = vld [vmem:[%s177 + $0x3390] sm:$0xff]
                %1008 = vst [vmem:[%s178 + $0xcf0] sm:$0xff] %v1007
                %v1009 = vld [vmem:[%s177 + $0x3398] sm:$0xff]
                %1010 = vst [vmem:[%s178 + $0xcf8] sm:$0xff] %v1009
                %v1011 = vld [vmem:[%s177 + $0x3400] sm:$0xff]
                %1012 = vst [vmem:[%s178 + $0xd00] sm:$0xff] %v1011
                %v1013 = vld [vmem:[%s177 + $0x3408] sm:$0xff]
                %1014 = vst [vmem:[%s178 + $0xd08] sm:$0xff] %v1013
                %v1015 = vld [vmem:[%s177 + $0x3410] sm:$0xff]
                %1016 = vst [vmem:[%s178 + $0xd10] sm:$0xff] %v1015
                %v1017 = vld [vmem:[%s177 + $0x3418] sm:$0xff]
                %1018 = vst [vmem:[%s178 + $0xd18] sm:$0xff] %v1017
                %v1019 = vld [vmem:[%s177 + $0x3480] sm:$0xff]
                %1020 = vst [vmem:[%s178 + $0xd20] sm:$0xff] %v1019
                %v1021 = vld [vmem:[%s177 + $0x3488] sm:$0xff]
                %1022 = vst [vmem:[%s178 + $0xd28] sm:$0xff] %v1021
                %v1023 = vld [vmem:[%s177 + $0x3490] sm:$0xff]
                %1024 = vst [vmem:[%s178 + $0xd30] sm:$0xff] %v1023
                %v1025 = vld [vmem:[%s177 + $0x3498] sm:$0xff]
                %1026 = vst [vmem:[%s178 + $0xd38] sm:$0xff] %v1025
                %v1027 = vld [vmem:[%s177 + $0x3500] sm:$0xff]
                %1028 = vst [vmem:[%s178 + $0xd40] sm:$0xff] %v1027
                %v1029 = vld [vmem:[%s177 + $0x3508] sm:$0xff]
                %1030 = vst [vmem:[%s178 + $0xd48] sm:$0xff] %v1029
                %v1031 = vld [vmem:[%s177 + $0x3510] sm:$0xff]
                %1032 = vst [vmem:[%s178 + $0xd50] sm:$0xff] %v1031
                %v1033 = vld [vmem:[%s177 + $0x3518] sm:$0xff]
                %1034 = vst [vmem:[%s178 + $0xd58] sm:$0xff] %v1033
                %v1035 = vld [vmem:[%s177 + $0x3580] sm:$0xff]
                %1036 = vst [vmem:[%s178 + $0xd60] sm:$0xff] %v1035
                %v1037 = vld [vmem:[%s177 + $0x3588] sm:$0xff]
                %1038 = vst [vmem:[%s178 + $0xd68] sm:$0xff] %v1037
                %v1039 = vld [vmem:[%s177 + $0x3590] sm:$0xff]
                %1040 = vst [vmem:[%s178 + $0xd70] sm:$0xff] %v1039
                %v1041 = vld [vmem:[%s177 + $0x3598] sm:$0xff]
                %1042 = vst [vmem:[%s178 + $0xd78] sm:$0xff] %v1041
                %v1043 = vld [vmem:[%s177 + $0x3600] sm:$0xff]
                %1044 = vst [vmem:[%s178 + $0xd80] sm:$0xff] %v1043
                %v1045 = vld [vmem:[%s177 + $0x3608] sm:$0xff]
                %1046 = vst [vmem:[%s178 + $0xd88] sm:$0xff] %v1045
                %v1047 = vld [vmem:[%s177 + $0x3610] sm:$0xff]
                %1048 = vst [vmem:[%s178 + $0xd90] sm:$0xff] %v1047
                %v1049 = vld [vmem:[%s177 + $0x3618] sm:$0xff]
                %1050 = vst [vmem:[%s178 + $0xd98] sm:$0xff] %v1049
                %v1051 = vld [vmem:[%s177 + $0x3680] sm:$0xff]
                %1052 = vst [vmem:[%s178 + $0xda0] sm:$0xff] %v1051
                %v1053 = vld [vmem:[%s177 + $0x3688] sm:$0xff]
                %1054 = vst [vmem:[%s178 + $0xda8] sm:$0xff] %v1053
                %v1055 = vld [vmem:[%s177 + $0x3690] sm:$0xff]
                %1056 = vst [vmem:[%s178 + $0xdb0] sm:$0xff] %v1055
                %v1057 = vld [vmem:[%s177 + $0x3698] sm:$0xff]
                %1058 = vst [vmem:[%s178 + $0xdb8] sm:$0xff] %v1057
                %v1059 = vld [vmem:[%s177 + $0x3700] sm:$0xff]
                %1060 = vst [vmem:[%s178 + $0xdc0] sm:$0xff] %v1059
                %v1061 = vld [vmem:[%s177 + $0x3708] sm:$0xff]
                %1062 = vst [vmem:[%s178 + $0xdc8] sm:$0xff] %v1061
                %v1063 = vld [vmem:[%s177 + $0x3710] sm:$0xff]
                %1064 = vst [vmem:[%s178 + $0xdd0] sm:$0xff] %v1063
                %v1065 = vld [vmem:[%s177 + $0x3718] sm:$0xff]
                %1066 = vst [vmem:[%s178 + $0xdd8] sm:$0xff] %v1065
                %v1067 = vld [vmem:[%s177 + $0x3780] sm:$0xff]
                %1068 = vst [vmem:[%s178 + $0xde0] sm:$0xff] %v1067
                %v1069 = vld [vmem:[%s177 + $0x3788] sm:$0xff]
                %1070 = vst [vmem:[%s178 + $0xde8] sm:$0xff] %v1069
                %v1071 = vld [vmem:[%s177 + $0x3790] sm:$0xff]
                %1072 = vst [vmem:[%s178 + $0xdf0] sm:$0xff] %v1071
                %v1073 = vld [vmem:[%s177 + $0x3798] sm:$0xff]
                %1074 = vst [vmem:[%s178 + $0xdf8] sm:$0xff] %v1073
                %v1075 = vld [vmem:[%s177 + $0x3800] sm:$0xff]
                %1076 = vst [vmem:[%s178 + $0xe00] sm:$0xff] %v1075
                %v1077 = vld [vmem:[%s177 + $0x3808] sm:$0xff]
                %1078 = vst [vmem:[%s178 + $0xe08] sm:$0xff] %v1077
                %v1079 = vld [vmem:[%s177 + $0x3810] sm:$0xff]
                %1080 = vst [vmem:[%s178 + $0xe10] sm:$0xff] %v1079
                %v1081 = vld [vmem:[%s177 + $0x3818] sm:$0xff]
                %1082 = vst [vmem:[%s178 + $0xe18] sm:$0xff] %v1081
                %v1083 = vld [vmem:[%s177 + $0x3880] sm:$0xff]
                %1084 = vst [vmem:[%s178 + $0xe20] sm:$0xff] %v1083
                %v1085 = vld [vmem:[%s177 + $0x3888] sm:$0xff]
                %1086 = vst [vmem:[%s178 + $0xe28] sm:$0xff] %v1085
                %v1087 = vld [vmem:[%s177 + $0x3890] sm:$0xff]
                %1088 = vst [vmem:[%s178 + $0xe30] sm:$0xff] %v1087
                %v1089 = vld [vmem:[%s177 + $0x3898] sm:$0xff]
                %1090 = vst [vmem:[%s178 + $0xe38] sm:$0xff] %v1089
                %v1091 = vld [vmem:[%s177 + $0x3900] sm:$0xff]
                %1092 = vst [vmem:[%s178 + $0xe40] sm:$0xff] %v1091
                %v1093 = vld [vmem:[%s177 + $0x3908] sm:$0xff]
                %1094 = vst [vmem:[%s178 + $0xe48] sm:$0xff] %v1093
                %v1095 = vld [vmem:[%s177 + $0x3910] sm:$0xff]
                %1096 = vst [vmem:[%s178 + $0xe50] sm:$0xff] %v1095
                %v1097 = vld [vmem:[%s177 + $0x3918] sm:$0xff]
                %1098 = vst [vmem:[%s178 + $0xe58] sm:$0xff] %v1097
                %v1099 = vld [vmem:[%s177 + $0x3980] sm:$0xff]
                %1100 = vst [vmem:[%s178 + $0xe60] sm:$0xff] %v1099
                %v1101 = vld [vmem:[%s177 + $0x3988] sm:$0xff]
                %1102 = vst [vmem:[%s178 + $0xe68] sm:$0xff] %v1101
                %v1103 = vld [vmem:[%s177 + $0x3990] sm:$0xff]
                %1104 = vst [vmem:[%s178 + $0xe70] sm:$0xff] %v1103
                %v1105 = vld [vmem:[%s177 + $0x3998] sm:$0xff]
                %1106 = vst [vmem:[%s178 + $0xe78] sm:$0xff] %v1105
                %v1107 = vld [vmem:[%s177 + $0x3a00] sm:$0xff]
                %1108 = vst [vmem:[%s178 + $0xe80] sm:$0xff] %v1107
                %v1109 = vld [vmem:[%s177 + $0x3a08] sm:$0xff]
                %1110 = vst [vmem:[%s178 + $0xe88] sm:$0xff] %v1109
                %v1111 = vld [vmem:[%s177 + $0x3a10] sm:$0xff]
                %1112 = vst [vmem:[%s178 + $0xe90] sm:$0xff] %v1111
                %v1113 = vld [vmem:[%s177 + $0x3a18] sm:$0xff]
                %1114 = vst [vmem:[%s178 + $0xe98] sm:$0xff] %v1113
                %v1115 = vld [vmem:[%s177 + $0x3a80] sm:$0xff]
                %1116 = vst [vmem:[%s178 + $0xea0] sm:$0xff] %v1115
                %v1117 = vld [vmem:[%s177 + $0x3a88] sm:$0xff]
                %1118 = vst [vmem:[%s178 + $0xea8] sm:$0xff] %v1117
                %v1119 = vld [vmem:[%s177 + $0x3a90] sm:$0xff]
                %1120 = vst [vmem:[%s178 + $0xeb0] sm:$0xff] %v1119
                %v1121 = vld [vmem:[%s177 + $0x3a98] sm:$0xff]
                %1122 = vst [vmem:[%s178 + $0xeb8] sm:$0xff] %v1121
                %v1123 = vld [vmem:[%s177 + $0x3b00] sm:$0xff]
                %1124 = vst [vmem:[%s178 + $0xec0] sm:$0xff] %v1123
                %v1125 = vld [vmem:[%s177 + $0x3b08] sm:$0xff]
                %1126 = vst [vmem:[%s178 + $0xec8] sm:$0xff] %v1125
                %v1127 = vld [vmem:[%s177 + $0x3b10] sm:$0xff]
                %1128 = vst [vmem:[%s178 + $0xed0] sm:$0xff] %v1127
                %v1129 = vld [vmem:[%s177 + $0x3b18] sm:$0xff]
                %1130 = vst [vmem:[%s178 + $0xed8] sm:$0xff] %v1129
                %v1131 = vld [vmem:[%s177 + $0x3b80] sm:$0xff]
                %1132 = vst [vmem:[%s178 + $0xee0] sm:$0xff] %v1131
                %v1133 = vld [vmem:[%s177 + $0x3b88] sm:$0xff]
                %1134 = vst [vmem:[%s178 + $0xee8] sm:$0xff] %v1133
                %v1135 = vld [vmem:[%s177 + $0x3b90] sm:$0xff]
                %1136 = vst [vmem:[%s178 + $0xef0] sm:$0xff] %v1135
                %v1137 = vld [vmem:[%s177 + $0x3b98] sm:$0xff]
                %1138 = vst [vmem:[%s178 + $0xef8] sm:$0xff] %v1137
                %v1139 = vld [vmem:[%s177 + $0x3c00] sm:$0xff]
                %1140 = vst [vmem:[%s178 + $0xf00] sm:$0xff] %v1139
                %v1141 = vld [vmem:[%s177 + $0x3c08] sm:$0xff]
                %1142 = vst [vmem:[%s178 + $0xf08] sm:$0xff] %v1141
                %v1143 = vld [vmem:[%s177 + $0x3c10] sm:$0xff]
                %1144 = vst [vmem:[%s178 + $0xf10] sm:$0xff] %v1143
                %v1145 = vld [vmem:[%s177 + $0x3c18] sm:$0xff]
                %1146 = vst [vmem:[%s178 + $0xf18] sm:$0xff] %v1145
                %v1147 = vld [vmem:[%s177 + $0x3c80] sm:$0xff]
                %1148 = vst [vmem:[%s178 + $0xf20] sm:$0xff] %v1147
                %v1149 = vld [vmem:[%s177 + $0x3c88] sm:$0xff]
                %1150 = vst [vmem:[%s178 + $0xf28] sm:$0xff] %v1149
                %v1151 = vld [vmem:[%s177 + $0x3c90] sm:$0xff]
                %1152 = vst [vmem:[%s178 + $0xf30] sm:$0xff] %v1151
                %v1153 = vld [vmem:[%s177 + $0x3c98] sm:$0xff]
                %1154 = vst [vmem:[%s178 + $0xf38] sm:$0xff] %v1153
                %v1155 = vld [vmem:[%s177 + $0x3d00] sm:$0xff]
                %1156 = vst [vmem:[%s178 + $0xf40] sm:$0xff] %v1155
                %v1157 = vld [vmem:[%s177 + $0x3d08] sm:$0xff]
                %1158 = vst [vmem:[%s178 + $0xf48] sm:$0xff] %v1157
                %v1159 = vld [vmem:[%s177 + $0x3d10] sm:$0xff]
                %1160 = vst [vmem:[%s178 + $0xf50] sm:$0xff] %v1159
                %v1161 = vld [vmem:[%s177 + $0x3d18] sm:$0xff]
                %1162 = vst [vmem:[%s178 + $0xf58] sm:$0xff] %v1161
                %v1163 = vld [vmem:[%s177 + $0x3d80] sm:$0xff]
                %1164 = vst [vmem:[%s178 + $0xf60] sm:$0xff] %v1163
                %v1165 = vld [vmem:[%s177 + $0x3d88] sm:$0xff]
                %1166 = vst [vmem:[%s178 + $0xf68] sm:$0xff] %v1165
                %v1167 = vld [vmem:[%s177 + $0x3d90] sm:$0xff]
                %1168 = vst [vmem:[%s178 + $0xf70] sm:$0xff] %v1167
                %v1169 = vld [vmem:[%s177 + $0x3d98] sm:$0xff]
                %1170 = vst [vmem:[%s178 + $0xf78] sm:$0xff] %v1169
                %v1171 = vld [vmem:[%s177 + $0x3e00] sm:$0xff]
                %1172 = vst [vmem:[%s178 + $0xf80] sm:$0xff] %v1171
                %v1173 = vld [vmem:[%s177 + $0x3e08] sm:$0xff]
                %1174 = vst [vmem:[%s178 + $0xf88] sm:$0xff] %v1173
                %v1175 = vld [vmem:[%s177 + $0x3e10] sm:$0xff]
                %1176 = vst [vmem:[%s178 + $0xf90] sm:$0xff] %v1175
                %v1177 = vld [vmem:[%s177 + $0x3e18] sm:$0xff]
                %1178 = vst [vmem:[%s178 + $0xf98] sm:$0xff] %v1177
                %v1179 = vld [vmem:[%s177 + $0x3e80] sm:$0xff]
                %1180 = vst [vmem:[%s178 + $0xfa0] sm:$0xff] %v1179
                %v1181 = vld [vmem:[%s177 + $0x3e88] sm:$0xff]
                %1182 = vst [vmem:[%s178 + $0xfa8] sm:$0xff] %v1181
                %v1183 = vld [vmem:[%s177 + $0x3e90] sm:$0xff]
                %1184 = vst [vmem:[%s178 + $0xfb0] sm:$0xff] %v1183
                %v1185 = vld [vmem:[%s177 + $0x3e98] sm:$0xff]
                %1186 = vst [vmem:[%s178 + $0xfb8] sm:$0xff] %v1185
                %v1187 = vld [vmem:[%s177 + $0x3f00] sm:$0xff]
                %1188 = vst [vmem:[%s178 + $0xfc0] sm:$0xff] %v1187
                %v1189 = vld [vmem:[%s177 + $0x3f08] sm:$0xff]
                %1190 = vst [vmem:[%s178 + $0xfc8] sm:$0xff] %v1189
                %v1191 = vld [vmem:[%s177 + $0x3f10] sm:$0xff]
                %1192 = vst [vmem:[%s178 + $0xfd0] sm:$0xff] %v1191
                %v1193 = vld [vmem:[%s177 + $0x3f18] sm:$0xff]
                %1194 = vst [vmem:[%s178 + $0xfd8] sm:$0xff] %v1193
                %v1195 = vld [vmem:[%s177 + $0x3f80] sm:$0xff]
                %1196 = vst [vmem:[%s178 + $0xfe0] sm:$0xff] %v1195
                %v1197 = vld [vmem:[%s177 + $0x3f88] sm:$0xff]
                %1198 = vst [vmem:[%s178 + $0xfe8] sm:$0xff] %v1197
                %v1199 = vld [vmem:[%s177 + $0x3f90] sm:$0xff]
                %1200 = vst [vmem:[%s178 + $0xff0] sm:$0xff] %v1199
                %v1201 = vld [vmem:[%s177 + $0x3f98] sm:$0xff]
                %1202 = vst [vmem:[%s178 + $0xff8] sm:$0xff] %v1201
                %v1203 = vld [vmem:[%s177 + $0x4000] sm:$0xff]
                %1204 = vst [vmem:[%s178 + $0x1000] sm:$0xff] %v1203
                %v1205 = vld [vmem:[%s177 + $0x4008] sm:$0xff]
                %1206 = vst [vmem:[%s178 + $0x1008] sm:$0xff] %v1205
                %v1207 = vld [vmem:[%s177 + $0x4010] sm:$0xff]
                %1208 = vst [vmem:[%s178 + $0x1010] sm:$0xff] %v1207
                %v1209 = vld [vmem:[%s177 + $0x4018] sm:$0xff]
                %1210 = vst [vmem:[%s178 + $0x1018] sm:$0xff] %v1209
                %v1211 = vld [vmem:[%s177 + $0x4080] sm:$0xff]
                %1212 = vst [vmem:[%s178 + $0x1020] sm:$0xff] %v1211
                %v1213 = vld [vmem:[%s177 + $0x4088] sm:$0xff]
                %1214 = vst [vmem:[%s178 + $0x1028] sm:$0xff] %v1213
                %v1215 = vld [vmem:[%s177 + $0x4090] sm:$0xff]
                %1216 = vst [vmem:[%s178 + $0x1030] sm:$0xff] %v1215
                %v1217 = vld [vmem:[%s177 + $0x4098] sm:$0xff]
                %1218 = vst [vmem:[%s178 + $0x1038] sm:$0xff] %v1217
                %v1219 = vld [vmem:[%s177 + $0x4100] sm:$0xff]
                %1220 = vst [vmem:[%s178 + $0x1040] sm:$0xff] %v1219
                %v1221 = vld [vmem:[%s177 + $0x4108] sm:$0xff]
                %1222 = vst [vmem:[%s178 + $0x1048] sm:$0xff] %v1221
                %v1223 = vld [vmem:[%s177 + $0x4110] sm:$0xff]
                %1224 = vst [vmem:[%s178 + $0x1050] sm:$0xff] %v1223
                %v1225 = vld [vmem:[%s177 + $0x4118] sm:$0xff]
                %1226 = vst [vmem:[%s178 + $0x1058] sm:$0xff] %v1225
                %v1227 = vld [vmem:[%s177 + $0x4180] sm:$0xff]
                %1228 = vst [vmem:[%s178 + $0x1060] sm:$0xff] %v1227
                %v1229 = vld [vmem:[%s177 + $0x4188] sm:$0xff]
                %1230 = vst [vmem:[%s178 + $0x1068] sm:$0xff] %v1229
                %v1231 = vld [vmem:[%s177 + $0x4190] sm:$0xff]
                %1232 = vst [vmem:[%s178 + $0x1070] sm:$0xff] %v1231
                %v1233 = vld [vmem:[%s177 + $0x4198] sm:$0xff]
                %1234 = vst [vmem:[%s178 + $0x1078] sm:$0xff] %v1233
                %v1235 = vld [vmem:[%s177 + $0x4200] sm:$0xff]
                %1236 = vst [vmem:[%s178 + $0x1080] sm:$0xff] %v1235
                %v1237 = vld [vmem:[%s177 + $0x4208] sm:$0xff]
                %1238 = vst [vmem:[%s178 + $0x1088] sm:$0xff] %v1237
                %v1239 = vld [vmem:[%s177 + $0x4210] sm:$0xff]
                %1240 = vst [vmem:[%s178 + $0x1090] sm:$0xff] %v1239
                %v1241 = vld [vmem:[%s177 + $0x4218] sm:$0xff]
                %1242 = vst [vmem:[%s178 + $0x1098] sm:$0xff] %v1241
                %v1243 = vld [vmem:[%s177 + $0x4280] sm:$0xff]
                %1244 = vst [vmem:[%s178 + $0x10a0] sm:$0xff] %v1243
                %v1245 = vld [vmem:[%s177 + $0x4288] sm:$0xff]
                %1246 = vst [vmem:[%s178 + $0x10a8] sm:$0xff] %v1245
                %v1247 = vld [vmem:[%s177 + $0x4290] sm:$0xff]
                %1248 = vst [vmem:[%s178 + $0x10b0] sm:$0xff] %v1247
                %v1249 = vld [vmem:[%s177 + $0x4298] sm:$0xff]
                %1250 = vst [vmem:[%s178 + $0x10b8] sm:$0xff] %v1249
                %v1251 = vld [vmem:[%s177 + $0x4300] sm:$0xff]
                %1252 = vst [vmem:[%s178 + $0x10c0] sm:$0xff] %v1251
                %v1253 = vld [vmem:[%s177 + $0x4308] sm:$0xff]
                %1254 = vst [vmem:[%s178 + $0x10c8] sm:$0xff] %v1253
                %v1255 = vld [vmem:[%s177 + $0x4310] sm:$0xff]
                %1256 = vst [vmem:[%s178 + $0x10d0] sm:$0xff] %v1255
                %v1257 = vld [vmem:[%s177 + $0x4318] sm:$0xff]
                %1258 = vst [vmem:[%s178 + $0x10d8] sm:$0xff] %v1257
                %v1259 = vld [vmem:[%s177 + $0x4380] sm:$0xff]
                %1260 = vst [vmem:[%s178 + $0x10e0] sm:$0xff] %v1259
                %v1261 = vld [vmem:[%s177 + $0x4388] sm:$0xff]
                %1262 = vst [vmem:[%s178 + $0x10e8] sm:$0xff] %v1261
                %v1263 = vld [vmem:[%s177 + $0x4390] sm:$0xff]
                %1264 = vst [vmem:[%s178 + $0x10f0] sm:$0xff] %v1263
                %v1265 = vld [vmem:[%s177 + $0x4398] sm:$0xff]
                %1266 = vst [vmem:[%s178 + $0x10f8] sm:$0xff] %v1265
                %v1267 = vld [vmem:[%s177 + $0x4400] sm:$0xff]
                %1268 = vst [vmem:[%s178 + $0x1100] sm:$0xff] %v1267
                %v1269 = vld [vmem:[%s177 + $0x4408] sm:$0xff]
                %1270 = vst [vmem:[%s178 + $0x1108] sm:$0xff] %v1269
                %v1271 = vld [vmem:[%s177 + $0x4410] sm:$0xff]
                %1272 = vst [vmem:[%s178 + $0x1110] sm:$0xff] %v1271
                %v1273 = vld [vmem:[%s177 + $0x4418] sm:$0xff]
                %1274 = vst [vmem:[%s178 + $0x1118] sm:$0xff] %v1273
                %v1275 = vld [vmem:[%s177 + $0x4480] sm:$0xff]
                %1276 = vst [vmem:[%s178 + $0x1120] sm:$0xff] %v1275
                %v1277 = vld [vmem:[%s177 + $0x4488] sm:$0xff]
                %1278 = vst [vmem:[%s178 + $0x1128] sm:$0xff] %v1277
                %v1279 = vld [vmem:[%s177 + $0x4490] sm:$0xff]
                %1280 = vst [vmem:[%s178 + $0x1130] sm:$0xff] %v1279
                %v1281 = vld [vmem:[%s177 + $0x4498] sm:$0xff]
                %1282 = vst [vmem:[%s178 + $0x1138] sm:$0xff] %v1281
                %v1283 = vld [vmem:[%s177 + $0x4500] sm:$0xff]
                %1284 = vst [vmem:[%s178 + $0x1140] sm:$0xff] %v1283
                %v1285 = vld [vmem:[%s177 + $0x4508] sm:$0xff]
                %1286 = vst [vmem:[%s178 + $0x1148] sm:$0xff] %v1285
                %v1287 = vld [vmem:[%s177 + $0x4510] sm:$0xff]
                %1288 = vst [vmem:[%s178 + $0x1150] sm:$0xff] %v1287
                %v1289 = vld [vmem:[%s177 + $0x4518] sm:$0xff]
                %1290 = vst [vmem:[%s178 + $0x1158] sm:$0xff] %v1289
                %v1291 = vld [vmem:[%s177 + $0x4580] sm:$0xff]
                %1292 = vst [vmem:[%s178 + $0x1160] sm:$0xff] %v1291
                %v1293 = vld [vmem:[%s177 + $0x4588] sm:$0xff]
                %1294 = vst [vmem:[%s178 + $0x1168] sm:$0xff] %v1293
                %v1295 = vld [vmem:[%s177 + $0x4590] sm:$0xff]
                %1296 = vst [vmem:[%s178 + $0x1170] sm:$0xff] %v1295
                %v1297 = vld [vmem:[%s177 + $0x4598] sm:$0xff]
                %1298 = vst [vmem:[%s178 + $0x1178] sm:$0xff] %v1297
                %v1299 = vld [vmem:[%s177 + $0x4600] sm:$0xff]
                %1300 = vst [vmem:[%s178 + $0x1180] sm:$0xff] %v1299
                %v1301 = vld [vmem:[%s177 + $0x4608] sm:$0xff]
                %1302 = vst [vmem:[%s178 + $0x1188] sm:$0xff] %v1301
                %v1303 = vld [vmem:[%s177 + $0x4610] sm:$0xff]
                %1304 = vst [vmem:[%s178 + $0x1190] sm:$0xff] %v1303
                %v1305 = vld [vmem:[%s177 + $0x4618] sm:$0xff]
                %1306 = vst [vmem:[%s178 + $0x1198] sm:$0xff] %v1305
                %v1307 = vld [vmem:[%s177 + $0x4680] sm:$0xff]
                %1308 = vst [vmem:[%s178 + $0x11a0] sm:$0xff] %v1307
                %v1309 = vld [vmem:[%s177 + $0x4688] sm:$0xff]
                %1310 = vst [vmem:[%s178 + $0x11a8] sm:$0xff] %v1309
                %v1311 = vld [vmem:[%s177 + $0x4690] sm:$0xff]
                %1312 = vst [vmem:[%s178 + $0x11b0] sm:$0xff] %v1311
                %v1313 = vld [vmem:[%s177 + $0x4698] sm:$0xff]
                %1314 = vst [vmem:[%s178 + $0x11b8] sm:$0xff] %v1313
                %v1315 = vld [vmem:[%s177 + $0x4700] sm:$0xff]
                %1316 = vst [vmem:[%s178 + $0x11c0] sm:$0xff] %v1315
                %v1317 = vld [vmem:[%s177 + $0x4708] sm:$0xff]
                %1318 = vst [vmem:[%s178 + $0x11c8] sm:$0xff] %v1317
                %v1319 = vld [vmem:[%s177 + $0x4710] sm:$0xff]
                %1320 = vst [vmem:[%s178 + $0x11d0] sm:$0xff] %v1319
                %v1321 = vld [vmem:[%s177 + $0x4718] sm:$0xff]
                %1322 = vst [vmem:[%s178 + $0x11d8] sm:$0xff] %v1321
                %v1323 = vld [vmem:[%s177 + $0x4780] sm:$0xff]
                %1324 = vst [vmem:[%s178 + $0x11e0] sm:$0xff] %v1323
                %v1325 = vld [vmem:[%s177 + $0x4788] sm:$0xff]
                %1326 = vst [vmem:[%s178 + $0x11e8] sm:$0xff] %v1325
                %v1327 = vld [vmem:[%s177 + $0x4790] sm:$0xff]
                %1328 = vst [vmem:[%s178 + $0x11f0] sm:$0xff] %v1327
                %v1329 = vld [vmem:[%s177 + $0x4798] sm:$0xff]
                %1330 = vst [vmem:[%s178 + $0x11f8] sm:$0xff] %v1329
                %v1331 = vld [vmem:[%s177 + $0x4800] sm:$0xff]
                %1332 = vst [vmem:[%s178 + $0x1200] sm:$0xff] %v1331
                %v1333 = vld [vmem:[%s177 + $0x4808] sm:$0xff]
                %1334 = vst [vmem:[%s178 + $0x1208] sm:$0xff] %v1333
                %v1335 = vld [vmem:[%s177 + $0x4810] sm:$0xff]
                %1336 = vst [vmem:[%s178 + $0x1210] sm:$0xff] %v1335
                %v1337 = vld [vmem:[%s177 + $0x4818] sm:$0xff]
                %1338 = vst [vmem:[%s178 + $0x1218] sm:$0xff] %v1337
                %v1339 = vld [vmem:[%s177 + $0x4880] sm:$0xff]
                %1340 = vst [vmem:[%s178 + $0x1220] sm:$0xff] %v1339
                %v1341 = vld [vmem:[%s177 + $0x4888] sm:$0xff]
                %1342 = vst [vmem:[%s178 + $0x1228] sm:$0xff] %v1341
                %v1343 = vld [vmem:[%s177 + $0x4890] sm:$0xff]
                %1344 = vst [vmem:[%s178 + $0x1230] sm:$0xff] %v1343
                %v1345 = vld [vmem:[%s177 + $0x4898] sm:$0xff]
                %1346 = vst [vmem:[%s178 + $0x1238] sm:$0xff] %v1345
                %v1347 = vld [vmem:[%s177 + $0x4900] sm:$0xff]
                %1348 = vst [vmem:[%s178 + $0x1240] sm:$0xff] %v1347
                %v1349 = vld [vmem:[%s177 + $0x4908] sm:$0xff]
                %1350 = vst [vmem:[%s178 + $0x1248] sm:$0xff] %v1349
                %v1351 = vld [vmem:[%s177 + $0x4910] sm:$0xff]
                %1352 = vst [vmem:[%s178 + $0x1250] sm:$0xff] %v1351
                %v1353 = vld [vmem:[%s177 + $0x4918] sm:$0xff]
                %1354 = vst [vmem:[%s178 + $0x1258] sm:$0xff] %v1353
                %v1355 = vld [vmem:[%s177 + $0x4980] sm:$0xff]
                %1356 = vst [vmem:[%s178 + $0x1260] sm:$0xff] %v1355
                %v1357 = vld [vmem:[%s177 + $0x4988] sm:$0xff]
                %1358 = vst [vmem:[%s178 + $0x1268] sm:$0xff] %v1357
                %v1359 = vld [vmem:[%s177 + $0x4990] sm:$0xff]
                %1360 = vst [vmem:[%s178 + $0x1270] sm:$0xff] %v1359
                %v1361 = vld [vmem:[%s177 + $0x4998] sm:$0xff]
                %1362 = vst [vmem:[%s178 + $0x1278] sm:$0xff] %v1361
                %v1363 = vld [vmem:[%s177 + $0x4a00] sm:$0xff]
                %1364 = vst [vmem:[%s178 + $0x1280] sm:$0xff] %v1363
                %v1365 = vld [vmem:[%s177 + $0x4a08] sm:$0xff]
                %1366 = vst [vmem:[%s178 + $0x1288] sm:$0xff] %v1365
                %v1367 = vld [vmem:[%s177 + $0x4a10] sm:$0xff]
                %1368 = vst [vmem:[%s178 + $0x1290] sm:$0xff] %v1367
                %v1369 = vld [vmem:[%s177 + $0x4a18] sm:$0xff]
                %1370 = vst [vmem:[%s178 + $0x1298] sm:$0xff] %v1369
                %v1371 = vld [vmem:[%s177 + $0x4a80] sm:$0xff]
                %1372 = vst [vmem:[%s178 + $0x12a0] sm:$0xff] %v1371
                %v1373 = vld [vmem:[%s177 + $0x4a88] sm:$0xff]
                %1374 = vst [vmem:[%s178 + $0x12a8] sm:$0xff] %v1373
                %v1375 = vld [vmem:[%s177 + $0x4a90] sm:$0xff]
                %1376 = vst [vmem:[%s178 + $0x12b0] sm:$0xff] %v1375
                %v1377 = vld [vmem:[%s177 + $0x4a98] sm:$0xff]
                %1378 = vst [vmem:[%s178 + $0x12b8] sm:$0xff] %v1377
                %v1379 = vld [vmem:[%s177 + $0x4b00] sm:$0xff]
                %1380 = vst [vmem:[%s178 + $0x12c0] sm:$0xff] %v1379
                %v1381 = vld [vmem:[%s177 + $0x4b08] sm:$0xff]
                %1382 = vst [vmem:[%s178 + $0x12c8] sm:$0xff] %v1381
                %v1383 = vld [vmem:[%s177 + $0x4b10] sm:$0xff]
                %1384 = vst [vmem:[%s178 + $0x12d0] sm:$0xff] %v1383
                %v1385 = vld [vmem:[%s177 + $0x4b18] sm:$0xff]
                %1386 = vst [vmem:[%s178 + $0x12d8] sm:$0xff] %v1385
                %v1387 = vld [vmem:[%s177 + $0x4b80] sm:$0xff]
                %1388 = vst [vmem:[%s178 + $0x12e0] sm:$0xff] %v1387
                %v1389 = vld [vmem:[%s177 + $0x4b88] sm:$0xff]
                %1390 = vst [vmem:[%s178 + $0x12e8] sm:$0xff] %v1389
                %v1391 = vld [vmem:[%s177 + $0x4b90] sm:$0xff]
                %1392 = vst [vmem:[%s178 + $0x12f0] sm:$0xff] %v1391
                %v1393 = vld [vmem:[%s177 + $0x4b98] sm:$0xff]
                %1394 = vst [vmem:[%s178 + $0x12f8] sm:$0xff] %v1393
                %v1395 = vld [vmem:[%s177 + $0x4c00] sm:$0xff]
                %1396 = vst [vmem:[%s178 + $0x1300] sm:$0xff] %v1395
                %v1397 = vld [vmem:[%s177 + $0x4c08] sm:$0xff]
                %1398 = vst [vmem:[%s178 + $0x1308] sm:$0xff] %v1397
                %v1399 = vld [vmem:[%s177 + $0x4c10] sm:$0xff]
                %1400 = vst [vmem:[%s178 + $0x1310] sm:$0xff] %v1399
                %v1401 = vld [vmem:[%s177 + $0x4c18] sm:$0xff]
                %1402 = vst [vmem:[%s178 + $0x1318] sm:$0xff] %v1401
                %v1403 = vld [vmem:[%s177 + $0x4c80] sm:$0xff]
                %1404 = vst [vmem:[%s178 + $0x1320] sm:$0xff] %v1403
                %v1405 = vld [vmem:[%s177 + $0x4c88] sm:$0xff]
                %1406 = vst [vmem:[%s178 + $0x1328] sm:$0xff] %v1405
                %v1407 = vld [vmem:[%s177 + $0x4c90] sm:$0xff]
                %1408 = vst [vmem:[%s178 + $0x1330] sm:$0xff] %v1407
                %v1409 = vld [vmem:[%s177 + $0x4c98] sm:$0xff]
                %1410 = vst [vmem:[%s178 + $0x1338] sm:$0xff] %v1409
                %v1411 = vld [vmem:[%s177 + $0x4d00] sm:$0xff]
                %1412 = vst [vmem:[%s178 + $0x1340] sm:$0xff] %v1411
                %v1413 = vld [vmem:[%s177 + $0x4d08] sm:$0xff]
                %1414 = vst [vmem:[%s178 + $0x1348] sm:$0xff] %v1413
                %v1415 = vld [vmem:[%s177 + $0x4d10] sm:$0xff]
                %1416 = vst [vmem:[%s178 + $0x1350] sm:$0xff] %v1415
                %v1417 = vld [vmem:[%s177 + $0x4d18] sm:$0xff]
                %1418 = vst [vmem:[%s178 + $0x1358] sm:$0xff] %v1417
                %v1419 = vld [vmem:[%s177 + $0x4d80] sm:$0xff]
                %1420 = vst [vmem:[%s178 + $0x1360] sm:$0xff] %v1419
                %v1421 = vld [vmem:[%s177 + $0x4d88] sm:$0xff]
                %1422 = vst [vmem:[%s178 + $0x1368] sm:$0xff] %v1421
                %v1423 = vld [vmem:[%s177 + $0x4d90] sm:$0xff]
                %1424 = vst [vmem:[%s178 + $0x1370] sm:$0xff] %v1423
                %v1425 = vld [vmem:[%s177 + $0x4d98] sm:$0xff]
                %1426 = vst [vmem:[%s178 + $0x1378] sm:$0xff] %v1425
                %v1427 = vld [vmem:[%s177 + $0x4e00] sm:$0xff]
                %1428 = vst [vmem:[%s178 + $0x1380] sm:$0xff] %v1427
                %v1429 = vld [vmem:[%s177 + $0x4e08] sm:$0xff]
                %1430 = vst [vmem:[%s178 + $0x1388] sm:$0xff] %v1429
                %v1431 = vld [vmem:[%s177 + $0x4e10] sm:$0xff]
                %1432 = vst [vmem:[%s178 + $0x1390] sm:$0xff] %v1431
                %v1433 = vld [vmem:[%s177 + $0x4e18] sm:$0xff]
                %1434 = vst [vmem:[%s178 + $0x1398] sm:$0xff] %v1433
                %v1435 = vld [vmem:[%s177 + $0x4e80] sm:$0xff]
                %1436 = vst [vmem:[%s178 + $0x13a0] sm:$0xff] %v1435
                %v1437 = vld [vmem:[%s177 + $0x4e88] sm:$0xff]
                %1438 = vst [vmem:[%s178 + $0x13a8] sm:$0xff] %v1437
                %v1439 = vld [vmem:[%s177 + $0x4e90] sm:$0xff]
                %1440 = vst [vmem:[%s178 + $0x13b0] sm:$0xff] %v1439
                %v1441 = vld [vmem:[%s177 + $0x4e98] sm:$0xff]
                %1442 = vst [vmem:[%s178 + $0x13b8] sm:$0xff] %v1441
                %v1443 = vld [vmem:[%s177 + $0x4f00] sm:$0xff]
                %1444 = vst [vmem:[%s178 + $0x13c0] sm:$0xff] %v1443
                %v1445 = vld [vmem:[%s177 + $0x4f08] sm:$0xff]
                %1446 = vst [vmem:[%s178 + $0x13c8] sm:$0xff] %v1445
                %v1447 = vld [vmem:[%s177 + $0x4f10] sm:$0xff]
                %1448 = vst [vmem:[%s178 + $0x13d0] sm:$0xff] %v1447
                %v1449 = vld [vmem:[%s177 + $0x4f18] sm:$0xff]
                %1450 = vst [vmem:[%s178 + $0x13d8] sm:$0xff] %v1449
                %v1451 = vld [vmem:[%s177 + $0x4f80] sm:$0xff]
                %1452 = vst [vmem:[%s178 + $0x13e0] sm:$0xff] %v1451
                %v1453 = vld [vmem:[%s177 + $0x4f88] sm:$0xff]
                %1454 = vst [vmem:[%s178 + $0x13e8] sm:$0xff] %v1453
                %v1455 = vld [vmem:[%s177 + $0x4f90] sm:$0xff]
                %1456 = vst [vmem:[%s178 + $0x13f0] sm:$0xff] %v1455
                %v1457 = vld [vmem:[%s177 + $0x4f98] sm:$0xff]
                %1458 = vst [vmem:[%s178 + $0x13f8] sm:$0xff] %v1457
                %v1459 = vld [vmem:[%s177 + $0x5000] sm:$0xff]
                %1460 = vst [vmem:[%s178 + $0x1400] sm:$0xff] %v1459
                %v1461 = vld [vmem:[%s177 + $0x5008] sm:$0xff]
                %1462 = vst [vmem:[%s178 + $0x1408] sm:$0xff] %v1461
                %v1463 = vld [vmem:[%s177 + $0x5010] sm:$0xff]
                %1464 = vst [vmem:[%s178 + $0x1410] sm:$0xff] %v1463
                %v1465 = vld [vmem:[%s177 + $0x5018] sm:$0xff]
                %1466 = vst [vmem:[%s178 + $0x1418] sm:$0xff] %v1465
                %v1467 = vld [vmem:[%s177 + $0x5080] sm:$0xff]
                %1468 = vst [vmem:[%s178 + $0x1420] sm:$0xff] %v1467
                %v1469 = vld [vmem:[%s177 + $0x5088] sm:$0xff]
                %1470 = vst [vmem:[%s178 + $0x1428] sm:$0xff] %v1469
                %v1471 = vld [vmem:[%s177 + $0x5090] sm:$0xff]
                %1472 = vst [vmem:[%s178 + $0x1430] sm:$0xff] %v1471
                %v1473 = vld [vmem:[%s177 + $0x5098] sm:$0xff]
                %1474 = vst [vmem:[%s178 + $0x1438] sm:$0xff] %v1473
                %v1475 = vld [vmem:[%s177 + $0x5100] sm:$0xff]
                %1476 = vst [vmem:[%s178 + $0x1440] sm:$0xff] %v1475
                %v1477 = vld [vmem:[%s177 + $0x5108] sm:$0xff]
                %1478 = vst [vmem:[%s178 + $0x1448] sm:$0xff] %v1477
                %v1479 = vld [vmem:[%s177 + $0x5110] sm:$0xff]
                %1480 = vst [vmem:[%s178 + $0x1450] sm:$0xff] %v1479
                %v1481 = vld [vmem:[%s177 + $0x5118] sm:$0xff]
                %1482 = vst [vmem:[%s178 + $0x1458] sm:$0xff] %v1481
                %v1483 = vld [vmem:[%s177 + $0x5180] sm:$0xff]
                %1484 = vst [vmem:[%s178 + $0x1460] sm:$0xff] %v1483
                %v1485 = vld [vmem:[%s177 + $0x5188] sm:$0xff]
                %1486 = vst [vmem:[%s178 + $0x1468] sm:$0xff] %v1485
                %v1487 = vld [vmem:[%s177 + $0x5190] sm:$0xff]
                %1488 = vst [vmem:[%s178 + $0x1470] sm:$0xff] %v1487
                %v1489 = vld [vmem:[%s177 + $0x5198] sm:$0xff]
                %1490 = vst [vmem:[%s178 + $0x1478] sm:$0xff] %v1489
                %v1491 = vld [vmem:[%s177 + $0x5200] sm:$0xff]
                %1492 = vst [vmem:[%s178 + $0x1480] sm:$0xff] %v1491
                %v1493 = vld [vmem:[%s177 + $0x5208] sm:$0xff]
                %1494 = vst [vmem:[%s178 + $0x1488] sm:$0xff] %v1493
                %v1495 = vld [vmem:[%s177 + $0x5210] sm:$0xff]
                %1496 = vst [vmem:[%s178 + $0x1490] sm:$0xff] %v1495
                %v1497 = vld [vmem:[%s177 + $0x5218] sm:$0xff]
                %1498 = vst [vmem:[%s178 + $0x1498] sm:$0xff] %v1497
                %v1499 = vld [vmem:[%s177 + $0x5280] sm:$0xff]
                %1500 = vst [vmem:[%s178 + $0x14a0] sm:$0xff] %v1499
                %v1501 = vld [vmem:[%s177 + $0x5288] sm:$0xff]
                %1502 = vst [vmem:[%s178 + $0x14a8] sm:$0xff] %v1501
                %v1503 = vld [vmem:[%s177 + $0x5290] sm:$0xff]
                %1504 = vst [vmem:[%s178 + $0x14b0] sm:$0xff] %v1503
                %v1505 = vld [vmem:[%s177 + $0x5298] sm:$0xff]
                %1506 = vst [vmem:[%s178 + $0x14b8] sm:$0xff] %v1505
                %v1507 = vld [vmem:[%s177 + $0x5300] sm:$0xff]
                %1508 = vst [vmem:[%s178 + $0x14c0] sm:$0xff] %v1507
                %v1509 = vld [vmem:[%s177 + $0x5308] sm:$0xff]
                %1510 = vst [vmem:[%s178 + $0x14c8] sm:$0xff] %v1509
                %v1511 = vld [vmem:[%s177 + $0x5310] sm:$0xff]
                %1512 = vst [vmem:[%s178 + $0x14d0] sm:$0xff] %v1511
                %v1513 = vld [vmem:[%s177 + $0x5318] sm:$0xff]
                %1514 = vst [vmem:[%s178 + $0x14d8] sm:$0xff] %v1513
                %v1515 = vld [vmem:[%s177 + $0x5380] sm:$0xff]
                %1516 = vst [vmem:[%s178 + $0x14e0] sm:$0xff] %v1515
                %v1517 = vld [vmem:[%s177 + $0x5388] sm:$0xff]
                %1518 = vst [vmem:[%s178 + $0x14e8] sm:$0xff] %v1517
                %v1519 = vld [vmem:[%s177 + $0x5390] sm:$0xff]
                %1520 = vst [vmem:[%s178 + $0x14f0] sm:$0xff] %v1519
                %v1521 = vld [vmem:[%s177 + $0x5398] sm:$0xff]
                %1522 = vst [vmem:[%s178 + $0x14f8] sm:$0xff] %v1521
                %v1523 = vld [vmem:[%s177 + $0x5400] sm:$0xff]
                %1524 = vst [vmem:[%s178 + $0x1500] sm:$0xff] %v1523
                %v1525 = vld [vmem:[%s177 + $0x5408] sm:$0xff]
                %1526 = vst [vmem:[%s178 + $0x1508] sm:$0xff] %v1525
                %v1527 = vld [vmem:[%s177 + $0x5410] sm:$0xff]
                %1528 = vst [vmem:[%s178 + $0x1510] sm:$0xff] %v1527
                %v1529 = vld [vmem:[%s177 + $0x5418] sm:$0xff]
                %1530 = vst [vmem:[%s178 + $0x1518] sm:$0xff] %v1529
                %v1531 = vld [vmem:[%s177 + $0x5480] sm:$0xff]
                %1532 = vst [vmem:[%s178 + $0x1520] sm:$0xff] %v1531
                %v1533 = vld [vmem:[%s177 + $0x5488] sm:$0xff]
                %1534 = vst [vmem:[%s178 + $0x1528] sm:$0xff] %v1533
                %v1535 = vld [vmem:[%s177 + $0x5490] sm:$0xff]
                %1536 = vst [vmem:[%s178 + $0x1530] sm:$0xff] %v1535
                %v1537 = vld [vmem:[%s177 + $0x5498] sm:$0xff]
                %1538 = vst [vmem:[%s178 + $0x1538] sm:$0xff] %v1537
                %v1539 = vld [vmem:[%s177 + $0x5500] sm:$0xff]
                %1540 = vst [vmem:[%s178 + $0x1540] sm:$0xff] %v1539
                %v1541 = vld [vmem:[%s177 + $0x5508] sm:$0xff]
                %1542 = vst [vmem:[%s178 + $0x1548] sm:$0xff] %v1541
                %v1543 = vld [vmem:[%s177 + $0x5510] sm:$0xff]
                %1544 = vst [vmem:[%s178 + $0x1550] sm:$0xff] %v1543
                %v1545 = vld [vmem:[%s177 + $0x5518] sm:$0xff]
                %1546 = vst [vmem:[%s178 + $0x1558] sm:$0xff] %v1545
                %v1547 = vld [vmem:[%s177 + $0x5580] sm:$0xff]
                %1548 = vst [vmem:[%s178 + $0x1560] sm:$0xff] %v1547
                %v1549 = vld [vmem:[%s177 + $0x5588] sm:$0xff]
                %1550 = vst [vmem:[%s178 + $0x1568] sm:$0xff] %v1549
                %v1551 = vld [vmem:[%s177 + $0x5590] sm:$0xff]
                %1552 = vst [vmem:[%s178 + $0x1570] sm:$0xff] %v1551
                %v1553 = vld [vmem:[%s177 + $0x5598] sm:$0xff]
                %1554 = vst [vmem:[%s178 + $0x1578] sm:$0xff] %v1553
                %v1555 = vld [vmem:[%s177 + $0x5600] sm:$0xff]
                %1556 = vst [vmem:[%s178 + $0x1580] sm:$0xff] %v1555
                %v1557 = vld [vmem:[%s177 + $0x5608] sm:$0xff]
                %1558 = vst [vmem:[%s178 + $0x1588] sm:$0xff] %v1557
                %v1559 = vld [vmem:[%s177 + $0x5610] sm:$0xff]
                %1560 = vst [vmem:[%s178 + $0x1590] sm:$0xff] %v1559
                %v1561 = vld [vmem:[%s177 + $0x5618] sm:$0xff]
                %1562 = vst [vmem:[%s178 + $0x1598] sm:$0xff] %v1561
                %v1563 = vld [vmem:[%s177 + $0x5680] sm:$0xff]
                %1564 = vst [vmem:[%s178 + $0x15a0] sm:$0xff] %v1563
                %v1565 = vld [vmem:[%s177 + $0x5688] sm:$0xff]
                %1566 = vst [vmem:[%s178 + $0x15a8] sm:$0xff] %v1565
                %v1567 = vld [vmem:[%s177 + $0x5690] sm:$0xff]
                %1568 = vst [vmem:[%s178 + $0x15b0] sm:$0xff] %v1567
                %v1569 = vld [vmem:[%s177 + $0x5698] sm:$0xff]
                %1570 = vst [vmem:[%s178 + $0x15b8] sm:$0xff] %v1569
                %v1571 = vld [vmem:[%s177 + $0x5700] sm:$0xff]
                %1572 = vst [vmem:[%s178 + $0x15c0] sm:$0xff] %v1571
                %v1573 = vld [vmem:[%s177 + $0x5708] sm:$0xff]
                %1574 = vst [vmem:[%s178 + $0x15c8] sm:$0xff] %v1573
                %v1575 = vld [vmem:[%s177 + $0x5710] sm:$0xff]
                %1576 = vst [vmem:[%s178 + $0x15d0] sm:$0xff] %v1575
                %v1577 = vld [vmem:[%s177 + $0x5718] sm:$0xff]
                %1578 = vst [vmem:[%s178 + $0x15d8] sm:$0xff] %v1577
                %v1579 = vld [vmem:[%s177 + $0x5780] sm:$0xff]
                %1580 = vst [vmem:[%s178 + $0x15e0] sm:$0xff] %v1579
                %v1581 = vld [vmem:[%s177 + $0x5788] sm:$0xff]
                %1582 = vst [vmem:[%s178 + $0x15e8] sm:$0xff] %v1581
                %v1583 = vld [vmem:[%s177 + $0x5790] sm:$0xff]
                %1584 = vst [vmem:[%s178 + $0x15f0] sm:$0xff] %v1583
                %v1585 = vld [vmem:[%s177 + $0x5798] sm:$0xff]
                %1586 = vst [vmem:[%s178 + $0x15f8] sm:$0xff] %v1585
                %v1587 = vld [vmem:[%s177 + $0x5800] sm:$0xff]
                %1588 = vst [vmem:[%s178 + $0x1600] sm:$0xff] %v1587
                %v1589 = vld [vmem:[%s177 + $0x5808] sm:$0xff]
                %1590 = vst [vmem:[%s178 + $0x1608] sm:$0xff] %v1589
                %v1591 = vld [vmem:[%s177 + $0x5810] sm:$0xff]
                %1592 = vst [vmem:[%s178 + $0x1610] sm:$0xff] %v1591
                %v1593 = vld [vmem:[%s177 + $0x5818] sm:$0xff]
                %1594 = vst [vmem:[%s178 + $0x1618] sm:$0xff] %v1593
                %v1595 = vld [vmem:[%s177 + $0x5880] sm:$0xff]
                %1596 = vst [vmem:[%s178 + $0x1620] sm:$0xff] %v1595
                %v1597 = vld [vmem:[%s177 + $0x5888] sm:$0xff]
                %1598 = vst [vmem:[%s178 + $0x1628] sm:$0xff] %v1597
                %v1599 = vld [vmem:[%s177 + $0x5890] sm:$0xff]
                %1600 = vst [vmem:[%s178 + $0x1630] sm:$0xff] %v1599
                %v1601 = vld [vmem:[%s177 + $0x5898] sm:$0xff]
                %1602 = vst [vmem:[%s178 + $0x1638] sm:$0xff] %v1601
                %v1603 = vld [vmem:[%s177 + $0x5900] sm:$0xff]
                %1604 = vst [vmem:[%s178 + $0x1640] sm:$0xff] %v1603
                %v1605 = vld [vmem:[%s177 + $0x5908] sm:$0xff]
                %1606 = vst [vmem:[%s178 + $0x1648] sm:$0xff] %v1605
                %v1607 = vld [vmem:[%s177 + $0x5910] sm:$0xff]
                %1608 = vst [vmem:[%s178 + $0x1650] sm:$0xff] %v1607
                %v1609 = vld [vmem:[%s177 + $0x5918] sm:$0xff]
                %1610 = vst [vmem:[%s178 + $0x1658] sm:$0xff] %v1609
                %v1611 = vld [vmem:[%s177 + $0x5980] sm:$0xff]
                %1612 = vst [vmem:[%s178 + $0x1660] sm:$0xff] %v1611
                %v1613 = vld [vmem:[%s177 + $0x5988] sm:$0xff]
                %1614 = vst [vmem:[%s178 + $0x1668] sm:$0xff] %v1613
                %v1615 = vld [vmem:[%s177 + $0x5990] sm:$0xff]
                %1616 = vst [vmem:[%s178 + $0x1670] sm:$0xff] %v1615
                %v1617 = vld [vmem:[%s177 + $0x5998] sm:$0xff]
                %1618 = vst [vmem:[%s178 + $0x1678] sm:$0xff] %v1617
                %v1619 = vld [vmem:[%s177 + $0x5a00] sm:$0xff]
                %1620 = vst [vmem:[%s178 + $0x1680] sm:$0xff] %v1619
                %v1621 = vld [vmem:[%s177 + $0x5a08] sm:$0xff]
                %1622 = vst [vmem:[%s178 + $0x1688] sm:$0xff] %v1621
                %v1623 = vld [vmem:[%s177 + $0x5a10] sm:$0xff]
                %1624 = vst [vmem:[%s178 + $0x1690] sm:$0xff] %v1623
                %v1625 = vld [vmem:[%s177 + $0x5a18] sm:$0xff]
                %1626 = vst [vmem:[%s178 + $0x1698] sm:$0xff] %v1625
                %v1627 = vld [vmem:[%s177 + $0x5a80] sm:$0xff]
                %1628 = vst [vmem:[%s178 + $0x16a0] sm:$0xff] %v1627
                %v1629 = vld [vmem:[%s177 + $0x5a88] sm:$0xff]
                %1630 = vst [vmem:[%s178 + $0x16a8] sm:$0xff] %v1629
                %v1631 = vld [vmem:[%s177 + $0x5a90] sm:$0xff]
                %1632 = vst [vmem:[%s178 + $0x16b0] sm:$0xff] %v1631
                %v1633 = vld [vmem:[%s177 + $0x5a98] sm:$0xff]
                %1634 = vst [vmem:[%s178 + $0x16b8] sm:$0xff] %v1633
                %v1635 = vld [vmem:[%s177 + $0x5b00] sm:$0xff]
                %1636 = vst [vmem:[%s178 + $0x16c0] sm:$0xff] %v1635
                %v1637 = vld [vmem:[%s177 + $0x5b08] sm:$0xff]
                %1638 = vst [vmem:[%s178 + $0x16c8] sm:$0xff] %v1637
                %v1639 = vld [vmem:[%s177 + $0x5b10] sm:$0xff]
                %1640 = vst [vmem:[%s178 + $0x16d0] sm:$0xff] %v1639
                %v1641 = vld [vmem:[%s177 + $0x5b18] sm:$0xff]
                %1642 = vst [vmem:[%s178 + $0x16d8] sm:$0xff] %v1641
                %v1643 = vld [vmem:[%s177 + $0x5b80] sm:$0xff]
                %1644 = vst [vmem:[%s178 + $0x16e0] sm:$0xff] %v1643
                %v1645 = vld [vmem:[%s177 + $0x5b88] sm:$0xff]
                %1646 = vst [vmem:[%s178 + $0x16e8] sm:$0xff] %v1645
                %v1647 = vld [vmem:[%s177 + $0x5b90] sm:$0xff]
                %1648 = vst [vmem:[%s178 + $0x16f0] sm:$0xff] %v1647
                %v1649 = vld [vmem:[%s177 + $0x5b98] sm:$0xff]
                %1650 = vst [vmem:[%s178 + $0x16f8] sm:$0xff] %v1649
                %v1651 = vld [vmem:[%s177 + $0x5c00] sm:$0xff]
                %1652 = vst [vmem:[%s178 + $0x1700] sm:$0xff] %v1651
                %v1653 = vld [vmem:[%s177 + $0x5c08] sm:$0xff]
                %1654 = vst [vmem:[%s178 + $0x1708] sm:$0xff] %v1653
                %v1655 = vld [vmem:[%s177 + $0x5c10] sm:$0xff]
                %1656 = vst [vmem:[%s178 + $0x1710] sm:$0xff] %v1655
                %v1657 = vld [vmem:[%s177 + $0x5c18] sm:$0xff]
                %1658 = vst [vmem:[%s178 + $0x1718] sm:$0xff] %v1657
                %v1659 = vld [vmem:[%s177 + $0x5c80] sm:$0xff]
                %1660 = vst [vmem:[%s178 + $0x1720] sm:$0xff] %v1659
                %v1661 = vld [vmem:[%s177 + $0x5c88] sm:$0xff]
                %1662 = vst [vmem:[%s178 + $0x1728] sm:$0xff] %v1661
                %v1663 = vld [vmem:[%s177 + $0x5c90] sm:$0xff]
                %1664 = vst [vmem:[%s178 + $0x1730] sm:$0xff] %v1663
                %v1665 = vld [vmem:[%s177 + $0x5c98] sm:$0xff]
                %1666 = vst [vmem:[%s178 + $0x1738] sm:$0xff] %v1665
                %v1667 = vld [vmem:[%s177 + $0x5d00] sm:$0xff]
                %1668 = vst [vmem:[%s178 + $0x1740] sm:$0xff] %v1667
                %v1669 = vld [vmem:[%s177 + $0x5d08] sm:$0xff]
                %1670 = vst [vmem:[%s178 + $0x1748] sm:$0xff] %v1669
                %v1671 = vld [vmem:[%s177 + $0x5d10] sm:$0xff]
                %1672 = vst [vmem:[%s178 + $0x1750] sm:$0xff] %v1671
                %v1673 = vld [vmem:[%s177 + $0x5d18] sm:$0xff]
                %1674 = vst [vmem:[%s178 + $0x1758] sm:$0xff] %v1673
                %v1675 = vld [vmem:[%s177 + $0x5d80] sm:$0xff]
                %1676 = vst [vmem:[%s178 + $0x1760] sm:$0xff] %v1675
                %v1677 = vld [vmem:[%s177 + $0x5d88] sm:$0xff]
                %1678 = vst [vmem:[%s178 + $0x1768] sm:$0xff] %v1677
                %v1679 = vld [vmem:[%s177 + $0x5d90] sm:$0xff]
                %1680 = vst [vmem:[%s178 + $0x1770] sm:$0xff] %v1679
                %v1681 = vld [vmem:[%s177 + $0x5d98] sm:$0xff]
                %1682 = vst [vmem:[%s178 + $0x1778] sm:$0xff] %v1681
                %v1683 = vld [vmem:[%s177 + $0x5e00] sm:$0xff]
                %1684 = vst [vmem:[%s178 + $0x1780] sm:$0xff] %v1683
                %v1685 = vld [vmem:[%s177 + $0x5e08] sm:$0xff]
                %1686 = vst [vmem:[%s178 + $0x1788] sm:$0xff] %v1685
                %v1687 = vld [vmem:[%s177 + $0x5e10] sm:$0xff]
                %1688 = vst [vmem:[%s178 + $0x1790] sm:$0xff] %v1687
                %v1689 = vld [vmem:[%s177 + $0x5e18] sm:$0xff]
                %1690 = vst [vmem:[%s178 + $0x1798] sm:$0xff] %v1689
                %v1691 = vld [vmem:[%s177 + $0x5e80] sm:$0xff]
                %1692 = vst [vmem:[%s178 + $0x17a0] sm:$0xff] %v1691
                %v1693 = vld [vmem:[%s177 + $0x5e88] sm:$0xff]
                %1694 = vst [vmem:[%s178 + $0x17a8] sm:$0xff] %v1693
                %v1695 = vld [vmem:[%s177 + $0x5e90] sm:$0xff]
                %1696 = vst [vmem:[%s178 + $0x17b0] sm:$0xff] %v1695
                %v1697 = vld [vmem:[%s177 + $0x5e98] sm:$0xff]
                %1698 = vst [vmem:[%s178 + $0x17b8] sm:$0xff] %v1697
                %v1699 = vld [vmem:[%s177 + $0x5f00] sm:$0xff]
                %1700 = vst [vmem:[%s178 + $0x17c0] sm:$0xff] %v1699
                %v1701 = vld [vmem:[%s177 + $0x5f08] sm:$0xff]
                %1702 = vst [vmem:[%s178 + $0x17c8] sm:$0xff] %v1701
                %v1703 = vld [vmem:[%s177 + $0x5f10] sm:$0xff]
                %1704 = vst [vmem:[%s178 + $0x17d0] sm:$0xff] %v1703
                %v1705 = vld [vmem:[%s177 + $0x5f18] sm:$0xff]
                %1706 = vst [vmem:[%s178 + $0x17d8] sm:$0xff] %v1705
                %v1707 = vld [vmem:[%s177 + $0x5f80] sm:$0xff]
                %1708 = vst [vmem:[%s178 + $0x17e0] sm:$0xff] %v1707
                %v1709 = vld [vmem:[%s177 + $0x5f88] sm:$0xff]
                %1710 = vst [vmem:[%s178 + $0x17e8] sm:$0xff] %v1709
                %v1711 = vld [vmem:[%s177 + $0x5f90] sm:$0xff]
                %1712 = vst [vmem:[%s178 + $0x17f0] sm:$0xff] %v1711
                %v1713 = vld [vmem:[%s177 + $0x5f98] sm:$0xff]
                %1714 = vst [vmem:[%s178 + $0x17f8] sm:$0xff] %v1713
                %v1715 = vld [vmem:[%s177 + $0x6000] sm:$0xff]
                %1716 = vst [vmem:[%s178 + $0x1800] sm:$0xff] %v1715
                %v1717 = vld [vmem:[%s177 + $0x6008] sm:$0xff]
                %1718 = vst [vmem:[%s178 + $0x1808] sm:$0xff] %v1717
                %v1719 = vld [vmem:[%s177 + $0x6010] sm:$0xff]
                %1720 = vst [vmem:[%s178 + $0x1810] sm:$0xff] %v1719
                %v1721 = vld [vmem:[%s177 + $0x6018] sm:$0xff]
                %1722 = vst [vmem:[%s178 + $0x1818] sm:$0xff] %v1721
                %v1723 = vld [vmem:[%s177 + $0x6080] sm:$0xff]
                %1724 = vst [vmem:[%s178 + $0x1820] sm:$0xff] %v1723
                %v1725 = vld [vmem:[%s177 + $0x6088] sm:$0xff]
                %1726 = vst [vmem:[%s178 + $0x1828] sm:$0xff] %v1725
                %v1727 = vld [vmem:[%s177 + $0x6090] sm:$0xff]
                %1728 = vst [vmem:[%s178 + $0x1830] sm:$0xff] %v1727
                %v1729 = vld [vmem:[%s177 + $0x6098] sm:$0xff]
                %1730 = vst [vmem:[%s178 + $0x1838] sm:$0xff] %v1729
                %v1731 = vld [vmem:[%s177 + $0x6100] sm:$0xff]
                %1732 = vst [vmem:[%s178 + $0x1840] sm:$0xff] %v1731
                %v1733 = vld [vmem:[%s177 + $0x6108] sm:$0xff]
                %1734 = vst [vmem:[%s178 + $0x1848] sm:$0xff] %v1733
                %v1735 = vld [vmem:[%s177 + $0x6110] sm:$0xff]
                %1736 = vst [vmem:[%s178 + $0x1850] sm:$0xff] %v1735
                %v1737 = vld [vmem:[%s177 + $0x6118] sm:$0xff]
                %1738 = vst [vmem:[%s178 + $0x1858] sm:$0xff] %v1737
                %v1739 = vld [vmem:[%s177 + $0x6180] sm:$0xff]
                %1740 = vst [vmem:[%s178 + $0x1860] sm:$0xff] %v1739
                %v1741 = vld [vmem:[%s177 + $0x6188] sm:$0xff]
                %1742 = vst [vmem:[%s178 + $0x1868] sm:$0xff] %v1741
                %v1743 = vld [vmem:[%s177 + $0x6190] sm:$0xff]
                %1744 = vst [vmem:[%s178 + $0x1870] sm:$0xff] %v1743
                %v1745 = vld [vmem:[%s177 + $0x6198] sm:$0xff]
                %1746 = vst [vmem:[%s178 + $0x1878] sm:$0xff] %v1745
                %v1747 = vld [vmem:[%s177 + $0x6200] sm:$0xff]
                %1748 = vst [vmem:[%s178 + $0x1880] sm:$0xff] %v1747
                %v1749 = vld [vmem:[%s177 + $0x6208] sm:$0xff]
                %1750 = vst [vmem:[%s178 + $0x1888] sm:$0xff] %v1749
                %v1751 = vld [vmem:[%s177 + $0x6210] sm:$0xff]
                %1752 = vst [vmem:[%s178 + $0x1890] sm:$0xff] %v1751
                %v1753 = vld [vmem:[%s177 + $0x6218] sm:$0xff]
                %1754 = vst [vmem:[%s178 + $0x1898] sm:$0xff] %v1753
                %v1755 = vld [vmem:[%s177 + $0x6280] sm:$0xff]
                %1756 = vst [vmem:[%s178 + $0x18a0] sm:$0xff] %v1755
                %v1757 = vld [vmem:[%s177 + $0x6288] sm:$0xff]
                %1758 = vst [vmem:[%s178 + $0x18a8] sm:$0xff] %v1757
                %v1759 = vld [vmem:[%s177 + $0x6290] sm:$0xff]
                %1760 = vst [vmem:[%s178 + $0x18b0] sm:$0xff] %v1759
                %v1761 = vld [vmem:[%s177 + $0x6298] sm:$0xff]
                %1762 = vst [vmem:[%s178 + $0x18b8] sm:$0xff] %v1761
                %v1763 = vld [vmem:[%s177 + $0x6300] sm:$0xff]
                %1764 = vst [vmem:[%s178 + $0x18c0] sm:$0xff] %v1763
                %v1765 = vld [vmem:[%s177 + $0x6308] sm:$0xff]
                %1766 = vst [vmem:[%s178 + $0x18c8] sm:$0xff] %v1765
                %v1767 = vld [vmem:[%s177 + $0x6310] sm:$0xff]
                %1768 = vst [vmem:[%s178 + $0x18d0] sm:$0xff] %v1767
                %v1769 = vld [vmem:[%s177 + $0x6318] sm:$0xff]
                %1770 = vst [vmem:[%s178 + $0x18d8] sm:$0xff] %v1769
                %v1771 = vld [vmem:[%s177 + $0x6380] sm:$0xff]
                %1772 = vst [vmem:[%s178 + $0x18e0] sm:$0xff] %v1771
                %v1773 = vld [vmem:[%s177 + $0x6388] sm:$0xff]
                %1774 = vst [vmem:[%s178 + $0x18e8] sm:$0xff] %v1773
                %v1775 = vld [vmem:[%s177 + $0x6390] sm:$0xff]
                %1776 = vst [vmem:[%s178 + $0x18f0] sm:$0xff] %v1775
                %v1777 = vld [vmem:[%s177 + $0x6398] sm:$0xff]
                %1778 = vst [vmem:[%s178 + $0x18f8] sm:$0xff] %v1777
                %v1779 = vld [vmem:[%s177 + $0x6400] sm:$0xff]
                %1780 = vst [vmem:[%s178 + $0x1900] sm:$0xff] %v1779
                %v1781 = vld [vmem:[%s177 + $0x6408] sm:$0xff]
                %1782 = vst [vmem:[%s178 + $0x1908] sm:$0xff] %v1781
                %v1783 = vld [vmem:[%s177 + $0x6410] sm:$0xff]
                %1784 = vst [vmem:[%s178 + $0x1910] sm:$0xff] %v1783
                %v1785 = vld [vmem:[%s177 + $0x6418] sm:$0xff]
                %1786 = vst [vmem:[%s178 + $0x1918] sm:$0xff] %v1785
                %v1787 = vld [vmem:[%s177 + $0x6480] sm:$0xff]
                %1788 = vst [vmem:[%s178 + $0x1920] sm:$0xff] %v1787
                %v1789 = vld [vmem:[%s177 + $0x6488] sm:$0xff]
                %1790 = vst [vmem:[%s178 + $0x1928] sm:$0xff] %v1789
                %v1791 = vld [vmem:[%s177 + $0x6490] sm:$0xff]
                %1792 = vst [vmem:[%s178 + $0x1930] sm:$0xff] %v1791
                %v1793 = vld [vmem:[%s177 + $0x6498] sm:$0xff]
                %1794 = vst [vmem:[%s178 + $0x1938] sm:$0xff] %v1793
                %v1795 = vld [vmem:[%s177 + $0x6500] sm:$0xff]
                %1796 = vst [vmem:[%s178 + $0x1940] sm:$0xff] %v1795
                %v1797 = vld [vmem:[%s177 + $0x6508] sm:$0xff]
                %1798 = vst [vmem:[%s178 + $0x1948] sm:$0xff] %v1797
                %v1799 = vld [vmem:[%s177 + $0x6510] sm:$0xff]
                %1800 = vst [vmem:[%s178 + $0x1950] sm:$0xff] %v1799
                %v1801 = vld [vmem:[%s177 + $0x6518] sm:$0xff]
                %1802 = vst [vmem:[%s178 + $0x1958] sm:$0xff] %v1801
                %v1803 = vld [vmem:[%s177 + $0x6580] sm:$0xff]
                %1804 = vst [vmem:[%s178 + $0x1960] sm:$0xff] %v1803
                %v1805 = vld [vmem:[%s177 + $0x6588] sm:$0xff]
                %1806 = vst [vmem:[%s178 + $0x1968] sm:$0xff] %v1805
                %v1807 = vld [vmem:[%s177 + $0x6590] sm:$0xff]
                %1808 = vst [vmem:[%s178 + $0x1970] sm:$0xff] %v1807
                %v1809 = vld [vmem:[%s177 + $0x6598] sm:$0xff]
                %1810 = vst [vmem:[%s178 + $0x1978] sm:$0xff] %v1809
                %v1811 = vld [vmem:[%s177 + $0x6600] sm:$0xff]
                %1812 = vst [vmem:[%s178 + $0x1980] sm:$0xff] %v1811
                %v1813 = vld [vmem:[%s177 + $0x6608] sm:$0xff]
                %1814 = vst [vmem:[%s178 + $0x1988] sm:$0xff] %v1813
                %v1815 = vld [vmem:[%s177 + $0x6610] sm:$0xff]
                %1816 = vst [vmem:[%s178 + $0x1990] sm:$0xff] %v1815
                %v1817 = vld [vmem:[%s177 + $0x6618] sm:$0xff]
                %1818 = vst [vmem:[%s178 + $0x1998] sm:$0xff] %v1817
                %v1819 = vld [vmem:[%s177 + $0x6680] sm:$0xff]
                %1820 = vst [vmem:[%s178 + $0x19a0] sm:$0xff] %v1819
                %v1821 = vld [vmem:[%s177 + $0x6688] sm:$0xff]
                %1822 = vst [vmem:[%s178 + $0x19a8] sm:$0xff] %v1821
                %v1823 = vld [vmem:[%s177 + $0x6690] sm:$0xff]
                %1824 = vst [vmem:[%s178 + $0x19b0] sm:$0xff] %v1823
                %v1825 = vld [vmem:[%s177 + $0x6698] sm:$0xff]
                %1826 = vst [vmem:[%s178 + $0x19b8] sm:$0xff] %v1825
                %v1827 = vld [vmem:[%s177 + $0x6700] sm:$0xff]
                %1828 = vst [vmem:[%s178 + $0x19c0] sm:$0xff] %v1827
                %v1829 = vld [vmem:[%s177 + $0x6708] sm:$0xff]
                %1830 = vst [vmem:[%s178 + $0x19c8] sm:$0xff] %v1829
                %v1831 = vld [vmem:[%s177 + $0x6710] sm:$0xff]
                %1832 = vst [vmem:[%s178 + $0x19d0] sm:$0xff] %v1831
                %v1833 = vld [vmem:[%s177 + $0x6718] sm:$0xff]
                %1834 = vst [vmem:[%s178 + $0x19d8] sm:$0xff] %v1833
                %v1835 = vld [vmem:[%s177 + $0x6780] sm:$0xff]
                %1836 = vst [vmem:[%s178 + $0x19e0] sm:$0xff] %v1835
                %v1837 = vld [vmem:[%s177 + $0x6788] sm:$0xff]
                %1838 = vst [vmem:[%s178 + $0x19e8] sm:$0xff] %v1837
                %v1839 = vld [vmem:[%s177 + $0x6790] sm:$0xff]
                %1840 = vst [vmem:[%s178 + $0x19f0] sm:$0xff] %v1839
                %v1841 = vld [vmem:[%s177 + $0x6798] sm:$0xff]
                %1842 = vst [vmem:[%s178 + $0x19f8] sm:$0xff] %v1841
                %v1843 = vld [vmem:[%s177 + $0x6800] sm:$0xff]
                %1844 = vst [vmem:[%s178 + $0x1a00] sm:$0xff] %v1843
                %v1845 = vld [vmem:[%s177 + $0x6808] sm:$0xff]
                %1846 = vst [vmem:[%s178 + $0x1a08] sm:$0xff] %v1845
                %v1847 = vld [vmem:[%s177 + $0x6810] sm:$0xff]
                %1848 = vst [vmem:[%s178 + $0x1a10] sm:$0xff] %v1847
                %v1849 = vld [vmem:[%s177 + $0x6818] sm:$0xff]
                %1850 = vst [vmem:[%s178 + $0x1a18] sm:$0xff] %v1849
                %v1851 = vld [vmem:[%s177 + $0x6880] sm:$0xff]
                %1852 = vst [vmem:[%s178 + $0x1a20] sm:$0xff] %v1851
                %v1853 = vld [vmem:[%s177 + $0x6888] sm:$0xff]
                %1854 = vst [vmem:[%s178 + $0x1a28] sm:$0xff] %v1853
                %v1855 = vld [vmem:[%s177 + $0x6890] sm:$0xff]
                %1856 = vst [vmem:[%s178 + $0x1a30] sm:$0xff] %v1855
                %v1857 = vld [vmem:[%s177 + $0x6898] sm:$0xff]
                %1858 = vst [vmem:[%s178 + $0x1a38] sm:$0xff] %v1857
                %v1859 = vld [vmem:[%s177 + $0x6900] sm:$0xff]
                %1860 = vst [vmem:[%s178 + $0x1a40] sm:$0xff] %v1859
                %v1861 = vld [vmem:[%s177 + $0x6908] sm:$0xff]
                %1862 = vst [vmem:[%s178 + $0x1a48] sm:$0xff] %v1861
                %v1863 = vld [vmem:[%s177 + $0x6910] sm:$0xff]
                %1864 = vst [vmem:[%s178 + $0x1a50] sm:$0xff] %v1863
                %v1865 = vld [vmem:[%s177 + $0x6918] sm:$0xff]
                %1866 = vst [vmem:[%s178 + $0x1a58] sm:$0xff] %v1865
                %v1867 = vld [vmem:[%s177 + $0x6980] sm:$0xff]
                %1868 = vst [vmem:[%s178 + $0x1a60] sm:$0xff] %v1867
                %v1869 = vld [vmem:[%s177 + $0x6988] sm:$0xff]
                %1870 = vst [vmem:[%s178 + $0x1a68] sm:$0xff] %v1869
                %v1871 = vld [vmem:[%s177 + $0x6990] sm:$0xff]
                %1872 = vst [vmem:[%s178 + $0x1a70] sm:$0xff] %v1871
                %v1873 = vld [vmem:[%s177 + $0x6998] sm:$0xff]
                %1874 = vst [vmem:[%s178 + $0x1a78] sm:$0xff] %v1873
                %v1875 = vld [vmem:[%s177 + $0x6a00] sm:$0xff]
                %1876 = vst [vmem:[%s178 + $0x1a80] sm:$0xff] %v1875
                %v1877 = vld [vmem:[%s177 + $0x6a08] sm:$0xff]
                %1878 = vst [vmem:[%s178 + $0x1a88] sm:$0xff] %v1877
                %v1879 = vld [vmem:[%s177 + $0x6a10] sm:$0xff]
                %1880 = vst [vmem:[%s178 + $0x1a90] sm:$0xff] %v1879
                %v1881 = vld [vmem:[%s177 + $0x6a18] sm:$0xff]
                %1882 = vst [vmem:[%s178 + $0x1a98] sm:$0xff] %v1881
                %v1883 = vld [vmem:[%s177 + $0x6a80] sm:$0xff]
                %1884 = vst [vmem:[%s178 + $0x1aa0] sm:$0xff] %v1883
                %v1885 = vld [vmem:[%s177 + $0x6a88] sm:$0xff]
                %1886 = vst [vmem:[%s178 + $0x1aa8] sm:$0xff] %v1885
                %v1887 = vld [vmem:[%s177 + $0x6a90] sm:$0xff]
                %1888 = vst [vmem:[%s178 + $0x1ab0] sm:$0xff] %v1887
                %v1889 = vld [vmem:[%s177 + $0x6a98] sm:$0xff]
                %1890 = vst [vmem:[%s178 + $0x1ab8] sm:$0xff] %v1889
                %v1891 = vld [vmem:[%s177 + $0x6b00] sm:$0xff]
                %1892 = vst [vmem:[%s178 + $0x1ac0] sm:$0xff] %v1891
                %v1893 = vld [vmem:[%s177 + $0x6b08] sm:$0xff]
                %1894 = vst [vmem:[%s178 + $0x1ac8] sm:$0xff] %v1893
                %v1895 = vld [vmem:[%s177 + $0x6b10] sm:$0xff]
                %1896 = vst [vmem:[%s178 + $0x1ad0] sm:$0xff] %v1895
                %v1897 = vld [vmem:[%s177 + $0x6b18] sm:$0xff]
                %1898 = vst [vmem:[%s178 + $0x1ad8] sm:$0xff] %v1897
                %v1899 = vld [vmem:[%s177 + $0x6b80] sm:$0xff]
                %1900 = vst [vmem:[%s178 + $0x1ae0] sm:$0xff] %v1899
                %v1901 = vld [vmem:[%s177 + $0x6b88] sm:$0xff]
                %1902 = vst [vmem:[%s178 + $0x1ae8] sm:$0xff] %v1901
                %v1903 = vld [vmem:[%s177 + $0x6b90] sm:$0xff]
                %1904 = vst [vmem:[%s178 + $0x1af0] sm:$0xff] %v1903
                %v1905 = vld [vmem:[%s177 + $0x6b98] sm:$0xff]
                %1906 = vst [vmem:[%s178 + $0x1af8] sm:$0xff] %v1905
                %v1907 = vld [vmem:[%s177 + $0x6c00] sm:$0xff]
                %1908 = vst [vmem:[%s178 + $0x1b00] sm:$0xff] %v1907
                %v1909 = vld [vmem:[%s177 + $0x6c08] sm:$0xff]
                %1910 = vst [vmem:[%s178 + $0x1b08] sm:$0xff] %v1909
                %v1911 = vld [vmem:[%s177 + $0x6c10] sm:$0xff]
                %1912 = vst [vmem:[%s178 + $0x1b10] sm:$0xff] %v1911
                %v1913 = vld [vmem:[%s177 + $0x6c18] sm:$0xff]
                %1914 = vst [vmem:[%s178 + $0x1b18] sm:$0xff] %v1913
                %v1915 = vld [vmem:[%s177 + $0x6c80] sm:$0xff]
                %1916 = vst [vmem:[%s178 + $0x1b20] sm:$0xff] %v1915
                %v1917 = vld [vmem:[%s177 + $0x6c88] sm:$0xff]
                %1918 = vst [vmem:[%s178 + $0x1b28] sm:$0xff] %v1917
                %v1919 = vld [vmem:[%s177 + $0x6c90] sm:$0xff]
                %1920 = vst [vmem:[%s178 + $0x1b30] sm:$0xff] %v1919
                %v1921 = vld [vmem:[%s177 + $0x6c98] sm:$0xff]
                %1922 = vst [vmem:[%s178 + $0x1b38] sm:$0xff] %v1921
                %v1923 = vld [vmem:[%s177 + $0x6d00] sm:$0xff]
                %1924 = vst [vmem:[%s178 + $0x1b40] sm:$0xff] %v1923
                %v1925 = vld [vmem:[%s177 + $0x6d08] sm:$0xff]
                %1926 = vst [vmem:[%s178 + $0x1b48] sm:$0xff] %v1925
                %v1927 = vld [vmem:[%s177 + $0x6d10] sm:$0xff]
                %1928 = vst [vmem:[%s178 + $0x1b50] sm:$0xff] %v1927
                %v1929 = vld [vmem:[%s177 + $0x6d18] sm:$0xff]
                %1930 = vst [vmem:[%s178 + $0x1b58] sm:$0xff] %v1929
                %v1931 = vld [vmem:[%s177 + $0x6d80] sm:$0xff]
                %1932 = vst [vmem:[%s178 + $0x1b60] sm:$0xff] %v1931
                %v1933 = vld [vmem:[%s177 + $0x6d88] sm:$0xff]
                %1934 = vst [vmem:[%s178 + $0x1b68] sm:$0xff] %v1933
                %v1935 = vld [vmem:[%s177 + $0x6d90] sm:$0xff]
                %1936 = vst [vmem:[%s178 + $0x1b70] sm:$0xff] %v1935
                %v1937 = vld [vmem:[%s177 + $0x6d98] sm:$0xff]
                %1938 = vst [vmem:[%s178 + $0x1b78] sm:$0xff] %v1937
                %v1939 = vld [vmem:[%s177 + $0x6e00] sm:$0xff]
                %1940 = vst [vmem:[%s178 + $0x1b80] sm:$0xff] %v1939
                %v1941 = vld [vmem:[%s177 + $0x6e08] sm:$0xff]
                %1942 = vst [vmem:[%s178 + $0x1b88] sm:$0xff] %v1941
                %v1943 = vld [vmem:[%s177 + $0x6e10] sm:$0xff]
                %1944 = vst [vmem:[%s178 + $0x1b90] sm:$0xff] %v1943
                %v1945 = vld [vmem:[%s177 + $0x6e18] sm:$0xff]
                %1946 = vst [vmem:[%s178 + $0x1b98] sm:$0xff] %v1945
                %v1947 = vld [vmem:[%s177 + $0x6e80] sm:$0xff]
                %1948 = vst [vmem:[%s178 + $0x1ba0] sm:$0xff] %v1947
                %v1949 = vld [vmem:[%s177 + $0x6e88] sm:$0xff]
                %1950 = vst [vmem:[%s178 + $0x1ba8] sm:$0xff] %v1949
                %v1951 = vld [vmem:[%s177 + $0x6e90] sm:$0xff]
                %1952 = vst [vmem:[%s178 + $0x1bb0] sm:$0xff] %v1951
                %v1953 = vld [vmem:[%s177 + $0x6e98] sm:$0xff]
                %1954 = vst [vmem:[%s178 + $0x1bb8] sm:$0xff] %v1953
                %v1955 = vld [vmem:[%s177 + $0x6f00] sm:$0xff]
                %1956 = vst [vmem:[%s178 + $0x1bc0] sm:$0xff] %v1955
                %v1957 = vld [vmem:[%s177 + $0x6f08] sm:$0xff]
                %1958 = vst [vmem:[%s178 + $0x1bc8] sm:$0xff] %v1957
                %v1959 = vld [vmem:[%s177 + $0x6f10] sm:$0xff]
                %1960 = vst [vmem:[%s178 + $0x1bd0] sm:$0xff] %v1959
                %v1961 = vld [vmem:[%s177 + $0x6f18] sm:$0xff]
                %1962 = vst [vmem:[%s178 + $0x1bd8] sm:$0xff] %v1961
                %v1963 = vld [vmem:[%s177 + $0x6f80] sm:$0xff]
                %1964 = vst [vmem:[%s178 + $0x1be0] sm:$0xff] %v1963
                %v1965 = vld [vmem:[%s177 + $0x6f88] sm:$0xff]
                %1966 = vst [vmem:[%s178 + $0x1be8] sm:$0xff] %v1965
                %v1967 = vld [vmem:[%s177 + $0x6f90] sm:$0xff]
                %1968 = vst [vmem:[%s178 + $0x1bf0] sm:$0xff] %v1967
                %v1969 = vld [vmem:[%s177 + $0x6f98] sm:$0xff]
                %1970 = vst [vmem:[%s178 + $0x1bf8] sm:$0xff] %v1969
                %v1971 = vld [vmem:[%s177 + $0x7000] sm:$0xff]
                %1972 = vst [vmem:[%s178 + $0x1c00] sm:$0xff] %v1971
                %v1973 = vld [vmem:[%s177 + $0x7008] sm:$0xff]
                %1974 = vst [vmem:[%s178 + $0x1c08] sm:$0xff] %v1973
                %v1975 = vld [vmem:[%s177 + $0x7010] sm:$0xff]
                %1976 = vst [vmem:[%s178 + $0x1c10] sm:$0xff] %v1975
                %v1977 = vld [vmem:[%s177 + $0x7018] sm:$0xff]
                %1978 = vst [vmem:[%s178 + $0x1c18] sm:$0xff] %v1977
                %v1979 = vld [vmem:[%s177 + $0x7080] sm:$0xff]
                %1980 = vst [vmem:[%s178 + $0x1c20] sm:$0xff] %v1979
                %v1981 = vld [vmem:[%s177 + $0x7088] sm:$0xff]
                %1982 = vst [vmem:[%s178 + $0x1c28] sm:$0xff] %v1981
                %v1983 = vld [vmem:[%s177 + $0x7090] sm:$0xff]
                %1984 = vst [vmem:[%s178 + $0x1c30] sm:$0xff] %v1983
                %v1985 = vld [vmem:[%s177 + $0x7098] sm:$0xff]
                %1986 = vst [vmem:[%s178 + $0x1c38] sm:$0xff] %v1985
                %v1987 = vld [vmem:[%s177 + $0x7100] sm:$0xff]
                %1988 = vst [vmem:[%s178 + $0x1c40] sm:$0xff] %v1987
                %v1989 = vld [vmem:[%s177 + $0x7108] sm:$0xff]
                %1990 = vst [vmem:[%s178 + $0x1c48] sm:$0xff] %v1989
                %v1991 = vld [vmem:[%s177 + $0x7110] sm:$0xff]
                %1992 = vst [vmem:[%s178 + $0x1c50] sm:$0xff] %v1991
                %v1993 = vld [vmem:[%s177 + $0x7118] sm:$0xff]
                %1994 = vst [vmem:[%s178 + $0x1c58] sm:$0xff] %v1993
                %v1995 = vld [vmem:[%s177 + $0x7180] sm:$0xff]
                %1996 = vst [vmem:[%s178 + $0x1c60] sm:$0xff] %v1995
                %v1997 = vld [vmem:[%s177 + $0x7188] sm:$0xff]
                %1998 = vst [vmem:[%s178 + $0x1c68] sm:$0xff] %v1997
                %v1999 = vld [vmem:[%s177 + $0x7190] sm:$0xff]
                %2000 = vst [vmem:[%s178 + $0x1c70] sm:$0xff] %v1999
                %v2001 = vld [vmem:[%s177 + $0x7198] sm:$0xff]
                %2002 = vst [vmem:[%s178 + $0x1c78] sm:$0xff] %v2001
                %v2003 = vld [vmem:[%s177 + $0x7200] sm:$0xff]
                %2004 = vst [vmem:[%s178 + $0x1c80] sm:$0xff] %v2003
                %v2005 = vld [vmem:[%s177 + $0x7208] sm:$0xff]
                %2006 = vst [vmem:[%s178 + $0x1c88] sm:$0xff] %v2005
                %v2007 = vld [vmem:[%s177 + $0x7210] sm:$0xff]
                %2008 = vst [vmem:[%s178 + $0x1c90] sm:$0xff] %v2007
                %v2009 = vld [vmem:[%s177 + $0x7218] sm:$0xff]
                %2010 = vst [vmem:[%s178 + $0x1c98] sm:$0xff] %v2009
                %v2011 = vld [vmem:[%s177 + $0x7280] sm:$0xff]
                %2012 = vst [vmem:[%s178 + $0x1ca0] sm:$0xff] %v2011
                %v2013 = vld [vmem:[%s177 + $0x7288] sm:$0xff]
                %2014 = vst [vmem:[%s178 + $0x1ca8] sm:$0xff] %v2013
                %v2015 = vld [vmem:[%s177 + $0x7290] sm:$0xff]
                %2016 = vst [vmem:[%s178 + $0x1cb0] sm:$0xff] %v2015
                %v2017 = vld [vmem:[%s177 + $0x7298] sm:$0xff]
                %2018 = vst [vmem:[%s178 + $0x1cb8] sm:$0xff] %v2017
                %v2019 = vld [vmem:[%s177 + $0x7300] sm:$0xff]
                %2020 = vst [vmem:[%s178 + $0x1cc0] sm:$0xff] %v2019
                %v2021 = vld [vmem:[%s177 + $0x7308] sm:$0xff]
                %2022 = vst [vmem:[%s178 + $0x1cc8] sm:$0xff] %v2021
                %v2023 = vld [vmem:[%s177 + $0x7310] sm:$0xff]
                %2024 = vst [vmem:[%s178 + $0x1cd0] sm:$0xff] %v2023
                %v2025 = vld [vmem:[%s177 + $0x7318] sm:$0xff]
                %2026 = vst [vmem:[%s178 + $0x1cd8] sm:$0xff] %v2025
                %v2027 = vld [vmem:[%s177 + $0x7380] sm:$0xff]
                %2028 = vst [vmem:[%s178 + $0x1ce0] sm:$0xff] %v2027
                %v2029 = vld [vmem:[%s177 + $0x7388] sm:$0xff]
                %2030 = vst [vmem:[%s178 + $0x1ce8] sm:$0xff] %v2029
                %v2031 = vld [vmem:[%s177 + $0x7390] sm:$0xff]
                %2032 = vst [vmem:[%s178 + $0x1cf0] sm:$0xff] %v2031
                %v2033 = vld [vmem:[%s177 + $0x7398] sm:$0xff]
                %2034 = vst [vmem:[%s178 + $0x1cf8] sm:$0xff] %v2033
                %v2035 = vld [vmem:[%s177 + $0x7400] sm:$0xff]
                %2036 = vst [vmem:[%s178 + $0x1d00] sm:$0xff] %v2035
                %v2037 = vld [vmem:[%s177 + $0x7408] sm:$0xff]
                %2038 = vst [vmem:[%s178 + $0x1d08] sm:$0xff] %v2037
                %v2039 = vld [vmem:[%s177 + $0x7410] sm:$0xff]
                %2040 = vst [vmem:[%s178 + $0x1d10] sm:$0xff] %v2039
                %v2041 = vld [vmem:[%s177 + $0x7418] sm:$0xff]
                %2042 = vst [vmem:[%s178 + $0x1d18] sm:$0xff] %v2041
                %v2043 = vld [vmem:[%s177 + $0x7480] sm:$0xff]
                %2044 = vst [vmem:[%s178 + $0x1d20] sm:$0xff] %v2043
                %v2045 = vld [vmem:[%s177 + $0x7488] sm:$0xff]
                %2046 = vst [vmem:[%s178 + $0x1d28] sm:$0xff] %v2045
                %v2047 = vld [vmem:[%s177 + $0x7490] sm:$0xff]
                %2048 = vst [vmem:[%s178 + $0x1d30] sm:$0xff] %v2047
                %v2049 = vld [vmem:[%s177 + $0x7498] sm:$0xff]
                %2050 = vst [vmem:[%s178 + $0x1d38] sm:$0xff] %v2049
                %v2051 = vld [vmem:[%s177 + $0x7500] sm:$0xff]
                %2052 = vst [vmem:[%s178 + $0x1d40] sm:$0xff] %v2051
                %v2053 = vld [vmem:[%s177 + $0x7508] sm:$0xff]
                %2054 = vst [vmem:[%s178 + $0x1d48] sm:$0xff] %v2053
                %v2055 = vld [vmem:[%s177 + $0x7510] sm:$0xff]
                %2056 = vst [vmem:[%s178 + $0x1d50] sm:$0xff] %v2055
                %v2057 = vld [vmem:[%s177 + $0x7518] sm:$0xff]
                %2058 = vst [vmem:[%s178 + $0x1d58] sm:$0xff] %v2057
                %v2059 = vld [vmem:[%s177 + $0x7580] sm:$0xff]
                %2060 = vst [vmem:[%s178 + $0x1d60] sm:$0xff] %v2059
                %v2061 = vld [vmem:[%s177 + $0x7588] sm:$0xff]
                %2062 = vst [vmem:[%s178 + $0x1d68] sm:$0xff] %v2061
                %v2063 = vld [vmem:[%s177 + $0x7590] sm:$0xff]
                %2064 = vst [vmem:[%s178 + $0x1d70] sm:$0xff] %v2063
                %v2065 = vld [vmem:[%s177 + $0x7598] sm:$0xff]
                %2066 = vst [vmem:[%s178 + $0x1d78] sm:$0xff] %v2065
                %v2067 = vld [vmem:[%s177 + $0x7600] sm:$0xff]
                %2068 = vst [vmem:[%s178 + $0x1d80] sm:$0xff] %v2067
                %v2069 = vld [vmem:[%s177 + $0x7608] sm:$0xff]
                %2070 = vst [vmem:[%s178 + $0x1d88] sm:$0xff] %v2069
                %v2071 = vld [vmem:[%s177 + $0x7610] sm:$0xff]
                %2072 = vst [vmem:[%s178 + $0x1d90] sm:$0xff] %v2071
                %v2073 = vld [vmem:[%s177 + $0x7618] sm:$0xff]
                %2074 = vst [vmem:[%s178 + $0x1d98] sm:$0xff] %v2073
                %v2075 = vld [vmem:[%s177 + $0x7680] sm:$0xff]
                %2076 = vst [vmem:[%s178 + $0x1da0] sm:$0xff] %v2075
                %v2077 = vld [vmem:[%s177 + $0x7688] sm:$0xff]
                %2078 = vst [vmem:[%s178 + $0x1da8] sm:$0xff] %v2077
                %v2079 = vld [vmem:[%s177 + $0x7690] sm:$0xff]
                %2080 = vst [vmem:[%s178 + $0x1db0] sm:$0xff] %v2079
                %v2081 = vld [vmem:[%s177 + $0x7698] sm:$0xff]
                %2082 = vst [vmem:[%s178 + $0x1db8] sm:$0xff] %v2081
                %v2083 = vld [vmem:[%s177 + $0x7700] sm:$0xff]
                %2084 = vst [vmem:[%s178 + $0x1dc0] sm:$0xff] %v2083
                %v2085 = vld [vmem:[%s177 + $0x7708] sm:$0xff]
                %2086 = vst [vmem:[%s178 + $0x1dc8] sm:$0xff] %v2085
                %v2087 = vld [vmem:[%s177 + $0x7710] sm:$0xff]
                %2088 = vst [vmem:[%s178 + $0x1dd0] sm:$0xff] %v2087
                %v2089 = vld [vmem:[%s177 + $0x7718] sm:$0xff]
                %2090 = vst [vmem:[%s178 + $0x1dd8] sm:$0xff] %v2089
                %v2091 = vld [vmem:[%s177 + $0x7780] sm:$0xff]
                %2092 = vst [vmem:[%s178 + $0x1de0] sm:$0xff] %v2091
                %v2093 = vld [vmem:[%s177 + $0x7788] sm:$0xff]
                %2094 = vst [vmem:[%s178 + $0x1de8] sm:$0xff] %v2093
                %v2095 = vld [vmem:[%s177 + $0x7790] sm:$0xff]
                %2096 = vst [vmem:[%s178 + $0x1df0] sm:$0xff] %v2095
                %v2097 = vld [vmem:[%s177 + $0x7798] sm:$0xff]
                %2098 = vst [vmem:[%s178 + $0x1df8] sm:$0xff] %v2097
                %v2099 = vld [vmem:[%s177 + $0x7800] sm:$0xff]
                %2100 = vst [vmem:[%s178 + $0x1e00] sm:$0xff] %v2099
                %v2101 = vld [vmem:[%s177 + $0x7808] sm:$0xff]
                %2102 = vst [vmem:[%s178 + $0x1e08] sm:$0xff] %v2101
                %v2103 = vld [vmem:[%s177 + $0x7810] sm:$0xff]
                %2104 = vst [vmem:[%s178 + $0x1e10] sm:$0xff] %v2103
                %v2105 = vld [vmem:[%s177 + $0x7818] sm:$0xff]
                %2106 = vst [vmem:[%s178 + $0x1e18] sm:$0xff] %v2105
                %v2107 = vld [vmem:[%s177 + $0x7880] sm:$0xff]
                %2108 = vst [vmem:[%s178 + $0x1e20] sm:$0xff] %v2107
                %v2109 = vld [vmem:[%s177 + $0x7888] sm:$0xff]
                %2110 = vst [vmem:[%s178 + $0x1e28] sm:$0xff] %v2109
                %v2111 = vld [vmem:[%s177 + $0x7890] sm:$0xff]
                %2112 = vst [vmem:[%s178 + $0x1e30] sm:$0xff] %v2111
                %v2113 = vld [vmem:[%s177 + $0x7898] sm:$0xff]
                %2114 = vst [vmem:[%s178 + $0x1e38] sm:$0xff] %v2113
                %v2115 = vld [vmem:[%s177 + $0x7900] sm:$0xff]
                %2116 = vst [vmem:[%s178 + $0x1e40] sm:$0xff] %v2115
                %v2117 = vld [vmem:[%s177 + $0x7908] sm:$0xff]
                %2118 = vst [vmem:[%s178 + $0x1e48] sm:$0xff] %v2117
                %v2119 = vld [vmem:[%s177 + $0x7910] sm:$0xff]
                %2120 = vst [vmem:[%s178 + $0x1e50] sm:$0xff] %v2119
                %v2121 = vld [vmem:[%s177 + $0x7918] sm:$0xff]
                %2122 = vst [vmem:[%s178 + $0x1e58] sm:$0xff] %v2121
                %v2123 = vld [vmem:[%s177 + $0x7980] sm:$0xff]
                %2124 = vst [vmem:[%s178 + $0x1e60] sm:$0xff] %v2123
                %v2125 = vld [vmem:[%s177 + $0x7988] sm:$0xff]
                %2126 = vst [vmem:[%s178 + $0x1e68] sm:$0xff] %v2125
                %v2127 = vld [vmem:[%s177 + $0x7990] sm:$0xff]
                %2128 = vst [vmem:[%s178 + $0x1e70] sm:$0xff] %v2127
                %v2129 = vld [vmem:[%s177 + $0x7998] sm:$0xff]
                %2130 = vst [vmem:[%s178 + $0x1e78] sm:$0xff] %v2129
                %v2131 = vld [vmem:[%s177 + $0x7a00] sm:$0xff]
                %2132 = vst [vmem:[%s178 + $0x1e80] sm:$0xff] %v2131
                %v2133 = vld [vmem:[%s177 + $0x7a08] sm:$0xff]
                %2134 = vst [vmem:[%s178 + $0x1e88] sm:$0xff] %v2133
                %v2135 = vld [vmem:[%s177 + $0x7a10] sm:$0xff]
                %2136 = vst [vmem:[%s178 + $0x1e90] sm:$0xff] %v2135
                %v2137 = vld [vmem:[%s177 + $0x7a18] sm:$0xff]
                %2138 = vst [vmem:[%s178 + $0x1e98] sm:$0xff] %v2137
                %v2139 = vld [vmem:[%s177 + $0x7a80] sm:$0xff]
                %2140 = vst [vmem:[%s178 + $0x1ea0] sm:$0xff] %v2139
                %v2141 = vld [vmem:[%s177 + $0x7a88] sm:$0xff]
                %2142 = vst [vmem:[%s178 + $0x1ea8] sm:$0xff] %v2141
                %v2143 = vld [vmem:[%s177 + $0x7a90] sm:$0xff]
                %2144 = vst [vmem:[%s178 + $0x1eb0] sm:$0xff] %v2143
                %v2145 = vld [vmem:[%s177 + $0x7a98] sm:$0xff]
                %2146 = vst [vmem:[%s178 + $0x1eb8] sm:$0xff] %v2145
                %v2147 = vld [vmem:[%s177 + $0x7b00] sm:$0xff]
                %2148 = vst [vmem:[%s178 + $0x1ec0] sm:$0xff] %v2147
                %v2149 = vld [vmem:[%s177 + $0x7b08] sm:$0xff]
                %2150 = vst [vmem:[%s178 + $0x1ec8] sm:$0xff] %v2149
                %v2151 = vld [vmem:[%s177 + $0x7b10] sm:$0xff]
                %2152 = vst [vmem:[%s178 + $0x1ed0] sm:$0xff] %v2151
                %v2153 = vld [vmem:[%s177 + $0x7b18] sm:$0xff]
                %2154 = vst [vmem:[%s178 + $0x1ed8] sm:$0xff] %v2153
                %v2155 = vld [vmem:[%s177 + $0x7b80] sm:$0xff]
                %2156 = vst [vmem:[%s178 + $0x1ee0] sm:$0xff] %v2155
                %v2157 = vld [vmem:[%s177 + $0x7b88] sm:$0xff]
                %2158 = vst [vmem:[%s178 + $0x1ee8] sm:$0xff] %v2157
                %v2159 = vld [vmem:[%s177 + $0x7b90] sm:$0xff]
                %2160 = vst [vmem:[%s178 + $0x1ef0] sm:$0xff] %v2159
                %v2161 = vld [vmem:[%s177 + $0x7b98] sm:$0xff]
                %2162 = vst [vmem:[%s178 + $0x1ef8] sm:$0xff] %v2161
                %v2163 = vld [vmem:[%s177 + $0x7c00] sm:$0xff]
                %2164 = vst [vmem:[%s178 + $0x1f00] sm:$0xff] %v2163
                %v2165 = vld [vmem:[%s177 + $0x7c08] sm:$0xff]
                %2166 = vst [vmem:[%s178 + $0x1f08] sm:$0xff] %v2165
                %v2167 = vld [vmem:[%s177 + $0x7c10] sm:$0xff]
                %2168 = vst [vmem:[%s178 + $0x1f10] sm:$0xff] %v2167
                %v2169 = vld [vmem:[%s177 + $0x7c18] sm:$0xff]
                %2170 = vst [vmem:[%s178 + $0x1f18] sm:$0xff] %v2169
                %v2171 = vld [vmem:[%s177 + $0x7c80] sm:$0xff]
                %2172 = vst [vmem:[%s178 + $0x1f20] sm:$0xff] %v2171
                %v2173 = vld [vmem:[%s177 + $0x7c88] sm:$0xff]
                %2174 = vst [vmem:[%s178 + $0x1f28] sm:$0xff] %v2173
                %v2175 = vld [vmem:[%s177 + $0x7c90] sm:$0xff]
                %2176 = vst [vmem:[%s178 + $0x1f30] sm:$0xff] %v2175
                %v2177 = vld [vmem:[%s177 + $0x7c98] sm:$0xff]
                %2178 = vst [vmem:[%s178 + $0x1f38] sm:$0xff] %v2177
                %v2179 = vld [vmem:[%s177 + $0x7d00] sm:$0xff]
                %2180 = vst [vmem:[%s178 + $0x1f40] sm:$0xff] %v2179
                %v2181 = vld [vmem:[%s177 + $0x7d08] sm:$0xff]
                %2182 = vst [vmem:[%s178 + $0x1f48] sm:$0xff] %v2181
                %v2183 = vld [vmem:[%s177 + $0x7d10] sm:$0xff]
                %2184 = vst [vmem:[%s178 + $0x1f50] sm:$0xff] %v2183
                %v2185 = vld [vmem:[%s177 + $0x7d18] sm:$0xff]
                %2186 = vst [vmem:[%s178 + $0x1f58] sm:$0xff] %v2185
                %v2187 = vld [vmem:[%s177 + $0x7d80] sm:$0xff]
                %2188 = vst [vmem:[%s178 + $0x1f60] sm:$0xff] %v2187
                %v2189 = vld [vmem:[%s177 + $0x7d88] sm:$0xff]
                %2190 = vst [vmem:[%s178 + $0x1f68] sm:$0xff] %v2189
                %v2191 = vld [vmem:[%s177 + $0x7d90] sm:$0xff]
                %2192 = vst [vmem:[%s178 + $0x1f70] sm:$0xff] %v2191
                %v2193 = vld [vmem:[%s177 + $0x7d98] sm:$0xff]
                %2194 = vst [vmem:[%s178 + $0x1f78] sm:$0xff] %v2193
                %v2195 = vld [vmem:[%s177 + $0x7e00] sm:$0xff]
                %2196 = vst [vmem:[%s178 + $0x1f80] sm:$0xff] %v2195
                %v2197 = vld [vmem:[%s177 + $0x7e08] sm:$0xff]
                %2198 = vst [vmem:[%s178 + $0x1f88] sm:$0xff] %v2197
                %v2199 = vld [vmem:[%s177 + $0x7e10] sm:$0xff]
                %2200 = vst [vmem:[%s178 + $0x1f90] sm:$0xff] %v2199
                %v2201 = vld [vmem:[%s177 + $0x7e18] sm:$0xff]
                %2202 = vst [vmem:[%s178 + $0x1f98] sm:$0xff] %v2201
                %v2203 = vld [vmem:[%s177 + $0x7e80] sm:$0xff]
                %2204 = vst [vmem:[%s178 + $0x1fa0] sm:$0xff] %v2203
                %v2205 = vld [vmem:[%s177 + $0x7e88] sm:$0xff]
                %2206 = vst [vmem:[%s178 + $0x1fa8] sm:$0xff] %v2205
                %v2207 = vld [vmem:[%s177 + $0x7e90] sm:$0xff]
                %2208 = vst [vmem:[%s178 + $0x1fb0] sm:$0xff] %v2207
                %v2209 = vld [vmem:[%s177 + $0x7e98] sm:$0xff]
                %2210 = vst [vmem:[%s178 + $0x1fb8] sm:$0xff] %v2209
                %v2211 = vld [vmem:[%s177 + $0x7f00] sm:$0xff]
                %2212 = vst [vmem:[%s178 + $0x1fc0] sm:$0xff] %v2211
                %v2213 = vld [vmem:[%s177 + $0x7f08] sm:$0xff]
                %2214 = vst [vmem:[%s178 + $0x1fc8] sm:$0xff] %v2213
                %v2215 = vld [vmem:[%s177 + $0x7f10] sm:$0xff]
                %2216 = vst [vmem:[%s178 + $0x1fd0] sm:$0xff] %v2215
                %v2217 = vld [vmem:[%s177 + $0x7f18] sm:$0xff]
                %2218 = vst [vmem:[%s178 + $0x1fd8] sm:$0xff] %v2217
                %v2219 = vld [vmem:[%s177 + $0x7f80] sm:$0xff]
                %2220 = vst [vmem:[%s178 + $0x1fe0] sm:$0xff] %v2219
                %v2221 = vld [vmem:[%s177 + $0x7f88] sm:$0xff]
                %2222 = vst [vmem:[%s178 + $0x1fe8] sm:$0xff] %v2221
                %v2223 = vld [vmem:[%s177 + $0x7f90] sm:$0xff]
                %2224 = vst [vmem:[%s178 + $0x1ff0] sm:$0xff] %v2223
                %v2225 = vld [vmem:[%s177 + $0x7f98] sm:$0xff]
                %2226 = vst [vmem:[%s178 + $0x1ff8] sm:$0xff] %v2225
              $region37: #{attribute_classifier_forward.3} parent=31 // loop_footer
                %s176 = sadd.s32 1, %s172
              $region38: #{attribute_classifier_forward.3} parent=31 // loop_footer_branch
                %171 = sbr.rel target = $region34
              $region39: #{attribute_classifier_forward.3} parent=31 // loop_exit
                _
            $region32: #{attribute_classifier_forward.3} parent=27 // pred_fallthru
              _
            // Predicated region
            $region40: #{attribute_classifier_forward.3} parent=27 // pred_check
              _
            $region41: #{attribute_classifier_forward.3} parent=27 // pred_check_branch
              %2228 = sbr.rel target = $region43
            $region42: #{attribute_classifier_forward.3} parent=27 // pred_region
              _
            $region43: #{attribute_classifier_forward.3} parent=27 // pred_fallthru
              _
          $region28: #{attribute_classifier_forward.3} parent=23 // pred_fallthru
            _
          %2229 = vnop
        $region24: #{attribute_classifier_forward.3} parent=19 // pred_fallthru
          _
        // Predicated region
        $region44: #{attribute_classifier_forward.3} parent=19 // pred_check
          %p2230 = pneg %p77
        $region45: #{attribute_classifier_forward.3} parent=19 // pred_check_branch
          %2232 = sbr.rel (%p2230) target = $region47
        $region46: #{attribute_classifier_forward.3} parent=19 // pred_region
          %s2233 = smul.u32 4, %s10
          %p2234 = scmp.lt.s32.totalorder %s2233, 15
          %s2235 = scalar_select %p2234, %s2233, 15
          %s2236 = scalar_lea.vmem %s2, %s2235
          %s2237 = smul.u32 4, %s10
        $region47: #{attribute_classifier_forward.3} parent=19 // pred_fallthru
          _
        // Predicated region
        $region48: #{attribute_classifier_forward.3} parent=19 // pred_check
          %p2238 = pneg %p103
        $region49: #{attribute_classifier_forward.3} parent=19 // pred_check_branch
          %2240 = sbr.rel (%p2238) target = $region51
        $region50: #{attribute_classifier_forward.3} parent=19 // pred_region
          %s2241 = smul.u32 64, %s10
          %p2242 = scmp.lt.s32.totalorder %s2241, 255
          %s2243 = scalar_select %p2242, %s2241, 255
          %s2244 = smul.addr %s2243, 8
          %s2245 = scalar_lea.vmem %s3, %s2244
          %s2246 = smul.u32 64, %s10
        $region51: #{attribute_classifier_forward.3} parent=19 // pred_fallthru
          _
      $region20: #{attribute_classifier_forward.3} parent=5 // pred_fallthru
        _
      %p2247 = scmp.le.s32.totalorder 1, %s10
      %p2248 = scmp.lt.s32.totalorder %s10, 5
      %p2249 = pnand %p2247, %p2248
      %p2250 = pneg %p2249
      // Predicated region
      $region52: #{attribute_classifier_forward.3} parent=5 // pred_check
        _
      $region53: #{attribute_classifier_forward.3} parent=5 // pred_check_branch
        %2252 = sbr.rel (%p2249) target = $region55
      $region54: #{attribute_classifier_forward.3} parent=5 // pred_region
        %s2253 = ssub.s32 %s10, 1
        %s2254 = sand.u32 %s44, 1
        %s2255 = sand.u32 %s44, 1
        %s2256 = smul.addr %s2255, 8192
        %s2257 = scalar_lea.vmem [#allocation2], %s2256
        // Predicated region
        $region56: #{attribute_classifier_forward.3} parent=54 // pred_check
          %p2258 = pneg %p57
        $region57: #{attribute_classifier_forward.3} parent=54 // pred_check_branch
          %2260 = sbr.rel (%p2258) target = $region59
        $region58: #{attribute_classifier_forward.3} parent=54 // pred_region
          _
        $region59: #{attribute_classifier_forward.3} parent=54 // pred_fallthru
          _
        %p2261 = pneg %p31
        %p2262 = pneg %p28
        %s2263 = sand.u32 %s44, 1
        %s2264 = sand.u32 %s44, 1
        %s2265 = smul.addr %s2264, 8192
        %s2266 = scalar_lea.vmem [#allocation2], %s2265
        %p2267 = pneg %p57
        %p2268 = pneg %p54
        %s2269 = smul.u32 4, %s15
        %p2270 = scmp.lt.s32.totalorder %s2269, 15
        %s2271 = scalar_select %p2270, %s2269, 15
        %s2272 = scalar_lea.vmem %s2, %s2271
        %p2273 = pneg %p83
        %p2274 = pneg %p80
        %s2275 = smul.u32 64, %s15
        %p2276 = scmp.lt.s32.totalorder %s2275, 255
        %s2277 = scalar_select %p2276, %s2275, 255
        %s2278 = smul.addr %s2277, 8
        %s2279 = scalar_lea.vmem %s3, %s2278
        %p2280 = pneg %p109
        %p2281 = pneg %p106
        %p2282 = pneg %p135
        %p2283 = pneg %p132
        %p2284 = scmp.lt.s32.totalorder %s15, 3
        %s2285 = scalar_select %p2284, %s15, 3
        %s2286 = smul.addr %s2285, 8
        %s2287 = scalar_lea.vmem %s4, %s2286
        %s2288 = smul.u32 4, %s15
        %s2289 = smul.u32 4, %s15
        %p2290 = scmp.lt.s32.totalorder %s2289, 15
        %s2291 = scalar_select %p2290, %s2289, 15
        %s2292 = scalar_lea.vmem %s2, %s2291
        %s2293 = smul.u32 4, %s15
        %s2294 = smul.u32 64, %s15
        %p2295 = scmp.lt.s32.totalorder %s2294, 255
        %s2296 = scalar_select %p2295, %s2294, 255
        %s2297 = smul.addr %s2296, 8
        %s2298 = scalar_lea.vmem %s3, %s2297
        %s2299 = smul.u32 64, %s15
        %p2300 = scmp.lt.s32.totalorder %s15, 3
        %s2301 = scalar_select %p2300, %s15, 3
        %s2302 = smul.addr %s2301, 8
        %s2303 = scalar_lea.vmem %s4, %s2302
        %v2304 = vld [vmem:[%s0] sm:$0xff]
        %v2305 = vld [vmem:[%s0 + $0x8] sm:$0xff]
        %v2306 = vld [vmem:[%s0 + $0x10] sm:$0xff]
        %v2307 = vld [vmem:[%s0 + $0x18] sm:$0xff]
        %v2308 = vld [vmem:[%s0 + $0x20] sm:$0xff]
        %v2309 = vld [vmem:[%s0 + $0x28] sm:$0xff]
        %v2310 = vld [vmem:[%s0 + $0x30] sm:$0xff]
        %v2311 = vld [vmem:[%s0 + $0x38] sm:$0xff]
        %v2312 = vld [vmem:[%s0 + $0x40] sm:$0xff]
        %v2313 = vld [vmem:[%s0 + $0x48] sm:$0xff]
        %v2314 = vld [vmem:[%s0 + $0x50] sm:$0xff]
        %v2315 = vld [vmem:[%s0 + $0x58] sm:$0xff]
        %v2316 = vld [vmem:[%s0 + $0x60] sm:$0xff]
        %v2317 = vld [vmem:[%s0 + $0x68] sm:$0xff]
        %v2318 = vld [vmem:[%s0 + $0x70] sm:$0xff]
        %v2319 = vld [vmem:[%s0 + $0x78] sm:$0xff]
        %v2320 = vld [vmem:[%s2257] sm:$0xff]
        %v2321 = vld [vmem:[%s2257 + $0x8] sm:$0xff]
        %v2322 = vld [vmem:[%s2257 + $0x10] sm:$0xff]
        %v2323 = vld [vmem:[%s2257 + $0x18] sm:$0xff]
        %v2324 = vld [vmem:[%s2257 + $0x20] sm:$0xff]
        %v2325 = vld [vmem:[%s2257 + $0x28] sm:$0xff]
        %v2326 = vld [vmem:[%s2257 + $0x30] sm:$0xff]
        %v2327 = vld [vmem:[%s2257 + $0x38] sm:$0xff]
        %v2328 = vld [vmem:[%s2257 + $0x40] sm:$0xff]
        %v2329 = vld [vmem:[%s2257 + $0x48] sm:$0xff]
        %v2330 = vld [vmem:[%s2257 + $0x50] sm:$0xff]
        %v2331 = vld [vmem:[%s2257 + $0x58] sm:$0xff]
        %v2332 = vld [vmem:[%s2257 + $0x60] sm:$0xff]
        %v2333 = vld [vmem:[%s2257 + $0x68] sm:$0xff]
        %v2334 = vld [vmem:[%s2257 + $0x70] sm:$0xff]
        %v2335 = vld [vmem:[%s2257 + $0x78] sm:$0xff]
        %v2336 = vld [vmem:[%s2257 + $0x80] sm:$0xff]
        %v2337 = vld [vmem:[%s2257 + $0x88] sm:$0xff]
        %v2338 = vld [vmem:[%s2257 + $0x90] sm:$0xff]
        %v2339 = vld [vmem:[%s2257 + $0x98] sm:$0xff]
        %v2340 = vld [vmem:[%s2257 + $0xa0] sm:$0xff]
        %v2341 = vld [vmem:[%s2257 + $0xa8] sm:$0xff]
        %v2342 = vld [vmem:[%s2257 + $0xb0] sm:$0xff]
        %v2343 = vld [vmem:[%s2257 + $0xb8] sm:$0xff]
        %v2344 = vld [vmem:[%s2257 + $0xc0] sm:$0xff]
        %v2345 = vld [vmem:[%s2257 + $0xc8] sm:$0xff]
        %v2346 = vld [vmem:[%s2257 + $0xd0] sm:$0xff]
        %v2347 = vld [vmem:[%s2257 + $0xd8] sm:$0xff]
        %v2348 = vld [vmem:[%s2257 + $0xe0] sm:$0xff]
        %v2349 = vld [vmem:[%s2257 + $0xe8] sm:$0xff]
        %v2350 = vld [vmem:[%s2257 + $0xf0] sm:$0xff]
        %v2351 = vld [vmem:[%s2257 + $0xf8] sm:$0xff]
        %v2352 = vld [vmem:[%s2257 + $0x100] sm:$0xff]
        %v2353 = vld [vmem:[%s2257 + $0x108] sm:$0xff]
        %v2354 = vld [vmem:[%s2257 + $0x110] sm:$0xff]
        %v2355 = vld [vmem:[%s2257 + $0x118] sm:$0xff]
        %v2356 = vld [vmem:[%s2257 + $0x120] sm:$0xff]
        %v2357 = vld [vmem:[%s2257 + $0x128] sm:$0xff]
        %v2358 = vld [vmem:[%s2257 + $0x130] sm:$0xff]
        %v2359 = vld [vmem:[%s2257 + $0x138] sm:$0xff]
        %v2360 = vld [vmem:[%s2257 + $0x140] sm:$0xff]
        %v2361 = vld [vmem:[%s2257 + $0x148] sm:$0xff]
        %v2362 = vld [vmem:[%s2257 + $0x150] sm:$0xff]
        %v2363 = vld [vmem:[%s2257 + $0x158] sm:$0xff]
        %v2364 = vld [vmem:[%s2257 + $0x160] sm:$0xff]
        %v2365 = vld [vmem:[%s2257 + $0x168] sm:$0xff]
        %v2366 = vld [vmem:[%s2257 + $0x170] sm:$0xff]
        %v2367 = vld [vmem:[%s2257 + $0x178] sm:$0xff]
        %v2368 = vld [vmem:[%s2257 + $0x180] sm:$0xff]
        %v2369 = vld [vmem:[%s2257 + $0x188] sm:$0xff]
        %v2370 = vld [vmem:[%s2257 + $0x190] sm:$0xff]
        %v2371 = vld [vmem:[%s2257 + $0x198] sm:$0xff]
        %v2372 = vld [vmem:[%s2257 + $0x1a0] sm:$0xff]
        %v2373 = vld [vmem:[%s2257 + $0x1a8] sm:$0xff]
        %v2374 = vld [vmem:[%s2257 + $0x1b0] sm:$0xff]
        %v2375 = vld [vmem:[%s2257 + $0x1b8] sm:$0xff]
        %v2376 = vld [vmem:[%s2257 + $0x1c0] sm:$0xff]
        %v2377 = vld [vmem:[%s2257 + $0x1c8] sm:$0xff]
        %v2378 = vld [vmem:[%s2257 + $0x1d0] sm:$0xff]
        %v2379 = vld [vmem:[%s2257 + $0x1d8] sm:$0xff]
        %v2380 = vld [vmem:[%s2257 + $0x1e0] sm:$0xff]
        %v2381 = vld [vmem:[%s2257 + $0x1e8] sm:$0xff]
        %v2382 = vld [vmem:[%s2257 + $0x1f0] sm:$0xff]
        %v2383 = vld [vmem:[%s2257 + $0x1f8] sm:$0xff]
        %v2384 = vld [vmem:[%s2257 + $0x200] sm:$0xff]
        %v2385 = vld [vmem:[%s2257 + $0x208] sm:$0xff]
        %v2386 = vld [vmem:[%s2257 + $0x210] sm:$0xff]
        %v2387 = vld [vmem:[%s2257 + $0x218] sm:$0xff]
        %v2388 = vld [vmem:[%s2257 + $0x220] sm:$0xff]
        %v2389 = vld [vmem:[%s2257 + $0x228] sm:$0xff]
        %v2390 = vld [vmem:[%s2257 + $0x230] sm:$0xff]
        %v2391 = vld [vmem:[%s2257 + $0x238] sm:$0xff]
        %v2392 = vld [vmem:[%s2257 + $0x240] sm:$0xff]
        %v2393 = vld [vmem:[%s2257 + $0x248] sm:$0xff]
        %v2394 = vld [vmem:[%s2257 + $0x250] sm:$0xff]
        %v2395 = vld [vmem:[%s2257 + $0x258] sm:$0xff]
        %v2396 = vld [vmem:[%s2257 + $0x260] sm:$0xff]
        %v2397 = vld [vmem:[%s2257 + $0x268] sm:$0xff]
        %v2398 = vld [vmem:[%s2257 + $0x270] sm:$0xff]
        %v2399 = vld [vmem:[%s2257 + $0x278] sm:$0xff]
        %v2400 = vld [vmem:[%s2257 + $0x280] sm:$0xff]
        %v2401 = vld [vmem:[%s2257 + $0x288] sm:$0xff]
        %v2402 = vld [vmem:[%s2257 + $0x290] sm:$0xff]
        %v2403 = vld [vmem:[%s2257 + $0x298] sm:$0xff]
        %v2404 = vld [vmem:[%s2257 + $0x2a0] sm:$0xff]
        %v2405 = vld [vmem:[%s2257 + $0x2a8] sm:$0xff]
        %v2406 = vld [vmem:[%s2257 + $0x2b0] sm:$0xff]
        %v2407 = vld [vmem:[%s2257 + $0x2b8] sm:$0xff]
        %v2408 = vld [vmem:[%s2257 + $0x2c0] sm:$0xff]
        %v2409 = vld [vmem:[%s2257 + $0x2c8] sm:$0xff]
        %v2410 = vld [vmem:[%s2257 + $0x2d0] sm:$0xff]
        %v2411 = vld [vmem:[%s2257 + $0x2d8] sm:$0xff]
        %v2412 = vld [vmem:[%s2257 + $0x2e0] sm:$0xff]
        %v2413 = vld [vmem:[%s2257 + $0x2e8] sm:$0xff]
        %v2414 = vld [vmem:[%s2257 + $0x2f0] sm:$0xff]
        %v2415 = vld [vmem:[%s2257 + $0x2f8] sm:$0xff]
        %v2416 = vld [vmem:[%s2257 + $0x300] sm:$0xff]
        %v2417 = vld [vmem:[%s2257 + $0x308] sm:$0xff]
        %v2418 = vld [vmem:[%s2257 + $0x310] sm:$0xff]
        %v2419 = vld [vmem:[%s2257 + $0x318] sm:$0xff]
        %v2420 = vld [vmem:[%s2257 + $0x320] sm:$0xff]
        %v2421 = vld [vmem:[%s2257 + $0x328] sm:$0xff]
        %v2422 = vld [vmem:[%s2257 + $0x330] sm:$0xff]
        %v2423 = vld [vmem:[%s2257 + $0x338] sm:$0xff]
        %v2424 = vld [vmem:[%s2257 + $0x340] sm:$0xff]
        %v2425 = vld [vmem:[%s2257 + $0x348] sm:$0xff]
        %v2426 = vld [vmem:[%s2257 + $0x350] sm:$0xff]
        %v2427 = vld [vmem:[%s2257 + $0x358] sm:$0xff]
        %v2428 = vld [vmem:[%s2257 + $0x360] sm:$0xff]
        %v2429 = vld [vmem:[%s2257 + $0x368] sm:$0xff]
        %v2430 = vld [vmem:[%s2257 + $0x370] sm:$0xff]
        %v2431 = vld [vmem:[%s2257 + $0x378] sm:$0xff]
        %v2432 = vld [vmem:[%s2257 + $0x380] sm:$0xff]
        %v2433 = vld [vmem:[%s2257 + $0x388] sm:$0xff]
        %v2434 = vld [vmem:[%s2257 + $0x390] sm:$0xff]
        %v2435 = vld [vmem:[%s2257 + $0x398] sm:$0xff]
        %v2436 = vld [vmem:[%s2257 + $0x3a0] sm:$0xff]
        %v2437 = vld [vmem:[%s2257 + $0x3a8] sm:$0xff]
        %v2438 = vld [vmem:[%s2257 + $0x3b0] sm:$0xff]
        %v2439 = vld [vmem:[%s2257 + $0x3b8] sm:$0xff]
        %v2440 = vld [vmem:[%s2257 + $0x3c0] sm:$0xff]
        %v2441 = vld [vmem:[%s2257 + $0x3c8] sm:$0xff]
        %v2442 = vld [vmem:[%s2257 + $0x3d0] sm:$0xff]
        %v2443 = vld [vmem:[%s2257 + $0x3d8] sm:$0xff]
        %v2444 = vld [vmem:[%s2257 + $0x3e0] sm:$0xff]
        %v2445 = vld [vmem:[%s2257 + $0x3e8] sm:$0xff]
        %v2446 = vld [vmem:[%s2257 + $0x3f0] sm:$0xff]
        %v2447 = vld [vmem:[%s2257 + $0x3f8] sm:$0xff]
        %v2448 = vld [vmem:[%s2257 + $0x400] sm:$0xff]
        %v2449 = vld [vmem:[%s2257 + $0x408] sm:$0xff]
        %v2450 = vld [vmem:[%s2257 + $0x410] sm:$0xff]
        %v2451 = vld [vmem:[%s2257 + $0x418] sm:$0xff]
        %v2452 = vld [vmem:[%s2257 + $0x420] sm:$0xff]
        %v2453 = vld [vmem:[%s2257 + $0x428] sm:$0xff]
        %v2454 = vld [vmem:[%s2257 + $0x430] sm:$0xff]
        %v2455 = vld [vmem:[%s2257 + $0x438] sm:$0xff]
        %v2456 = vld [vmem:[%s2257 + $0x440] sm:$0xff]
        %v2457 = vld [vmem:[%s2257 + $0x448] sm:$0xff]
        %v2458 = vld [vmem:[%s2257 + $0x450] sm:$0xff]
        %v2459 = vld [vmem:[%s2257 + $0x458] sm:$0xff]
        %v2460 = vld [vmem:[%s2257 + $0x460] sm:$0xff]
        %v2461 = vld [vmem:[%s2257 + $0x468] sm:$0xff]
        %v2462 = vld [vmem:[%s2257 + $0x470] sm:$0xff]
        %v2463 = vld [vmem:[%s2257 + $0x478] sm:$0xff]
        %v2464 = vld [vmem:[%s2257 + $0x480] sm:$0xff]
        %v2465 = vld [vmem:[%s2257 + $0x488] sm:$0xff]
        %v2466 = vld [vmem:[%s2257 + $0x490] sm:$0xff]
        %v2467 = vld [vmem:[%s2257 + $0x498] sm:$0xff]
        %v2468 = vld [vmem:[%s2257 + $0x4a0] sm:$0xff]
        %v2469 = vld [vmem:[%s2257 + $0x4a8] sm:$0xff]
        %v2470 = vld [vmem:[%s2257 + $0x4b0] sm:$0xff]
        %v2471 = vld [vmem:[%s2257 + $0x4b8] sm:$0xff]
        %v2472 = vld [vmem:[%s2257 + $0x4c0] sm:$0xff]
        %v2473 = vld [vmem:[%s2257 + $0x4c8] sm:$0xff]
        %v2474 = vld [vmem:[%s2257 + $0x4d0] sm:$0xff]
        %v2475 = vld [vmem:[%s2257 + $0x4d8] sm:$0xff]
        %v2476 = vld [vmem:[%s2257 + $0x4e0] sm:$0xff]
        %v2477 = vld [vmem:[%s2257 + $0x4e8] sm:$0xff]
        %v2478 = vld [vmem:[%s2257 + $0x4f0] sm:$0xff]
        %v2479 = vld [vmem:[%s2257 + $0x4f8] sm:$0xff]
        %v2480 = vld [vmem:[%s2257 + $0x500] sm:$0xff]
        %v2481 = vld [vmem:[%s2257 + $0x508] sm:$0xff]
        %v2482 = vld [vmem:[%s2257 + $0x510] sm:$0xff]
        %v2483 = vld [vmem:[%s2257 + $0x518] sm:$0xff]
        %v2484 = vld [vmem:[%s2257 + $0x520] sm:$0xff]
        %v2485 = vld [vmem:[%s2257 + $0x528] sm:$0xff]
        %v2486 = vld [vmem:[%s2257 + $0x530] sm:$0xff]
        %v2487 = vld [vmem:[%s2257 + $0x538] sm:$0xff]
        %v2488 = vld [vmem:[%s2257 + $0x540] sm:$0xff]
        %v2489 = vld [vmem:[%s2257 + $0x548] sm:$0xff]
        %v2490 = vld [vmem:[%s2257 + $0x550] sm:$0xff]
        %v2491 = vld [vmem:[%s2257 + $0x558] sm:$0xff]
        %v2492 = vld [vmem:[%s2257 + $0x560] sm:$0xff]
        %v2493 = vld [vmem:[%s2257 + $0x568] sm:$0xff]
        %v2494 = vld [vmem:[%s2257 + $0x570] sm:$0xff]
        %v2495 = vld [vmem:[%s2257 + $0x578] sm:$0xff]
        %v2496 = vld [vmem:[%s2257 + $0x580] sm:$0xff]
        %v2497 = vld [vmem:[%s2257 + $0x588] sm:$0xff]
        %v2498 = vld [vmem:[%s2257 + $0x590] sm:$0xff]
        %v2499 = vld [vmem:[%s2257 + $0x598] sm:$0xff]
        %v2500 = vld [vmem:[%s2257 + $0x5a0] sm:$0xff]
        %v2501 = vld [vmem:[%s2257 + $0x5a8] sm:$0xff]
        %v2502 = vld [vmem:[%s2257 + $0x5b0] sm:$0xff]
        %v2503 = vld [vmem:[%s2257 + $0x5b8] sm:$0xff]
        %v2504 = vld [vmem:[%s2257 + $0x5c0] sm:$0xff]
        %v2505 = vld [vmem:[%s2257 + $0x5c8] sm:$0xff]
        %v2506 = vld [vmem:[%s2257 + $0x5d0] sm:$0xff]
        %v2507 = vld [vmem:[%s2257 + $0x5d8] sm:$0xff]
        %v2508 = vld [vmem:[%s2257 + $0x5e0] sm:$0xff]
        %v2509 = vld [vmem:[%s2257 + $0x5e8] sm:$0xff]
        %v2510 = vld [vmem:[%s2257 + $0x5f0] sm:$0xff]
        %v2511 = vld [vmem:[%s2257 + $0x5f8] sm:$0xff]
        %v2512 = vld [vmem:[%s2257 + $0x600] sm:$0xff]
        %v2513 = vld [vmem:[%s2257 + $0x608] sm:$0xff]
        %v2514 = vld [vmem:[%s2257 + $0x610] sm:$0xff]
        %v2515 = vld [vmem:[%s2257 + $0x618] sm:$0xff]
        %v2516 = vld [vmem:[%s2257 + $0x620] sm:$0xff]
        %v2517 = vld [vmem:[%s2257 + $0x628] sm:$0xff]
        %v2518 = vld [vmem:[%s2257 + $0x630] sm:$0xff]
        %v2519 = vld [vmem:[%s2257 + $0x638] sm:$0xff]
        %v2520 = vld [vmem:[%s2257 + $0x640] sm:$0xff]
        %v2521 = vld [vmem:[%s2257 + $0x648] sm:$0xff]
        %v2522 = vld [vmem:[%s2257 + $0x650] sm:$0xff]
        %v2523 = vld [vmem:[%s2257 + $0x658] sm:$0xff]
        %v2524 = vld [vmem:[%s2257 + $0x660] sm:$0xff]
        %v2525 = vld [vmem:[%s2257 + $0x668] sm:$0xff]
        %v2526 = vld [vmem:[%s2257 + $0x670] sm:$0xff]
        %v2527 = vld [vmem:[%s2257 + $0x678] sm:$0xff]
        %v2528 = vld [vmem:[%s2257 + $0x680] sm:$0xff]
        %v2529 = vld [vmem:[%s2257 + $0x688] sm:$0xff]
        %v2530 = vld [vmem:[%s2257 + $0x690] sm:$0xff]
        %v2531 = vld [vmem:[%s2257 + $0x698] sm:$0xff]
        %v2532 = vld [vmem:[%s2257 + $0x6a0] sm:$0xff]
        %v2533 = vld [vmem:[%s2257 + $0x6a8] sm:$0xff]
        %v2534 = vld [vmem:[%s2257 + $0x6b0] sm:$0xff]
        %v2535 = vld [vmem:[%s2257 + $0x6b8] sm:$0xff]
        %v2536 = vld [vmem:[%s2257 + $0x6c0] sm:$0xff]
        %v2537 = vld [vmem:[%s2257 + $0x6c8] sm:$0xff]
        %v2538 = vld [vmem:[%s2257 + $0x6d0] sm:$0xff]
        %v2539 = vld [vmem:[%s2257 + $0x6d8] sm:$0xff]
        %v2540 = vld [vmem:[%s2257 + $0x6e0] sm:$0xff]
        %v2541 = vld [vmem:[%s2257 + $0x6e8] sm:$0xff]
        %v2542 = vld [vmem:[%s2257 + $0x6f0] sm:$0xff]
        %v2543 = vld [vmem:[%s2257 + $0x6f8] sm:$0xff]
        %v2544 = vld [vmem:[%s2257 + $0x700] sm:$0xff]
        %v2545 = vld [vmem:[%s2257 + $0x708] sm:$0xff]
        %v2546 = vld [vmem:[%s2257 + $0x710] sm:$0xff]
        %v2547 = vld [vmem:[%s2257 + $0x718] sm:$0xff]
        %v2548 = vld [vmem:[%s2257 + $0x720] sm:$0xff]
        %v2549 = vld [vmem:[%s2257 + $0x728] sm:$0xff]
        %v2550 = vld [vmem:[%s2257 + $0x730] sm:$0xff]
        %v2551 = vld [vmem:[%s2257 + $0x738] sm:$0xff]
        %v2552 = vld [vmem:[%s2257 + $0x740] sm:$0xff]
        %v2553 = vld [vmem:[%s2257 + $0x748] sm:$0xff]
        %v2554 = vld [vmem:[%s2257 + $0x750] sm:$0xff]
        %v2555 = vld [vmem:[%s2257 + $0x758] sm:$0xff]
        %v2556 = vld [vmem:[%s2257 + $0x760] sm:$0xff]
        %v2557 = vld [vmem:[%s2257 + $0x768] sm:$0xff]
        %v2558 = vld [vmem:[%s2257 + $0x770] sm:$0xff]
        %v2559 = vld [vmem:[%s2257 + $0x778] sm:$0xff]
        %v2560 = vld [vmem:[%s2257 + $0x780] sm:$0xff]
        %v2561 = vld [vmem:[%s2257 + $0x788] sm:$0xff]
        %v2562 = vld [vmem:[%s2257 + $0x790] sm:$0xff]
        %v2563 = vld [vmem:[%s2257 + $0x798] sm:$0xff]
        %v2564 = vld [vmem:[%s2257 + $0x7a0] sm:$0xff]
        %v2565 = vld [vmem:[%s2257 + $0x7a8] sm:$0xff]
        %v2566 = vld [vmem:[%s2257 + $0x7b0] sm:$0xff]
        %v2567 = vld [vmem:[%s2257 + $0x7b8] sm:$0xff]
        %v2568 = vld [vmem:[%s2257 + $0x7c0] sm:$0xff]
        %v2569 = vld [vmem:[%s2257 + $0x7c8] sm:$0xff]
        %v2570 = vld [vmem:[%s2257 + $0x7d0] sm:$0xff]
        %v2571 = vld [vmem:[%s2257 + $0x7d8] sm:$0xff]
        %v2572 = vld [vmem:[%s2257 + $0x7e0] sm:$0xff]
        %v2573 = vld [vmem:[%s2257 + $0x7e8] sm:$0xff]
        %v2574 = vld [vmem:[%s2257 + $0x7f0] sm:$0xff]
        %v2575 = vld [vmem:[%s2257 + $0x7f8] sm:$0xff]
        %v2576 = vld [vmem:[%s2257 + $0x800] sm:$0xff]
        %v2577 = vld [vmem:[%s2257 + $0x808] sm:$0xff]
        %v2578 = vld [vmem:[%s2257 + $0x810] sm:$0xff]
        %v2579 = vld [vmem:[%s2257 + $0x818] sm:$0xff]
        %v2580 = vld [vmem:[%s2257 + $0x820] sm:$0xff]
        %v2581 = vld [vmem:[%s2257 + $0x828] sm:$0xff]
        %v2582 = vld [vmem:[%s2257 + $0x830] sm:$0xff]
        %v2583 = vld [vmem:[%s2257 + $0x838] sm:$0xff]
        %v2584 = vld [vmem:[%s2257 + $0x840] sm:$0xff]
        %v2585 = vld [vmem:[%s2257 + $0x848] sm:$0xff]
        %v2586 = vld [vmem:[%s2257 + $0x850] sm:$0xff]
        %v2587 = vld [vmem:[%s2257 + $0x858] sm:$0xff]
        %v2588 = vld [vmem:[%s2257 + $0x860] sm:$0xff]
        %v2589 = vld [vmem:[%s2257 + $0x868] sm:$0xff]
        %v2590 = vld [vmem:[%s2257 + $0x870] sm:$0xff]
        %v2591 = vld [vmem:[%s2257 + $0x878] sm:$0xff]
        %v2592 = vld [vmem:[%s2257 + $0x880] sm:$0xff]
        %v2593 = vld [vmem:[%s2257 + $0x888] sm:$0xff]
        %v2594 = vld [vmem:[%s2257 + $0x890] sm:$0xff]
        %v2595 = vld [vmem:[%s2257 + $0x898] sm:$0xff]
        %v2596 = vld [vmem:[%s2257 + $0x8a0] sm:$0xff]
        %v2597 = vld [vmem:[%s2257 + $0x8a8] sm:$0xff]
        %v2598 = vld [vmem:[%s2257 + $0x8b0] sm:$0xff]
        %v2599 = vld [vmem:[%s2257 + $0x8b8] sm:$0xff]
        %v2600 = vld [vmem:[%s2257 + $0x8c0] sm:$0xff]
        %v2601 = vld [vmem:[%s2257 + $0x8c8] sm:$0xff]
        %v2602 = vld [vmem:[%s2257 + $0x8d0] sm:$0xff]
        %v2603 = vld [vmem:[%s2257 + $0x8d8] sm:$0xff]
        %v2604 = vld [vmem:[%s2257 + $0x8e0] sm:$0xff]
        %v2605 = vld [vmem:[%s2257 + $0x8e8] sm:$0xff]
        %v2606 = vld [vmem:[%s2257 + $0x8f0] sm:$0xff]
        %v2607 = vld [vmem:[%s2257 + $0x8f8] sm:$0xff]
        %v2608 = vld [vmem:[%s2257 + $0x900] sm:$0xff]
        %v2609 = vld [vmem:[%s2257 + $0x908] sm:$0xff]
        %v2610 = vld [vmem:[%s2257 + $0x910] sm:$0xff]
        %v2611 = vld [vmem:[%s2257 + $0x918] sm:$0xff]
        %v2612 = vld [vmem:[%s2257 + $0x920] sm:$0xff]
        %v2613 = vld [vmem:[%s2257 + $0x928] sm:$0xff]
        %v2614 = vld [vmem:[%s2257 + $0x930] sm:$0xff]
        %v2615 = vld [vmem:[%s2257 + $0x938] sm:$0xff]
        %v2616 = vld [vmem:[%s2257 + $0x940] sm:$0xff]
        %v2617 = vld [vmem:[%s2257 + $0x948] sm:$0xff]
        %v2618 = vld [vmem:[%s2257 + $0x950] sm:$0xff]
        %v2619 = vld [vmem:[%s2257 + $0x958] sm:$0xff]
        %v2620 = vld [vmem:[%s2257 + $0x960] sm:$0xff]
        %v2621 = vld [vmem:[%s2257 + $0x968] sm:$0xff]
        %v2622 = vld [vmem:[%s2257 + $0x970] sm:$0xff]
        %v2623 = vld [vmem:[%s2257 + $0x978] sm:$0xff]
        %v2624 = vld [vmem:[%s2257 + $0x980] sm:$0xff]
        %v2625 = vld [vmem:[%s2257 + $0x988] sm:$0xff]
        %v2626 = vld [vmem:[%s2257 + $0x990] sm:$0xff]
        %v2627 = vld [vmem:[%s2257 + $0x998] sm:$0xff]
        %v2628 = vld [vmem:[%s2257 + $0x9a0] sm:$0xff]
        %v2629 = vld [vmem:[%s2257 + $0x9a8] sm:$0xff]
        %v2630 = vld [vmem:[%s2257 + $0x9b0] sm:$0xff]
        %v2631 = vld [vmem:[%s2257 + $0x9b8] sm:$0xff]
        %v2632 = vld [vmem:[%s2257 + $0x9c0] sm:$0xff]
        %v2633 = vld [vmem:[%s2257 + $0x9c8] sm:$0xff]
        %v2634 = vld [vmem:[%s2257 + $0x9d0] sm:$0xff]
        %v2635 = vld [vmem:[%s2257 + $0x9d8] sm:$0xff]
        %v2636 = vld [vmem:[%s2257 + $0x9e0] sm:$0xff]
        %v2637 = vld [vmem:[%s2257 + $0x9e8] sm:$0xff]
        %v2638 = vld [vmem:[%s2257 + $0x9f0] sm:$0xff]
        %v2639 = vld [vmem:[%s2257 + $0x9f8] sm:$0xff]
        %v2640 = vld [vmem:[%s2257 + $0xa00] sm:$0xff]
        %v2641 = vld [vmem:[%s2257 + $0xa08] sm:$0xff]
        %v2642 = vld [vmem:[%s2257 + $0xa10] sm:$0xff]
        %v2643 = vld [vmem:[%s2257 + $0xa18] sm:$0xff]
        %v2644 = vld [vmem:[%s2257 + $0xa20] sm:$0xff]
        %v2645 = vld [vmem:[%s2257 + $0xa28] sm:$0xff]
        %v2646 = vld [vmem:[%s2257 + $0xa30] sm:$0xff]
        %v2647 = vld [vmem:[%s2257 + $0xa38] sm:$0xff]
        %v2648 = vld [vmem:[%s2257 + $0xa40] sm:$0xff]
        %v2649 = vld [vmem:[%s2257 + $0xa48] sm:$0xff]
        %v2650 = vld [vmem:[%s2257 + $0xa50] sm:$0xff]
        %v2651 = vld [vmem:[%s2257 + $0xa58] sm:$0xff]
        %v2652 = vld [vmem:[%s2257 + $0xa60] sm:$0xff]
        %v2653 = vld [vmem:[%s2257 + $0xa68] sm:$0xff]
        %v2654 = vld [vmem:[%s2257 + $0xa70] sm:$0xff]
        %v2655 = vld [vmem:[%s2257 + $0xa78] sm:$0xff]
        %v2656 = vld [vmem:[%s2257 + $0xa80] sm:$0xff]
        %v2657 = vld [vmem:[%s2257 + $0xa88] sm:$0xff]
        %v2658 = vld [vmem:[%s2257 + $0xa90] sm:$0xff]
        %v2659 = vld [vmem:[%s2257 + $0xa98] sm:$0xff]
        %v2660 = vld [vmem:[%s2257 + $0xaa0] sm:$0xff]
        %v2661 = vld [vmem:[%s2257 + $0xaa8] sm:$0xff]
        %v2662 = vld [vmem:[%s2257 + $0xab0] sm:$0xff]
        %v2663 = vld [vmem:[%s2257 + $0xab8] sm:$0xff]
        %v2664 = vld [vmem:[%s2257 + $0xac0] sm:$0xff]
        %v2665 = vld [vmem:[%s2257 + $0xac8] sm:$0xff]
        %v2666 = vld [vmem:[%s2257 + $0xad0] sm:$0xff]
        %v2667 = vld [vmem:[%s2257 + $0xad8] sm:$0xff]
        %v2668 = vld [vmem:[%s2257 + $0xae0] sm:$0xff]
        %v2669 = vld [vmem:[%s2257 + $0xae8] sm:$0xff]
        %v2670 = vld [vmem:[%s2257 + $0xaf0] sm:$0xff]
        %v2671 = vld [vmem:[%s2257 + $0xaf8] sm:$0xff]
        %v2672 = vld [vmem:[%s2257 + $0xb00] sm:$0xff]
        %v2673 = vld [vmem:[%s2257 + $0xb08] sm:$0xff]
        %v2674 = vld [vmem:[%s2257 + $0xb10] sm:$0xff]
        %v2675 = vld [vmem:[%s2257 + $0xb18] sm:$0xff]
        %v2676 = vld [vmem:[%s2257 + $0xb20] sm:$0xff]
        %v2677 = vld [vmem:[%s2257 + $0xb28] sm:$0xff]
        %v2678 = vld [vmem:[%s2257 + $0xb30] sm:$0xff]
        %v2679 = vld [vmem:[%s2257 + $0xb38] sm:$0xff]
        %v2680 = vld [vmem:[%s2257 + $0xb40] sm:$0xff]
        %v2681 = vld [vmem:[%s2257 + $0xb48] sm:$0xff]
        %v2682 = vld [vmem:[%s2257 + $0xb50] sm:$0xff]
        %v2683 = vld [vmem:[%s2257 + $0xb58] sm:$0xff]
        %v2684 = vld [vmem:[%s2257 + $0xb60] sm:$0xff]
        %v2685 = vld [vmem:[%s2257 + $0xb68] sm:$0xff]
        %v2686 = vld [vmem:[%s2257 + $0xb70] sm:$0xff]
        %v2687 = vld [vmem:[%s2257 + $0xb78] sm:$0xff]
        %v2688 = vld [vmem:[%s2257 + $0xb80] sm:$0xff]
        %v2689 = vld [vmem:[%s2257 + $0xb88] sm:$0xff]
        %v2690 = vld [vmem:[%s2257 + $0xb90] sm:$0xff]
        %v2691 = vld [vmem:[%s2257 + $0xb98] sm:$0xff]
        %v2692 = vld [vmem:[%s2257 + $0xba0] sm:$0xff]
        %v2693 = vld [vmem:[%s2257 + $0xba8] sm:$0xff]
        %v2694 = vld [vmem:[%s2257 + $0xbb0] sm:$0xff]
        %v2695 = vld [vmem:[%s2257 + $0xbb8] sm:$0xff]
        %v2696 = vld [vmem:[%s2257 + $0xbc0] sm:$0xff]
        %v2697 = vld [vmem:[%s2257 + $0xbc8] sm:$0xff]
        %v2698 = vld [vmem:[%s2257 + $0xbd0] sm:$0xff]
        %v2699 = vld [vmem:[%s2257 + $0xbd8] sm:$0xff]
        %v2700 = vld [vmem:[%s2257 + $0xbe0] sm:$0xff]
        %v2701 = vld [vmem:[%s2257 + $0xbe8] sm:$0xff]
        %v2702 = vld [vmem:[%s2257 + $0xbf0] sm:$0xff]
        %v2703 = vld [vmem:[%s2257 + $0xbf8] sm:$0xff]
        %v2704 = vld [vmem:[%s2257 + $0xc00] sm:$0xff]
        %v2705 = vld [vmem:[%s2257 + $0xc08] sm:$0xff]
        %v2706 = vld [vmem:[%s2257 + $0xc10] sm:$0xff]
        %v2707 = vld [vmem:[%s2257 + $0xc18] sm:$0xff]
        %v2708 = vld [vmem:[%s2257 + $0xc20] sm:$0xff]
        %v2709 = vld [vmem:[%s2257 + $0xc28] sm:$0xff]
        %v2710 = vld [vmem:[%s2257 + $0xc30] sm:$0xff]
        %v2711 = vld [vmem:[%s2257 + $0xc38] sm:$0xff]
        %v2712 = vld [vmem:[%s2257 + $0xc40] sm:$0xff]
        %v2713 = vld [vmem:[%s2257 + $0xc48] sm:$0xff]
        %v2714 = vld [vmem:[%s2257 + $0xc50] sm:$0xff]
        %v2715 = vld [vmem:[%s2257 + $0xc58] sm:$0xff]
        %v2716 = vld [vmem:[%s2257 + $0xc60] sm:$0xff]
        %v2717 = vld [vmem:[%s2257 + $0xc68] sm:$0xff]
        %v2718 = vld [vmem:[%s2257 + $0xc70] sm:$0xff]
        %v2719 = vld [vmem:[%s2257 + $0xc78] sm:$0xff]
        %v2720 = vld [vmem:[%s2257 + $0xc80] sm:$0xff]
        %v2721 = vld [vmem:[%s2257 + $0xc88] sm:$0xff]
        %v2722 = vld [vmem:[%s2257 + $0xc90] sm:$0xff]
        %v2723 = vld [vmem:[%s2257 + $0xc98] sm:$0xff]
        %v2724 = vld [vmem:[%s2257 + $0xca0] sm:$0xff]
        %v2725 = vld [vmem:[%s2257 + $0xca8] sm:$0xff]
        %v2726 = vld [vmem:[%s2257 + $0xcb0] sm:$0xff]
        %v2727 = vld [vmem:[%s2257 + $0xcb8] sm:$0xff]
        %v2728 = vld [vmem:[%s2257 + $0xcc0] sm:$0xff]
        %v2729 = vld [vmem:[%s2257 + $0xcc8] sm:$0xff]
        %v2730 = vld [vmem:[%s2257 + $0xcd0] sm:$0xff]
        %v2731 = vld [vmem:[%s2257 + $0xcd8] sm:$0xff]
        %v2732 = vld [vmem:[%s2257 + $0xce0] sm:$0xff]
        %v2733 = vld [vmem:[%s2257 + $0xce8] sm:$0xff]
        %v2734 = vld [vmem:[%s2257 + $0xcf0] sm:$0xff]
        %v2735 = vld [vmem:[%s2257 + $0xcf8] sm:$0xff]
        %v2736 = vld [vmem:[%s2257 + $0xd00] sm:$0xff]
        %v2737 = vld [vmem:[%s2257 + $0xd08] sm:$0xff]
        %v2738 = vld [vmem:[%s2257 + $0xd10] sm:$0xff]
        %v2739 = vld [vmem:[%s2257 + $0xd18] sm:$0xff]
        %v2740 = vld [vmem:[%s2257 + $0xd20] sm:$0xff]
        %v2741 = vld [vmem:[%s2257 + $0xd28] sm:$0xff]
        %v2742 = vld [vmem:[%s2257 + $0xd30] sm:$0xff]
        %v2743 = vld [vmem:[%s2257 + $0xd38] sm:$0xff]
        %v2744 = vld [vmem:[%s2257 + $0xd40] sm:$0xff]
        %v2745 = vld [vmem:[%s2257 + $0xd48] sm:$0xff]
        %v2746 = vld [vmem:[%s2257 + $0xd50] sm:$0xff]
        %v2747 = vld [vmem:[%s2257 + $0xd58] sm:$0xff]
        %v2748 = vld [vmem:[%s2257 + $0xd60] sm:$0xff]
        %v2749 = vld [vmem:[%s2257 + $0xd68] sm:$0xff]
        %v2750 = vld [vmem:[%s2257 + $0xd70] sm:$0xff]
        %v2751 = vld [vmem:[%s2257 + $0xd78] sm:$0xff]
        %v2752 = vld [vmem:[%s2257 + $0xd80] sm:$0xff]
        %v2753 = vld [vmem:[%s2257 + $0xd88] sm:$0xff]
        %v2754 = vld [vmem:[%s2257 + $0xd90] sm:$0xff]
        %v2755 = vld [vmem:[%s2257 + $0xd98] sm:$0xff]
        %v2756 = vld [vmem:[%s2257 + $0xda0] sm:$0xff]
        %v2757 = vld [vmem:[%s2257 + $0xda8] sm:$0xff]
        %v2758 = vld [vmem:[%s2257 + $0xdb0] sm:$0xff]
        %v2759 = vld [vmem:[%s2257 + $0xdb8] sm:$0xff]
        %v2760 = vld [vmem:[%s2257 + $0xdc0] sm:$0xff]
        %v2761 = vld [vmem:[%s2257 + $0xdc8] sm:$0xff]
        %v2762 = vld [vmem:[%s2257 + $0xdd0] sm:$0xff]
        %v2763 = vld [vmem:[%s2257 + $0xdd8] sm:$0xff]
        %v2764 = vld [vmem:[%s2257 + $0xde0] sm:$0xff]
        %v2765 = vld [vmem:[%s2257 + $0xde8] sm:$0xff]
        %v2766 = vld [vmem:[%s2257 + $0xdf0] sm:$0xff]
        %v2767 = vld [vmem:[%s2257 + $0xdf8] sm:$0xff]
        %v2768 = vld [vmem:[%s2257 + $0xe00] sm:$0xff]
        %v2769 = vld [vmem:[%s2257 + $0xe08] sm:$0xff]
        %v2770 = vld [vmem:[%s2257 + $0xe10] sm:$0xff]
        %v2771 = vld [vmem:[%s2257 + $0xe18] sm:$0xff]
        %v2772 = vld [vmem:[%s2257 + $0xe20] sm:$0xff]
        %v2773 = vld [vmem:[%s2257 + $0xe28] sm:$0xff]
        %v2774 = vld [vmem:[%s2257 + $0xe30] sm:$0xff]
        %v2775 = vld [vmem:[%s2257 + $0xe38] sm:$0xff]
        %v2776 = vld [vmem:[%s2257 + $0xe40] sm:$0xff]
        %v2777 = vld [vmem:[%s2257 + $0xe48] sm:$0xff]
        %v2778 = vld [vmem:[%s2257 + $0xe50] sm:$0xff]
        %v2779 = vld [vmem:[%s2257 + $0xe58] sm:$0xff]
        %v2780 = vld [vmem:[%s2257 + $0xe60] sm:$0xff]
        %v2781 = vld [vmem:[%s2257 + $0xe68] sm:$0xff]
        %v2782 = vld [vmem:[%s2257 + $0xe70] sm:$0xff]
        %v2783 = vld [vmem:[%s2257 + $0xe78] sm:$0xff]
        %v2784 = vld [vmem:[%s2257 + $0xe80] sm:$0xff]
        %v2785 = vld [vmem:[%s2257 + $0xe88] sm:$0xff]
        %v2786 = vld [vmem:[%s2257 + $0xe90] sm:$0xff]
        %v2787 = vld [vmem:[%s2257 + $0xe98] sm:$0xff]
        %v2788 = vld [vmem:[%s2257 + $0xea0] sm:$0xff]
        %v2789 = vld [vmem:[%s2257 + $0xea8] sm:$0xff]
        %v2790 = vld [vmem:[%s2257 + $0xeb0] sm:$0xff]
        %v2791 = vld [vmem:[%s2257 + $0xeb8] sm:$0xff]
        %v2792 = vld [vmem:[%s2257 + $0xec0] sm:$0xff]
        %v2793 = vld [vmem:[%s2257 + $0xec8] sm:$0xff]
        %v2794 = vld [vmem:[%s2257 + $0xed0] sm:$0xff]
        %v2795 = vld [vmem:[%s2257 + $0xed8] sm:$0xff]
        %v2796 = vld [vmem:[%s2257 + $0xee0] sm:$0xff]
        %v2797 = vld [vmem:[%s2257 + $0xee8] sm:$0xff]
        %v2798 = vld [vmem:[%s2257 + $0xef0] sm:$0xff]
        %v2799 = vld [vmem:[%s2257 + $0xef8] sm:$0xff]
        %v2800 = vld [vmem:[%s2257 + $0xf00] sm:$0xff]
        %v2801 = vld [vmem:[%s2257 + $0xf08] sm:$0xff]
        %v2802 = vld [vmem:[%s2257 + $0xf10] sm:$0xff]
        %v2803 = vld [vmem:[%s2257 + $0xf18] sm:$0xff]
        %v2804 = vld [vmem:[%s2257 + $0xf20] sm:$0xff]
        %v2805 = vld [vmem:[%s2257 + $0xf28] sm:$0xff]
        %v2806 = vld [vmem:[%s2257 + $0xf30] sm:$0xff]
        %v2807 = vld [vmem:[%s2257 + $0xf38] sm:$0xff]
        %v2808 = vld [vmem:[%s2257 + $0xf40] sm:$0xff]
        %v2809 = vld [vmem:[%s2257 + $0xf48] sm:$0xff]
        %v2810 = vld [vmem:[%s2257 + $0xf50] sm:$0xff]
        %v2811 = vld [vmem:[%s2257 + $0xf58] sm:$0xff]
        %v2812 = vld [vmem:[%s2257 + $0xf60] sm:$0xff]
        %v2813 = vld [vmem:[%s2257 + $0xf68] sm:$0xff]
        %v2814 = vld [vmem:[%s2257 + $0xf70] sm:$0xff]
        %v2815 = vld [vmem:[%s2257 + $0xf78] sm:$0xff]
        %v2816 = vld [vmem:[%s2257 + $0xf80] sm:$0xff]
        %v2817 = vld [vmem:[%s2257 + $0xf88] sm:$0xff]
        %v2818 = vld [vmem:[%s2257 + $0xf90] sm:$0xff]
        %v2819 = vld [vmem:[%s2257 + $0xf98] sm:$0xff]
        %v2820 = vld [vmem:[%s2257 + $0xfa0] sm:$0xff]
        %v2821 = vld [vmem:[%s2257 + $0xfa8] sm:$0xff]
        %v2822 = vld [vmem:[%s2257 + $0xfb0] sm:$0xff]
        %v2823 = vld [vmem:[%s2257 + $0xfb8] sm:$0xff]
        %v2824 = vld [vmem:[%s2257 + $0xfc0] sm:$0xff]
        %v2825 = vld [vmem:[%s2257 + $0xfc8] sm:$0xff]
        %v2826 = vld [vmem:[%s2257 + $0xfd0] sm:$0xff]
        %v2827 = vld [vmem:[%s2257 + $0xfd8] sm:$0xff]
        %v2828 = vld [vmem:[%s2257 + $0xfe0] sm:$0xff]
        %v2829 = vld [vmem:[%s2257 + $0xfe8] sm:$0xff]
        %v2830 = vld [vmem:[%s2257 + $0xff0] sm:$0xff]
        %v2831 = vld [vmem:[%s2257 + $0xff8] sm:$0xff]
        %v2832 = vld [vmem:[%s2257 + $0x1000] sm:$0xff]
        %v2833 = vld [vmem:[%s2257 + $0x1008] sm:$0xff]
        %v2834 = vld [vmem:[%s2257 + $0x1010] sm:$0xff]
        %v2835 = vld [vmem:[%s2257 + $0x1018] sm:$0xff]
        %v2836 = vld [vmem:[%s2257 + $0x1020] sm:$0xff]
        %v2837 = vld [vmem:[%s2257 + $0x1028] sm:$0xff]
        %v2838 = vld [vmem:[%s2257 + $0x1030] sm:$0xff]
        %v2839 = vld [vmem:[%s2257 + $0x1038] sm:$0xff]
        %v2840 = vld [vmem:[%s2257 + $0x1040] sm:$0xff]
        %v2841 = vld [vmem:[%s2257 + $0x1048] sm:$0xff]
        %v2842 = vld [vmem:[%s2257 + $0x1050] sm:$0xff]
        %v2843 = vld [vmem:[%s2257 + $0x1058] sm:$0xff]
        %v2844 = vld [vmem:[%s2257 + $0x1060] sm:$0xff]
        %v2845 = vld [vmem:[%s2257 + $0x1068] sm:$0xff]
        %v2846 = vld [vmem:[%s2257 + $0x1070] sm:$0xff]
        %v2847 = vld [vmem:[%s2257 + $0x1078] sm:$0xff]
        %v2848 = vld [vmem:[%s2257 + $0x1080] sm:$0xff]
        %v2849 = vld [vmem:[%s2257 + $0x1088] sm:$0xff]
        %v2850 = vld [vmem:[%s2257 + $0x1090] sm:$0xff]
        %v2851 = vld [vmem:[%s2257 + $0x1098] sm:$0xff]
        %v2852 = vld [vmem:[%s2257 + $0x10a0] sm:$0xff]
        %v2853 = vld [vmem:[%s2257 + $0x10a8] sm:$0xff]
        %v2854 = vld [vmem:[%s2257 + $0x10b0] sm:$0xff]
        %v2855 = vld [vmem:[%s2257 + $0x10b8] sm:$0xff]
        %v2856 = vld [vmem:[%s2257 + $0x10c0] sm:$0xff]
        %v2857 = vld [vmem:[%s2257 + $0x10c8] sm:$0xff]
        %v2858 = vld [vmem:[%s2257 + $0x10d0] sm:$0xff]
        %v2859 = vld [vmem:[%s2257 + $0x10d8] sm:$0xff]
        %v2860 = vld [vmem:[%s2257 + $0x10e0] sm:$0xff]
        %v2861 = vld [vmem:[%s2257 + $0x10e8] sm:$0xff]
        %v2862 = vld [vmem:[%s2257 + $0x10f0] sm:$0xff]
        %v2863 = vld [vmem:[%s2257 + $0x10f8] sm:$0xff]
        %v2864 = vld [vmem:[%s2257 + $0x1100] sm:$0xff]
        %v2865 = vld [vmem:[%s2257 + $0x1108] sm:$0xff]
        %v2866 = vld [vmem:[%s2257 + $0x1110] sm:$0xff]
        %v2867 = vld [vmem:[%s2257 + $0x1118] sm:$0xff]
        %v2868 = vld [vmem:[%s2257 + $0x1120] sm:$0xff]
        %v2869 = vld [vmem:[%s2257 + $0x1128] sm:$0xff]
        %v2870 = vld [vmem:[%s2257 + $0x1130] sm:$0xff]
        %v2871 = vld [vmem:[%s2257 + $0x1138] sm:$0xff]
        %v2872 = vld [vmem:[%s2257 + $0x1140] sm:$0xff]
        %v2873 = vld [vmem:[%s2257 + $0x1148] sm:$0xff]
        %v2874 = vld [vmem:[%s2257 + $0x1150] sm:$0xff]
        %v2875 = vld [vmem:[%s2257 + $0x1158] sm:$0xff]
        %v2876 = vld [vmem:[%s2257 + $0x1160] sm:$0xff]
        %v2877 = vld [vmem:[%s2257 + $0x1168] sm:$0xff]
        %v2878 = vld [vmem:[%s2257 + $0x1170] sm:$0xff]
        %v2879 = vld [vmem:[%s2257 + $0x1178] sm:$0xff]
        %v2880 = vld [vmem:[%s2257 + $0x1180] sm:$0xff]
        %v2881 = vld [vmem:[%s2257 + $0x1188] sm:$0xff]
        %v2882 = vld [vmem:[%s2257 + $0x1190] sm:$0xff]
        %v2883 = vld [vmem:[%s2257 + $0x1198] sm:$0xff]
        %v2884 = vld [vmem:[%s2257 + $0x11a0] sm:$0xff]
        %v2885 = vld [vmem:[%s2257 + $0x11a8] sm:$0xff]
        %v2886 = vld [vmem:[%s2257 + $0x11b0] sm:$0xff]
        %v2887 = vld [vmem:[%s2257 + $0x11b8] sm:$0xff]
        %v2888 = vld [vmem:[%s2257 + $0x11c0] sm:$0xff]
        %v2889 = vld [vmem:[%s2257 + $0x11c8] sm:$0xff]
        %v2890 = vld [vmem:[%s2257 + $0x11d0] sm:$0xff]
        %v2891 = vld [vmem:[%s2257 + $0x11d8] sm:$0xff]
        %v2892 = vld [vmem:[%s2257 + $0x11e0] sm:$0xff]
        %v2893 = vld [vmem:[%s2257 + $0x11e8] sm:$0xff]
        %v2894 = vld [vmem:[%s2257 + $0x11f0] sm:$0xff]
        %v2895 = vld [vmem:[%s2257 + $0x11f8] sm:$0xff]
        %v2896 = vld [vmem:[%s2257 + $0x1200] sm:$0xff]
        %v2897 = vld [vmem:[%s2257 + $0x1208] sm:$0xff]
        %v2898 = vld [vmem:[%s2257 + $0x1210] sm:$0xff]
        %v2899 = vld [vmem:[%s2257 + $0x1218] sm:$0xff]
        %v2900 = vld [vmem:[%s2257 + $0x1220] sm:$0xff]
        %v2901 = vld [vmem:[%s2257 + $0x1228] sm:$0xff]
        %v2902 = vld [vmem:[%s2257 + $0x1230] sm:$0xff]
        %v2903 = vld [vmem:[%s2257 + $0x1238] sm:$0xff]
        %v2904 = vld [vmem:[%s2257 + $0x1240] sm:$0xff]
        %v2905 = vld [vmem:[%s2257 + $0x1248] sm:$0xff]
        %v2906 = vld [vmem:[%s2257 + $0x1250] sm:$0xff]
        %v2907 = vld [vmem:[%s2257 + $0x1258] sm:$0xff]
        %v2908 = vld [vmem:[%s2257 + $0x1260] sm:$0xff]
        %v2909 = vld [vmem:[%s2257 + $0x1268] sm:$0xff]
        %v2910 = vld [vmem:[%s2257 + $0x1270] sm:$0xff]
        %v2911 = vld [vmem:[%s2257 + $0x1278] sm:$0xff]
        %v2912 = vld [vmem:[%s2257 + $0x1280] sm:$0xff]
        %v2913 = vld [vmem:[%s2257 + $0x1288] sm:$0xff]
        %v2914 = vld [vmem:[%s2257 + $0x1290] sm:$0xff]
        %v2915 = vld [vmem:[%s2257 + $0x1298] sm:$0xff]
        %v2916 = vld [vmem:[%s2257 + $0x12a0] sm:$0xff]
        %v2917 = vld [vmem:[%s2257 + $0x12a8] sm:$0xff]
        %v2918 = vld [vmem:[%s2257 + $0x12b0] sm:$0xff]
        %v2919 = vld [vmem:[%s2257 + $0x12b8] sm:$0xff]
        %v2920 = vld [vmem:[%s2257 + $0x12c0] sm:$0xff]
        %v2921 = vld [vmem:[%s2257 + $0x12c8] sm:$0xff]
        %v2922 = vld [vmem:[%s2257 + $0x12d0] sm:$0xff]
        %v2923 = vld [vmem:[%s2257 + $0x12d8] sm:$0xff]
        %v2924 = vld [vmem:[%s2257 + $0x12e0] sm:$0xff]
        %v2925 = vld [vmem:[%s2257 + $0x12e8] sm:$0xff]
        %v2926 = vld [vmem:[%s2257 + $0x12f0] sm:$0xff]
        %v2927 = vld [vmem:[%s2257 + $0x12f8] sm:$0xff]
        %v2928 = vld [vmem:[%s2257 + $0x1300] sm:$0xff]
        %v2929 = vld [vmem:[%s2257 + $0x1308] sm:$0xff]
        %v2930 = vld [vmem:[%s2257 + $0x1310] sm:$0xff]
        %v2931 = vld [vmem:[%s2257 + $0x1318] sm:$0xff]
        %v2932 = vld [vmem:[%s2257 + $0x1320] sm:$0xff]
        %v2933 = vld [vmem:[%s2257 + $0x1328] sm:$0xff]
        %v2934 = vld [vmem:[%s2257 + $0x1330] sm:$0xff]
        %v2935 = vld [vmem:[%s2257 + $0x1338] sm:$0xff]
        %v2936 = vld [vmem:[%s2257 + $0x1340] sm:$0xff]
        %v2937 = vld [vmem:[%s2257 + $0x1348] sm:$0xff]
        %v2938 = vld [vmem:[%s2257 + $0x1350] sm:$0xff]
        %v2939 = vld [vmem:[%s2257 + $0x1358] sm:$0xff]
        %v2940 = vld [vmem:[%s2257 + $0x1360] sm:$0xff]
        %v2941 = vld [vmem:[%s2257 + $0x1368] sm:$0xff]
        %v2942 = vld [vmem:[%s2257 + $0x1370] sm:$0xff]
        %v2943 = vld [vmem:[%s2257 + $0x1378] sm:$0xff]
        %v2944 = vld [vmem:[%s2257 + $0x1380] sm:$0xff]
        %v2945 = vld [vmem:[%s2257 + $0x1388] sm:$0xff]
        %v2946 = vld [vmem:[%s2257 + $0x1390] sm:$0xff]
        %v2947 = vld [vmem:[%s2257 + $0x1398] sm:$0xff]
        %v2948 = vld [vmem:[%s2257 + $0x13a0] sm:$0xff]
        %v2949 = vld [vmem:[%s2257 + $0x13a8] sm:$0xff]
        %v2950 = vld [vmem:[%s2257 + $0x13b0] sm:$0xff]
        %v2951 = vld [vmem:[%s2257 + $0x13b8] sm:$0xff]
        %v2952 = vld [vmem:[%s2257 + $0x13c0] sm:$0xff]
        %v2953 = vld [vmem:[%s2257 + $0x13c8] sm:$0xff]
        %v2954 = vld [vmem:[%s2257 + $0x13d0] sm:$0xff]
        %v2955 = vld [vmem:[%s2257 + $0x13d8] sm:$0xff]
        %v2956 = vld [vmem:[%s2257 + $0x13e0] sm:$0xff]
        %v2957 = vld [vmem:[%s2257 + $0x13e8] sm:$0xff]
        %v2958 = vld [vmem:[%s2257 + $0x13f0] sm:$0xff]
        %v2959 = vld [vmem:[%s2257 + $0x13f8] sm:$0xff]
        %v2960 = vld [vmem:[%s2257 + $0x1400] sm:$0xff]
        %v2961 = vld [vmem:[%s2257 + $0x1408] sm:$0xff]
        %v2962 = vld [vmem:[%s2257 + $0x1410] sm:$0xff]
        %v2963 = vld [vmem:[%s2257 + $0x1418] sm:$0xff]
        %v2964 = vld [vmem:[%s2257 + $0x1420] sm:$0xff]
        %v2965 = vld [vmem:[%s2257 + $0x1428] sm:$0xff]
        %v2966 = vld [vmem:[%s2257 + $0x1430] sm:$0xff]
        %v2967 = vld [vmem:[%s2257 + $0x1438] sm:$0xff]
        %v2968 = vld [vmem:[%s2257 + $0x1440] sm:$0xff]
        %v2969 = vld [vmem:[%s2257 + $0x1448] sm:$0xff]
        %v2970 = vld [vmem:[%s2257 + $0x1450] sm:$0xff]
        %v2971 = vld [vmem:[%s2257 + $0x1458] sm:$0xff]
        %v2972 = vld [vmem:[%s2257 + $0x1460] sm:$0xff]
        %v2973 = vld [vmem:[%s2257 + $0x1468] sm:$0xff]
        %v2974 = vld [vmem:[%s2257 + $0x1470] sm:$0xff]
        %v2975 = vld [vmem:[%s2257 + $0x1478] sm:$0xff]
        %v2976 = vld [vmem:[%s2257 + $0x1480] sm:$0xff]
        %v2977 = vld [vmem:[%s2257 + $0x1488] sm:$0xff]
        %v2978 = vld [vmem:[%s2257 + $0x1490] sm:$0xff]
        %v2979 = vld [vmem:[%s2257 + $0x1498] sm:$0xff]
        %v2980 = vld [vmem:[%s2257 + $0x14a0] sm:$0xff]
        %v2981 = vld [vmem:[%s2257 + $0x14a8] sm:$0xff]
        %v2982 = vld [vmem:[%s2257 + $0x14b0] sm:$0xff]
        %v2983 = vld [vmem:[%s2257 + $0x14b8] sm:$0xff]
        %v2984 = vld [vmem:[%s2257 + $0x14c0] sm:$0xff]
        %v2985 = vld [vmem:[%s2257 + $0x14c8] sm:$0xff]
        %v2986 = vld [vmem:[%s2257 + $0x14d0] sm:$0xff]
        %v2987 = vld [vmem:[%s2257 + $0x14d8] sm:$0xff]
        %v2988 = vld [vmem:[%s2257 + $0x14e0] sm:$0xff]
        %v2989 = vld [vmem:[%s2257 + $0x14e8] sm:$0xff]
        %v2990 = vld [vmem:[%s2257 + $0x14f0] sm:$0xff]
        %v2991 = vld [vmem:[%s2257 + $0x14f8] sm:$0xff]
        %v2992 = vld [vmem:[%s2257 + $0x1500] sm:$0xff]
        %v2993 = vld [vmem:[%s2257 + $0x1508] sm:$0xff]
        %v2994 = vld [vmem:[%s2257 + $0x1510] sm:$0xff]
        %v2995 = vld [vmem:[%s2257 + $0x1518] sm:$0xff]
        %v2996 = vld [vmem:[%s2257 + $0x1520] sm:$0xff]
        %v2997 = vld [vmem:[%s2257 + $0x1528] sm:$0xff]
        %v2998 = vld [vmem:[%s2257 + $0x1530] sm:$0xff]
        %v2999 = vld [vmem:[%s2257 + $0x1538] sm:$0xff]
        %v3000 = vld [vmem:[%s2257 + $0x1540] sm:$0xff]
        %v3001 = vld [vmem:[%s2257 + $0x1548] sm:$0xff]
        %v3002 = vld [vmem:[%s2257 + $0x1550] sm:$0xff]
        %v3003 = vld [vmem:[%s2257 + $0x1558] sm:$0xff]
        %v3004 = vld [vmem:[%s2257 + $0x1560] sm:$0xff]
        %v3005 = vld [vmem:[%s2257 + $0x1568] sm:$0xff]
        %v3006 = vld [vmem:[%s2257 + $0x1570] sm:$0xff]
        %v3007 = vld [vmem:[%s2257 + $0x1578] sm:$0xff]
        %v3008 = vld [vmem:[%s2257 + $0x1580] sm:$0xff]
        %v3009 = vld [vmem:[%s2257 + $0x1588] sm:$0xff]
        %v3010 = vld [vmem:[%s2257 + $0x1590] sm:$0xff]
        %v3011 = vld [vmem:[%s2257 + $0x1598] sm:$0xff]
        %v3012 = vld [vmem:[%s2257 + $0x15a0] sm:$0xff]
        %v3013 = vld [vmem:[%s2257 + $0x15a8] sm:$0xff]
        %v3014 = vld [vmem:[%s2257 + $0x15b0] sm:$0xff]
        %v3015 = vld [vmem:[%s2257 + $0x15b8] sm:$0xff]
        %v3016 = vld [vmem:[%s2257 + $0x15c0] sm:$0xff]
        %v3017 = vld [vmem:[%s2257 + $0x15c8] sm:$0xff]
        %v3018 = vld [vmem:[%s2257 + $0x15d0] sm:$0xff]
        %v3019 = vld [vmem:[%s2257 + $0x15d8] sm:$0xff]
        %v3020 = vld [vmem:[%s2257 + $0x15e0] sm:$0xff]
        %v3021 = vld [vmem:[%s2257 + $0x15e8] sm:$0xff]
        %v3022 = vld [vmem:[%s2257 + $0x15f0] sm:$0xff]
        %v3023 = vld [vmem:[%s2257 + $0x15f8] sm:$0xff]
        %v3024 = vld [vmem:[%s2257 + $0x1600] sm:$0xff]
        %v3025 = vld [vmem:[%s2257 + $0x1608] sm:$0xff]
        %v3026 = vld [vmem:[%s2257 + $0x1610] sm:$0xff]
        %v3027 = vld [vmem:[%s2257 + $0x1618] sm:$0xff]
        %v3028 = vld [vmem:[%s2257 + $0x1620] sm:$0xff]
        %v3029 = vld [vmem:[%s2257 + $0x1628] sm:$0xff]
        %v3030 = vld [vmem:[%s2257 + $0x1630] sm:$0xff]
        %v3031 = vld [vmem:[%s2257 + $0x1638] sm:$0xff]
        %v3032 = vld [vmem:[%s2257 + $0x1640] sm:$0xff]
        %v3033 = vld [vmem:[%s2257 + $0x1648] sm:$0xff]
        %v3034 = vld [vmem:[%s2257 + $0x1650] sm:$0xff]
        %v3035 = vld [vmem:[%s2257 + $0x1658] sm:$0xff]
        %v3036 = vld [vmem:[%s2257 + $0x1660] sm:$0xff]
        %v3037 = vld [vmem:[%s2257 + $0x1668] sm:$0xff]
        %v3038 = vld [vmem:[%s2257 + $0x1670] sm:$0xff]
        %v3039 = vld [vmem:[%s2257 + $0x1678] sm:$0xff]
        %v3040 = vld [vmem:[%s2257 + $0x1680] sm:$0xff]
        %v3041 = vld [vmem:[%s2257 + $0x1688] sm:$0xff]
        %v3042 = vld [vmem:[%s2257 + $0x1690] sm:$0xff]
        %v3043 = vld [vmem:[%s2257 + $0x1698] sm:$0xff]
        %v3044 = vld [vmem:[%s2257 + $0x16a0] sm:$0xff]
        %v3045 = vld [vmem:[%s2257 + $0x16a8] sm:$0xff]
        %v3046 = vld [vmem:[%s2257 + $0x16b0] sm:$0xff]
        %v3047 = vld [vmem:[%s2257 + $0x16b8] sm:$0xff]
        %v3048 = vld [vmem:[%s2257 + $0x16c0] sm:$0xff]
        %v3049 = vld [vmem:[%s2257 + $0x16c8] sm:$0xff]
        %v3050 = vld [vmem:[%s2257 + $0x16d0] sm:$0xff]
        %v3051 = vld [vmem:[%s2257 + $0x16d8] sm:$0xff]
        %v3052 = vld [vmem:[%s2257 + $0x16e0] sm:$0xff]
        %v3053 = vld [vmem:[%s2257 + $0x16e8] sm:$0xff]
        %v3054 = vld [vmem:[%s2257 + $0x16f0] sm:$0xff]
        %v3055 = vld [vmem:[%s2257 + $0x16f8] sm:$0xff]
        %v3056 = vld [vmem:[%s2257 + $0x1700] sm:$0xff]
        %v3057 = vld [vmem:[%s2257 + $0x1708] sm:$0xff]
        %v3058 = vld [vmem:[%s2257 + $0x1710] sm:$0xff]
        %v3059 = vld [vmem:[%s2257 + $0x1718] sm:$0xff]
        %v3060 = vld [vmem:[%s2257 + $0x1720] sm:$0xff]
        %v3061 = vld [vmem:[%s2257 + $0x1728] sm:$0xff]
        %v3062 = vld [vmem:[%s2257 + $0x1730] sm:$0xff]
        %v3063 = vld [vmem:[%s2257 + $0x1738] sm:$0xff]
        %v3064 = vld [vmem:[%s2257 + $0x1740] sm:$0xff]
        %v3065 = vld [vmem:[%s2257 + $0x1748] sm:$0xff]
        %v3066 = vld [vmem:[%s2257 + $0x1750] sm:$0xff]
        %v3067 = vld [vmem:[%s2257 + $0x1758] sm:$0xff]
        %v3068 = vld [vmem:[%s2257 + $0x1760] sm:$0xff]
        %v3069 = vld [vmem:[%s2257 + $0x1768] sm:$0xff]
        %v3070 = vld [vmem:[%s2257 + $0x1770] sm:$0xff]
        %v3071 = vld [vmem:[%s2257 + $0x1778] sm:$0xff]
        %v3072 = vld [vmem:[%s2257 + $0x1780] sm:$0xff]
        %v3073 = vld [vmem:[%s2257 + $0x1788] sm:$0xff]
        %v3074 = vld [vmem:[%s2257 + $0x1790] sm:$0xff]
        %v3075 = vld [vmem:[%s2257 + $0x1798] sm:$0xff]
        %v3076 = vld [vmem:[%s2257 + $0x17a0] sm:$0xff]
        %v3077 = vld [vmem:[%s2257 + $0x17a8] sm:$0xff]
        %v3078 = vld [vmem:[%s2257 + $0x17b0] sm:$0xff]
        %v3079 = vld [vmem:[%s2257 + $0x17b8] sm:$0xff]
        %v3080 = vld [vmem:[%s2257 + $0x17c0] sm:$0xff]
        %v3081 = vld [vmem:[%s2257 + $0x17c8] sm:$0xff]
        %v3082 = vld [vmem:[%s2257 + $0x17d0] sm:$0xff]
        %v3083 = vld [vmem:[%s2257 + $0x17d8] sm:$0xff]
        %v3084 = vld [vmem:[%s2257 + $0x17e0] sm:$0xff]
        %v3085 = vld [vmem:[%s2257 + $0x17e8] sm:$0xff]
        %v3086 = vld [vmem:[%s2257 + $0x17f0] sm:$0xff]
        %v3087 = vld [vmem:[%s2257 + $0x17f8] sm:$0xff]
        %v3088 = vld [vmem:[%s2257 + $0x1800] sm:$0xff]
        %v3089 = vld [vmem:[%s2257 + $0x1808] sm:$0xff]
        %v3090 = vld [vmem:[%s2257 + $0x1810] sm:$0xff]
        %v3091 = vld [vmem:[%s2257 + $0x1818] sm:$0xff]
        %v3092 = vld [vmem:[%s2257 + $0x1820] sm:$0xff]
        %v3093 = vld [vmem:[%s2257 + $0x1828] sm:$0xff]
        %v3094 = vld [vmem:[%s2257 + $0x1830] sm:$0xff]
        %v3095 = vld [vmem:[%s2257 + $0x1838] sm:$0xff]
        %v3096 = vld [vmem:[%s2257 + $0x1840] sm:$0xff]
        %v3097 = vld [vmem:[%s2257 + $0x1848] sm:$0xff]
        %v3098 = vld [vmem:[%s2257 + $0x1850] sm:$0xff]
        %v3099 = vld [vmem:[%s2257 + $0x1858] sm:$0xff]
        %v3100 = vld [vmem:[%s2257 + $0x1860] sm:$0xff]
        %v3101 = vld [vmem:[%s2257 + $0x1868] sm:$0xff]
        %v3102 = vld [vmem:[%s2257 + $0x1870] sm:$0xff]
        %v3103 = vld [vmem:[%s2257 + $0x1878] sm:$0xff]
        %v3104 = vld [vmem:[%s2257 + $0x1880] sm:$0xff]
        %v3105 = vld [vmem:[%s2257 + $0x1888] sm:$0xff]
        %v3106 = vld [vmem:[%s2257 + $0x1890] sm:$0xff]
        %v3107 = vld [vmem:[%s2257 + $0x1898] sm:$0xff]
        %v3108 = vld [vmem:[%s2257 + $0x18a0] sm:$0xff]
        %v3109 = vld [vmem:[%s2257 + $0x18a8] sm:$0xff]
        %v3110 = vld [vmem:[%s2257 + $0x18b0] sm:$0xff]
        %v3111 = vld [vmem:[%s2257 + $0x18b8] sm:$0xff]
        %v3112 = vld [vmem:[%s2257 + $0x18c0] sm:$0xff]
        %v3113 = vld [vmem:[%s2257 + $0x18c8] sm:$0xff]
        %v3114 = vld [vmem:[%s2257 + $0x18d0] sm:$0xff]
        %v3115 = vld [vmem:[%s2257 + $0x18d8] sm:$0xff]
        %v3116 = vld [vmem:[%s2257 + $0x18e0] sm:$0xff]
        %v3117 = vld [vmem:[%s2257 + $0x18e8] sm:$0xff]
        %v3118 = vld [vmem:[%s2257 + $0x18f0] sm:$0xff]
        %v3119 = vld [vmem:[%s2257 + $0x18f8] sm:$0xff]
        %v3120 = vld [vmem:[%s2257 + $0x1900] sm:$0xff]
        %v3121 = vld [vmem:[%s2257 + $0x1908] sm:$0xff]
        %v3122 = vld [vmem:[%s2257 + $0x1910] sm:$0xff]
        %v3123 = vld [vmem:[%s2257 + $0x1918] sm:$0xff]
        %v3124 = vld [vmem:[%s2257 + $0x1920] sm:$0xff]
        %v3125 = vld [vmem:[%s2257 + $0x1928] sm:$0xff]
        %v3126 = vld [vmem:[%s2257 + $0x1930] sm:$0xff]
        %v3127 = vld [vmem:[%s2257 + $0x1938] sm:$0xff]
        %v3128 = vld [vmem:[%s2257 + $0x1940] sm:$0xff]
        %v3129 = vld [vmem:[%s2257 + $0x1948] sm:$0xff]
        %v3130 = vld [vmem:[%s2257 + $0x1950] sm:$0xff]
        %v3131 = vld [vmem:[%s2257 + $0x1958] sm:$0xff]
        %v3132 = vld [vmem:[%s2257 + $0x1960] sm:$0xff]
        %v3133 = vld [vmem:[%s2257 + $0x1968] sm:$0xff]
        %v3134 = vld [vmem:[%s2257 + $0x1970] sm:$0xff]
        %v3135 = vld [vmem:[%s2257 + $0x1978] sm:$0xff]
        %v3136 = vld [vmem:[%s2257 + $0x1980] sm:$0xff]
        %v3137 = vld [vmem:[%s2257 + $0x1988] sm:$0xff]
        %v3138 = vld [vmem:[%s2257 + $0x1990] sm:$0xff]
        %v3139 = vld [vmem:[%s2257 + $0x1998] sm:$0xff]
        %v3140 = vld [vmem:[%s2257 + $0x19a0] sm:$0xff]
        %v3141 = vld [vmem:[%s2257 + $0x19a8] sm:$0xff]
        %v3142 = vld [vmem:[%s2257 + $0x19b0] sm:$0xff]
        %v3143 = vld [vmem:[%s2257 + $0x19b8] sm:$0xff]
        %v3144 = vld [vmem:[%s2257 + $0x19c0] sm:$0xff]
        %v3145 = vld [vmem:[%s2257 + $0x19c8] sm:$0xff]
        %v3146 = vld [vmem:[%s2257 + $0x19d0] sm:$0xff]
        %v3147 = vld [vmem:[%s2257 + $0x19d8] sm:$0xff]
        %v3148 = vld [vmem:[%s2257 + $0x19e0] sm:$0xff]
        %v3149 = vld [vmem:[%s2257 + $0x19e8] sm:$0xff]
        %v3150 = vld [vmem:[%s2257 + $0x19f0] sm:$0xff]
        %v3151 = vld [vmem:[%s2257 + $0x19f8] sm:$0xff]
        %v3152 = vld [vmem:[%s2257 + $0x1a00] sm:$0xff]
        %v3153 = vld [vmem:[%s2257 + $0x1a08] sm:$0xff]
        %v3154 = vld [vmem:[%s2257 + $0x1a10] sm:$0xff]
        %v3155 = vld [vmem:[%s2257 + $0x1a18] sm:$0xff]
        %v3156 = vld [vmem:[%s2257 + $0x1a20] sm:$0xff]
        %v3157 = vld [vmem:[%s2257 + $0x1a28] sm:$0xff]
        %v3158 = vld [vmem:[%s2257 + $0x1a30] sm:$0xff]
        %v3159 = vld [vmem:[%s2257 + $0x1a38] sm:$0xff]
        %v3160 = vld [vmem:[%s2257 + $0x1a40] sm:$0xff]
        %v3161 = vld [vmem:[%s2257 + $0x1a48] sm:$0xff]
        %v3162 = vld [vmem:[%s2257 + $0x1a50] sm:$0xff]
        %v3163 = vld [vmem:[%s2257 + $0x1a58] sm:$0xff]
        %v3164 = vld [vmem:[%s2257 + $0x1a60] sm:$0xff]
        %v3165 = vld [vmem:[%s2257 + $0x1a68] sm:$0xff]
        %v3166 = vld [vmem:[%s2257 + $0x1a70] sm:$0xff]
        %v3167 = vld [vmem:[%s2257 + $0x1a78] sm:$0xff]
        %v3168 = vld [vmem:[%s2257 + $0x1a80] sm:$0xff]
        %v3169 = vld [vmem:[%s2257 + $0x1a88] sm:$0xff]
        %v3170 = vld [vmem:[%s2257 + $0x1a90] sm:$0xff]
        %v3171 = vld [vmem:[%s2257 + $0x1a98] sm:$0xff]
        %v3172 = vld [vmem:[%s2257 + $0x1aa0] sm:$0xff]
        %v3173 = vld [vmem:[%s2257 + $0x1aa8] sm:$0xff]
        %v3174 = vld [vmem:[%s2257 + $0x1ab0] sm:$0xff]
        %v3175 = vld [vmem:[%s2257 + $0x1ab8] sm:$0xff]
        %v3176 = vld [vmem:[%s2257 + $0x1ac0] sm:$0xff]
        %v3177 = vld [vmem:[%s2257 + $0x1ac8] sm:$0xff]
        %v3178 = vld [vmem:[%s2257 + $0x1ad0] sm:$0xff]
        %v3179 = vld [vmem:[%s2257 + $0x1ad8] sm:$0xff]
        %v3180 = vld [vmem:[%s2257 + $0x1ae0] sm:$0xff]
        %v3181 = vld [vmem:[%s2257 + $0x1ae8] sm:$0xff]
        %v3182 = vld [vmem:[%s2257 + $0x1af0] sm:$0xff]
        %v3183 = vld [vmem:[%s2257 + $0x1af8] sm:$0xff]
        %v3184 = vld [vmem:[%s2257 + $0x1b00] sm:$0xff]
        %v3185 = vld [vmem:[%s2257 + $0x1b08] sm:$0xff]
        %v3186 = vld [vmem:[%s2257 + $0x1b10] sm:$0xff]
        %v3187 = vld [vmem:[%s2257 + $0x1b18] sm:$0xff]
        %v3188 = vld [vmem:[%s2257 + $0x1b20] sm:$0xff]
        %v3189 = vld [vmem:[%s2257 + $0x1b28] sm:$0xff]
        %v3190 = vld [vmem:[%s2257 + $0x1b30] sm:$0xff]
        %v3191 = vld [vmem:[%s2257 + $0x1b38] sm:$0xff]
        %v3192 = vld [vmem:[%s2257 + $0x1b40] sm:$0xff]
        %v3193 = vld [vmem:[%s2257 + $0x1b48] sm:$0xff]
        %v3194 = vld [vmem:[%s2257 + $0x1b50] sm:$0xff]
        %v3195 = vld [vmem:[%s2257 + $0x1b58] sm:$0xff]
        %v3196 = vld [vmem:[%s2257 + $0x1b60] sm:$0xff]
        %v3197 = vld [vmem:[%s2257 + $0x1b68] sm:$0xff]
        %v3198 = vld [vmem:[%s2257 + $0x1b70] sm:$0xff]
        %v3199 = vld [vmem:[%s2257 + $0x1b78] sm:$0xff]
        %v3200 = vld [vmem:[%s2257 + $0x1b80] sm:$0xff]
        %v3201 = vld [vmem:[%s2257 + $0x1b88] sm:$0xff]
        %v3202 = vld [vmem:[%s2257 + $0x1b90] sm:$0xff]
        %v3203 = vld [vmem:[%s2257 + $0x1b98] sm:$0xff]
        %v3204 = vld [vmem:[%s2257 + $0x1ba0] sm:$0xff]
        %v3205 = vld [vmem:[%s2257 + $0x1ba8] sm:$0xff]
        %v3206 = vld [vmem:[%s2257 + $0x1bb0] sm:$0xff]
        %v3207 = vld [vmem:[%s2257 + $0x1bb8] sm:$0xff]
        %v3208 = vld [vmem:[%s2257 + $0x1bc0] sm:$0xff]
        %v3209 = vld [vmem:[%s2257 + $0x1bc8] sm:$0xff]
        %v3210 = vld [vmem:[%s2257 + $0x1bd0] sm:$0xff]
        %v3211 = vld [vmem:[%s2257 + $0x1bd8] sm:$0xff]
        %v3212 = vld [vmem:[%s2257 + $0x1be0] sm:$0xff]
        %v3213 = vld [vmem:[%s2257 + $0x1be8] sm:$0xff]
        %v3214 = vld [vmem:[%s2257 + $0x1bf0] sm:$0xff]
        %v3215 = vld [vmem:[%s2257 + $0x1bf8] sm:$0xff]
        %v3216 = vld [vmem:[%s2257 + $0x1c00] sm:$0xff]
        %v3217 = vld [vmem:[%s2257 + $0x1c08] sm:$0xff]
        %v3218 = vld [vmem:[%s2257 + $0x1c10] sm:$0xff]
        %v3219 = vld [vmem:[%s2257 + $0x1c18] sm:$0xff]
        %v3220 = vld [vmem:[%s2257 + $0x1c20] sm:$0xff]
        %v3221 = vld [vmem:[%s2257 + $0x1c28] sm:$0xff]
        %v3222 = vld [vmem:[%s2257 + $0x1c30] sm:$0xff]
        %v3223 = vld [vmem:[%s2257 + $0x1c38] sm:$0xff]
        %v3224 = vld [vmem:[%s2257 + $0x1c40] sm:$0xff]
        %v3225 = vld [vmem:[%s2257 + $0x1c48] sm:$0xff]
        %v3226 = vld [vmem:[%s2257 + $0x1c50] sm:$0xff]
        %v3227 = vld [vmem:[%s2257 + $0x1c58] sm:$0xff]
        %v3228 = vld [vmem:[%s2257 + $0x1c60] sm:$0xff]
        %v3229 = vld [vmem:[%s2257 + $0x1c68] sm:$0xff]
        %v3230 = vld [vmem:[%s2257 + $0x1c70] sm:$0xff]
        %v3231 = vld [vmem:[%s2257 + $0x1c78] sm:$0xff]
        %v3232 = vld [vmem:[%s2257 + $0x1c80] sm:$0xff]
        %v3233 = vld [vmem:[%s2257 + $0x1c88] sm:$0xff]
        %v3234 = vld [vmem:[%s2257 + $0x1c90] sm:$0xff]
        %v3235 = vld [vmem:[%s2257 + $0x1c98] sm:$0xff]
        %v3236 = vld [vmem:[%s2257 + $0x1ca0] sm:$0xff]
        %v3237 = vld [vmem:[%s2257 + $0x1ca8] sm:$0xff]
        %v3238 = vld [vmem:[%s2257 + $0x1cb0] sm:$0xff]
        %v3239 = vld [vmem:[%s2257 + $0x1cb8] sm:$0xff]
        %v3240 = vld [vmem:[%s2257 + $0x1cc0] sm:$0xff]
        %v3241 = vld [vmem:[%s2257 + $0x1cc8] sm:$0xff]
        %v3242 = vld [vmem:[%s2257 + $0x1cd0] sm:$0xff]
        %v3243 = vld [vmem:[%s2257 + $0x1cd8] sm:$0xff]
        %v3244 = vld [vmem:[%s2257 + $0x1ce0] sm:$0xff]
        %v3245 = vld [vmem:[%s2257 + $0x1ce8] sm:$0xff]
        %v3246 = vld [vmem:[%s2257 + $0x1cf0] sm:$0xff]
        %v3247 = vld [vmem:[%s2257 + $0x1cf8] sm:$0xff]
        %v3248 = vld [vmem:[%s2257 + $0x1d00] sm:$0xff]
        %v3249 = vld [vmem:[%s2257 + $0x1d08] sm:$0xff]
        %v3250 = vld [vmem:[%s2257 + $0x1d10] sm:$0xff]
        %v3251 = vld [vmem:[%s2257 + $0x1d18] sm:$0xff]
        %v3252 = vld [vmem:[%s2257 + $0x1d20] sm:$0xff]
        %v3253 = vld [vmem:[%s2257 + $0x1d28] sm:$0xff]
        %v3254 = vld [vmem:[%s2257 + $0x1d30] sm:$0xff]
        %v3255 = vld [vmem:[%s2257 + $0x1d38] sm:$0xff]
        %v3256 = vld [vmem:[%s2257 + $0x1d40] sm:$0xff]
        %v3257 = vld [vmem:[%s2257 + $0x1d48] sm:$0xff]
        %v3258 = vld [vmem:[%s2257 + $0x1d50] sm:$0xff]
        %v3259 = vld [vmem:[%s2257 + $0x1d58] sm:$0xff]
        %v3260 = vld [vmem:[%s2257 + $0x1d60] sm:$0xff]
        %v3261 = vld [vmem:[%s2257 + $0x1d68] sm:$0xff]
        %v3262 = vld [vmem:[%s2257 + $0x1d70] sm:$0xff]
        %v3263 = vld [vmem:[%s2257 + $0x1d78] sm:$0xff]
        %v3264 = vld [vmem:[%s2257 + $0x1d80] sm:$0xff]
        %v3265 = vld [vmem:[%s2257 + $0x1d88] sm:$0xff]
        %v3266 = vld [vmem:[%s2257 + $0x1d90] sm:$0xff]
        %v3267 = vld [vmem:[%s2257 + $0x1d98] sm:$0xff]
        %v3268 = vld [vmem:[%s2257 + $0x1da0] sm:$0xff]
        %v3269 = vld [vmem:[%s2257 + $0x1da8] sm:$0xff]
        %v3270 = vld [vmem:[%s2257 + $0x1db0] sm:$0xff]
        %v3271 = vld [vmem:[%s2257 + $0x1db8] sm:$0xff]
        %v3272 = vld [vmem:[%s2257 + $0x1dc0] sm:$0xff]
        %v3273 = vld [vmem:[%s2257 + $0x1dc8] sm:$0xff]
        %v3274 = vld [vmem:[%s2257 + $0x1dd0] sm:$0xff]
        %v3275 = vld [vmem:[%s2257 + $0x1dd8] sm:$0xff]
        %v3276 = vld [vmem:[%s2257 + $0x1de0] sm:$0xff]
        %v3277 = vld [vmem:[%s2257 + $0x1de8] sm:$0xff]
        %v3278 = vld [vmem:[%s2257 + $0x1df0] sm:$0xff]
        %v3279 = vld [vmem:[%s2257 + $0x1df8] sm:$0xff]
        %v3280 = vld [vmem:[%s2257 + $0x1e00] sm:$0xff]
        %v3281 = vld [vmem:[%s2257 + $0x1e08] sm:$0xff]
        %v3282 = vld [vmem:[%s2257 + $0x1e10] sm:$0xff]
        %v3283 = vld [vmem:[%s2257 + $0x1e18] sm:$0xff]
        %v3284 = vld [vmem:[%s2257 + $0x1e20] sm:$0xff]
        %v3285 = vld [vmem:[%s2257 + $0x1e28] sm:$0xff]
        %v3286 = vld [vmem:[%s2257 + $0x1e30] sm:$0xff]
        %v3287 = vld [vmem:[%s2257 + $0x1e38] sm:$0xff]
        %v3288 = vld [vmem:[%s2257 + $0x1e40] sm:$0xff]
        %v3289 = vld [vmem:[%s2257 + $0x1e48] sm:$0xff]
        %v3290 = vld [vmem:[%s2257 + $0x1e50] sm:$0xff]
        %v3291 = vld [vmem:[%s2257 + $0x1e58] sm:$0xff]
        %v3292 = vld [vmem:[%s2257 + $0x1e60] sm:$0xff]
        %v3293 = vld [vmem:[%s2257 + $0x1e68] sm:$0xff]
        %v3294 = vld [vmem:[%s2257 + $0x1e70] sm:$0xff]
        %v3295 = vld [vmem:[%s2257 + $0x1e78] sm:$0xff]
        %v3296 = vld [vmem:[%s2257 + $0x1e80] sm:$0xff]
        %v3297 = vld [vmem:[%s2257 + $0x1e88] sm:$0xff]
        %v3298 = vld [vmem:[%s2257 + $0x1e90] sm:$0xff]
        %v3299 = vld [vmem:[%s2257 + $0x1e98] sm:$0xff]
        %v3300 = vld [vmem:[%s2257 + $0x1ea0] sm:$0xff]
        %v3301 = vld [vmem:[%s2257 + $0x1ea8] sm:$0xff]
        %v3302 = vld [vmem:[%s2257 + $0x1eb0] sm:$0xff]
        %v3303 = vld [vmem:[%s2257 + $0x1eb8] sm:$0xff]
        %v3304 = vld [vmem:[%s2257 + $0x1ec0] sm:$0xff]
        %v3305 = vld [vmem:[%s2257 + $0x1ec8] sm:$0xff]
        %v3306 = vld [vmem:[%s2257 + $0x1ed0] sm:$0xff]
        %v3307 = vld [vmem:[%s2257 + $0x1ed8] sm:$0xff]
        %v3308 = vld [vmem:[%s2257 + $0x1ee0] sm:$0xff]
        %v3309 = vld [vmem:[%s2257 + $0x1ee8] sm:$0xff]
        %v3310 = vld [vmem:[%s2257 + $0x1ef0] sm:$0xff]
        %v3311 = vld [vmem:[%s2257 + $0x1ef8] sm:$0xff]
        %v3312 = vld [vmem:[%s2257 + $0x1f00] sm:$0xff]
        %v3313 = vld [vmem:[%s2257 + $0x1f08] sm:$0xff]
        %v3314 = vld [vmem:[%s2257 + $0x1f10] sm:$0xff]
        %v3315 = vld [vmem:[%s2257 + $0x1f18] sm:$0xff]
        %v3316 = vld [vmem:[%s2257 + $0x1f20] sm:$0xff]
        %v3317 = vld [vmem:[%s2257 + $0x1f28] sm:$0xff]
        %v3318 = vld [vmem:[%s2257 + $0x1f30] sm:$0xff]
        %v3319 = vld [vmem:[%s2257 + $0x1f38] sm:$0xff]
        %v3320 = vld [vmem:[%s2257 + $0x1f40] sm:$0xff]
        %v3321 = vld [vmem:[%s2257 + $0x1f48] sm:$0xff]
        %v3322 = vld [vmem:[%s2257 + $0x1f50] sm:$0xff]
        %v3323 = vld [vmem:[%s2257 + $0x1f58] sm:$0xff]
        %v3324 = vld [vmem:[%s2257 + $0x1f60] sm:$0xff]
        %v3325 = vld [vmem:[%s2257 + $0x1f68] sm:$0xff]
        %v3326 = vld [vmem:[%s2257 + $0x1f70] sm:$0xff]
        %v3327 = vld [vmem:[%s2257 + $0x1f78] sm:$0xff]
        %v3328 = vld [vmem:[%s2257 + $0x1f80] sm:$0xff]
        %v3329 = vld [vmem:[%s2257 + $0x1f88] sm:$0xff]
        %v3330 = vld [vmem:[%s2257 + $0x1f90] sm:$0xff]
        %v3331 = vld [vmem:[%s2257 + $0x1f98] sm:$0xff]
        %v3332 = vld [vmem:[%s2257 + $0x1fa0] sm:$0xff]
        %v3333 = vld [vmem:[%s2257 + $0x1fa8] sm:$0xff]
        %v3334 = vld [vmem:[%s2257 + $0x1fb0] sm:$0xff]
        %v3335 = vld [vmem:[%s2257 + $0x1fb8] sm:$0xff]
        %v3336 = vld [vmem:[%s2257 + $0x1fc0] sm:$0xff]
        %v3337 = vld [vmem:[%s2257 + $0x1fc8] sm:$0xff]
        %v3338 = vld [vmem:[%s2257 + $0x1fd0] sm:$0xff]
        %v3339 = vld [vmem:[%s2257 + $0x1fd8] sm:$0xff]
        %v3340 = vld [vmem:[%s2257 + $0x1fe0] sm:$0xff]
        %v3341 = vld [vmem:[%s2257 + $0x1fe8] sm:$0xff]
        %v3342 = vld [vmem:[%s2257 + $0x1ff0] sm:$0xff]
        %v3343 = vld [vmem:[%s2257 + $0x1ff8] sm:$0xff]
        %v3344 = vld [vmem:[%s2292] sm:$0xf]
        %v3346 = vlaneseq
        %v3347 = vshrl.u32 %v3346, 7
        %v3348 = vsub.s32 0, %v3347
        %v3349 = vrot.slane %v3344, %v3348
        %v3350 = vlaneseq
        %v3351 = vshrl.u32 %v3350, 7
        %v3352 = vsub.s32 1, %v3351
        %v3353 = vrot.slane %v3344, %v3352
        %v3354 = vlaneseq
        %v3355 = vshrl.u32 %v3354, 7
        %v3356 = vsub.s32 2, %v3355
        %v3357 = vrot.slane %v3344, %v3356
        %v3358 = vlaneseq
        %v3359 = vshrl.u32 %v3358, 7
        %v3360 = vsub.s32 3, %v3359
        %v3361 = vrot.slane %v3344, %v3360
        %3366 = vmatprep.subr.mxu0 %v2321
        %3367 = vmatpush1.msra.mxu0 %v2320
        %3368 = vmatprep.subr.mxu0 %v2325
        %3369 = vmatpush1.msra.mxu0 %v2324
        %3370 = vmatprep.subr.mxu0 %v2329
        %3371 = vmatpush1.msra.mxu0 %v2328
        %3372 = vmatprep.subr.mxu0 %v2333
        %3373 = vmatpush1.msra.mxu0 %v2332
        %3374 = vmatprep.subr.mxu0 %v2337
        %3375 = vmatpush1.msra.mxu0 %v2336
        %3376 = vmatprep.subr.mxu0 %v2341
        %3377 = vmatpush1.msra.mxu0 %v2340
        %3378 = vmatprep.subr.mxu0 %v2345
        %3379 = vmatpush1.msra.mxu0 %v2344
        %3380 = vmatprep.subr.mxu0 %v2349
        %3381 = vmatpush1.msra.mxu0 %v2348
        %3382 = vmatprep.subr.mxu0 %v2353
        %3383 = vmatpush1.msra.mxu0 %v2352
        %3384 = vmatprep.subr.mxu0 %v2357
        %3385 = vmatpush1.msra.mxu0 %v2356
        %3386 = vmatprep.subr.mxu0 %v2361
        %3387 = vmatpush1.msra.mxu0 %v2360
        %3388 = vmatprep.subr.mxu0 %v2365
        %3389 = vmatpush1.msra.mxu0 %v2364
        %3390 = vmatprep.subr.mxu0 %v2369
        %3391 = vmatpush1.msra.mxu0 %v2368
        %3392 = vmatprep.subr.mxu0 %v2373
        %3393 = vmatpush1.msra.mxu0 %v2372
        %3394 = vmatprep.subr.mxu0 %v2377
        %3395 = vmatpush1.msra.mxu0 %v2376
        %3396 = vmatprep.subr.mxu0 %v2381
        %3397 = vmatpush1.msra.mxu0 %v2380
        %3398 = vmatprep.subr.mxu0 %v2385
        %3399 = vmatpush1.msra.mxu0 %v2384
        %3400 = vmatprep.subr.mxu0 %v2389
        %3401 = vmatpush1.msra.mxu0 %v2388
        %3402 = vmatprep.subr.mxu0 %v2393
        %3403 = vmatpush1.msra.mxu0 %v2392
        %3404 = vmatprep.subr.mxu0 %v2397
        %3405 = vmatpush1.msra.mxu0 %v2396
        %3406 = vmatprep.subr.mxu0 %v2401
        %3407 = vmatpush1.msra.mxu0 %v2400
        %3408 = vmatprep.subr.mxu0 %v2405
        %3409 = vmatpush1.msra.mxu0 %v2404
        %3410 = vmatprep.subr.mxu0 %v2409
        %3411 = vmatpush1.msra.mxu0 %v2408
        %3412 = vmatprep.subr.mxu0 %v2413
        %3413 = vmatpush1.msra.mxu0 %v2412
        %3414 = vmatprep.subr.mxu0 %v2417
        %3415 = vmatpush1.msra.mxu0 %v2416
        %3416 = vmatprep.subr.mxu0 %v2421
        %3417 = vmatpush1.msra.mxu0 %v2420
        %3418 = vmatprep.subr.mxu0 %v2425
        %3419 = vmatpush1.msra.mxu0 %v2424
        %3420 = vmatprep.subr.mxu0 %v2429
        %3421 = vmatpush1.msra.mxu0 %v2428
        %3422 = vmatprep.subr.mxu0 %v2433
        %3423 = vmatpush1.msra.mxu0 %v2432
        %3424 = vmatprep.subr.mxu0 %v2437
        %3425 = vmatpush1.msra.mxu0 %v2436
        %3426 = vmatprep.subr.mxu0 %v2441
        %3427 = vmatpush1.msra.mxu0 %v2440
        %3428 = vmatprep.subr.mxu0 %v2445
        %3429 = vmatpush1.msra.mxu0 %v2444
        %3430 = vmatprep.mubr.f32.mxu0 %v2305
        %3431 = vmatmul.mubr.f32.gmra.mrb[0].mxu0 %v2304
        %v3432 = vpop.f32.mrb[0].mxu0
        %v3433 = vadd.f32 %v3349, %v3432
        %v3434 = vpop.f32.mrb[0].mxu0
        %v3435 = vadd.f32 %v3353, %v3434
        %3436 = vdwg.mxu0
        %3437 = vmatprep.subr.mxu0 %v2449
        %3438 = vmatpush1.msra.mxu0 %v2448
        %3439 = vmatprep.subr.mxu0 %v2453
        %3440 = vmatpush1.msra.mxu0 %v2452
        %3441 = vmatprep.subr.mxu0 %v2457
        %3442 = vmatpush1.msra.mxu0 %v2456
        %3443 = vmatprep.subr.mxu0 %v2461
        %3444 = vmatpush1.msra.mxu0 %v2460
        %3445 = vmatprep.subr.mxu0 %v2465
        %3446 = vmatpush1.msra.mxu0 %v2464
        %3447 = vmatprep.subr.mxu0 %v2469
        %3448 = vmatpush1.msra.mxu0 %v2468
        %3449 = vmatprep.subr.mxu0 %v2473
        %3450 = vmatpush1.msra.mxu0 %v2472
        %3451 = vmatprep.subr.mxu0 %v2477
        %3452 = vmatpush1.msra.mxu0 %v2476
        %3453 = vmatprep.subr.mxu0 %v2481
        %3454 = vmatpush1.msra.mxu0 %v2480
        %3455 = vmatprep.subr.mxu0 %v2485
        %3456 = vmatpush1.msra.mxu0 %v2484
        %3457 = vmatprep.subr.mxu0 %v2489
        %3458 = vmatpush1.msra.mxu0 %v2488
        %3459 = vmatprep.subr.mxu0 %v2493
        %3460 = vmatpush1.msra.mxu0 %v2492
        %3461 = vmatprep.subr.mxu0 %v2497
        %3462 = vmatpush1.msra.mxu0 %v2496
        %3463 = vmatprep.subr.mxu0 %v2501
        %3464 = vmatpush1.msra.mxu0 %v2500
        %3465 = vmatprep.subr.mxu0 %v2505
        %3466 = vmatpush1.msra.mxu0 %v2504
        %3467 = vmatprep.subr.mxu0 %v2509
        %3468 = vmatpush1.msra.mxu0 %v2508
        %3469 = vmatprep.subr.mxu0 %v2513
        %3470 = vmatpush1.msra.mxu0 %v2512
        %3471 = vmatprep.subr.mxu0 %v2517
        %3472 = vmatpush1.msra.mxu0 %v2516
        %3473 = vmatprep.subr.mxu0 %v2521
        %3474 = vmatpush1.msra.mxu0 %v2520
        %3475 = vmatprep.subr.mxu0 %v2525
        %3476 = vmatpush1.msra.mxu0 %v2524
        %3477 = vmatprep.subr.mxu0 %v2529
        %3478 = vmatpush1.msra.mxu0 %v2528
        %3479 = vmatprep.subr.mxu0 %v2533
        %3480 = vmatpush1.msra.mxu0 %v2532
        %3481 = vmatprep.subr.mxu0 %v2537
        %3482 = vmatpush1.msra.mxu0 %v2536
        %3483 = vmatprep.subr.mxu0 %v2541
        %3484 = vmatpush1.msra.mxu0 %v2540
        %3485 = vmatprep.subr.mxu0 %v2545
        %3486 = vmatpush1.msra.mxu0 %v2544
        %3487 = vmatprep.subr.mxu0 %v2549
        %3488 = vmatpush1.msra.mxu0 %v2548
        %3489 = vmatprep.subr.mxu0 %v2553
        %3490 = vmatpush1.msra.mxu0 %v2552
        %3491 = vmatprep.subr.mxu0 %v2557
        %3492 = vmatpush1.msra.mxu0 %v2556
        %3493 = vmatprep.subr.mxu0 %v2561
        %3494 = vmatpush1.msra.mxu0 %v2560
        %3495 = vmatprep.subr.mxu0 %v2565
        %3496 = vmatpush1.msra.mxu0 %v2564
        %3497 = vmatprep.subr.mxu0 %v2569
        %3498 = vmatpush1.msra.mxu0 %v2568
        %3499 = vmatprep.subr.mxu0 %v2573
        %3500 = vmatpush1.msra.mxu0 %v2572
        %3501 = vmatprep.mubr.f32.mxu0 %v2307
        %3502 = vmatmul.mubr.f32.gmra.mrb[0].mxu0 %v2306
        %v3503 = vpop.f32.mrb[0].mxu0
        %v3504 = vadd.f32 %v3433, %v3503
        %v3505 = vpop.f32.mrb[0].mxu0
        %v3506 = vadd.f32 %v3435, %v3505
        %3507 = vdwg.mxu0
        %3508 = vmatprep.subr.mxu0 %v2577
        %3509 = vmatpush1.msra.mxu0 %v2576
        %3510 = vmatprep.subr.mxu0 %v2581
        %3511 = vmatpush1.msra.mxu0 %v2580
        %3512 = vmatprep.subr.mxu0 %v2585
        %3513 = vmatpush1.msra.mxu0 %v2584
        %3514 = vmatprep.subr.mxu0 %v2589
        %3515 = vmatpush1.msra.mxu0 %v2588
        %3516 = vmatprep.subr.mxu0 %v2593
        %3517 = vmatpush1.msra.mxu0 %v2592
        %3518 = vmatprep.subr.mxu0 %v2597
        %3519 = vmatpush1.msra.mxu0 %v2596
        %3520 = vmatprep.subr.mxu0 %v2601
        %3521 = vmatpush1.msra.mxu0 %v2600
        %3522 = vmatprep.subr.mxu0 %v2605
        %3523 = vmatpush1.msra.mxu0 %v2604
        %3524 = vmatprep.subr.mxu0 %v2609
        %3525 = vmatpush1.msra.mxu0 %v2608
        %3526 = vmatprep.subr.mxu0 %v2613
        %3527 = vmatpush1.msra.mxu0 %v2612
        %3528 = vmatprep.subr.mxu0 %v2617
        %3529 = vmatpush1.msra.mxu0 %v2616
        %3530 = vmatprep.subr.mxu0 %v2621
        %3531 = vmatpush1.msra.mxu0 %v2620
        %3532 = vmatprep.subr.mxu0 %v2625
        %3533 = vmatpush1.msra.mxu0 %v2624
        %3534 = vmatprep.subr.mxu0 %v2629
        %3535 = vmatpush1.msra.mxu0 %v2628
        %3536 = vmatprep.subr.mxu0 %v2633
        %3537 = vmatpush1.msra.mxu0 %v2632
        %3538 = vmatprep.subr.mxu0 %v2637
        %3539 = vmatpush1.msra.mxu0 %v2636
        %3540 = vmatprep.subr.mxu0 %v2641
        %3541 = vmatpush1.msra.mxu0 %v2640
        %3542 = vmatprep.subr.mxu0 %v2645
        %3543 = vmatpush1.msra.mxu0 %v2644
        %3544 = vmatprep.subr.mxu0 %v2649
        %3545 = vmatpush1.msra.mxu0 %v2648
        %3546 = vmatprep.subr.mxu0 %v2653
        %3547 = vmatpush1.msra.mxu0 %v2652
        %3548 = vmatprep.subr.mxu0 %v2657
        %3549 = vmatpush1.msra.mxu0 %v2656
        %3550 = vmatprep.subr.mxu0 %v2661
        %3551 = vmatpush1.msra.mxu0 %v2660
        %3552 = vmatprep.subr.mxu0 %v2665
        %3553 = vmatpush1.msra.mxu0 %v2664
        %3554 = vmatprep.subr.mxu0 %v2669
        %3555 = vmatpush1.msra.mxu0 %v2668
        %3556 = vmatprep.subr.mxu0 %v2673
        %3557 = vmatpush1.msra.mxu0 %v2672
        %3558 = vmatprep.subr.mxu0 %v2677
        %3559 = vmatpush1.msra.mxu0 %v2676
        %3560 = vmatprep.subr.mxu0 %v2681
        %3561 = vmatpush1.msra.mxu0 %v2680
        %3562 = vmatprep.subr.mxu0 %v2685
        %3563 = vmatpush1.msra.mxu0 %v2684
        %3564 = vmatprep.subr.mxu0 %v2689
        %3565 = vmatpush1.msra.mxu0 %v2688
        %3566 = vmatprep.subr.mxu0 %v2693
        %3567 = vmatpush1.msra.mxu0 %v2692
        %3568 = vmatprep.subr.mxu0 %v2697
        %3569 = vmatpush1.msra.mxu0 %v2696
        %3570 = vmatprep.subr.mxu0 %v2701
        %3571 = vmatpush1.msra.mxu0 %v2700
        %3572 = vmatprep.mubr.f32.mxu0 %v2309
        %3573 = vmatmul.mubr.f32.gmra.mrb[0].mxu0 %v2308
        %v3574 = vpop.f32.mrb[0].mxu0
        %v3575 = vadd.f32 %v3504, %v3574
        %v3576 = vpop.f32.mrb[0].mxu0
        %v3577 = vadd.f32 %v3506, %v3576
        %3578 = vdwg.mxu0
        %3579 = vmatprep.subr.mxu0 %v2705
        %3580 = vmatpush1.msra.mxu0 %v2704
        %3581 = vmatprep.subr.mxu0 %v2709
        %3582 = vmatpush1.msra.mxu0 %v2708
        %3583 = vmatprep.subr.mxu0 %v2713
        %3584 = vmatpush1.msra.mxu0 %v2712
        %3585 = vmatprep.subr.mxu0 %v2717
        %3586 = vmatpush1.msra.mxu0 %v2716
        %3587 = vmatprep.subr.mxu0 %v2721
        %3588 = vmatpush1.msra.mxu0 %v2720
        %3589 = vmatprep.subr.mxu0 %v2725
        %3590 = vmatpush1.msra.mxu0 %v2724
        %3591 = vmatprep.subr.mxu0 %v2729
        %3592 = vmatpush1.msra.mxu0 %v2728
        %3593 = vmatprep.subr.mxu0 %v2733
        %3594 = vmatpush1.msra.mxu0 %v2732
        %3595 = vmatprep.subr.mxu0 %v2737
        %3596 = vmatpush1.msra.mxu0 %v2736
        %3597 = vmatprep.subr.mxu0 %v2741
        %3598 = vmatpush1.msra.mxu0 %v2740
        %3599 = vmatprep.subr.mxu0 %v2745
        %3600 = vmatpush1.msra.mxu0 %v2744
        %3601 = vmatprep.subr.mxu0 %v2749
        %3602 = vmatpush1.msra.mxu0 %v2748
        %3603 = vmatprep.subr.mxu0 %v2753
        %3604 = vmatpush1.msra.mxu0 %v2752
        %3605 = vmatprep.subr.mxu0 %v2757
        %3606 = vmatpush1.msra.mxu0 %v2756
        %3607 = vmatprep.subr.mxu0 %v2761
        %3608 = vmatpush1.msra.mxu0 %v2760
        %3609 = vmatprep.subr.mxu0 %v2765
        %3610 = vmatpush1.msra.mxu0 %v2764
        %3611 = vmatprep.subr.mxu0 %v2769
        %3612 = vmatpush1.msra.mxu0 %v2768
        %3613 = vmatprep.subr.mxu0 %v2773
        %3614 = vmatpush1.msra.mxu0 %v2772
        %3615 = vmatprep.subr.mxu0 %v2777
        %3616 = vmatpush1.msra.mxu0 %v2776
        %3617 = vmatprep.subr.mxu0 %v2781
        %3618 = vmatpush1.msra.mxu0 %v2780
        %3619 = vmatprep.subr.mxu0 %v2785
        %3620 = vmatpush1.msra.mxu0 %v2784
        %3621 = vmatprep.subr.mxu0 %v2789
        %3622 = vmatpush1.msra.mxu0 %v2788
        %3623 = vmatprep.subr.mxu0 %v2793
        %3624 = vmatpush1.msra.mxu0 %v2792
        %3625 = vmatprep.subr.mxu0 %v2797
        %3626 = vmatpush1.msra.mxu0 %v2796
        %3627 = vmatprep.subr.mxu0 %v2801
        %3628 = vmatpush1.msra.mxu0 %v2800
        %3629 = vmatprep.subr.mxu0 %v2805
        %3630 = vmatpush1.msra.mxu0 %v2804
        %3631 = vmatprep.subr.mxu0 %v2809
        %3632 = vmatpush1.msra.mxu0 %v2808
        %3633 = vmatprep.subr.mxu0 %v2813
        %3634 = vmatpush1.msra.mxu0 %v2812
        %3635 = vmatprep.subr.mxu0 %v2817
        %3636 = vmatpush1.msra.mxu0 %v2816
        %3637 = vmatprep.subr.mxu0 %v2821
        %3638 = vmatpush1.msra.mxu0 %v2820
        %3639 = vmatprep.subr.mxu0 %v2825
        %3640 = vmatpush1.msra.mxu0 %v2824
        %3641 = vmatprep.subr.mxu0 %v2829
        %3642 = vmatpush1.msra.mxu0 %v2828
        %3643 = vmatprep.mubr.f32.mxu0 %v2311
        %3644 = vmatmul.mubr.f32.gmra.mrb[0].mxu0 %v2310
        %v3645 = vpop.f32.mrb[0].mxu0
        %v3646 = vadd.f32 %v3575, %v3645
        %v3647 = vpop.f32.mrb[0].mxu0
        %v3648 = vadd.f32 %v3577, %v3647
        %3649 = vdwg.mxu0
        %3650 = vmatprep.subr.mxu0 %v2833
        %3651 = vmatpush1.msra.mxu0 %v2832
        %3652 = vmatprep.subr.mxu0 %v2837
        %3653 = vmatpush1.msra.mxu0 %v2836
        %3654 = vmatprep.subr.mxu0 %v2841
        %3655 = vmatpush1.msra.mxu0 %v2840
        %3656 = vmatprep.subr.mxu0 %v2845
        %3657 = vmatpush1.msra.mxu0 %v2844
        %3658 = vmatprep.subr.mxu0 %v2849
        %3659 = vmatpush1.msra.mxu0 %v2848
        %3660 = vmatprep.subr.mxu0 %v2853
        %3661 = vmatpush1.msra.mxu0 %v2852
        %3662 = vmatprep.subr.mxu0 %v2857
        %3663 = vmatpush1.msra.mxu0 %v2856
        %3664 = vmatprep.subr.mxu0 %v2861
        %3665 = vmatpush1.msra.mxu0 %v2860
        %3666 = vmatprep.subr.mxu0 %v2865
        %3667 = vmatpush1.msra.mxu0 %v2864
        %3668 = vmatprep.subr.mxu0 %v2869
        %3669 = vmatpush1.msra.mxu0 %v2868
        %3670 = vmatprep.subr.mxu0 %v2873
        %3671 = vmatpush1.msra.mxu0 %v2872
        %3672 = vmatprep.subr.mxu0 %v2877
        %3673 = vmatpush1.msra.mxu0 %v2876
        %3674 = vmatprep.subr.mxu0 %v2881
        %3675 = vmatpush1.msra.mxu0 %v2880
        %3676 = vmatprep.subr.mxu0 %v2885
        %3677 = vmatpush1.msra.mxu0 %v2884
        %3678 = vmatprep.subr.mxu0 %v2889
        %3679 = vmatpush1.msra.mxu0 %v2888
        %3680 = vmatprep.subr.mxu0 %v2893
        %3681 = vmatpush1.msra.mxu0 %v2892
        %3682 = vmatprep.subr.mxu0 %v2897
        %3683 = vmatpush1.msra.mxu0 %v2896
        %3684 = vmatprep.subr.mxu0 %v2901
        %3685 = vmatpush1.msra.mxu0 %v2900
        %3686 = vmatprep.subr.mxu0 %v2905
        %3687 = vmatpush1.msra.mxu0 %v2904
        %3688 = vmatprep.subr.mxu0 %v2909
        %3689 = vmatpush1.msra.mxu0 %v2908
        %3690 = vmatprep.subr.mxu0 %v2913
        %3691 = vmatpush1.msra.mxu0 %v2912
        %3692 = vmatprep.subr.mxu0 %v2917
        %3693 = vmatpush1.msra.mxu0 %v2916
        %3694 = vmatprep.subr.mxu0 %v2921
        %3695 = vmatpush1.msra.mxu0 %v2920
        %3696 = vmatprep.subr.mxu0 %v2925
        %3697 = vmatpush1.msra.mxu0 %v2924
        %3698 = vmatprep.subr.mxu0 %v2929
        %3699 = vmatpush1.msra.mxu0 %v2928
        %3700 = vmatprep.subr.mxu0 %v2933
        %3701 = vmatpush1.msra.mxu0 %v2932
        %3702 = vmatprep.subr.mxu0 %v2937
        %3703 = vmatpush1.msra.mxu0 %v2936
        %3704 = vmatprep.subr.mxu0 %v2941
        %3705 = vmatpush1.msra.mxu0 %v2940
        %3706 = vmatprep.subr.mxu0 %v2945
        %3707 = vmatpush1.msra.mxu0 %v2944
        %3708 = vmatprep.subr.mxu0 %v2949
        %3709 = vmatpush1.msra.mxu0 %v2948
        %3710 = vmatprep.subr.mxu0 %v2953
        %3711 = vmatpush1.msra.mxu0 %v2952
        %3712 = vmatprep.subr.mxu0 %v2957
        %3713 = vmatpush1.msra.mxu0 %v2956
        %3714 = vmatprep.mubr.f32.mxu0 %v2313
        %3715 = vmatmul.mubr.f32.gmra.mrb[0].mxu0 %v2312
        %v3716 = vpop.f32.mrb[0].mxu0
        %v3717 = vadd.f32 %v3646, %v3716
        %v3718 = vpop.f32.mrb[0].mxu0
        %v3719 = vadd.f32 %v3648, %v3718
        %3720 = vdwg.mxu0
        %3721 = vmatprep.subr.mxu0 %v2961
        %3722 = vmatpush1.msra.mxu0 %v2960
        %3723 = vmatprep.subr.mxu0 %v2965
        %3724 = vmatpush1.msra.mxu0 %v2964
        %3725 = vmatprep.subr.mxu0 %v2969
        %3726 = vmatpush1.msra.mxu0 %v2968
        %3727 = vmatprep.subr.mxu0 %v2973
        %3728 = vmatpush1.msra.mxu0 %v2972
        %3729 = vmatprep.subr.mxu0 %v2977
        %3730 = vmatpush1.msra.mxu0 %v2976
        %3731 = vmatprep.subr.mxu0 %v2981
        %3732 = vmatpush1.msra.mxu0 %v2980
        %3733 = vmatprep.subr.mxu0 %v2985
        %3734 = vmatpush1.msra.mxu0 %v2984
        %3735 = vmatprep.subr.mxu0 %v2989
        %3736 = vmatpush1.msra.mxu0 %v2988
        %3737 = vmatprep.subr.mxu0 %v2993
        %3738 = vmatpush1.msra.mxu0 %v2992
        %3739 = vmatprep.subr.mxu0 %v2997
        %3740 = vmatpush1.msra.mxu0 %v2996
        %3741 = vmatprep.subr.mxu0 %v3001
        %3742 = vmatpush1.msra.mxu0 %v3000
        %3743 = vmatprep.subr.mxu0 %v3005
        %3744 = vmatpush1.msra.mxu0 %v3004
        %3745 = vmatprep.subr.mxu0 %v3009
        %3746 = vmatpush1.msra.mxu0 %v3008
        %3747 = vmatprep.subr.mxu0 %v3013
        %3748 = vmatpush1.msra.mxu0 %v3012
        %3749 = vmatprep.subr.mxu0 %v3017
        %3750 = vmatpush1.msra.mxu0 %v3016
        %3751 = vmatprep.subr.mxu0 %v3021
        %3752 = vmatpush1.msra.mxu0 %v3020
        %3753 = vmatprep.subr.mxu0 %v3025
        %3754 = vmatpush1.msra.mxu0 %v3024
        %3755 = vmatprep.subr.mxu0 %v3029
        %3756 = vmatpush1.msra.mxu0 %v3028
        %3757 = vmatprep.subr.mxu0 %v3033
        %3758 = vmatpush1.msra.mxu0 %v3032
        %3759 = vmatprep.subr.mxu0 %v3037
        %3760 = vmatpush1.msra.mxu0 %v3036
        %3761 = vmatprep.subr.mxu0 %v3041
        %3762 = vmatpush1.msra.mxu0 %v3040
        %3763 = vmatprep.subr.mxu0 %v3045
        %3764 = vmatpush1.msra.mxu0 %v3044
        %3765 = vmatprep.subr.mxu0 %v3049
        %3766 = vmatpush1.msra.mxu0 %v3048
        %3767 = vmatprep.subr.mxu0 %v3053
        %3768 = vmatpush1.msra.mxu0 %v3052
        %3769 = vmatprep.subr.mxu0 %v3057
        %3770 = vmatpush1.msra.mxu0 %v3056
        %3771 = vmatprep.subr.mxu0 %v3061
        %3772 = vmatpush1.msra.mxu0 %v3060
        %3773 = vmatprep.subr.mxu0 %v3065
        %3774 = vmatpush1.msra.mxu0 %v3064
        %3775 = vmatprep.subr.mxu0 %v3069
        %3776 = vmatpush1.msra.mxu0 %v3068
        %3777 = vmatprep.subr.mxu0 %v3073
        %3778 = vmatpush1.msra.mxu0 %v3072
        %3779 = vmatprep.subr.mxu0 %v3077
        %3780 = vmatpush1.msra.mxu0 %v3076
        %3781 = vmatprep.subr.mxu0 %v3081
        %3782 = vmatpush1.msra.mxu0 %v3080
        %3783 = vmatprep.subr.mxu0 %v3085
        %3784 = vmatpush1.msra.mxu0 %v3084
        %3785 = vmatprep.mubr.f32.mxu0 %v2315
        %3786 = vmatmul.mubr.f32.gmra.mrb[0].mxu0 %v2314
        %v3787 = vpop.f32.mrb[0].mxu0
        %v3788 = vadd.f32 %v3717, %v3787
        %v3789 = vpop.f32.mrb[0].mxu0
        %v3790 = vadd.f32 %v3719, %v3789
        %3791 = vdwg.mxu0
        %3792 = vmatprep.subr.mxu0 %v3089
        %3793 = vmatpush1.msra.mxu0 %v3088
        %3794 = vmatprep.subr.mxu0 %v3093
        %3795 = vmatpush1.msra.mxu0 %v3092
        %3796 = vmatprep.subr.mxu0 %v3097
        %3797 = vmatpush1.msra.mxu0 %v3096
        %3798 = vmatprep.subr.mxu0 %v3101
        %3799 = vmatpush1.msra.mxu0 %v3100
        %3800 = vmatprep.subr.mxu0 %v3105
        %3801 = vmatpush1.msra.mxu0 %v3104
        %3802 = vmatprep.subr.mxu0 %v3109
        %3803 = vmatpush1.msra.mxu0 %v3108
        %3804 = vmatprep.subr.mxu0 %v3113
        %3805 = vmatpush1.msra.mxu0 %v3112
        %3806 = vmatprep.subr.mxu0 %v3117
        %3807 = vmatpush1.msra.mxu0 %v3116
        %3808 = vmatprep.subr.mxu0 %v3121
        %3809 = vmatpush1.msra.mxu0 %v3120
        %3810 = vmatprep.subr.mxu0 %v3125
        %3811 = vmatpush1.msra.mxu0 %v3124
        %3812 = vmatprep.subr.mxu0 %v3129
        %3813 = vmatpush1.msra.mxu0 %v3128
        %3814 = vmatprep.subr.mxu0 %v3133
        %3815 = vmatpush1.msra.mxu0 %v3132
        %3816 = vmatprep.subr.mxu0 %v3137
        %3817 = vmatpush1.msra.mxu0 %v3136
        %3818 = vmatprep.subr.mxu0 %v3141
        %3819 = vmatpush1.msra.mxu0 %v3140
        %3820 = vmatprep.subr.mxu0 %v3145
        %3821 = vmatpush1.msra.mxu0 %v3144
        %3822 = vmatprep.subr.mxu0 %v3149
        %3823 = vmatpush1.msra.mxu0 %v3148
        %3824 = vmatprep.subr.mxu0 %v3153
        %3825 = vmatpush1.msra.mxu0 %v3152
        %3826 = vmatprep.subr.mxu0 %v3157
        %3827 = vmatpush1.msra.mxu0 %v3156
        %3828 = vmatprep.subr.mxu0 %v3161
        %3829 = vmatpush1.msra.mxu0 %v3160
        %3830 = vmatprep.subr.mxu0 %v3165
        %3831 = vmatpush1.msra.mxu0 %v3164
        %3832 = vmatprep.subr.mxu0 %v3169
        %3833 = vmatpush1.msra.mxu0 %v3168
        %3834 = vmatprep.subr.mxu0 %v3173
        %3835 = vmatpush1.msra.mxu0 %v3172
        %3836 = vmatprep.subr.mxu0 %v3177
        %3837 = vmatpush1.msra.mxu0 %v3176
        %3838 = vmatprep.subr.mxu0 %v3181
        %3839 = vmatpush1.msra.mxu0 %v3180
        %3840 = vmatprep.subr.mxu0 %v3185
        %3841 = vmatpush1.msra.mxu0 %v3184
        %3842 = vmatprep.subr.mxu0 %v3189
        %3843 = vmatpush1.msra.mxu0 %v3188
        %3844 = vmatprep.subr.mxu0 %v3193
        %3845 = vmatpush1.msra.mxu0 %v3192
        %3846 = vmatprep.subr.mxu0 %v3197
        %3847 = vmatpush1.msra.mxu0 %v3196
        %3848 = vmatprep.subr.mxu0 %v3201
        %3849 = vmatpush1.msra.mxu0 %v3200
        %3850 = vmatprep.subr.mxu0 %v3205
        %3851 = vmatpush1.msra.mxu0 %v3204
        %3852 = vmatprep.subr.mxu0 %v3209
        %3853 = vmatpush1.msra.mxu0 %v3208
        %3854 = vmatprep.subr.mxu0 %v3213
        %3855 = vmatpush1.msra.mxu0 %v3212
        %3856 = vmatprep.mubr.f32.mxu0 %v2317
        %3857 = vmatmul.mubr.f32.gmra.mrb[0].mxu0 %v2316
        %v3858 = vpop.f32.mrb[0].mxu0
        %v3859 = vadd.f32 %v3788, %v3858
        %v3860 = vpop.f32.mrb[0].mxu0
        %v3861 = vadd.f32 %v3790, %v3860
        %3862 = vdwg.mxu0
        %3863 = vmatprep.subr.mxu0 %v3217
        %3864 = vmatpush1.msra.mxu0 %v3216
        %3865 = vmatprep.subr.mxu0 %v3221
        %3866 = vmatpush1.msra.mxu0 %v3220
        %3867 = vmatprep.subr.mxu0 %v3225
        %3868 = vmatpush1.msra.mxu0 %v3224
        %3869 = vmatprep.subr.mxu0 %v3229
        %3870 = vmatpush1.msra.mxu0 %v3228
        %3871 = vmatprep.subr.mxu0 %v3233
        %3872 = vmatpush1.msra.mxu0 %v3232
        %3873 = vmatprep.subr.mxu0 %v3237
        %3874 = vmatpush1.msra.mxu0 %v3236
        %3875 = vmatprep.subr.mxu0 %v3241
        %3876 = vmatpush1.msra.mxu0 %v3240
        %3877 = vmatprep.subr.mxu0 %v3245
        %3878 = vmatpush1.msra.mxu0 %v3244
        %3879 = vmatprep.subr.mxu0 %v3249
        %3880 = vmatpush1.msra.mxu0 %v3248
        %3881 = vmatprep.subr.mxu0 %v3253
        %3882 = vmatpush1.msra.mxu0 %v3252
        %3883 = vmatprep.subr.mxu0 %v3257
        %3884 = vmatpush1.msra.mxu0 %v3256
        %3885 = vmatprep.subr.mxu0 %v3261
        %3886 = vmatpush1.msra.mxu0 %v3260
        %3887 = vmatprep.subr.mxu0 %v3265
        %3888 = vmatpush1.msra.mxu0 %v3264
        %3889 = vmatprep.subr.mxu0 %v3269
        %3890 = vmatpush1.msra.mxu0 %v3268
        %3891 = vmatprep.subr.mxu0 %v3273
        %3892 = vmatpush1.msra.mxu0 %v3272
        %3893 = vmatprep.subr.mxu0 %v3277
        %3894 = vmatpush1.msra.mxu0 %v3276
        %3895 = vmatprep.subr.mxu0 %v3281
        %3896 = vmatpush1.msra.mxu0 %v3280
        %3897 = vmatprep.subr.mxu0 %v3285
        %3898 = vmatpush1.msra.mxu0 %v3284
        %3899 = vmatprep.subr.mxu0 %v3289
        %3900 = vmatpush1.msra.mxu0 %v3288
        %3901 = vmatprep.subr.mxu0 %v3293
        %3902 = vmatpush1.msra.mxu0 %v3292
        %3903 = vmatprep.subr.mxu0 %v3297
        %3904 = vmatpush1.msra.mxu0 %v3296
        %3905 = vmatprep.subr.mxu0 %v3301
        %3906 = vmatpush1.msra.mxu0 %v3300
        %3907 = vmatprep.subr.mxu0 %v3305
        %3908 = vmatpush1.msra.mxu0 %v3304
        %3909 = vmatprep.subr.mxu0 %v3309
        %3910 = vmatpush1.msra.mxu0 %v3308
        %3911 = vmatprep.subr.mxu0 %v3313
        %3912 = vmatpush1.msra.mxu0 %v3312
        %3913 = vmatprep.subr.mxu0 %v3317
        %3914 = vmatpush1.msra.mxu0 %v3316
        %3915 = vmatprep.subr.mxu0 %v3321
        %3916 = vmatpush1.msra.mxu0 %v3320
        %3917 = vmatprep.subr.mxu0 %v3325
        %3918 = vmatpush1.msra.mxu0 %v3324
        %3919 = vmatprep.subr.mxu0 %v3329
        %3920 = vmatpush1.msra.mxu0 %v3328
        %3921 = vmatprep.subr.mxu0 %v3333
        %3922 = vmatpush1.msra.mxu0 %v3332
        %3923 = vmatprep.subr.mxu0 %v3337
        %3924 = vmatpush1.msra.mxu0 %v3336
        %3925 = vmatprep.subr.mxu0 %v3341
        %3926 = vmatpush1.msra.mxu0 %v3340
        %3927 = vmatprep.mubr.f32.mxu0 %v2319
        %3928 = vmatmul.mubr.f32.gmra.mrb[0].mxu0 %v2318
        %v3929 = vpop.f32.mrb[0].mxu0
        %v3930 = vadd.f32 %v3859, %v3929
        %v3931 = vpop.f32.mrb[0].mxu0
        %v3932 = vadd.f32 %v3861, %v3931
        %3933 = vdwg.mxu0
        %3934 = vmatprep.subr.mxu0 %v2323
        %3935 = vmatpush1.msra.mxu0 %v2322
        %3936 = vmatprep.subr.mxu0 %v2327
        %3937 = vmatpush1.msra.mxu0 %v2326
        %3938 = vmatprep.subr.mxu0 %v2331
        %3939 = vmatpush1.msra.mxu0 %v2330
        %3940 = vmatprep.subr.mxu0 %v2335
        %3941 = vmatpush1.msra.mxu0 %v2334
        %3942 = vmatprep.subr.mxu0 %v2339
        %3943 = vmatpush1.msra.mxu0 %v2338
        %3944 = vmatprep.subr.mxu0 %v2343
        %3945 = vmatpush1.msra.mxu0 %v2342
        %3946 = vmatprep.subr.mxu0 %v2347
        %3947 = vmatpush1.msra.mxu0 %v2346
        %3948 = vmatprep.subr.mxu0 %v2351
        %3949 = vmatpush1.msra.mxu0 %v2350
        %3950 = vmatprep.subr.mxu0 %v2355
        %3951 = vmatpush1.msra.mxu0 %v2354
        %3952 = vmatprep.subr.mxu0 %v2359
        %3953 = vmatpush1.msra.mxu0 %v2358
        %3954 = vmatprep.subr.mxu0 %v2363
        %3955 = vmatpush1.msra.mxu0 %v2362
        %3956 = vmatprep.subr.mxu0 %v2367
        %3957 = vmatpush1.msra.mxu0 %v2366
        %3958 = vmatprep.subr.mxu0 %v2371
        %3959 = vmatpush1.msra.mxu0 %v2370
        %3960 = vmatprep.subr.mxu0 %v2375
        %3961 = vmatpush1.msra.mxu0 %v2374
        %3962 = vmatprep.subr.mxu0 %v2379
        %3963 = vmatpush1.msra.mxu0 %v2378
        %3964 = vmatprep.subr.mxu0 %v2383
        %3965 = vmatpush1.msra.mxu0 %v2382
        %3966 = vmatprep.subr.mxu0 %v2387
        %3967 = vmatpush1.msra.mxu0 %v2386
        %3968 = vmatprep.subr.mxu0 %v2391
        %3969 = vmatpush1.msra.mxu0 %v2390
        %3970 = vmatprep.subr.mxu0 %v2395
        %3971 = vmatpush1.msra.mxu0 %v2394
        %3972 = vmatprep.subr.mxu0 %v2399
        %3973 = vmatpush1.msra.mxu0 %v2398
        %3974 = vmatprep.subr.mxu0 %v2403
        %3975 = vmatpush1.msra.mxu0 %v2402
        %3976 = vmatprep.subr.mxu0 %v2407
        %3977 = vmatpush1.msra.mxu0 %v2406
        %3978 = vmatprep.subr.mxu0 %v2411
        %3979 = vmatpush1.msra.mxu0 %v2410
        %3980 = vmatprep.subr.mxu0 %v2415
        %3981 = vmatpush1.msra.mxu0 %v2414
        %3982 = vmatprep.subr.mxu0 %v2419
        %3983 = vmatpush1.msra.mxu0 %v2418
        %3984 = vmatprep.subr.mxu0 %v2423
        %3985 = vmatpush1.msra.mxu0 %v2422
        %3986 = vmatprep.subr.mxu0 %v2427
        %3987 = vmatpush1.msra.mxu0 %v2426
        %3988 = vmatprep.subr.mxu0 %v2431
        %3989 = vmatpush1.msra.mxu0 %v2430
        %3990 = vmatprep.subr.mxu0 %v2435
        %3991 = vmatpush1.msra.mxu0 %v2434
        %3992 = vmatprep.subr.mxu0 %v2439
        %3993 = vmatpush1.msra.mxu0 %v2438
        %3994 = vmatprep.subr.mxu0 %v2443
        %3995 = vmatpush1.msra.mxu0 %v2442
        %3996 = vmatprep.subr.mxu0 %v2447
        %3997 = vmatpush1.msra.mxu0 %v2446
        %3998 = vmatprep.mubr.f32.mxu0 %v2305
        %3999 = vmatmul.mubr.f32.gmra.mrb[0].mxu0 %v2304
        %v4000 = vpop.f32.mrb[0].mxu0
        %v4001 = vadd.f32 %v3357, %v4000
        %v4002 = vpop.f32.mrb[0].mxu0
        %v4003 = vadd.f32 %v3361, %v4002
        %4004 = vdwg.mxu0
        %4005 = vmatprep.subr.mxu0 %v2451
        %4006 = vmatpush1.msra.mxu0 %v2450
        %4007 = vmatprep.subr.mxu0 %v2455
        %4008 = vmatpush1.msra.mxu0 %v2454
        %4009 = vmatprep.subr.mxu0 %v2459
        %4010 = vmatpush1.msra.mxu0 %v2458
        %4011 = vmatprep.subr.mxu0 %v2463
        %4012 = vmatpush1.msra.mxu0 %v2462
        %4013 = vmatprep.subr.mxu0 %v2467
        %4014 = vmatpush1.msra.mxu0 %v2466
        %4015 = vmatprep.subr.mxu0 %v2471
        %4016 = vmatpush1.msra.mxu0 %v2470
        %4017 = vmatprep.subr.mxu0 %v2475
        %4018 = vmatpush1.msra.mxu0 %v2474
        %4019 = vmatprep.subr.mxu0 %v2479
        %4020 = vmatpush1.msra.mxu0 %v2478
        %4021 = vmatprep.subr.mxu0 %v2483
        %4022 = vmatpush1.msra.mxu0 %v2482
        %4023 = vmatprep.subr.mxu0 %v2487
        %4024 = vmatpush1.msra.mxu0 %v2486
        %4025 = vmatprep.subr.mxu0 %v2491
        %4026 = vmatpush1.msra.mxu0 %v2490
        %4027 = vmatprep.subr.mxu0 %v2495
        %4028 = vmatpush1.msra.mxu0 %v2494
        %4029 = vmatprep.subr.mxu0 %v2499
        %4030 = vmatpush1.msra.mxu0 %v2498
        %4031 = vmatprep.subr.mxu0 %v2503
        %4032 = vmatpush1.msra.mxu0 %v2502
        %4033 = vmatprep.subr.mxu0 %v2507
        %4034 = vmatpush1.msra.mxu0 %v2506
        %4035 = vmatprep.subr.mxu0 %v2511
        %4036 = vmatpush1.msra.mxu0 %v2510
        %4037 = vmatprep.subr.mxu0 %v2515
        %4038 = vmatpush1.msra.mxu0 %v2514
        %4039 = vmatprep.subr.mxu0 %v2519
        %4040 = vmatpush1.msra.mxu0 %v2518
        %4041 = vmatprep.subr.mxu0 %v2523
        %4042 = vmatpush1.msra.mxu0 %v2522
        %4043 = vmatprep.subr.mxu0 %v2527
        %4044 = vmatpush1.msra.mxu0 %v2526
        %4045 = vmatprep.subr.mxu0 %v2531
        %4046 = vmatpush1.msra.mxu0 %v2530
        %4047 = vmatprep.subr.mxu0 %v2535
        %4048 = vmatpush1.msra.mxu0 %v2534
        %4049 = vmatprep.subr.mxu0 %v2539
        %4050 = vmatpush1.msra.mxu0 %v2538
        %4051 = vmatprep.subr.mxu0 %v2543
        %4052 = vmatpush1.msra.mxu0 %v2542
        %4053 = vmatprep.subr.mxu0 %v2547
        %4054 = vmatpush1.msra.mxu0 %v2546
        %4055 = vmatprep.subr.mxu0 %v2551
        %4056 = vmatpush1.msra.mxu0 %v2550
        %4057 = vmatprep.subr.mxu0 %v2555
        %4058 = vmatpush1.msra.mxu0 %v2554
        %4059 = vmatprep.subr.mxu0 %v2559
        %4060 = vmatpush1.msra.mxu0 %v2558
        %4061 = vmatprep.subr.mxu0 %v2563
        %4062 = vmatpush1.msra.mxu0 %v2562
        %4063 = vmatprep.subr.mxu0 %v2567
        %4064 = vmatpush1.msra.mxu0 %v2566
        %4065 = vmatprep.subr.mxu0 %v2571
        %4066 = vmatpush1.msra.mxu0 %v2570
        %4067 = vmatprep.subr.mxu0 %v2575
        %4068 = vmatpush1.msra.mxu0 %v2574
        %4069 = vmatprep.mubr.f32.mxu0 %v2307
        %4070 = vmatmul.mubr.f32.gmra.mrb[0].mxu0 %v2306
        %v4071 = vpop.f32.mrb[0].mxu0
        %v4072 = vadd.f32 %v4001, %v4071
        %v4073 = vpop.f32.mrb[0].mxu0
        %v4074 = vadd.f32 %v4003, %v4073
        %4075 = vdwg.mxu0
        %4076 = vmatprep.subr.mxu0 %v2579
        %4077 = vmatpush1.msra.mxu0 %v2578
        %4078 = vmatprep.subr.mxu0 %v2583
        %4079 = vmatpush1.msra.mxu0 %v2582
        %4080 = vmatprep.subr.mxu0 %v2587
        %4081 = vmatpush1.msra.mxu0 %v2586
        %4082 = vmatprep.subr.mxu0 %v2591
        %4083 = vmatpush1.msra.mxu0 %v2590
        %4084 = vmatprep.subr.mxu0 %v2595
        %4085 = vmatpush1.msra.mxu0 %v2594
        %4086 = vmatprep.subr.mxu0 %v2599
        %4087 = vmatpush1.msra.mxu0 %v2598
        %4088 = vmatprep.subr.mxu0 %v2603
        %4089 = vmatpush1.msra.mxu0 %v2602
        %4090 = vmatprep.subr.mxu0 %v2607
        %4091 = vmatpush1.msra.mxu0 %v2606
        %4092 = vmatprep.subr.mxu0 %v2611
        %4093 = vmatpush1.msra.mxu0 %v2610
        %4094 = vmatprep.subr.mxu0 %v2615
        %4095 = vmatpush1.msra.mxu0 %v2614
        %4096 = vmatprep.subr.mxu0 %v2619
        %4097 = vmatpush1.msra.mxu0 %v2618
        %4098 = vmatprep.subr.mxu0 %v2623
        %4099 = vmatpush1.msra.mxu0 %v2622
        %4100 = vmatprep.subr.mxu0 %v2627
        %4101 = vmatpush1.msra.mxu0 %v2626
        %4102 = vmatprep.subr.mxu0 %v2631
        %4103 = vmatpush1.msra.mxu0 %v2630
        %4104 = vmatprep.subr.mxu0 %v2635
        %4105 = vmatpush1.msra.mxu0 %v2634
        %4106 = vmatprep.subr.mxu0 %v2639
        %4107 = vmatpush1.msra.mxu0 %v2638
        %4108 = vmatprep.subr.mxu0 %v2643
        %4109 = vmatpush1.msra.mxu0 %v2642
        %4110 = vmatprep.subr.mxu0 %v2647
        %4111 = vmatpush1.msra.mxu0 %v2646
        %4112 = vmatprep.subr.mxu0 %v2651
        %4113 = vmatpush1.msra.mxu0 %v2650
        %4114 = vmatprep.subr.mxu0 %v2655
        %4115 = vmatpush1.msra.mxu0 %v2654
        %4116 = vmatprep.subr.mxu0 %v2659
        %4117 = vmatpush1.msra.mxu0 %v2658
        %4118 = vmatprep.subr.mxu0 %v2663
        %4119 = vmatpush1.msra.mxu0 %v2662
        %4120 = vmatprep.subr.mxu0 %v2667
        %4121 = vmatpush1.msra.mxu0 %v2666
        %4122 = vmatprep.subr.mxu0 %v2671
        %4123 = vmatpush1.msra.mxu0 %v2670
        %4124 = vmatprep.subr.mxu0 %v2675
        %4125 = vmatpush1.msra.mxu0 %v2674
        %4126 = vmatprep.subr.mxu0 %v2679
        %4127 = vmatpush1.msra.mxu0 %v2678
        %4128 = vmatprep.subr.mxu0 %v2683
        %4129 = vmatpush1.msra.mxu0 %v2682
        %4130 = vmatprep.subr.mxu0 %v2687
        %4131 = vmatpush1.msra.mxu0 %v2686
        %4132 = vmatprep.subr.mxu0 %v2691
        %4133 = vmatpush1.msra.mxu0 %v2690
        %4134 = vmatprep.subr.mxu0 %v2695
        %4135 = vmatpush1.msra.mxu0 %v2694
        %4136 = vmatprep.subr.mxu0 %v2699
        %4137 = vmatpush1.msra.mxu0 %v2698
        %4138 = vmatprep.subr.mxu0 %v2703
        %4139 = vmatpush1.msra.mxu0 %v2702
        %4140 = vmatprep.mubr.f32.mxu0 %v2309
        %4141 = vmatmul.mubr.f32.gmra.mrb[0].mxu0 %v2308
        %v4142 = vpop.f32.mrb[0].mxu0
        %v4143 = vadd.f32 %v4072, %v4142
        %v4144 = vpop.f32.mrb[0].mxu0
        %v4145 = vadd.f32 %v4074, %v4144
        %4146 = vdwg.mxu0
        %4147 = vmatprep.subr.mxu0 %v2707
        %4148 = vmatpush1.msra.mxu0 %v2706
        %4149 = vmatprep.subr.mxu0 %v2711
        %4150 = vmatpush1.msra.mxu0 %v2710
        %4151 = vmatprep.subr.mxu0 %v2715
        %4152 = vmatpush1.msra.mxu0 %v2714
        %4153 = vmatprep.subr.mxu0 %v2719
        %4154 = vmatpush1.msra.mxu0 %v2718
        %4155 = vmatprep.subr.mxu0 %v2723
        %4156 = vmatpush1.msra.mxu0 %v2722
        %4157 = vmatprep.subr.mxu0 %v2727
        %4158 = vmatpush1.msra.mxu0 %v2726
        %4159 = vmatprep.subr.mxu0 %v2731
        %4160 = vmatpush1.msra.mxu0 %v2730
        %4161 = vmatprep.subr.mxu0 %v2735
        %4162 = vmatpush1.msra.mxu0 %v2734
        %4163 = vmatprep.subr.mxu0 %v2739
        %4164 = vmatpush1.msra.mxu0 %v2738
        %4165 = vmatprep.subr.mxu0 %v2743
        %4166 = vmatpush1.msra.mxu0 %v2742
        %4167 = vmatprep.subr.mxu0 %v2747
        %4168 = vmatpush1.msra.mxu0 %v2746
        %4169 = vmatprep.subr.mxu0 %v2751
        %4170 = vmatpush1.msra.mxu0 %v2750
        %4171 = vmatprep.subr.mxu0 %v2755
        %4172 = vmatpush1.msra.mxu0 %v2754
        %4173 = vmatprep.subr.mxu0 %v2759
        %4174 = vmatpush1.msra.mxu0 %v2758
        %4175 = vmatprep.subr.mxu0 %v2763
        %4176 = vmatpush1.msra.mxu0 %v2762
        %4177 = vmatprep.subr.mxu0 %v2767
        %4178 = vmatpush1.msra.mxu0 %v2766
        %4179 = vmatprep.subr.mxu0 %v2771
        %4180 = vmatpush1.msra.mxu0 %v2770
        %4181 = vmatprep.subr.mxu0 %v2775
        %4182 = vmatpush1.msra.mxu0 %v2774
        %4183 = vmatprep.subr.mxu0 %v2779
        %4184 = vmatpush1.msra.mxu0 %v2778
        %4185 = vmatprep.subr.mxu0 %v2783
        %4186 = vmatpush1.msra.mxu0 %v2782
        %4187 = vmatprep.subr.mxu0 %v2787
        %4188 = vmatpush1.msra.mxu0 %v2786
        %4189 = vmatprep.subr.mxu0 %v2791
        %4190 = vmatpush1.msra.mxu0 %v2790
        %4191 = vmatprep.subr.mxu0 %v2795
        %4192 = vmatpush1.msra.mxu0 %v2794
        %4193 = vmatprep.subr.mxu0 %v2799
        %4194 = vmatpush1.msra.mxu0 %v2798
        %4195 = vmatprep.subr.mxu0 %v2803
        %4196 = vmatpush1.msra.mxu0 %v2802
        %4197 = vmatprep.subr.mxu0 %v2807
        %4198 = vmatpush1.msra.mxu0 %v2806
        %4199 = vmatprep.subr.mxu0 %v2811
        %4200 = vmatpush1.msra.mxu0 %v2810
        %4201 = vmatprep.subr.mxu0 %v2815
        %4202 = vmatpush1.msra.mxu0 %v2814
        %4203 = vmatprep.subr.mxu0 %v2819
        %4204 = vmatpush1.msra.mxu0 %v2818
        %4205 = vmatprep.subr.mxu0 %v2823
        %4206 = vmatpush1.msra.mxu0 %v2822
        %4207 = vmatprep.subr.mxu0 %v2827
        %4208 = vmatpush1.msra.mxu0 %v2826
        %4209 = vmatprep.subr.mxu0 %v2831
        %4210 = vmatpush1.msra.mxu0 %v2830
        %4211 = vmatprep.mubr.f32.mxu0 %v2311
        %4212 = vmatmul.mubr.f32.gmra.mrb[0].mxu0 %v2310
        %v4213 = vpop.f32.mrb[0].mxu0
        %v4214 = vadd.f32 %v4143, %v4213
        %v4215 = vpop.f32.mrb[0].mxu0
        %v4216 = vadd.f32 %v4145, %v4215
        %4217 = vdwg.mxu0
        %4218 = vmatprep.subr.mxu0 %v2835
        %4219 = vmatpush1.msra.mxu0 %v2834
        %4220 = vmatprep.subr.mxu0 %v2839
        %4221 = vmatpush1.msra.mxu0 %v2838
        %4222 = vmatprep.subr.mxu0 %v2843
        %4223 = vmatpush1.msra.mxu0 %v2842
        %4224 = vmatprep.subr.mxu0 %v2847
        %4225 = vmatpush1.msra.mxu0 %v2846
        %4226 = vmatprep.subr.mxu0 %v2851
        %4227 = vmatpush1.msra.mxu0 %v2850
        %4228 = vmatprep.subr.mxu0 %v2855
        %4229 = vmatpush1.msra.mxu0 %v2854
        %4230 = vmatprep.subr.mxu0 %v2859
        %4231 = vmatpush1.msra.mxu0 %v2858
        %4232 = vmatprep.subr.mxu0 %v2863
        %4233 = vmatpush1.msra.mxu0 %v2862
        %4234 = vmatprep.subr.mxu0 %v2867
        %4235 = vmatpush1.msra.mxu0 %v2866
        %4236 = vmatprep.subr.mxu0 %v2871
        %4237 = vmatpush1.msra.mxu0 %v2870
        %4238 = vmatprep.subr.mxu0 %v2875
        %4239 = vmatpush1.msra.mxu0 %v2874
        %4240 = vmatprep.subr.mxu0 %v2879
        %4241 = vmatpush1.msra.mxu0 %v2878
        %4242 = vmatprep.subr.mxu0 %v2883
        %4243 = vmatpush1.msra.mxu0 %v2882
        %4244 = vmatprep.subr.mxu0 %v2887
        %4245 = vmatpush1.msra.mxu0 %v2886
        %4246 = vmatprep.subr.mxu0 %v2891
        %4247 = vmatpush1.msra.mxu0 %v2890
        %4248 = vmatprep.subr.mxu0 %v2895
        %4249 = vmatpush1.msra.mxu0 %v2894
        %4250 = vmatprep.subr.mxu0 %v2899
        %4251 = vmatpush1.msra.mxu0 %v2898
        %4252 = vmatprep.subr.mxu0 %v2903
        %4253 = vmatpush1.msra.mxu0 %v2902
        %4254 = vmatprep.subr.mxu0 %v2907
        %4255 = vmatpush1.msra.mxu0 %v2906
        %4256 = vmatprep.subr.mxu0 %v2911
        %4257 = vmatpush1.msra.mxu0 %v2910
        %4258 = vmatprep.subr.mxu0 %v2915
        %4259 = vmatpush1.msra.mxu0 %v2914
        %4260 = vmatprep.subr.mxu0 %v2919
        %4261 = vmatpush1.msra.mxu0 %v2918
        %4262 = vmatprep.subr.mxu0 %v2923
        %4263 = vmatpush1.msra.mxu0 %v2922
        %4264 = vmatprep.subr.mxu0 %v2927
        %4265 = vmatpush1.msra.mxu0 %v2926
        %4266 = vmatprep.subr.mxu0 %v2931
        %4267 = vmatpush1.msra.mxu0 %v2930
        %4268 = vmatprep.subr.mxu0 %v2935
        %4269 = vmatpush1.msra.mxu0 %v2934
        %4270 = vmatprep.subr.mxu0 %v2939
        %4271 = vmatpush1.msra.mxu0 %v2938
        %4272 = vmatprep.subr.mxu0 %v2943
        %4273 = vmatpush1.msra.mxu0 %v2942
        %4274 = vmatprep.subr.mxu0 %v2947
        %4275 = vmatpush1.msra.mxu0 %v2946
        %4276 = vmatprep.subr.mxu0 %v2951
        %4277 = vmatpush1.msra.mxu0 %v2950
        %4278 = vmatprep.subr.mxu0 %v2955
        %4279 = vmatpush1.msra.mxu0 %v2954
        %4280 = vmatprep.subr.mxu0 %v2959
        %4281 = vmatpush1.msra.mxu0 %v2958
        %4282 = vmatprep.mubr.f32.mxu0 %v2313
        %4283 = vmatmul.mubr.f32.gmra.mrb[0].mxu0 %v2312
        %v4284 = vpop.f32.mrb[0].mxu0
        %v4285 = vadd.f32 %v4214, %v4284
        %v4286 = vpop.f32.mrb[0].mxu0
        %v4287 = vadd.f32 %v4216, %v4286
        %4288 = vdwg.mxu0
        %4289 = vmatprep.subr.mxu0 %v2963
        %4290 = vmatpush1.msra.mxu0 %v2962
        %4291 = vmatprep.subr.mxu0 %v2967
        %4292 = vmatpush1.msra.mxu0 %v2966
        %4293 = vmatprep.subr.mxu0 %v2971
        %4294 = vmatpush1.msra.mxu0 %v2970
        %4295 = vmatprep.subr.mxu0 %v2975
        %4296 = vmatpush1.msra.mxu0 %v2974
        %4297 = vmatprep.subr.mxu0 %v2979
        %4298 = vmatpush1.msra.mxu0 %v2978
        %4299 = vmatprep.subr.mxu0 %v2983
        %4300 = vmatpush1.msra.mxu0 %v2982
        %4301 = vmatprep.subr.mxu0 %v2987
        %4302 = vmatpush1.msra.mxu0 %v2986
        %4303 = vmatprep.subr.mxu0 %v2991
        %4304 = vmatpush1.msra.mxu0 %v2990
        %4305 = vmatprep.subr.mxu0 %v2995
        %4306 = vmatpush1.msra.mxu0 %v2994
        %4307 = vmatprep.subr.mxu0 %v2999
        %4308 = vmatpush1.msra.mxu0 %v2998
        %4309 = vmatprep.subr.mxu0 %v3003
        %4310 = vmatpush1.msra.mxu0 %v3002
        %4311 = vmatprep.subr.mxu0 %v3007
        %4312 = vmatpush1.msra.mxu0 %v3006
        %4313 = vmatprep.subr.mxu0 %v3011
        %4314 = vmatpush1.msra.mxu0 %v3010
        %4315 = vmatprep.subr.mxu0 %v3015
        %4316 = vmatpush1.msra.mxu0 %v3014
        %4317 = vmatprep.subr.mxu0 %v3019
        %4318 = vmatpush1.msra.mxu0 %v3018
        %4319 = vmatprep.subr.mxu0 %v3023
        %4320 = vmatpush1.msra.mxu0 %v3022
        %4321 = vmatprep.subr.mxu0 %v3027
        %4322 = vmatpush1.msra.mxu0 %v3026
        %4323 = vmatprep.subr.mxu0 %v3031
        %4324 = vmatpush1.msra.mxu0 %v3030
        %4325 = vmatprep.subr.mxu0 %v3035
        %4326 = vmatpush1.msra.mxu0 %v3034
        %4327 = vmatprep.subr.mxu0 %v3039
        %4328 = vmatpush1.msra.mxu0 %v3038
        %4329 = vmatprep.subr.mxu0 %v3043
        %4330 = vmatpush1.msra.mxu0 %v3042
        %4331 = vmatprep.subr.mxu0 %v3047
        %4332 = vmatpush1.msra.mxu0 %v3046
        %4333 = vmatprep.subr.mxu0 %v3051
        %4334 = vmatpush1.msra.mxu0 %v3050
        %4335 = vmatprep.subr.mxu0 %v3055
        %4336 = vmatpush1.msra.mxu0 %v3054
        %4337 = vmatprep.subr.mxu0 %v3059
        %4338 = vmatpush1.msra.mxu0 %v3058
        %4339 = vmatprep.subr.mxu0 %v3063
        %4340 = vmatpush1.msra.mxu0 %v3062
        %4341 = vmatprep.subr.mxu0 %v3067
        %4342 = vmatpush1.msra.mxu0 %v3066
        %4343 = vmatprep.subr.mxu0 %v3071
        %4344 = vmatpush1.msra.mxu0 %v3070
        %4345 = vmatprep.subr.mxu0 %v3075
        %4346 = vmatpush1.msra.mxu0 %v3074
        %4347 = vmatprep.subr.mxu0 %v3079
        %4348 = vmatpush1.msra.mxu0 %v3078
        %4349 = vmatprep.subr.mxu0 %v3083
        %4350 = vmatpush1.msra.mxu0 %v3082
        %4351 = vmatprep.subr.mxu0 %v3087
        %4352 = vmatpush1.msra.mxu0 %v3086
        %4353 = vmatprep.mubr.f32.mxu0 %v2315
        %4354 = vmatmul.mubr.f32.gmra.mrb[0].mxu0 %v2314
        %v4355 = vpop.f32.mrb[0].mxu0
        %v4356 = vadd.f32 %v4285, %v4355
        %v4357 = vpop.f32.mrb[0].mxu0
        %v4358 = vadd.f32 %v4287, %v4357
        %4359 = vdwg.mxu0
        %4360 = vmatprep.subr.mxu0 %v3091
        %4361 = vmatpush1.msra.mxu0 %v3090
        %4362 = vmatprep.subr.mxu0 %v3095
        %4363 = vmatpush1.msra.mxu0 %v3094
        %4364 = vmatprep.subr.mxu0 %v3099
        %4365 = vmatpush1.msra.mxu0 %v3098
        %4366 = vmatprep.subr.mxu0 %v3103
        %4367 = vmatpush1.msra.mxu0 %v3102
        %4368 = vmatprep.subr.mxu0 %v3107
        %4369 = vmatpush1.msra.mxu0 %v3106
        %4370 = vmatprep.subr.mxu0 %v3111
        %4371 = vmatpush1.msra.mxu0 %v3110
        %4372 = vmatprep.subr.mxu0 %v3115
        %4373 = vmatpush1.msra.mxu0 %v3114
        %4374 = vmatprep.subr.mxu0 %v3119
        %4375 = vmatpush1.msra.mxu0 %v3118
        %4376 = vmatprep.subr.mxu0 %v3123
        %4377 = vmatpush1.msra.mxu0 %v3122
        %4378 = vmatprep.subr.mxu0 %v3127
        %4379 = vmatpush1.msra.mxu0 %v3126
        %4380 = vmatprep.subr.mxu0 %v3131
        %4381 = vmatpush1.msra.mxu0 %v3130
        %4382 = vmatprep.subr.mxu0 %v3135
        %4383 = vmatpush1.msra.mxu0 %v3134
        %4384 = vmatprep.subr.mxu0 %v3139
        %4385 = vmatpush1.msra.mxu0 %v3138
        %4386 = vmatprep.subr.mxu0 %v3143
        %4387 = vmatpush1.msra.mxu0 %v3142
        %4388 = vmatprep.subr.mxu0 %v3147
        %4389 = vmatpush1.msra.mxu0 %v3146
        %4390 = vmatprep.subr.mxu0 %v3151
        %4391 = vmatpush1.msra.mxu0 %v3150
        %4392 = vmatprep.subr.mxu0 %v3155
        %4393 = vmatpush1.msra.mxu0 %v3154
        %4394 = vmatprep.subr.mxu0 %v3159
        %4395 = vmatpush1.msra.mxu0 %v3158
        %4396 = vmatprep.subr.mxu0 %v3163
        %4397 = vmatpush1.msra.mxu0 %v3162
        %4398 = vmatprep.subr.mxu0 %v3167
        %4399 = vmatpush1.msra.mxu0 %v3166
        %4400 = vmatprep.subr.mxu0 %v3171
        %4401 = vmatpush1.msra.mxu0 %v3170
        %4402 = vmatprep.subr.mxu0 %v3175
        %4403 = vmatpush1.msra.mxu0 %v3174
        %4404 = vmatprep.subr.mxu0 %v3179
        %4405 = vmatpush1.msra.mxu0 %v3178
        %4406 = vmatprep.subr.mxu0 %v3183
        %4407 = vmatpush1.msra.mxu0 %v3182
        %4408 = vmatprep.subr.mxu0 %v3187
        %4409 = vmatpush1.msra.mxu0 %v3186
        %4410 = vmatprep.subr.mxu0 %v3191
        %4411 = vmatpush1.msra.mxu0 %v3190
        %4412 = vmatprep.subr.mxu0 %v3195
        %4413 = vmatpush1.msra.mxu0 %v3194
        %4414 = vmatprep.subr.mxu0 %v3199
        %4415 = vmatpush1.msra.mxu0 %v3198
        %4416 = vmatprep.subr.mxu0 %v3203
        %4417 = vmatpush1.msra.mxu0 %v3202
        %4418 = vmatprep.subr.mxu0 %v3207
        %4419 = vmatpush1.msra.mxu0 %v3206
        %4420 = vmatprep.subr.mxu0 %v3211
        %4421 = vmatpush1.msra.mxu0 %v3210
        %4422 = vmatprep.subr.mxu0 %v3215
        %4423 = vmatpush1.msra.mxu0 %v3214
        %4424 = vmatprep.mubr.f32.mxu0 %v2317
        %4425 = vmatmul.mubr.f32.gmra.mrb[0].mxu0 %v2316
        %v4426 = vpop.f32.mrb[0].mxu0
        %v4427 = vadd.f32 %v4356, %v4426
        %v4428 = vpop.f32.mrb[0].mxu0
        %v4429 = vadd.f32 %v4358, %v4428
        %4430 = vdwg.mxu0
        %4431 = vmatprep.subr.mxu0 %v3219
        %4432 = vmatpush1.msra.mxu0 %v3218
        %4433 = vmatprep.subr.mxu0 %v3223
        %4434 = vmatpush1.msra.mxu0 %v3222
        %4435 = vmatprep.subr.mxu0 %v3227
        %4436 = vmatpush1.msra.mxu0 %v3226
        %4437 = vmatprep.subr.mxu0 %v3231
        %4438 = vmatpush1.msra.mxu0 %v3230
        %4439 = vmatprep.subr.mxu0 %v3235
        %4440 = vmatpush1.msra.mxu0 %v3234
        %4441 = vmatprep.subr.mxu0 %v3239
        %4442 = vmatpush1.msra.mxu0 %v3238
        %4443 = vmatprep.subr.mxu0 %v3243
        %4444 = vmatpush1.msra.mxu0 %v3242
        %4445 = vmatprep.subr.mxu0 %v3247
        %4446 = vmatpush1.msra.mxu0 %v3246
        %4447 = vmatprep.subr.mxu0 %v3251
        %4448 = vmatpush1.msra.mxu0 %v3250
        %4449 = vmatprep.subr.mxu0 %v3255
        %4450 = vmatpush1.msra.mxu0 %v3254
        %4451 = vmatprep.subr.mxu0 %v3259
        %4452 = vmatpush1.msra.mxu0 %v3258
        %4453 = vmatprep.subr.mxu0 %v3263
        %4454 = vmatpush1.msra.mxu0 %v3262
        %4455 = vmatprep.subr.mxu0 %v3267
        %4456 = vmatpush1.msra.mxu0 %v3266
        %4457 = vmatprep.subr.mxu0 %v3271
        %4458 = vmatpush1.msra.mxu0 %v3270
        %4459 = vmatprep.subr.mxu0 %v3275
        %4460 = vmatpush1.msra.mxu0 %v3274
        %4461 = vmatprep.subr.mxu0 %v3279
        %4462 = vmatpush1.msra.mxu0 %v3278
        %4463 = vmatprep.subr.mxu0 %v3283
        %4464 = vmatpush1.msra.mxu0 %v3282
        %4465 = vmatprep.subr.mxu0 %v3287
        %4466 = vmatpush1.msra.mxu0 %v3286
        %4467 = vmatprep.subr.mxu0 %v3291
        %4468 = vmatpush1.msra.mxu0 %v3290
        %4469 = vmatprep.subr.mxu0 %v3295
        %4470 = vmatpush1.msra.mxu0 %v3294
        %4471 = vmatprep.subr.mxu0 %v3299
        %4472 = vmatpush1.msra.mxu0 %v3298
        %4473 = vmatprep.subr.mxu0 %v3303
        %4474 = vmatpush1.msra.mxu0 %v3302
        %4475 = vmatprep.subr.mxu0 %v3307
        %4476 = vmatpush1.msra.mxu0 %v3306
        %4477 = vmatprep.subr.mxu0 %v3311
        %4478 = vmatpush1.msra.mxu0 %v3310
        %4479 = vmatprep.subr.mxu0 %v3315
        %4480 = vmatpush1.msra.mxu0 %v3314
        %4481 = vmatprep.subr.mxu0 %v3319
        %4482 = vmatpush1.msra.mxu0 %v3318
        %4483 = vmatprep.subr.mxu0 %v3323
        %4484 = vmatpush1.msra.mxu0 %v3322
        %4485 = vmatprep.subr.mxu0 %v3327
        %4486 = vmatpush1.msra.mxu0 %v3326
        %4487 = vmatprep.subr.mxu0 %v3331
        %4488 = vmatpush1.msra.mxu0 %v3330
        %4489 = vmatprep.subr.mxu0 %v3335
        %4490 = vmatpush1.msra.mxu0 %v3334
        %4491 = vmatprep.subr.mxu0 %v3339
        %4492 = vmatpush1.msra.mxu0 %v3338
        %4493 = vmatprep.subr.mxu0 %v3343
        %4494 = vmatpush1.msra.mxu0 %v3342
        %4495 = vmatprep.mubr.f32.mxu0 %v2319
        %4496 = vmatmul.mubr.f32.gmra.mrb[0].mxu0 %v2318
        %v4497 = vpop.f32.mrb[0].mxu0
        %v4498 = vadd.f32 %v4427, %v4497
        %v4499 = vpop.f32.mrb[0].mxu0
        %v4500 = vadd.f32 %v4429, %v4499
        %4501 = vdwg.mxu0
        %v4502 = vmax.f32 %v3930, 0.0
        %v4503 = vmax.f32 %v3932, 0.0
        %v4504 = vmax.f32 %v4498, 0.0
        %v4505 = vmax.f32 %v4500, 0.0
        %v4506 = vld [vmem:[%s2298] sm:$0xff]
        %v4507 = vld [vmem:[%s2298 + $0x8] sm:$0xff]
        %v4508 = vld [vmem:[%s2298 + $0x10] sm:$0xff]
        %v4509 = vld [vmem:[%s2298 + $0x18] sm:$0xff]
        %v4510 = vld [vmem:[%s2298 + $0x20] sm:$0xff]
        %v4511 = vld [vmem:[%s2298 + $0x28] sm:$0xff]
        %v4512 = vld [vmem:[%s2298 + $0x30] sm:$0xff]
        %v4513 = vld [vmem:[%s2298 + $0x38] sm:$0xff]
        %v4514 = vld [vmem:[%s2298 + $0x40] sm:$0xff]
        %v4515 = vld [vmem:[%s2298 + $0x48] sm:$0xff]
        %v4516 = vld [vmem:[%s2298 + $0x50] sm:$0xff]
        %v4517 = vld [vmem:[%s2298 + $0x58] sm:$0xff]
        %v4518 = vld [vmem:[%s2298 + $0x60] sm:$0xff]
        %v4519 = vld [vmem:[%s2298 + $0x68] sm:$0xff]
        %v4520 = vld [vmem:[%s2298 + $0x70] sm:$0xff]
        %v4521 = vld [vmem:[%s2298 + $0x78] sm:$0xff]
        %v4522 = vld [vmem:[%s2298 + $0x80] sm:$0xff]
        %v4523 = vld [vmem:[%s2298 + $0x88] sm:$0xff]
        %v4524 = vld [vmem:[%s2298 + $0x90] sm:$0xff]
        %v4525 = vld [vmem:[%s2298 + $0x98] sm:$0xff]
        %v4526 = vld [vmem:[%s2298 + $0xa0] sm:$0xff]
        %v4527 = vld [vmem:[%s2298 + $0xa8] sm:$0xff]
        %v4528 = vld [vmem:[%s2298 + $0xb0] sm:$0xff]
        %v4529 = vld [vmem:[%s2298 + $0xb8] sm:$0xff]
        %v4530 = vld [vmem:[%s2298 + $0xc0] sm:$0xff]
        %v4531 = vld [vmem:[%s2298 + $0xc8] sm:$0xff]
        %v4532 = vld [vmem:[%s2298 + $0xd0] sm:$0xff]
        %v4533 = vld [vmem:[%s2298 + $0xd8] sm:$0xff]
        %v4534 = vld [vmem:[%s2298 + $0xe0] sm:$0xff]
        %v4535 = vld [vmem:[%s2298 + $0xe8] sm:$0xff]
        %v4536 = vld [vmem:[%s2298 + $0xf0] sm:$0xff]
        %v4537 = vld [vmem:[%s2298 + $0xf8] sm:$0xff]
        %v4538 = vld [vmem:[%s2298 + $0x100] sm:$0xff]
        %v4539 = vld [vmem:[%s2298 + $0x108] sm:$0xff]
        %v4540 = vld [vmem:[%s2298 + $0x110] sm:$0xff]
        %v4541 = vld [vmem:[%s2298 + $0x118] sm:$0xff]
        %v4542 = vld [vmem:[%s2298 + $0x120] sm:$0xff]
        %v4543 = vld [vmem:[%s2298 + $0x128] sm:$0xff]
        %v4544 = vld [vmem:[%s2298 + $0x130] sm:$0xff]
        %v4545 = vld [vmem:[%s2298 + $0x138] sm:$0xff]
        %v4546 = vld [vmem:[%s2298 + $0x140] sm:$0xff]
        %v4547 = vld [vmem:[%s2298 + $0x148] sm:$0xff]
        %v4548 = vld [vmem:[%s2298 + $0x150] sm:$0xff]
        %v4549 = vld [vmem:[%s2298 + $0x158] sm:$0xff]
        %v4550 = vld [vmem:[%s2298 + $0x160] sm:$0xff]
        %v4551 = vld [vmem:[%s2298 + $0x168] sm:$0xff]
        %v4552 = vld [vmem:[%s2298 + $0x170] sm:$0xff]
        %v4553 = vld [vmem:[%s2298 + $0x178] sm:$0xff]
        %v4554 = vld [vmem:[%s2298 + $0x180] sm:$0xff]
        %v4555 = vld [vmem:[%s2298 + $0x188] sm:$0xff]
        %v4556 = vld [vmem:[%s2298 + $0x190] sm:$0xff]
        %v4557 = vld [vmem:[%s2298 + $0x198] sm:$0xff]
        %v4558 = vld [vmem:[%s2298 + $0x1a0] sm:$0xff]
        %v4559 = vld [vmem:[%s2298 + $0x1a8] sm:$0xff]
        %v4560 = vld [vmem:[%s2298 + $0x1b0] sm:$0xff]
        %v4561 = vld [vmem:[%s2298 + $0x1b8] sm:$0xff]
        %v4562 = vld [vmem:[%s2298 + $0x1c0] sm:$0xff]
        %v4563 = vld [vmem:[%s2298 + $0x1c8] sm:$0xff]
        %v4564 = vld [vmem:[%s2298 + $0x1d0] sm:$0xff]
        %v4565 = vld [vmem:[%s2298 + $0x1d8] sm:$0xff]
        %v4566 = vld [vmem:[%s2298 + $0x1e0] sm:$0xff]
        %v4567 = vld [vmem:[%s2298 + $0x1e8] sm:$0xff]
        %v4568 = vld [vmem:[%s2298 + $0x1f0] sm:$0xff]
        %v4569 = vld [vmem:[%s2298 + $0x1f8] sm:$0xff]
        %4570 = vmatprep.subr.mxu0 0.0
        %4571 = vmatpush1.msra.mxu0 %v4506
        %4572 = vmatprep.subr.mxu0 0.0
        %4573 = vmatpush1.msra.mxu0 %v4507
        %4574 = vmatprep.subr.mxu0 0.0
        %4575 = vmatpush1.msra.mxu0 %v4508
        %4576 = vmatprep.subr.mxu0 0.0
        %4577 = vmatpush1.msra.mxu0 %v4509
        %4578 = vmatprep.subr.mxu0 0.0
        %4579 = vmatpush1.msra.mxu0 %v4510
        %4580 = vmatprep.subr.mxu0 0.0
        %4581 = vmatpush1.msra.mxu0 %v4511
        %4582 = vmatprep.subr.mxu0 0.0
        %4583 = vmatpush1.msra.mxu0 %v4512
        %4584 = vmatprep.subr.mxu0 0.0
        %4585 = vmatpush1.msra.mxu0 %v4513
        %4586 = vmatprep.subr.mxu0 0.0
        %4587 = vmatpush1.msra.mxu0 %v4514
        %4588 = vmatprep.subr.mxu0 0.0
        %4589 = vmatpush1.msra.mxu0 %v4515
        %4590 = vmatprep.subr.mxu0 0.0
        %4591 = vmatpush1.msra.mxu0 %v4516
        %4592 = vmatprep.subr.mxu0 0.0
        %4593 = vmatpush1.msra.mxu0 %v4517
        %4594 = vmatprep.subr.mxu0 0.0
        %4595 = vmatpush1.msra.mxu0 %v4518
        %4596 = vmatprep.subr.mxu0 0.0
        %4597 = vmatpush1.msra.mxu0 %v4519
        %4598 = vmatprep.subr.mxu0 0.0
        %4599 = vmatpush1.msra.mxu0 %v4520
        %4600 = vmatprep.subr.mxu0 0.0
        %4601 = vmatpush1.msra.mxu0 %v4521
        %4602 = vmatprep.subr.mxu0 0.0
        %4603 = vmatpush1.msra.mxu0 %v4522
        %4604 = vmatprep.subr.mxu0 0.0
        %4605 = vmatpush1.msra.mxu0 %v4523
        %4606 = vmatprep.subr.mxu0 0.0
        %4607 = vmatpush1.msra.mxu0 %v4524
        %4608 = vmatprep.subr.mxu0 0.0
        %4609 = vmatpush1.msra.mxu0 %v4525
        %4610 = vmatprep.subr.mxu0 0.0
        %4611 = vmatpush1.msra.mxu0 %v4526
        %4612 = vmatprep.subr.mxu0 0.0
        %4613 = vmatpush1.msra.mxu0 %v4527
        %4614 = vmatprep.subr.mxu0 0.0
        %4615 = vmatpush1.msra.mxu0 %v4528
        %4616 = vmatprep.subr.mxu0 0.0
        %4617 = vmatpush1.msra.mxu0 %v4529
        %4618 = vmatprep.subr.mxu0 0.0
        %4619 = vmatpush1.msra.mxu0 %v4530
        %4620 = vmatprep.subr.mxu0 0.0
        %4621 = vmatpush1.msra.mxu0 %v4531
        %4622 = vmatprep.subr.mxu0 0.0
        %4623 = vmatpush1.msra.mxu0 %v4532
        %4624 = vmatprep.subr.mxu0 0.0
        %4625 = vmatpush1.msra.mxu0 %v4533
        %4626 = vmatprep.subr.mxu0 0.0
        %4627 = vmatpush1.msra.mxu0 %v4534
        %4628 = vmatprep.subr.mxu0 0.0
        %4629 = vmatpush1.msra.mxu0 %v4535
        %4630 = vmatprep.subr.mxu0 0.0
        %4631 = vmatpush1.msra.mxu0 %v4536
        %4632 = vmatprep.subr.mxu0 0.0
        %4633 = vmatpush1.msra.mxu0 %v4537
        %4634 = vmatprep.mubr.f32.mxu0 %v4503
        %4635 = vmatmul.mubr.f32.gmra.mrb[0].mxu0 %v4502
        %v4636 = vpop.f32.mrb[0].mxu0
        %v4637 = vadd.f32 0.0, %v4636
        %v4638 = vpop.f32.mrb[0].mxu0
        %4639 = vdwg.mxu0
        %4640 = vmatprep.subr.mxu0 0.0
        %4641 = vmatpush1.msra.mxu0 %v4538
        %4642 = vmatprep.subr.mxu0 0.0
        %4643 = vmatpush1.msra.mxu0 %v4539
        %4644 = vmatprep.subr.mxu0 0.0
        %4645 = vmatpush1.msra.mxu0 %v4540
        %4646 = vmatprep.subr.mxu0 0.0
        %4647 = vmatpush1.msra.mxu0 %v4541
        %4648 = vmatprep.subr.mxu0 0.0
        %4649 = vmatpush1.msra.mxu0 %v4542
        %4650 = vmatprep.subr.mxu0 0.0
        %4651 = vmatpush1.msra.mxu0 %v4543
        %4652 = vmatprep.subr.mxu0 0.0
        %4653 = vmatpush1.msra.mxu0 %v4544
        %4654 = vmatprep.subr.mxu0 0.0
        %4655 = vmatpush1.msra.mxu0 %v4545
        %4656 = vmatprep.subr.mxu0 0.0
        %4657 = vmatpush1.msra.mxu0 %v4546
        %4658 = vmatprep.subr.mxu0 0.0
        %4659 = vmatpush1.msra.mxu0 %v4547
        %4660 = vmatprep.subr.mxu0 0.0
        %4661 = vmatpush1.msra.mxu0 %v4548
        %4662 = vmatprep.subr.mxu0 0.0
        %4663 = vmatpush1.msra.mxu0 %v4549
        %4664 = vmatprep.subr.mxu0 0.0
        %4665 = vmatpush1.msra.mxu0 %v4550
        %4666 = vmatprep.subr.mxu0 0.0
        %4667 = vmatpush1.msra.mxu0 %v4551
        %4668 = vmatprep.subr.mxu0 0.0
        %4669 = vmatpush1.msra.mxu0 %v4552
        %4670 = vmatprep.subr.mxu0 0.0
        %4671 = vmatpush1.msra.mxu0 %v4553
        %4672 = vmatprep.subr.mxu0 0.0
        %4673 = vmatpush1.msra.mxu0 %v4554
        %4674 = vmatprep.subr.mxu0 0.0
        %4675 = vmatpush1.msra.mxu0 %v4555
        %4676 = vmatprep.subr.mxu0 0.0
        %4677 = vmatpush1.msra.mxu0 %v4556
        %4678 = vmatprep.subr.mxu0 0.0
        %4679 = vmatpush1.msra.mxu0 %v4557
        %4680 = vmatprep.subr.mxu0 0.0
        %4681 = vmatpush1.msra.mxu0 %v4558
        %4682 = vmatprep.subr.mxu0 0.0
        %4683 = vmatpush1.msra.mxu0 %v4559
        %4684 = vmatprep.subr.mxu0 0.0
        %4685 = vmatpush1.msra.mxu0 %v4560
        %4686 = vmatprep.subr.mxu0 0.0
        %4687 = vmatpush1.msra.mxu0 %v4561
        %4688 = vmatprep.subr.mxu0 0.0
        %4689 = vmatpush1.msra.mxu0 %v4562
        %4690 = vmatprep.subr.mxu0 0.0
        %4691 = vmatpush1.msra.mxu0 %v4563
        %4692 = vmatprep.subr.mxu0 0.0
        %4693 = vmatpush1.msra.mxu0 %v4564
        %4694 = vmatprep.subr.mxu0 0.0
        %4695 = vmatpush1.msra.mxu0 %v4565
        %4696 = vmatprep.subr.mxu0 0.0
        %4697 = vmatpush1.msra.mxu0 %v4566
        %4698 = vmatprep.subr.mxu0 0.0
        %4699 = vmatpush1.msra.mxu0 %v4567
        %4700 = vmatprep.subr.mxu0 0.0
        %4701 = vmatpush1.msra.mxu0 %v4568
        %4702 = vmatprep.subr.mxu0 0.0
        %4703 = vmatpush1.msra.mxu0 %v4569
        %4704 = vmatprep.mubr.f32.mxu0 %v4505
        %4705 = vmatmul.mubr.f32.gmra.mrb[0].mxu0 %v4504
        %v4706 = vpop.f32.mrb[0].mxu0
        %v4707 = vadd.f32 %v4637, %v4706
        %v4708 = vpop.f32.mrb[0].mxu0
        %4709 = vdwg.mxu0
        %vm4710 = vcmask 80896
        %4711 = vst.msk [vmem:[%s2303] sm:$0xff] %vm4710, %v4707
        %p4712 = scmp.lt.s32.totalorder %s15, 3
        %s4713 = scalar_select %p4712, %s15, 3
        %s4714 = smul.addr %s4713, 8
        %s4715 = scalar_lea.vmem %s4, %s4714
        // Predicated region
        $region60: #{attribute_classifier_forward.3} parent=54 // pred_check
          %p4716 = pneg %p132
        $region61: #{attribute_classifier_forward.3} parent=54 // pred_check_branch
          %4718 = sbr.rel (%p4716) target = $region63
        $region62: #{attribute_classifier_forward.3} parent=54 // pred_region
          _
        $region63: #{attribute_classifier_forward.3} parent=54 // pred_fallthru
          _
      $region55: #{attribute_classifier_forward.3} parent=5 // pred_fallthru
        _
      %p4719 = scmp.le.s32.totalorder 2, %s10
      // Predicated region
      $region64: #{attribute_classifier_forward.3} parent=5 // pred_check
        %p4720 = pneg %p4719
      $region65: #{attribute_classifier_forward.3} parent=5 // pred_check_branch
        %4722 = sbr.rel (%p4720) target = $region67
      $region66: #{attribute_classifier_forward.3} parent=5 // pred_region
        %s4723 = ssub.s32 %s10, 2
        // Predicated region
        $region68: #{attribute_classifier_forward.3} parent=66 // pred_check
          %p4724 = pneg %p138
        $region69: #{attribute_classifier_forward.3} parent=66 // pred_check_branch
          %4726 = sbr.rel (%p4724) target = $region71
        $region70: #{attribute_classifier_forward.3} parent=66 // pred_region
          %p4727 = scmp.lt.s32.totalorder %s16, 3
          %s4728 = scalar_select %p4727, %s16, 3
          %s4729 = smul.addr %s4728, 8
          %s4730 = scalar_lea.vmem %s4, %s4729
        $region71: #{attribute_classifier_forward.3} parent=66 // pred_fallthru
          _
      $region67: #{attribute_classifier_forward.3} parent=5 // pred_fallthru
        _
    $region6: #{attribute_classifier_forward.3} parent=1 // loop_footer
      %s14 = sadd.s32 1, %s10
    $region7: #{attribute_classifier_forward.3} parent=1 // loop_footer_branch
      %9 = sbr.rel target = $region3
    $region8: #{attribute_classifier_forward.3} parent=1 // loop_exit
      _

// kernel: attribute_classifier_forward.2
$region0: #{attribute_classifier_forward.2}
  #allocation0 [shape = 'u32[]', space=smem, size = 0x4, offset = 0x4, fixed_abs, tag = 'smem constant byte address 0x4 - core index']
  #allocation1 [shape = 'u32[144,128]{1,0:T(1,128)}', space=vmem, size = 0x12000, scoped, tag = 'internal scratch']
  %s0 = inlined_call_operand.hbm [shape: f32[8,2048], index: 0, kind: input, shape index: {}]
  %s1 = inlined_call_operand.hbm [shape: f32[2048,2048], index: 1, kind: input, shape index: {}]
  %s2 = inlined_call_operand.hbm [shape: f32[1,2048], index: 2, kind: input, shape index: {}]
  %s3 = inlined_call_operand.vmem [shape: f32[8,2048], index: 3, kind: output, shape index: {}]
  %s4 = sld [smem:[#allocation0]]
  $region57: #{attribute_classifier_forward.2} parent=0
    _
  %s6 = ssub.s32 1, %s4
  %s7 = scalar_select 0, %s6, %s4
  $region1: #{attribute_classifier_forward.2} parent=0
    #allocation2 [shape = 'u8[65536]{0}', space=vmem, size = 0x10000, scoped, tag = 'input window, operand 0, single buffered']
    #allocation3 [shape = 's32[2]{0}', space=sflag, size = 0x8, scoped, tag = 'scoped memory for attribute_classifier_forward.2']
    #allocation4 [shape = 'u8[8388608]{0}', space=vmem, size = 0x800000, scoped, tag = 'input window, operand 1']
    #allocation5 [shape = 's32[2]{0}', space=sflag, size = 0x8, scoped, tag = 'scoped memory for attribute_classifier_forward.2']
    #allocation6 [shape = 'u8[4096]{0}', space=vmem, size = 0x1000, scoped, tag = 'input window, operand 2']
    %8 = vsyncpa [#allocation3], 0
    %9 = vsyncpa [#allocation5], 0
    %s10 = scalar_lea.sflag [#allocation5], 1
    %11 = vsyncpa %s10, 0
    loop: start=0, step=1, limit=6
    $region2: #{attribute_classifier_forward.2} parent=1 // loop_pre_header
      _
    $region3: #{attribute_classifier_forward.2} parent=1 // loop_header
      %s13 = sphi 0, %s17
      %p14 = scmp.ge.s32.totalorder %s13, 6
      %s21 = sphi 0, %s21
      %s23 = sphi 0, %s21
      %s24 = sphi 0, %s23
      %s38 = sphi 0, %s24
      %s44 = sphi 0, %s46
      %s47 = sphi 0, %s44
      %s48 = sphi 0, %s47
      %s64 = sphi 0, %s48
      %s70 = sphi 0, %s72
      %s73 = sphi 0, %s70
      %s74 = sphi 0, %s73
      %s90 = sphi 0, %s74
      %s96 = sphi 0, %s98
      %s99 = sphi 0, %s96
      %s100 = sphi 0, %s99
      %s116 = sphi 0, %s100
    $region4: #{attribute_classifier_forward.2} parent=1 // loop_header_branch
      %16 = sbr.rel (%p14) target = $region8
    $region5: #{attribute_classifier_forward.2} parent=1 // loop_body
      %s18 = ssub.s32 %s13, 1
      %s19 = ssub.s32 %s13, 2
      %s20 = sadd.s32 %s13, 1
      %s22 = sadd.s32 %s21, 1
      %p25 = scmp.eq.s32.totalorder %s13, 3
      %p26 = scmp.ne.s32.totalorder %s21, %s23
      %p27 = scmp.eq.s32.totalorder %s13, 0
      %p28 = por %p26, %p27
      %p29 = scmp.ne.s32.totalorder %s21, %s23
      %p30 = scmp.eq.s32.totalorder %s18, 3
      %p31 = por %p29, %p30
      %p32 = scmp.ne.s32.totalorder %s23, %s24
      %p33 = scmp.eq.s32.totalorder %s18, 0
      %p34 = por %p32, %p33
      %p35 = scmp.ne.s32.totalorder %s23, %s24
      %p36 = scmp.eq.s32.totalorder %s19, 3
      %p37 = por %p35, %p36
      %p39 = scmp.ne.s32.totalorder %s24, %s38
      %p40 = scmp.eq.s32.totalorder %s19, 0
      %p41 = por %p39, %p40
      %s42 = ssub.s32 %s13, %s20
      %p43 = scmp.eq.s32.totalorder %s42, 0
      %s45 = sadd.s32 %s44, 1
      %s46 = scalar_select %p43, %s44, %s45
      %p49 = pneg %p43
      %p50 = scmp.eq.s32.totalorder %s13, 3
      %p51 = por %p49, %p50
      %p52 = scmp.ne.s32.totalorder %s44, %s47
      %p53 = scmp.eq.s32.totalorder %s13, 0
      %p54 = por %p52, %p53
      %p55 = scmp.ne.s32.totalorder %s44, %s47
      %p56 = scmp.eq.s32.totalorder %s18, 3
      %p57 = por %p55, %p56
      %p58 = scmp.ne.s32.totalorder %s47, %s48
      %p59 = scmp.eq.s32.totalorder %s18, 0
      %p60 = por %p58, %p59
      %p61 = scmp.ne.s32.totalorder %s47, %s48
      %p62 = scmp.eq.s32.totalorder %s19, 3
      %p63 = por %p61, %p62
      %p65 = scmp.ne.s32.totalorder %s48, %s64
      %p66 = scmp.eq.s32.totalorder %s19, 0
      %p67 = por %p65, %p66
      %s68 = ssub.s32 %s13, %s20
      %p69 = scmp.eq.s32.totalorder %s68, 0
      %s71 = sadd.s32 %s70, 1
      %s72 = scalar_select %p69, %s70, %s71
      %p75 = pneg %p69
      %p76 = scmp.eq.s32.totalorder %s13, 3
      %p77 = por %p75, %p76
      %p78 = scmp.ne.s32.totalorder %s70, %s73
      %p79 = scmp.eq.s32.totalorder %s13, 0
      %p80 = por %p78, %p79
      %p81 = scmp.ne.s32.totalorder %s70, %s73
      %p82 = scmp.eq.s32.totalorder %s18, 3
      %p83 = por %p81, %p82
      %p84 = scmp.ne.s32.totalorder %s73, %s74
      %p85 = scmp.eq.s32.totalorder %s18, 0
      %p86 = por %p84, %p85
      %p87 = scmp.ne.s32.totalorder %s73, %s74
      %p88 = scmp.eq.s32.totalorder %s19, 3
      %p89 = por %p87, %p88
      %p91 = scmp.ne.s32.totalorder %s74, %s90
      %p92 = scmp.eq.s32.totalorder %s19, 0
      %p93 = por %p91, %p92
      %s94 = ssub.s32 %s13, %s20
      %p95 = scmp.eq.s32.totalorder %s94, 0
      %s97 = sadd.s32 %s96, 1
      %s98 = scalar_select %p95, %s96, %s97
      %p101 = pneg %p95
      %p102 = scmp.eq.s32.totalorder %s13, 3
      %p103 = por %p101, %p102
      %p104 = scmp.ne.s32.totalorder %s96, %s99
      %p105 = scmp.eq.s32.totalorder %s13, 0
      %p106 = por %p104, %p105
      %p107 = scmp.ne.s32.totalorder %s96, %s99
      %p108 = scmp.eq.s32.totalorder %s18, 3
      %p109 = por %p107, %p108
      %p110 = scmp.ne.s32.totalorder %s99, %s100
      %p111 = scmp.eq.s32.totalorder %s18, 0
      %p112 = por %p110, %p111
      %p113 = scmp.ne.s32.totalorder %s99, %s100
      %p114 = scmp.eq.s32.totalorder %s19, 3
      %p115 = por %p113, %p114
      %p117 = scmp.ne.s32.totalorder %s100, %s116
      %p118 = scmp.eq.s32.totalorder %s19, 0
      %p119 = por %p117, %p118
      %p120 = scmp.le.s32.totalorder 1, %s13
      %p121 = scmp.lt.s32.totalorder %s13, 5
      %p122 = pnand %p120, %p121
      %p123 = pneg %p122
      // Predicated region
      $region9: #{attribute_classifier_forward.2} parent=5 // pred_check
        _
      $region10: #{attribute_classifier_forward.2} parent=5 // pred_check_branch
        %125 = sbr.rel (%p122) target = $region12
      $region11: #{attribute_classifier_forward.2} parent=5 // pred_region
        %s126 = ssub.s32 %s13, 1
        // Predicated region
        $region13: #{attribute_classifier_forward.2} parent=11 // pred_check
          %p127 = pneg %p34
        $region14: #{attribute_classifier_forward.2} parent=11 // pred_check_branch
          %129 = sbr.rel (%p127) target = $region16
        $region15: #{attribute_classifier_forward.2} parent=11 // pred_region
          %s131 = ssub.s32 2048, 2048
          %132 = vsyncadd [#allocation3], %s131
          %s134 = sshll.u32 [#allocation2], 4
          %s135 = int_to_ptr.vmem [resolvable:$true] %s134
          %137 = dma.hbm_to_vmem [thread:$0]  %s0, 2048, %s135, [#allocation3]
        $region16: #{attribute_classifier_forward.2} parent=11 // pred_fallthru
          _
      $region12: #{attribute_classifier_forward.2} parent=5 // pred_fallthru
        _
      %p138 = scmp.lt.s32.totalorder %s13, 4
      // Predicated region
      $region17: #{attribute_classifier_forward.2} parent=5 // pred_check
        %p139 = pneg %p138
      $region18: #{attribute_classifier_forward.2} parent=5 // pred_check_branch
        %141 = sbr.rel (%p139) target = $region20
      $region19: #{attribute_classifier_forward.2} parent=5 // pred_region
        // Predicated region
        $region21: #{attribute_classifier_forward.2} parent=19 // pred_check
          %p142 = pneg %p54
        $region22: #{attribute_classifier_forward.2} parent=19 // pred_check_branch
          %144 = sbr.rel (%p142) target = $region24
        $region23: #{attribute_classifier_forward.2} parent=19 // pred_region
          %s145 = sand.u32 %s13, 1
          %s146 = scalar_lea.sflag [#allocation5], %s145
          %s147 = sand.u32 %s44, 1
          %s148 = smul.addr %s147, 8192
          %s149 = scalar_lea.vmem [#allocation4], %s148
          %s150 = smul.u32 4, %s13
          %s152 = ssub.s32 131072, 131072
          %153 = vsyncadd %s146, %s152
          %s154 = smul.addr %s150, 128
          %s155 = scalar_lea.hbm %s1, %s154
          %s156 = sshll.u32 %s149, 4
          %s157 = int_to_ptr.vmem [resolvable:$true] %s156
          %162 = dma.hbm_to_vmem [thread:$0]  %s155, 131072, %s157, %s146, 2048, 512, 32
        $region24: #{attribute_classifier_forward.2} parent=19 // pred_fallthru
          _
        // Predicated region
        $region25: #{attribute_classifier_forward.2} parent=19 // pred_check
          %p163 = pneg %p80
        $region26: #{attribute_classifier_forward.2} parent=19 // pred_check_branch
          %165 = sbr.rel (%p163) target = $region28
        $region27: #{attribute_classifier_forward.2} parent=19 // pred_region
          %s166 = sand.u32 %s13, 1
          %s167 = scalar_lea.sflag [#allocation5], %s166
          %s168 = sand.u32 %s70, 1
          %s169 = smul.addr %s168, 4
          %s170 = scalar_lea.vmem [#allocation6], %s169
          %s171 = smul.u32 4, %s13
          %s173 = ssub.s32 64, 64
          %174 = vsyncadd %s167, %s173
          %s175 = smul.addr %s171, 16
          %s176 = scalar_lea.hbm %s2, %s175
          %s178 = sshll.u32 %s170, 4
          %s179 = int_to_ptr.vmem [resolvable:$true] %s178
          %181 = dma.hbm_to_vmem [thread:$0]  %s176, 64, %s179, %s167
        $region28: #{attribute_classifier_forward.2} parent=19 // pred_fallthru
          _
      $region20: #{attribute_classifier_forward.2} parent=5 // pred_fallthru
        _
      %p182 = scmp.le.s32.totalorder 1, %s13
      %p183 = scmp.lt.s32.totalorder %s13, 5
      %p184 = pnand %p182, %p183
      %p185 = pneg %p184
      // Predicated region
      $region29: #{attribute_classifier_forward.2} parent=5 // pred_check
        _
      $region30: #{attribute_classifier_forward.2} parent=5 // pred_check_branch
        %187 = sbr.rel (%p184) target = $region32
      $region31: #{attribute_classifier_forward.2} parent=5 // pred_region
        %s188 = ssub.s32 %s13, 1
        // Predicated region
        $region33: #{attribute_classifier_forward.2} parent=31 // pred_check
          %p189 = pneg %p34
        $region34: #{attribute_classifier_forward.2} parent=31 // pred_check_branch
          %191 = sbr.rel (%p189) target = $region36
        $region35: #{attribute_classifier_forward.2} parent=31 // pred_region
          %192 = dma.done [#allocation3], 2048
        $region36: #{attribute_classifier_forward.2} parent=31 // pred_fallthru
          _
        %s193 = sand.u32 %s18, 1
        %s194 = scalar_lea.sflag [#allocation5], %s193
        %s195 = sand.u32 %s47, 1
        %s196 = smul.addr %s195, 8192
        %s197 = scalar_lea.vmem [#allocation4], %s196
        // Predicated region
        $region37: #{attribute_classifier_forward.2} parent=31 // pred_check
          %p198 = pneg %p60
        $region38: #{attribute_classifier_forward.2} parent=31 // pred_check_branch
          %200 = sbr.rel (%p198) target = $region40
        $region39: #{attribute_classifier_forward.2} parent=31 // pred_region
          %201 = dma.done %s194, 131072
        $region40: #{attribute_classifier_forward.2} parent=31 // pred_fallthru
          _
        %s202 = sand.u32 %s18, 1
        %s203 = scalar_lea.sflag [#allocation5], %s202
        %s204 = sand.u32 %s73, 1
        %s205 = smul.addr %s204, 4
        %s206 = scalar_lea.vmem [#allocation6], %s205
        // Predicated region
        $region41: #{attribute_classifier_forward.2} parent=31 // pred_check
          %p207 = pneg %p86
        $region42: #{attribute_classifier_forward.2} parent=31 // pred_check_branch
          %209 = sbr.rel (%p207) target = $region44
        $region43: #{attribute_classifier_forward.2} parent=31 // pred_region
          %210 = dma.done %s203, 64
        $region44: #{attribute_classifier_forward.2} parent=31 // pred_fallthru
          _
        %p211 = pneg %p34
        %p212 = pneg %p31
        %s213 = sand.u32 %s18, 1
        %s214 = scalar_lea.sflag [#allocation5], %s213
        %s215 = sand.u32 %s47, 1
        %s216 = smul.addr %s215, 8192
        %s217 = scalar_lea.vmem [#allocation4], %s216
        %p218 = pneg %p60
        %p219 = pneg %p57
        %s220 = sand.u32 %s18, 1
        %s221 = scalar_lea.sflag [#allocation5], %s220
        %s222 = sand.u32 %s73, 1
        %s223 = smul.addr %s222, 4
        %s224 = scalar_lea.vmem [#allocation6], %s223
        %p225 = pneg %p86
        %p226 = pneg %p83
        %p227 = pneg %p112
        %p228 = pneg %p109
        %s229 = smul.u32 4, %s18
        %p230 = scmp.lt.s32.totalorder %s229, 15
        %s231 = scalar_select %p230, %s229, 15
        %s232 = smul.addr %s231, 8
        %s233 = scalar_lea.vmem %s3, %s232
        %s234 = smul.u32 4, %s18
        %s235 = smul.u32 4, %s18
        %s236 = smul.u32 4, %s18
        %p237 = scmp.lt.s32.totalorder %s236, 15
        %s238 = scalar_select %p237, %s236, 15
        %s239 = smul.addr %s238, 8
        %s240 = scalar_lea.vmem %s3, %s239
        %s241 = smul.u32 4, %s18
        %v242 = vld [vmem:[#allocation2] sm:$0xff]
        %v243 = vld [vmem:[#allocation2 + $0x8] sm:$0xff]
        %v244 = vld [vmem:[#allocation2 + $0x10] sm:$0xff]
        %v245 = vld [vmem:[#allocation2 + $0x18] sm:$0xff]
        %v246 = vld [vmem:[#allocation2 + $0x20] sm:$0xff]
        %v247 = vld [vmem:[#allocation2 + $0x28] sm:$0xff]
        %v248 = vld [vmem:[#allocation2 + $0x30] sm:$0xff]
        %v249 = vld [vmem:[#allocation2 + $0x38] sm:$0xff]
        %v250 = vld [vmem:[#allocation2 + $0x40] sm:$0xff]
        %v251 = vld [vmem:[#allocation2 + $0x48] sm:$0xff]
        %v252 = vld [vmem:[#allocation2 + $0x50] sm:$0xff]
        %v253 = vld [vmem:[#allocation2 + $0x58] sm:$0xff]
        %v254 = vld [vmem:[#allocation2 + $0x60] sm:$0xff]
        %v255 = vld [vmem:[#allocation2 + $0x68] sm:$0xff]
        %v256 = vld [vmem:[#allocation2 + $0x70] sm:$0xff]
        %v257 = vld [vmem:[#allocation2 + $0x78] sm:$0xff]
        %v258 = vld [vmem:[%s197] sm:$0xff]
        %v259 = vld [vmem:[%s197 + $0x8] sm:$0xff]
        %v260 = vld [vmem:[%s197 + $0x10] sm:$0xff]
        %v261 = vld [vmem:[%s197 + $0x18] sm:$0xff]
        %v262 = vld [vmem:[%s197 + $0x20] sm:$0xff]
        %v263 = vld [vmem:[%s197 + $0x28] sm:$0xff]
        %v264 = vld [vmem:[%s197 + $0x30] sm:$0xff]
        %v265 = vld [vmem:[%s197 + $0x38] sm:$0xff]
        %v266 = vld [vmem:[%s197 + $0x40] sm:$0xff]
        %v267 = vld [vmem:[%s197 + $0x48] sm:$0xff]
        %v268 = vld [vmem:[%s197 + $0x50] sm:$0xff]
        %v269 = vld [vmem:[%s197 + $0x58] sm:$0xff]
        %v270 = vld [vmem:[%s197 + $0x60] sm:$0xff]
        %v271 = vld [vmem:[%s197 + $0x68] sm:$0xff]
        %v272 = vld [vmem:[%s197 + $0x70] sm:$0xff]
        %v273 = vld [vmem:[%s197 + $0x78] sm:$0xff]
        %v274 = vld [vmem:[%s197 + $0x80] sm:$0xff]
        %v275 = vld [vmem:[%s197 + $0x88] sm:$0xff]
        %v276 = vld [vmem:[%s197 + $0x90] sm:$0xff]
        %v277 = vld [vmem:[%s197 + $0x98] sm:$0xff]
        %v278 = vld [vmem:[%s197 + $0xa0] sm:$0xff]
        %v279 = vld [vmem:[%s197 + $0xa8] sm:$0xff]
        %v280 = vld [vmem:[%s197 + $0xb0] sm:$0xff]
        %v281 = vld [vmem:[%s197 + $0xb8] sm:$0xff]
        %v282 = vld [vmem:[%s197 + $0xc0] sm:$0xff]
        %v283 = vld [vmem:[%s197 + $0xc8] sm:$0xff]
        %v284 = vld [vmem:[%s197 + $0xd0] sm:$0xff]
        %v285 = vld [vmem:[%s197 + $0xd8] sm:$0xff]
        %v286 = vld [vmem:[%s197 + $0xe0] sm:$0xff]
        %v287 = vld [vmem:[%s197 + $0xe8] sm:$0xff]
        %v288 = vld [vmem:[%s197 + $0xf0] sm:$0xff]
        %v289 = vld [vmem:[%s197 + $0xf8] sm:$0xff]
        %v290 = vld [vmem:[%s197 + $0x100] sm:$0xff]
        %v291 = vld [vmem:[%s197 + $0x108] sm:$0xff]
        %v292 = vld [vmem:[%s197 + $0x110] sm:$0xff]
        %v293 = vld [vmem:[%s197 + $0x118] sm:$0xff]
        %v294 = vld [vmem:[%s197 + $0x120] sm:$0xff]
        %v295 = vld [vmem:[%s197 + $0x128] sm:$0xff]
        %v296 = vld [vmem:[%s197 + $0x130] sm:$0xff]
        %v297 = vld [vmem:[%s197 + $0x138] sm:$0xff]
        %v298 = vld [vmem:[%s197 + $0x140] sm:$0xff]
        %v299 = vld [vmem:[%s197 + $0x148] sm:$0xff]
        %v300 = vld [vmem:[%s197 + $0x150] sm:$0xff]
        %v301 = vld [vmem:[%s197 + $0x158] sm:$0xff]
        %v302 = vld [vmem:[%s197 + $0x160] sm:$0xff]
        %v303 = vld [vmem:[%s197 + $0x168] sm:$0xff]
        %v304 = vld [vmem:[%s197 + $0x170] sm:$0xff]
        %v305 = vld [vmem:[%s197 + $0x178] sm:$0xff]
        %v306 = vld [vmem:[%s197 + $0x180] sm:$0xff]
        %v307 = vld [vmem:[%s197 + $0x188] sm:$0xff]
        %v308 = vld [vmem:[%s197 + $0x190] sm:$0xff]
        %v309 = vld [vmem:[%s197 + $0x198] sm:$0xff]
        %v310 = vld [vmem:[%s197 + $0x1a0] sm:$0xff]
        %v311 = vld [vmem:[%s197 + $0x1a8] sm:$0xff]
        %v312 = vld [vmem:[%s197 + $0x1b0] sm:$0xff]
        %v313 = vld [vmem:[%s197 + $0x1b8] sm:$0xff]
        %v314 = vld [vmem:[%s197 + $0x1c0] sm:$0xff]
        %v315 = vld [vmem:[%s197 + $0x1c8] sm:$0xff]
        %v316 = vld [vmem:[%s197 + $0x1d0] sm:$0xff]
        %v317 = vld [vmem:[%s197 + $0x1d8] sm:$0xff]
        %v318 = vld [vmem:[%s197 + $0x1e0] sm:$0xff]
        %v319 = vld [vmem:[%s197 + $0x1e8] sm:$0xff]
        %v320 = vld [vmem:[%s197 + $0x1f0] sm:$0xff]
        %v321 = vld [vmem:[%s197 + $0x1f8] sm:$0xff]
        %v322 = vld [vmem:[%s197 + $0x200] sm:$0xff]
        %v323 = vld [vmem:[%s197 + $0x208] sm:$0xff]
        %v324 = vld [vmem:[%s197 + $0x210] sm:$0xff]
        %v325 = vld [vmem:[%s197 + $0x218] sm:$0xff]
        %v326 = vld [vmem:[%s197 + $0x220] sm:$0xff]
        %v327 = vld [vmem:[%s197 + $0x228] sm:$0xff]
        %v328 = vld [vmem:[%s197 + $0x230] sm:$0xff]
        %v329 = vld [vmem:[%s197 + $0x238] sm:$0xff]
        %v330 = vld [vmem:[%s197 + $0x240] sm:$0xff]
        %v331 = vld [vmem:[%s197 + $0x248] sm:$0xff]
        %v332 = vld [vmem:[%s197 + $0x250] sm:$0xff]
        %v333 = vld [vmem:[%s197 + $0x258] sm:$0xff]
        %v334 = vld [vmem:[%s197 + $0x260] sm:$0xff]
        %v335 = vld [vmem:[%s197 + $0x268] sm:$0xff]
        %v336 = vld [vmem:[%s197 + $0x270] sm:$0xff]
        %v337 = vld [vmem:[%s197 + $0x278] sm:$0xff]
        %v338 = vld [vmem:[%s197 + $0x280] sm:$0xff]
        %v339 = vld [vmem:[%s197 + $0x288] sm:$0xff]
        %v340 = vld [vmem:[%s197 + $0x290] sm:$0xff]
        %v341 = vld [vmem:[%s197 + $0x298] sm:$0xff]
        %v342 = vld [vmem:[%s197 + $0x2a0] sm:$0xff]
        %v343 = vld [vmem:[%s197 + $0x2a8] sm:$0xff]
        %v344 = vld [vmem:[%s197 + $0x2b0] sm:$0xff]
        %v345 = vld [vmem:[%s197 + $0x2b8] sm:$0xff]
        %v346 = vld [vmem:[%s197 + $0x2c0] sm:$0xff]
        %v347 = vld [vmem:[%s197 + $0x2c8] sm:$0xff]
        %v348 = vld [vmem:[%s197 + $0x2d0] sm:$0xff]
        %v349 = vld [vmem:[%s197 + $0x2d8] sm:$0xff]
        %v350 = vld [vmem:[%s197 + $0x2e0] sm:$0xff]
        %v351 = vld [vmem:[%s197 + $0x2e8] sm:$0xff]
        %v352 = vld [vmem:[%s197 + $0x2f0] sm:$0xff]
        %v353 = vld [vmem:[%s197 + $0x2f8] sm:$0xff]
        %v354 = vld [vmem:[%s197 + $0x300] sm:$0xff]
        %v355 = vld [vmem:[%s197 + $0x308] sm:$0xff]
        %v356 = vld [vmem:[%s197 + $0x310] sm:$0xff]
        %v357 = vld [vmem:[%s197 + $0x318] sm:$0xff]
        %v358 = vld [vmem:[%s197 + $0x320] sm:$0xff]
        %v359 = vld [vmem:[%s197 + $0x328] sm:$0xff]
        %v360 = vld [vmem:[%s197 + $0x330] sm:$0xff]
        %v361 = vld [vmem:[%s197 + $0x338] sm:$0xff]
        %v362 = vld [vmem:[%s197 + $0x340] sm:$0xff]
        %v363 = vld [vmem:[%s197 + $0x348] sm:$0xff]
        %v364 = vld [vmem:[%s197 + $0x350] sm:$0xff]
        %v365 = vld [vmem:[%s197 + $0x358] sm:$0xff]
        %v366 = vld [vmem:[%s197 + $0x360] sm:$0xff]
        %v367 = vld [vmem:[%s197 + $0x368] sm:$0xff]
        %v368 = vld [vmem:[%s197 + $0x370] sm:$0xff]
        %v369 = vld [vmem:[%s197 + $0x378] sm:$0xff]
        %v370 = vld [vmem:[%s197 + $0x380] sm:$0xff]
        %v371 = vld [vmem:[%s197 + $0x388] sm:$0xff]
        %v372 = vld [vmem:[%s197 + $0x390] sm:$0xff]
        %v373 = vld [vmem:[%s197 + $0x398] sm:$0xff]
        %v374 = vld [vmem:[%s197 + $0x3a0] sm:$0xff]
        %v375 = vld [vmem:[%s197 + $0x3a8] sm:$0xff]
        %v376 = vld [vmem:[%s197 + $0x3b0] sm:$0xff]
        %v377 = vld [vmem:[%s197 + $0x3b8] sm:$0xff]
        %v378 = vld [vmem:[%s197 + $0x3c0] sm:$0xff]
        %v379 = vld [vmem:[%s197 + $0x3c8] sm:$0xff]
        %v380 = vld [vmem:[%s197 + $0x3d0] sm:$0xff]
        %v381 = vld [vmem:[%s197 + $0x3d8] sm:$0xff]
        %v382 = vld [vmem:[%s197 + $0x3e0] sm:$0xff]
        %v383 = vld [vmem:[%s197 + $0x3e8] sm:$0xff]
        %v384 = vld [vmem:[%s197 + $0x3f0] sm:$0xff]
        %v385 = vld [vmem:[%s197 + $0x3f8] sm:$0xff]
        %v386 = vld [vmem:[%s197 + $0x400] sm:$0xff]
        %v387 = vld [vmem:[%s197 + $0x408] sm:$0xff]
        %v388 = vld [vmem:[%s197 + $0x410] sm:$0xff]
        %v389 = vld [vmem:[%s197 + $0x418] sm:$0xff]
        %v390 = vld [vmem:[%s197 + $0x420] sm:$0xff]
        %v391 = vld [vmem:[%s197 + $0x428] sm:$0xff]
        %v392 = vld [vmem:[%s197 + $0x430] sm:$0xff]
        %v393 = vld [vmem:[%s197 + $0x438] sm:$0xff]
        %v394 = vld [vmem:[%s197 + $0x440] sm:$0xff]
        %v395 = vld [vmem:[%s197 + $0x448] sm:$0xff]
        %v396 = vld [vmem:[%s197 + $0x450] sm:$0xff]
        %v397 = vld [vmem:[%s197 + $0x458] sm:$0xff]
        %v398 = vld [vmem:[%s197 + $0x460] sm:$0xff]
        %v399 = vld [vmem:[%s197 + $0x468] sm:$0xff]
        %v400 = vld [vmem:[%s197 + $0x470] sm:$0xff]
        %v401 = vld [vmem:[%s197 + $0x478] sm:$0xff]
        %v402 = vld [vmem:[%s197 + $0x480] sm:$0xff]
        %v403 = vld [vmem:[%s197 + $0x488] sm:$0xff]
        %v404 = vld [vmem:[%s197 + $0x490] sm:$0xff]
        %v405 = vld [vmem:[%s197 + $0x498] sm:$0xff]
        %v406 = vld [vmem:[%s197 + $0x4a0] sm:$0xff]
        %v407 = vld [vmem:[%s197 + $0x4a8] sm:$0xff]
        %v408 = vld [vmem:[%s197 + $0x4b0] sm:$0xff]
        %v409 = vld [vmem:[%s197 + $0x4b8] sm:$0xff]
        %v410 = vld [vmem:[%s197 + $0x4c0] sm:$0xff]
        %v411 = vld [vmem:[%s197 + $0x4c8] sm:$0xff]
        %v412 = vld [vmem:[%s197 + $0x4d0] sm:$0xff]
        %v413 = vld [vmem:[%s197 + $0x4d8] sm:$0xff]
        %v414 = vld [vmem:[%s197 + $0x4e0] sm:$0xff]
        %v415 = vld [vmem:[%s197 + $0x4e8] sm:$0xff]
        %v416 = vld [vmem:[%s197 + $0x4f0] sm:$0xff]
        %v417 = vld [vmem:[%s197 + $0x4f8] sm:$0xff]
        %v418 = vld [vmem:[%s197 + $0x500] sm:$0xff]
        %v419 = vld [vmem:[%s197 + $0x508] sm:$0xff]
        %v420 = vld [vmem:[%s197 + $0x510] sm:$0xff]
        %v421 = vld [vmem:[%s197 + $0x518] sm:$0xff]
        %v422 = vld [vmem:[%s197 + $0x520] sm:$0xff]
        %v423 = vld [vmem:[%s197 + $0x528] sm:$0xff]
        %v424 = vld [vmem:[%s197 + $0x530] sm:$0xff]
        %v425 = vld [vmem:[%s197 + $0x538] sm:$0xff]
        %v426 = vld [vmem:[%s197 + $0x540] sm:$0xff]
        %v427 = vld [vmem:[%s197 + $0x548] sm:$0xff]
        %v428 = vld [vmem:[%s197 + $0x550] sm:$0xff]
        %v429 = vld [vmem:[%s197 + $0x558] sm:$0xff]
        %v430 = vld [vmem:[%s197 + $0x560] sm:$0xff]
        %v431 = vld [vmem:[%s197 + $0x568] sm:$0xff]
        %v432 = vld [vmem:[%s197 + $0x570] sm:$0xff]
        %v433 = vld [vmem:[%s197 + $0x578] sm:$0xff]
        %v434 = vld [vmem:[%s197 + $0x580] sm:$0xff]
        %v435 = vld [vmem:[%s197 + $0x588] sm:$0xff]
        %v436 = vld [vmem:[%s197 + $0x590] sm:$0xff]
        %v437 = vld [vmem:[%s197 + $0x598] sm:$0xff]
        %v438 = vld [vmem:[%s197 + $0x5a0] sm:$0xff]
        %v439 = vld [vmem:[%s197 + $0x5a8] sm:$0xff]
        %v440 = vld [vmem:[%s197 + $0x5b0] sm:$0xff]
        %v441 = vld [vmem:[%s197 + $0x5b8] sm:$0xff]
        %v442 = vld [vmem:[%s197 + $0x5c0] sm:$0xff]
        %v443 = vld [vmem:[%s197 + $0x5c8] sm:$0xff]
        %v444 = vld [vmem:[%s197 + $0x5d0] sm:$0xff]
        %v445 = vld [vmem:[%s197 + $0x5d8] sm:$0xff]
        %v446 = vld [vmem:[%s197 + $0x5e0] sm:$0xff]
        %v447 = vld [vmem:[%s197 + $0x5e8] sm:$0xff]
        %v448 = vld [vmem:[%s197 + $0x5f0] sm:$0xff]
        %v449 = vld [vmem:[%s197 + $0x5f8] sm:$0xff]
        %v450 = vld [vmem:[%s197 + $0x600] sm:$0xff]
        %v451 = vld [vmem:[%s197 + $0x608] sm:$0xff]
        %v452 = vld [vmem:[%s197 + $0x610] sm:$0xff]
        %v453 = vld [vmem:[%s197 + $0x618] sm:$0xff]
        %v454 = vld [vmem:[%s197 + $0x620] sm:$0xff]
        %v455 = vld [vmem:[%s197 + $0x628] sm:$0xff]
        %v456 = vld [vmem:[%s197 + $0x630] sm:$0xff]
        %v457 = vld [vmem:[%s197 + $0x638] sm:$0xff]
        %v458 = vld [vmem:[%s197 + $0x640] sm:$0xff]
        %v459 = vld [vmem:[%s197 + $0x648] sm:$0xff]
        %v460 = vld [vmem:[%s197 + $0x650] sm:$0xff]
        %v461 = vld [vmem:[%s197 + $0x658] sm:$0xff]
        %v462 = vld [vmem:[%s197 + $0x660] sm:$0xff]
        %v463 = vld [vmem:[%s197 + $0x668] sm:$0xff]
        %v464 = vld [vmem:[%s197 + $0x670] sm:$0xff]
        %v465 = vld [vmem:[%s197 + $0x678] sm:$0xff]
        %v466 = vld [vmem:[%s197 + $0x680] sm:$0xff]
        %v467 = vld [vmem:[%s197 + $0x688] sm:$0xff]
        %v468 = vld [vmem:[%s197 + $0x690] sm:$0xff]
        %v469 = vld [vmem:[%s197 + $0x698] sm:$0xff]
        %v470 = vld [vmem:[%s197 + $0x6a0] sm:$0xff]
        %v471 = vld [vmem:[%s197 + $0x6a8] sm:$0xff]
        %v472 = vld [vmem:[%s197 + $0x6b0] sm:$0xff]
        %v473 = vld [vmem:[%s197 + $0x6b8] sm:$0xff]
        %v474 = vld [vmem:[%s197 + $0x6c0] sm:$0xff]
        %v475 = vld [vmem:[%s197 + $0x6c8] sm:$0xff]
        %v476 = vld [vmem:[%s197 + $0x6d0] sm:$0xff]
        %v477 = vld [vmem:[%s197 + $0x6d8] sm:$0xff]
        %v478 = vld [vmem:[%s197 + $0x6e0] sm:$0xff]
        %v479 = vld [vmem:[%s197 + $0x6e8] sm:$0xff]
        %v480 = vld [vmem:[%s197 + $0x6f0] sm:$0xff]
        %v481 = vld [vmem:[%s197 + $0x6f8] sm:$0xff]
        %v482 = vld [vmem:[%s197 + $0x700] sm:$0xff]
        %v483 = vld [vmem:[%s197 + $0x708] sm:$0xff]
        %v484 = vld [vmem:[%s197 + $0x710] sm:$0xff]
        %v485 = vld [vmem:[%s197 + $0x718] sm:$0xff]
        %v486 = vld [vmem:[%s197 + $0x720] sm:$0xff]
        %v487 = vld [vmem:[%s197 + $0x728] sm:$0xff]
        %v488 = vld [vmem:[%s197 + $0x730] sm:$0xff]
        %v489 = vld [vmem:[%s197 + $0x738] sm:$0xff]
        %v490 = vld [vmem:[%s197 + $0x740] sm:$0xff]
        %v491 = vld [vmem:[%s197 + $0x748] sm:$0xff]
        %v492 = vld [vmem:[%s197 + $0x750] sm:$0xff]
        %v493 = vld [vmem:[%s197 + $0x758] sm:$0xff]
        %v494 = vld [vmem:[%s197 + $0x760] sm:$0xff]
        %v495 = vld [vmem:[%s197 + $0x768] sm:$0xff]
        %v496 = vld [vmem:[%s197 + $0x770] sm:$0xff]
        %v497 = vld [vmem:[%s197 + $0x778] sm:$0xff]
        %v498 = vld [vmem:[%s197 + $0x780] sm:$0xff]
        %v499 = vld [vmem:[%s197 + $0x788] sm:$0xff]
        %v500 = vld [vmem:[%s197 + $0x790] sm:$0xff]
        %v501 = vld [vmem:[%s197 + $0x798] sm:$0xff]
        %v502 = vld [vmem:[%s197 + $0x7a0] sm:$0xff]
        %v503 = vld [vmem:[%s197 + $0x7a8] sm:$0xff]
        %v504 = vld [vmem:[%s197 + $0x7b0] sm:$0xff]
        %v505 = vld [vmem:[%s197 + $0x7b8] sm:$0xff]
        %v506 = vld [vmem:[%s197 + $0x7c0] sm:$0xff]
        %v507 = vld [vmem:[%s197 + $0x7c8] sm:$0xff]
        %v508 = vld [vmem:[%s197 + $0x7d0] sm:$0xff]
        %v509 = vld [vmem:[%s197 + $0x7d8] sm:$0xff]
        %v510 = vld [vmem:[%s197 + $0x7e0] sm:$0xff]
        %v511 = vld [vmem:[%s197 + $0x7e8] sm:$0xff]
        %v512 = vld [vmem:[%s197 + $0x7f0] sm:$0xff]
        %v513 = vld [vmem:[%s197 + $0x7f8] sm:$0xff]
        %v514 = vld [vmem:[%s197 + $0x800] sm:$0xff]
        %v515 = vld [vmem:[%s197 + $0x808] sm:$0xff]
        %v516 = vld [vmem:[%s197 + $0x810] sm:$0xff]
        %v517 = vld [vmem:[%s197 + $0x818] sm:$0xff]
        %v518 = vld [vmem:[%s197 + $0x820] sm:$0xff]
        %v519 = vld [vmem:[%s197 + $0x828] sm:$0xff]
        %v520 = vld [vmem:[%s197 + $0x830] sm:$0xff]
        %v521 = vld [vmem:[%s197 + $0x838] sm:$0xff]
        %v522 = vld [vmem:[%s197 + $0x840] sm:$0xff]
        %v523 = vld [vmem:[%s197 + $0x848] sm:$0xff]
        %v524 = vld [vmem:[%s197 + $0x850] sm:$0xff]
        %v525 = vld [vmem:[%s197 + $0x858] sm:$0xff]
        %v526 = vld [vmem:[%s197 + $0x860] sm:$0xff]
        %v527 = vld [vmem:[%s197 + $0x868] sm:$0xff]
        %v528 = vld [vmem:[%s197 + $0x870] sm:$0xff]
        %v529 = vld [vmem:[%s197 + $0x878] sm:$0xff]
        %v530 = vld [vmem:[%s197 + $0x880] sm:$0xff]
        %v531 = vld [vmem:[%s197 + $0x888] sm:$0xff]
        %v532 = vld [vmem:[%s197 + $0x890] sm:$0xff]
        %v533 = vld [vmem:[%s197 + $0x898] sm:$0xff]
        %v534 = vld [vmem:[%s197 + $0x8a0] sm:$0xff]
        %v535 = vld [vmem:[%s197 + $0x8a8] sm:$0xff]
        %v536 = vld [vmem:[%s197 + $0x8b0] sm:$0xff]
        %v537 = vld [vmem:[%s197 + $0x8b8] sm:$0xff]
        %v538 = vld [vmem:[%s197 + $0x8c0] sm:$0xff]
        %v539 = vld [vmem:[%s197 + $0x8c8] sm:$0xff]
        %v540 = vld [vmem:[%s197 + $0x8d0] sm:$0xff]
        %v541 = vld [vmem:[%s197 + $0x8d8] sm:$0xff]
        %v542 = vld [vmem:[%s197 + $0x8e0] sm:$0xff]
        %v543 = vld [vmem:[%s197 + $0x8e8] sm:$0xff]
        %v544 = vld [vmem:[%s197 + $0x8f0] sm:$0xff]
        %v545 = vld [vmem:[%s197 + $0x8f8] sm:$0xff]
        %v546 = vld [vmem:[%s197 + $0x900] sm:$0xff]
        %v547 = vld [vmem:[%s197 + $0x908] sm:$0xff]
        %v548 = vld [vmem:[%s197 + $0x910] sm:$0xff]
        %v549 = vld [vmem:[%s197 + $0x918] sm:$0xff]
        %v550 = vld [vmem:[%s197 + $0x920] sm:$0xff]
        %v551 = vld [vmem:[%s197 + $0x928] sm:$0xff]
        %v552 = vld [vmem:[%s197 + $0x930] sm:$0xff]
        %v553 = vld [vmem:[%s197 + $0x938] sm:$0xff]
        %v554 = vld [vmem:[%s197 + $0x940] sm:$0xff]
        %v555 = vld [vmem:[%s197 + $0x948] sm:$0xff]
        %v556 = vld [vmem:[%s197 + $0x950] sm:$0xff]
        %v557 = vld [vmem:[%s197 + $0x958] sm:$0xff]
        %v558 = vld [vmem:[%s197 + $0x960] sm:$0xff]
        %v559 = vld [vmem:[%s197 + $0x968] sm:$0xff]
        %v560 = vld [vmem:[%s197 + $0x970] sm:$0xff]
        %v561 = vld [vmem:[%s197 + $0x978] sm:$0xff]
        %v562 = vld [vmem:[%s197 + $0x980] sm:$0xff]
        %v563 = vld [vmem:[%s197 + $0x988] sm:$0xff]
        %v564 = vld [vmem:[%s197 + $0x990] sm:$0xff]
        %v565 = vld [vmem:[%s197 + $0x998] sm:$0xff]
        %v566 = vld [vmem:[%s197 + $0x9a0] sm:$0xff]
        %v567 = vld [vmem:[%s197 + $0x9a8] sm:$0xff]
        %v568 = vld [vmem:[%s197 + $0x9b0] sm:$0xff]
        %v569 = vld [vmem:[%s197 + $0x9b8] sm:$0xff]
        %v570 = vld [vmem:[%s197 + $0x9c0] sm:$0xff]
        %v571 = vld [vmem:[%s197 + $0x9c8] sm:$0xff]
        %v572 = vld [vmem:[%s197 + $0x9d0] sm:$0xff]
        %v573 = vld [vmem:[%s197 + $0x9d8] sm:$0xff]
        %v574 = vld [vmem:[%s197 + $0x9e0] sm:$0xff]
        %v575 = vld [vmem:[%s197 + $0x9e8] sm:$0xff]
        %v576 = vld [vmem:[%s197 + $0x9f0] sm:$0xff]
        %v577 = vld [vmem:[%s197 + $0x9f8] sm:$0xff]
        %v578 = vld [vmem:[%s197 + $0xa00] sm:$0xff]
        %v579 = vld [vmem:[%s197 + $0xa08] sm:$0xff]
        %v580 = vld [vmem:[%s197 + $0xa10] sm:$0xff]
        %v581 = vld [vmem:[%s197 + $0xa18] sm:$0xff]
        %v582 = vld [vmem:[%s197 + $0xa20] sm:$0xff]
        %v583 = vld [vmem:[%s197 + $0xa28] sm:$0xff]
        %v584 = vld [vmem:[%s197 + $0xa30] sm:$0xff]
        %v585 = vld [vmem:[%s197 + $0xa38] sm:$0xff]
        %v586 = vld [vmem:[%s197 + $0xa40] sm:$0xff]
        %v587 = vld [vmem:[%s197 + $0xa48] sm:$0xff]
        %v588 = vld [vmem:[%s197 + $0xa50] sm:$0xff]
        %v589 = vld [vmem:[%s197 + $0xa58] sm:$0xff]
        %v590 = vld [vmem:[%s197 + $0xa60] sm:$0xff]
        %v591 = vld [vmem:[%s197 + $0xa68] sm:$0xff]
        %v592 = vld [vmem:[%s197 + $0xa70] sm:$0xff]
        %v593 = vld [vmem:[%s197 + $0xa78] sm:$0xff]
        %v594 = vld [vmem:[%s197 + $0xa80] sm:$0xff]
        %v595 = vld [vmem:[%s197 + $0xa88] sm:$0xff]
        %v596 = vld [vmem:[%s197 + $0xa90] sm:$0xff]
        %v597 = vld [vmem:[%s197 + $0xa98] sm:$0xff]
        %v598 = vld [vmem:[%s197 + $0xaa0] sm:$0xff]
        %v599 = vld [vmem:[%s197 + $0xaa8] sm:$0xff]
        %v600 = vld [vmem:[%s197 + $0xab0] sm:$0xff]
        %v601 = vld [vmem:[%s197 + $0xab8] sm:$0xff]
        %v602 = vld [vmem:[%s197 + $0xac0] sm:$0xff]
        %v603 = vld [vmem:[%s197 + $0xac8] sm:$0xff]
        %v604 = vld [vmem:[%s197 + $0xad0] sm:$0xff]
        %v605 = vld [vmem:[%s197 + $0xad8] sm:$0xff]
        %v606 = vld [vmem:[%s197 + $0xae0] sm:$0xff]
        %v607 = vld [vmem:[%s197 + $0xae8] sm:$0xff]
        %v608 = vld [vmem:[%s197 + $0xaf0] sm:$0xff]
        %v609 = vld [vmem:[%s197 + $0xaf8] sm:$0xff]
        %v610 = vld [vmem:[%s197 + $0xb00] sm:$0xff]
        %v611 = vld [vmem:[%s197 + $0xb08] sm:$0xff]
        %v612 = vld [vmem:[%s197 + $0xb10] sm:$0xff]
        %v613 = vld [vmem:[%s197 + $0xb18] sm:$0xff]
        %v614 = vld [vmem:[%s197 + $0xb20] sm:$0xff]
        %v615 = vld [vmem:[%s197 + $0xb28] sm:$0xff]
        %v616 = vld [vmem:[%s197 + $0xb30] sm:$0xff]
        %v617 = vld [vmem:[%s197 + $0xb38] sm:$0xff]
        %v618 = vld [vmem:[%s197 + $0xb40] sm:$0xff]
        %v619 = vld [vmem:[%s197 + $0xb48] sm:$0xff]
        %v620 = vld [vmem:[%s197 + $0xb50] sm:$0xff]
        %v621 = vld [vmem:[%s197 + $0xb58] sm:$0xff]
        %v622 = vld [vmem:[%s197 + $0xb60] sm:$0xff]
        %v623 = vld [vmem:[%s197 + $0xb68] sm:$0xff]
        %v624 = vld [vmem:[%s197 + $0xb70] sm:$0xff]
        %v625 = vld [vmem:[%s197 + $0xb78] sm:$0xff]
        %v626 = vld [vmem:[%s197 + $0xb80] sm:$0xff]
        %v627 = vld [vmem:[%s197 + $0xb88] sm:$0xff]
        %v628 = vld [vmem:[%s197 + $0xb90] sm:$0xff]
        %v629 = vld [vmem:[%s197 + $0xb98] sm:$0xff]
        %v630 = vld [vmem:[%s197 + $0xba0] sm:$0xff]
        %v631 = vld [vmem:[%s197 + $0xba8] sm:$0xff]
        %v632 = vld [vmem:[%s197 + $0xbb0] sm:$0xff]
        %v633 = vld [vmem:[%s197 + $0xbb8] sm:$0xff]
        %v634 = vld [vmem:[%s197 + $0xbc0] sm:$0xff]
        %v635 = vld [vmem:[%s197 + $0xbc8] sm:$0xff]
        %v636 = vld [vmem:[%s197 + $0xbd0] sm:$0xff]
        %v637 = vld [vmem:[%s197 + $0xbd8] sm:$0xff]
        %v638 = vld [vmem:[%s197 + $0xbe0] sm:$0xff]
        %v639 = vld [vmem:[%s197 + $0xbe8] sm:$0xff]
        %v640 = vld [vmem:[%s197 + $0xbf0] sm:$0xff]
        %v641 = vld [vmem:[%s197 + $0xbf8] sm:$0xff]
        %v642 = vld [vmem:[%s197 + $0xc00] sm:$0xff]
        %v643 = vld [vmem:[%s197 + $0xc08] sm:$0xff]
        %v644 = vld [vmem:[%s197 + $0xc10] sm:$0xff]
        %v645 = vld [vmem:[%s197 + $0xc18] sm:$0xff]
        %v646 = vld [vmem:[%s197 + $0xc20] sm:$0xff]
        %v647 = vld [vmem:[%s197 + $0xc28] sm:$0xff]
        %v648 = vld [vmem:[%s197 + $0xc30] sm:$0xff]
        %v649 = vld [vmem:[%s197 + $0xc38] sm:$0xff]
        %v650 = vld [vmem:[%s197 + $0xc40] sm:$0xff]
        %v651 = vld [vmem:[%s197 + $0xc48] sm:$0xff]
        %v652 = vld [vmem:[%s197 + $0xc50] sm:$0xff]
        %v653 = vld [vmem:[%s197 + $0xc58] sm:$0xff]
        %v654 = vld [vmem:[%s197 + $0xc60] sm:$0xff]
        %v655 = vld [vmem:[%s197 + $0xc68] sm:$0xff]
        %v656 = vld [vmem:[%s197 + $0xc70] sm:$0xff]
        %v657 = vld [vmem:[%s197 + $0xc78] sm:$0xff]
        %v658 = vld [vmem:[%s197 + $0xc80] sm:$0xff]
        %v659 = vld [vmem:[%s197 + $0xc88] sm:$0xff]
        %v660 = vld [vmem:[%s197 + $0xc90] sm:$0xff]
        %v661 = vld [vmem:[%s197 + $0xc98] sm:$0xff]
        %v662 = vld [vmem:[%s197 + $0xca0] sm:$0xff]
        %v663 = vld [vmem:[%s197 + $0xca8] sm:$0xff]
        %v664 = vld [vmem:[%s197 + $0xcb0] sm:$0xff]
        %v665 = vld [vmem:[%s197 + $0xcb8] sm:$0xff]
        %v666 = vld [vmem:[%s197 + $0xcc0] sm:$0xff]
        %v667 = vld [vmem:[%s197 + $0xcc8] sm:$0xff]
        %v668 = vld [vmem:[%s197 + $0xcd0] sm:$0xff]
        %v669 = vld [vmem:[%s197 + $0xcd8] sm:$0xff]
        %v670 = vld [vmem:[%s197 + $0xce0] sm:$0xff]
        %v671 = vld [vmem:[%s197 + $0xce8] sm:$0xff]
        %v672 = vld [vmem:[%s197 + $0xcf0] sm:$0xff]
        %v673 = vld [vmem:[%s197 + $0xcf8] sm:$0xff]
        %v674 = vld [vmem:[%s197 + $0xd00] sm:$0xff]
        %v675 = vld [vmem:[%s197 + $0xd08] sm:$0xff]
        %v676 = vld [vmem:[%s197 + $0xd10] sm:$0xff]
        %v677 = vld [vmem:[%s197 + $0xd18] sm:$0xff]
        %v678 = vld [vmem:[%s197 + $0xd20] sm:$0xff]
        %v679 = vld [vmem:[%s197 + $0xd28] sm:$0xff]
        %v680 = vld [vmem:[%s197 + $0xd30] sm:$0xff]
        %v681 = vld [vmem:[%s197 + $0xd38] sm:$0xff]
        %v682 = vld [vmem:[%s197 + $0xd40] sm:$0xff]
        %v683 = vld [vmem:[%s197 + $0xd48] sm:$0xff]
        %v684 = vld [vmem:[%s197 + $0xd50] sm:$0xff]
        %v685 = vld [vmem:[%s197 + $0xd58] sm:$0xff]
        %v686 = vld [vmem:[%s197 + $0xd60] sm:$0xff]
        %v687 = vld [vmem:[%s197 + $0xd68] sm:$0xff]
        %v688 = vld [vmem:[%s197 + $0xd70] sm:$0xff]
        %v689 = vld [vmem:[%s197 + $0xd78] sm:$0xff]
        %v690 = vld [vmem:[%s197 + $0xd80] sm:$0xff]
        %v691 = vld [vmem:[%s197 + $0xd88] sm:$0xff]
        %v692 = vld [vmem:[%s197 + $0xd90] sm:$0xff]
        %v693 = vld [vmem:[%s197 + $0xd98] sm:$0xff]
        %v694 = vld [vmem:[%s197 + $0xda0] sm:$0xff]
        %v695 = vld [vmem:[%s197 + $0xda8] sm:$0xff]
        %v696 = vld [vmem:[%s197 + $0xdb0] sm:$0xff]
        %v697 = vld [vmem:[%s197 + $0xdb8] sm:$0xff]
        %v698 = vld [vmem:[%s197 + $0xdc0] sm:$0xff]
        %v699 = vld [vmem:[%s197 + $0xdc8] sm:$0xff]
        %v700 = vld [vmem:[%s197 + $0xdd0] sm:$0xff]
        %v701 = vld [vmem:[%s197 + $0xdd8] sm:$0xff]
        %v702 = vld [vmem:[%s197 + $0xde0] sm:$0xff]
        %v703 = vld [vmem:[%s197 + $0xde8] sm:$0xff]
        %v704 = vld [vmem:[%s197 + $0xdf0] sm:$0xff]
        %v705 = vld [vmem:[%s197 + $0xdf8] sm:$0xff]
        %v706 = vld [vmem:[%s197 + $0xe00] sm:$0xff]
        %v707 = vld [vmem:[%s197 + $0xe08] sm:$0xff]
        %v708 = vld [vmem:[%s197 + $0xe10] sm:$0xff]
        %v709 = vld [vmem:[%s197 + $0xe18] sm:$0xff]
        %v710 = vld [vmem:[%s197 + $0xe20] sm:$0xff]
        %v711 = vld [vmem:[%s197 + $0xe28] sm:$0xff]
        %v712 = vld [vmem:[%s197 + $0xe30] sm:$0xff]
        %v713 = vld [vmem:[%s197 + $0xe38] sm:$0xff]
        %v714 = vld [vmem:[%s197 + $0xe40] sm:$0xff]
        %v715 = vld [vmem:[%s197 + $0xe48] sm:$0xff]
        %v716 = vld [vmem:[%s197 + $0xe50] sm:$0xff]
        %v717 = vld [vmem:[%s197 + $0xe58] sm:$0xff]
        %v718 = vld [vmem:[%s197 + $0xe60] sm:$0xff]
        %v719 = vld [vmem:[%s197 + $0xe68] sm:$0xff]
        %v720 = vld [vmem:[%s197 + $0xe70] sm:$0xff]
        %v721 = vld [vmem:[%s197 + $0xe78] sm:$0xff]
        %v722 = vld [vmem:[%s197 + $0xe80] sm:$0xff]
        %v723 = vld [vmem:[%s197 + $0xe88] sm:$0xff]
        %v724 = vld [vmem:[%s197 + $0xe90] sm:$0xff]
        %v725 = vld [vmem:[%s197 + $0xe98] sm:$0xff]
        %v726 = vld [vmem:[%s197 + $0xea0] sm:$0xff]
        %v727 = vld [vmem:[%s197 + $0xea8] sm:$0xff]
        %v728 = vld [vmem:[%s197 + $0xeb0] sm:$0xff]
        %v729 = vld [vmem:[%s197 + $0xeb8] sm:$0xff]
        %v730 = vld [vmem:[%s197 + $0xec0] sm:$0xff]
        %v731 = vld [vmem:[%s197 + $0xec8] sm:$0xff]
        %v732 = vld [vmem:[%s197 + $0xed0] sm:$0xff]
        %v733 = vld [vmem:[%s197 + $0xed8] sm:$0xff]
        %v734 = vld [vmem:[%s197 + $0xee0] sm:$0xff]
        %v735 = vld [vmem:[%s197 + $0xee8] sm:$0xff]
        %v736 = vld [vmem:[%s197 + $0xef0] sm:$0xff]
        %v737 = vld [vmem:[%s197 + $0xef8] sm:$0xff]
        %v738 = vld [vmem:[%s197 + $0xf00] sm:$0xff]
        %v739 = vld [vmem:[%s197 + $0xf08] sm:$0xff]
        %v740 = vld [vmem:[%s197 + $0xf10] sm:$0xff]
        %v741 = vld [vmem:[%s197 + $0xf18] sm:$0xff]
        %v742 = vld [vmem:[%s197 + $0xf20] sm:$0xff]
        %v743 = vld [vmem:[%s197 + $0xf28] sm:$0xff]
        %v744 = vld [vmem:[%s197 + $0xf30] sm:$0xff]
        %v745 = vld [vmem:[%s197 + $0xf38] sm:$0xff]
        %v746 = vld [vmem:[%s197 + $0xf40] sm:$0xff]
        %v747 = vld [vmem:[%s197 + $0xf48] sm:$0xff]
        %v748 = vld [vmem:[%s197 + $0xf50] sm:$0xff]
        %v749 = vld [vmem:[%s197 + $0xf58] sm:$0xff]
        %v750 = vld [vmem:[%s197 + $0xf60] sm:$0xff]
        %v751 = vld [vmem:[%s197 + $0xf68] sm:$0xff]
        %v752 = vld [vmem:[%s197 + $0xf70] sm:$0xff]
        %v753 = vld [vmem:[%s197 + $0xf78] sm:$0xff]
        %v754 = vld [vmem:[%s197 + $0xf80] sm:$0xff]
        %v755 = vld [vmem:[%s197 + $0xf88] sm:$0xff]
        %v756 = vld [vmem:[%s197 + $0xf90] sm:$0xff]
        %v757 = vld [vmem:[%s197 + $0xf98] sm:$0xff]
        %v758 = vld [vmem:[%s197 + $0xfa0] sm:$0xff]
        %v759 = vld [vmem:[%s197 + $0xfa8] sm:$0xff]
        %v760 = vld [vmem:[%s197 + $0xfb0] sm:$0xff]
        %v761 = vld [vmem:[%s197 + $0xfb8] sm:$0xff]
        %v762 = vld [vmem:[%s197 + $0xfc0] sm:$0xff]
        %v763 = vld [vmem:[%s197 + $0xfc8] sm:$0xff]
        %v764 = vld [vmem:[%s197 + $0xfd0] sm:$0xff]
        %v765 = vld [vmem:[%s197 + $0xfd8] sm:$0xff]
        %v766 = vld [vmem:[%s197 + $0xfe0] sm:$0xff]
        %v767 = vld [vmem:[%s197 + $0xfe8] sm:$0xff]
        %v768 = vld [vmem:[%s197 + $0xff0] sm:$0xff]
        %v769 = vld [vmem:[%s197 + $0xff8] sm:$0xff]
        %v770 = vld [vmem:[%s197 + $0x1000] sm:$0xff]
        %v771 = vld [vmem:[%s197 + $0x1008] sm:$0xff]
        %v772 = vld [vmem:[%s197 + $0x1010] sm:$0xff]
        %v773 = vld [vmem:[%s197 + $0x1018] sm:$0xff]
        %v774 = vld [vmem:[%s197 + $0x1020] sm:$0xff]
        %v775 = vld [vmem:[%s197 + $0x1028] sm:$0xff]
        %v776 = vld [vmem:[%s197 + $0x1030] sm:$0xff]
        %v777 = vld [vmem:[%s197 + $0x1038] sm:$0xff]
        %v778 = vld [vmem:[%s197 + $0x1040] sm:$0xff]
        %v779 = vld [vmem:[%s197 + $0x1048] sm:$0xff]
        %v780 = vld [vmem:[%s197 + $0x1050] sm:$0xff]
        %v781 = vld [vmem:[%s197 + $0x1058] sm:$0xff]
        %v782 = vld [vmem:[%s197 + $0x1060] sm:$0xff]
        %v783 = vld [vmem:[%s197 + $0x1068] sm:$0xff]
        %v784 = vld [vmem:[%s197 + $0x1070] sm:$0xff]
        %v785 = vld [vmem:[%s197 + $0x1078] sm:$0xff]
        %v786 = vld [vmem:[%s197 + $0x1080] sm:$0xff]
        %v787 = vld [vmem:[%s197 + $0x1088] sm:$0xff]
        %v788 = vld [vmem:[%s197 + $0x1090] sm:$0xff]
        %v789 = vld [vmem:[%s197 + $0x1098] sm:$0xff]
        %v790 = vld [vmem:[%s197 + $0x10a0] sm:$0xff]
        %v791 = vld [vmem:[%s197 + $0x10a8] sm:$0xff]
        %v792 = vld [vmem:[%s197 + $0x10b0] sm:$0xff]
        %v793 = vld [vmem:[%s197 + $0x10b8] sm:$0xff]
        %v794 = vld [vmem:[%s197 + $0x10c0] sm:$0xff]
        %v795 = vld [vmem:[%s197 + $0x10c8] sm:$0xff]
        %v796 = vld [vmem:[%s197 + $0x10d0] sm:$0xff]
        %v797 = vld [vmem:[%s197 + $0x10d8] sm:$0xff]
        %v798 = vld [vmem:[%s197 + $0x10e0] sm:$0xff]
        %v799 = vld [vmem:[%s197 + $0x10e8] sm:$0xff]
        %v800 = vld [vmem:[%s197 + $0x10f0] sm:$0xff]
        %v801 = vld [vmem:[%s197 + $0x10f8] sm:$0xff]
        %v802 = vld [vmem:[%s197 + $0x1100] sm:$0xff]
        %v803 = vld [vmem:[%s197 + $0x1108] sm:$0xff]
        %v804 = vld [vmem:[%s197 + $0x1110] sm:$0xff]
        %v805 = vld [vmem:[%s197 + $0x1118] sm:$0xff]
        %v806 = vld [vmem:[%s197 + $0x1120] sm:$0xff]
        %v807 = vld [vmem:[%s197 + $0x1128] sm:$0xff]
        %v808 = vld [vmem:[%s197 + $0x1130] sm:$0xff]
        %v809 = vld [vmem:[%s197 + $0x1138] sm:$0xff]
        %v810 = vld [vmem:[%s197 + $0x1140] sm:$0xff]
        %v811 = vld [vmem:[%s197 + $0x1148] sm:$0xff]
        %v812 = vld [vmem:[%s197 + $0x1150] sm:$0xff]
        %v813 = vld [vmem:[%s197 + $0x1158] sm:$0xff]
        %v814 = vld [vmem:[%s197 + $0x1160] sm:$0xff]
        %v815 = vld [vmem:[%s197 + $0x1168] sm:$0xff]
        %v816 = vld [vmem:[%s197 + $0x1170] sm:$0xff]
        %v817 = vld [vmem:[%s197 + $0x1178] sm:$0xff]
        %v818 = vld [vmem:[%s197 + $0x1180] sm:$0xff]
        %v819 = vld [vmem:[%s197 + $0x1188] sm:$0xff]
        %v820 = vld [vmem:[%s197 + $0x1190] sm:$0xff]
        %v821 = vld [vmem:[%s197 + $0x1198] sm:$0xff]
        %v822 = vld [vmem:[%s197 + $0x11a0] sm:$0xff]
        %v823 = vld [vmem:[%s197 + $0x11a8] sm:$0xff]
        %v824 = vld [vmem:[%s197 + $0x11b0] sm:$0xff]
        %v825 = vld [vmem:[%s197 + $0x11b8] sm:$0xff]
        %v826 = vld [vmem:[%s197 + $0x11c0] sm:$0xff]
        %v827 = vld [vmem:[%s197 + $0x11c8] sm:$0xff]
        %v828 = vld [vmem:[%s197 + $0x11d0] sm:$0xff]
        %v829 = vld [vmem:[%s197 + $0x11d8] sm:$0xff]
        %v830 = vld [vmem:[%s197 + $0x11e0] sm:$0xff]
        %v831 = vld [vmem:[%s197 + $0x11e8] sm:$0xff]
        %v832 = vld [vmem:[%s197 + $0x11f0] sm:$0xff]
        %v833 = vld [vmem:[%s197 + $0x11f8] sm:$0xff]
        %v834 = vld [vmem:[%s197 + $0x1200] sm:$0xff]
        %v835 = vld [vmem:[%s197 + $0x1208] sm:$0xff]
        %v836 = vld [vmem:[%s197 + $0x1210] sm:$0xff]
        %v837 = vld [vmem:[%s197 + $0x1218] sm:$0xff]
        %v838 = vld [vmem:[%s197 + $0x1220] sm:$0xff]
        %v839 = vld [vmem:[%s197 + $0x1228] sm:$0xff]
        %v840 = vld [vmem:[%s197 + $0x1230] sm:$0xff]
        %v841 = vld [vmem:[%s197 + $0x1238] sm:$0xff]
        %v842 = vld [vmem:[%s197 + $0x1240] sm:$0xff]
        %v843 = vld [vmem:[%s197 + $0x1248] sm:$0xff]
        %v844 = vld [vmem:[%s197 + $0x1250] sm:$0xff]
        %v845 = vld [vmem:[%s197 + $0x1258] sm:$0xff]
        %v846 = vld [vmem:[%s197 + $0x1260] sm:$0xff]
        %v847 = vld [vmem:[%s197 + $0x1268] sm:$0xff]
        %v848 = vld [vmem:[%s197 + $0x1270] sm:$0xff]
        %v849 = vld [vmem:[%s197 + $0x1278] sm:$0xff]
        %v850 = vld [vmem:[%s197 + $0x1280] sm:$0xff]
        %v851 = vld [vmem:[%s197 + $0x1288] sm:$0xff]
        %v852 = vld [vmem:[%s197 + $0x1290] sm:$0xff]
        %v853 = vld [vmem:[%s197 + $0x1298] sm:$0xff]
        %v854 = vld [vmem:[%s197 + $0x12a0] sm:$0xff]
        %v855 = vld [vmem:[%s197 + $0x12a8] sm:$0xff]
        %v856 = vld [vmem:[%s197 + $0x12b0] sm:$0xff]
        %v857 = vld [vmem:[%s197 + $0x12b8] sm:$0xff]
        %v858 = vld [vmem:[%s197 + $0x12c0] sm:$0xff]
        %v859 = vld [vmem:[%s197 + $0x12c8] sm:$0xff]
        %v860 = vld [vmem:[%s197 + $0x12d0] sm:$0xff]
        %v861 = vld [vmem:[%s197 + $0x12d8] sm:$0xff]
        %v862 = vld [vmem:[%s197 + $0x12e0] sm:$0xff]
        %v863 = vld [vmem:[%s197 + $0x12e8] sm:$0xff]
        %v864 = vld [vmem:[%s197 + $0x12f0] sm:$0xff]
        %v865 = vld [vmem:[%s197 + $0x12f8] sm:$0xff]
        %v866 = vld [vmem:[%s197 + $0x1300] sm:$0xff]
        %v867 = vld [vmem:[%s197 + $0x1308] sm:$0xff]
        %v868 = vld [vmem:[%s197 + $0x1310] sm:$0xff]
        %v869 = vld [vmem:[%s197 + $0x1318] sm:$0xff]
        %v870 = vld [vmem:[%s197 + $0x1320] sm:$0xff]
        %v871 = vld [vmem:[%s197 + $0x1328] sm:$0xff]
        %v872 = vld [vmem:[%s197 + $0x1330] sm:$0xff]
        %v873 = vld [vmem:[%s197 + $0x1338] sm:$0xff]
        %v874 = vld [vmem:[%s197 + $0x1340] sm:$0xff]
        %v875 = vld [vmem:[%s197 + $0x1348] sm:$0xff]
        %v876 = vld [vmem:[%s197 + $0x1350] sm:$0xff]
        %v877 = vld [vmem:[%s197 + $0x1358] sm:$0xff]
        %v878 = vld [vmem:[%s197 + $0x1360] sm:$0xff]
        %v879 = vld [vmem:[%s197 + $0x1368] sm:$0xff]
        %v880 = vld [vmem:[%s197 + $0x1370] sm:$0xff]
        %v881 = vld [vmem:[%s197 + $0x1378] sm:$0xff]
        %v882 = vld [vmem:[%s197 + $0x1380] sm:$0xff]
        %v883 = vld [vmem:[%s197 + $0x1388] sm:$0xff]
        %v884 = vld [vmem:[%s197 + $0x1390] sm:$0xff]
        %v885 = vld [vmem:[%s197 + $0x1398] sm:$0xff]
        %v886 = vld [vmem:[%s197 + $0x13a0] sm:$0xff]
        %v887 = vld [vmem:[%s197 + $0x13a8] sm:$0xff]
        %v888 = vld [vmem:[%s197 + $0x13b0] sm:$0xff]
        %v889 = vld [vmem:[%s197 + $0x13b8] sm:$0xff]
        %v890 = vld [vmem:[%s197 + $0x13c0] sm:$0xff]
        %v891 = vld [vmem:[%s197 + $0x13c8] sm:$0xff]
        %v892 = vld [vmem:[%s197 + $0x13d0] sm:$0xff]
        %v893 = vld [vmem:[%s197 + $0x13d8] sm:$0xff]
        %v894 = vld [vmem:[%s197 + $0x13e0] sm:$0xff]
        %v895 = vld [vmem:[%s197 + $0x13e8] sm:$0xff]
        %v896 = vld [vmem:[%s197 + $0x13f0] sm:$0xff]
        %v897 = vld [vmem:[%s197 + $0x13f8] sm:$0xff]
        %v898 = vld [vmem:[%s197 + $0x1400] sm:$0xff]
        %v899 = vld [vmem:[%s197 + $0x1408] sm:$0xff]
        %v900 = vld [vmem:[%s197 + $0x1410] sm:$0xff]
        %v901 = vld [vmem:[%s197 + $0x1418] sm:$0xff]
        %v902 = vld [vmem:[%s197 + $0x1420] sm:$0xff]
        %v903 = vld [vmem:[%s197 + $0x1428] sm:$0xff]
        %v904 = vld [vmem:[%s197 + $0x1430] sm:$0xff]
        %v905 = vld [vmem:[%s197 + $0x1438] sm:$0xff]
        %v906 = vld [vmem:[%s197 + $0x1440] sm:$0xff]
        %v907 = vld [vmem:[%s197 + $0x1448] sm:$0xff]
        %v908 = vld [vmem:[%s197 + $0x1450] sm:$0xff]
        %v909 = vld [vmem:[%s197 + $0x1458] sm:$0xff]
        %v910 = vld [vmem:[%s197 + $0x1460] sm:$0xff]
        %v911 = vld [vmem:[%s197 + $0x1468] sm:$0xff]
        %v912 = vld [vmem:[%s197 + $0x1470] sm:$0xff]
        %v913 = vld [vmem:[%s197 + $0x1478] sm:$0xff]
        %v914 = vld [vmem:[%s197 + $0x1480] sm:$0xff]
        %v915 = vld [vmem:[%s197 + $0x1488] sm:$0xff]
        %v916 = vld [vmem:[%s197 + $0x1490] sm:$0xff]
        %v917 = vld [vmem:[%s197 + $0x1498] sm:$0xff]
        %v918 = vld [vmem:[%s197 + $0x14a0] sm:$0xff]
        %v919 = vld [vmem:[%s197 + $0x14a8] sm:$0xff]
        %v920 = vld [vmem:[%s197 + $0x14b0] sm:$0xff]
        %v921 = vld [vmem:[%s197 + $0x14b8] sm:$0xff]
        %v922 = vld [vmem:[%s197 + $0x14c0] sm:$0xff]
        %v923 = vld [vmem:[%s197 + $0x14c8] sm:$0xff]
        %v924 = vld [vmem:[%s197 + $0x14d0] sm:$0xff]
        %v925 = vld [vmem:[%s197 + $0x14d8] sm:$0xff]
        %v926 = vld [vmem:[%s197 + $0x14e0] sm:$0xff]
        %v927 = vld [vmem:[%s197 + $0x14e8] sm:$0xff]
        %v928 = vld [vmem:[%s197 + $0x14f0] sm:$0xff]
        %v929 = vld [vmem:[%s197 + $0x14f8] sm:$0xff]
        %v930 = vld [vmem:[%s197 + $0x1500] sm:$0xff]
        %v931 = vld [vmem:[%s197 + $0x1508] sm:$0xff]
        %v932 = vld [vmem:[%s197 + $0x1510] sm:$0xff]
        %v933 = vld [vmem:[%s197 + $0x1518] sm:$0xff]
        %v934 = vld [vmem:[%s197 + $0x1520] sm:$0xff]
        %v935 = vld [vmem:[%s197 + $0x1528] sm:$0xff]
        %v936 = vld [vmem:[%s197 + $0x1530] sm:$0xff]
        %v937 = vld [vmem:[%s197 + $0x1538] sm:$0xff]
        %v938 = vld [vmem:[%s197 + $0x1540] sm:$0xff]
        %v939 = vld [vmem:[%s197 + $0x1548] sm:$0xff]
        %v940 = vld [vmem:[%s197 + $0x1550] sm:$0xff]
        %v941 = vld [vmem:[%s197 + $0x1558] sm:$0xff]
        %v942 = vld [vmem:[%s197 + $0x1560] sm:$0xff]
        %v943 = vld [vmem:[%s197 + $0x1568] sm:$0xff]
        %v944 = vld [vmem:[%s197 + $0x1570] sm:$0xff]
        %v945 = vld [vmem:[%s197 + $0x1578] sm:$0xff]
        %v946 = vld [vmem:[%s197 + $0x1580] sm:$0xff]
        %v947 = vld [vmem:[%s197 + $0x1588] sm:$0xff]
        %v948 = vld [vmem:[%s197 + $0x1590] sm:$0xff]
        %v949 = vld [vmem:[%s197 + $0x1598] sm:$0xff]
        %v950 = vld [vmem:[%s197 + $0x15a0] sm:$0xff]
        %v951 = vld [vmem:[%s197 + $0x15a8] sm:$0xff]
        %v952 = vld [vmem:[%s197 + $0x15b0] sm:$0xff]
        %v953 = vld [vmem:[%s197 + $0x15b8] sm:$0xff]
        %v954 = vld [vmem:[%s197 + $0x15c0] sm:$0xff]
        %v955 = vld [vmem:[%s197 + $0x15c8] sm:$0xff]
        %v956 = vld [vmem:[%s197 + $0x15d0] sm:$0xff]
        %v957 = vld [vmem:[%s197 + $0x15d8] sm:$0xff]
        %v958 = vld [vmem:[%s197 + $0x15e0] sm:$0xff]
        %v959 = vld [vmem:[%s197 + $0x15e8] sm:$0xff]
        %v960 = vld [vmem:[%s197 + $0x15f0] sm:$0xff]
        %v961 = vld [vmem:[%s197 + $0x15f8] sm:$0xff]
        %v962 = vld [vmem:[%s197 + $0x1600] sm:$0xff]
        %v963 = vld [vmem:[%s197 + $0x1608] sm:$0xff]
        %v964 = vld [vmem:[%s197 + $0x1610] sm:$0xff]
        %v965 = vld [vmem:[%s197 + $0x1618] sm:$0xff]
        %v966 = vld [vmem:[%s197 + $0x1620] sm:$0xff]
        %v967 = vld [vmem:[%s197 + $0x1628] sm:$0xff]
        %v968 = vld [vmem:[%s197 + $0x1630] sm:$0xff]
        %v969 = vld [vmem:[%s197 + $0x1638] sm:$0xff]
        %v970 = vld [vmem:[%s197 + $0x1640] sm:$0xff]
        %v971 = vld [vmem:[%s197 + $0x1648] sm:$0xff]
        %v972 = vld [vmem:[%s197 + $0x1650] sm:$0xff]
        %v973 = vld [vmem:[%s197 + $0x1658] sm:$0xff]
        %v974 = vld [vmem:[%s197 + $0x1660] sm:$0xff]
        %v975 = vld [vmem:[%s197 + $0x1668] sm:$0xff]
        %v976 = vld [vmem:[%s197 + $0x1670] sm:$0xff]
        %v977 = vld [vmem:[%s197 + $0x1678] sm:$0xff]
        %v978 = vld [vmem:[%s197 + $0x1680] sm:$0xff]
        %v979 = vld [vmem:[%s197 + $0x1688] sm:$0xff]
        %v980 = vld [vmem:[%s197 + $0x1690] sm:$0xff]
        %v981 = vld [vmem:[%s197 + $0x1698] sm:$0xff]
        %v982 = vld [vmem:[%s197 + $0x16a0] sm:$0xff]
        %v983 = vld [vmem:[%s197 + $0x16a8] sm:$0xff]
        %v984 = vld [vmem:[%s197 + $0x16b0] sm:$0xff]
        %v985 = vld [vmem:[%s197 + $0x16b8] sm:$0xff]
        %v986 = vld [vmem:[%s197 + $0x16c0] sm:$0xff]
        %v987 = vld [vmem:[%s197 + $0x16c8] sm:$0xff]
        %v988 = vld [vmem:[%s197 + $0x16d0] sm:$0xff]
        %v989 = vld [vmem:[%s197 + $0x16d8] sm:$0xff]
        %v990 = vld [vmem:[%s197 + $0x16e0] sm:$0xff]
        %v991 = vld [vmem:[%s197 + $0x16e8] sm:$0xff]
        %v992 = vld [vmem:[%s197 + $0x16f0] sm:$0xff]
        %v993 = vld [vmem:[%s197 + $0x16f8] sm:$0xff]
        %v994 = vld [vmem:[%s197 + $0x1700] sm:$0xff]
        %v995 = vld [vmem:[%s197 + $0x1708] sm:$0xff]
        %v996 = vld [vmem:[%s197 + $0x1710] sm:$0xff]
        %v997 = vld [vmem:[%s197 + $0x1718] sm:$0xff]
        %v998 = vld [vmem:[%s197 + $0x1720] sm:$0xff]
        %v999 = vld [vmem:[%s197 + $0x1728] sm:$0xff]
        %v1000 = vld [vmem:[%s197 + $0x1730] sm:$0xff]
        %v1001 = vld [vmem:[%s197 + $0x1738] sm:$0xff]
        %v1002 = vld [vmem:[%s197 + $0x1740] sm:$0xff]
        %v1003 = vld [vmem:[%s197 + $0x1748] sm:$0xff]
        %v1004 = vld [vmem:[%s197 + $0x1750] sm:$0xff]
        %v1005 = vld [vmem:[%s197 + $0x1758] sm:$0xff]
        %v1006 = vld [vmem:[%s197 + $0x1760] sm:$0xff]
        %v1007 = vld [vmem:[%s197 + $0x1768] sm:$0xff]
        %v1008 = vld [vmem:[%s197 + $0x1770] sm:$0xff]
        %v1009 = vld [vmem:[%s197 + $0x1778] sm:$0xff]
        %v1010 = vld [vmem:[%s197 + $0x1780] sm:$0xff]
        %v1011 = vld [vmem:[%s197 + $0x1788] sm:$0xff]
        %v1012 = vld [vmem:[%s197 + $0x1790] sm:$0xff]
        %v1013 = vld [vmem:[%s197 + $0x1798] sm:$0xff]
        %v1014 = vld [vmem:[%s197 + $0x17a0] sm:$0xff]
        %v1015 = vld [vmem:[%s197 + $0x17a8] sm:$0xff]
        %v1016 = vld [vmem:[%s197 + $0x17b0] sm:$0xff]
        %v1017 = vld [vmem:[%s197 + $0x17b8] sm:$0xff]
        %v1018 = vld [vmem:[%s197 + $0x17c0] sm:$0xff]
        %v1019 = vld [vmem:[%s197 + $0x17c8] sm:$0xff]
        %v1020 = vld [vmem:[%s197 + $0x17d0] sm:$0xff]
        %v1021 = vld [vmem:[%s197 + $0x17d8] sm:$0xff]
        %v1022 = vld [vmem:[%s197 + $0x17e0] sm:$0xff]
        %v1023 = vld [vmem:[%s197 + $0x17e8] sm:$0xff]
        %v1024 = vld [vmem:[%s197 + $0x17f0] sm:$0xff]
        %v1025 = vld [vmem:[%s197 + $0x17f8] sm:$0xff]
        %v1026 = vld [vmem:[%s197 + $0x1800] sm:$0xff]
        %v1027 = vld [vmem:[%s197 + $0x1808] sm:$0xff]
        %v1028 = vld [vmem:[%s197 + $0x1810] sm:$0xff]
        %v1029 = vld [vmem:[%s197 + $0x1818] sm:$0xff]
        %v1030 = vld [vmem:[%s197 + $0x1820] sm:$0xff]
        %v1031 = vld [vmem:[%s197 + $0x1828] sm:$0xff]
        %v1032 = vld [vmem:[%s197 + $0x1830] sm:$0xff]
        %v1033 = vld [vmem:[%s197 + $0x1838] sm:$0xff]
        %v1034 = vld [vmem:[%s197 + $0x1840] sm:$0xff]
        %v1035 = vld [vmem:[%s197 + $0x1848] sm:$0xff]
        %v1036 = vld [vmem:[%s197 + $0x1850] sm:$0xff]
        %v1037 = vld [vmem:[%s197 + $0x1858] sm:$0xff]
        %v1038 = vld [vmem:[%s197 + $0x1860] sm:$0xff]
        %v1039 = vld [vmem:[%s197 + $0x1868] sm:$0xff]
        %v1040 = vld [vmem:[%s197 + $0x1870] sm:$0xff]
        %v1041 = vld [vmem:[%s197 + $0x1878] sm:$0xff]
        %v1042 = vld [vmem:[%s197 + $0x1880] sm:$0xff]
        %v1043 = vld [vmem:[%s197 + $0x1888] sm:$0xff]
        %v1044 = vld [vmem:[%s197 + $0x1890] sm:$0xff]
        %v1045 = vld [vmem:[%s197 + $0x1898] sm:$0xff]
        %v1046 = vld [vmem:[%s197 + $0x18a0] sm:$0xff]
        %v1047 = vld [vmem:[%s197 + $0x18a8] sm:$0xff]
        %v1048 = vld [vmem:[%s197 + $0x18b0] sm:$0xff]
        %v1049 = vld [vmem:[%s197 + $0x18b8] sm:$0xff]
        %v1050 = vld [vmem:[%s197 + $0x18c0] sm:$0xff]
        %v1051 = vld [vmem:[%s197 + $0x18c8] sm:$0xff]
        %v1052 = vld [vmem:[%s197 + $0x18d0] sm:$0xff]
        %v1053 = vld [vmem:[%s197 + $0x18d8] sm:$0xff]
        %v1054 = vld [vmem:[%s197 + $0x18e0] sm:$0xff]
        %v1055 = vld [vmem:[%s197 + $0x18e8] sm:$0xff]
        %v1056 = vld [vmem:[%s197 + $0x18f0] sm:$0xff]
        %v1057 = vld [vmem:[%s197 + $0x18f8] sm:$0xff]
        %v1058 = vld [vmem:[%s197 + $0x1900] sm:$0xff]
        %v1059 = vld [vmem:[%s197 + $0x1908] sm:$0xff]
        %v1060 = vld [vmem:[%s197 + $0x1910] sm:$0xff]
        %v1061 = vld [vmem:[%s197 + $0x1918] sm:$0xff]
        %v1062 = vld [vmem:[%s197 + $0x1920] sm:$0xff]
        %v1063 = vld [vmem:[%s197 + $0x1928] sm:$0xff]
        %v1064 = vld [vmem:[%s197 + $0x1930] sm:$0xff]
        %v1065 = vld [vmem:[%s197 + $0x1938] sm:$0xff]
        %v1066 = vld [vmem:[%s197 + $0x1940] sm:$0xff]
        %v1067 = vld [vmem:[%s197 + $0x1948] sm:$0xff]
        %v1068 = vld [vmem:[%s197 + $0x1950] sm:$0xff]
        %v1069 = vld [vmem:[%s197 + $0x1958] sm:$0xff]
        %v1070 = vld [vmem:[%s197 + $0x1960] sm:$0xff]
        %v1071 = vld [vmem:[%s197 + $0x1968] sm:$0xff]
        %v1072 = vld [vmem:[%s197 + $0x1970] sm:$0xff]
        %v1073 = vld [vmem:[%s197 + $0x1978] sm:$0xff]
        %v1074 = vld [vmem:[%s197 + $0x1980] sm:$0xff]
        %v1075 = vld [vmem:[%s197 + $0x1988] sm:$0xff]
        %v1076 = vld [vmem:[%s197 + $0x1990] sm:$0xff]
        %v1077 = vld [vmem:[%s197 + $0x1998] sm:$0xff]
        %v1078 = vld [vmem:[%s197 + $0x19a0] sm:$0xff]
        %v1079 = vld [vmem:[%s197 + $0x19a8] sm:$0xff]
        %v1080 = vld [vmem:[%s197 + $0x19b0] sm:$0xff]
        %v1081 = vld [vmem:[%s197 + $0x19b8] sm:$0xff]
        %v1082 = vld [vmem:[%s197 + $0x19c0] sm:$0xff]
        %v1083 = vld [vmem:[%s197 + $0x19c8] sm:$0xff]
        %v1084 = vld [vmem:[%s197 + $0x19d0] sm:$0xff]
        %v1085 = vld [vmem:[%s197 + $0x19d8] sm:$0xff]
        %v1086 = vld [vmem:[%s197 + $0x19e0] sm:$0xff]
        %v1087 = vld [vmem:[%s197 + $0x19e8] sm:$0xff]
        %v1088 = vld [vmem:[%s197 + $0x19f0] sm:$0xff]
        %v1089 = vld [vmem:[%s197 + $0x19f8] sm:$0xff]
        %v1090 = vld [vmem:[%s197 + $0x1a00] sm:$0xff]
        %v1091 = vld [vmem:[%s197 + $0x1a08] sm:$0xff]
        %v1092 = vld [vmem:[%s197 + $0x1a10] sm:$0xff]
        %v1093 = vld [vmem:[%s197 + $0x1a18] sm:$0xff]
        %v1094 = vld [vmem:[%s197 + $0x1a20] sm:$0xff]
        %v1095 = vld [vmem:[%s197 + $0x1a28] sm:$0xff]
        %v1096 = vld [vmem:[%s197 + $0x1a30] sm:$0xff]
        %v1097 = vld [vmem:[%s197 + $0x1a38] sm:$0xff]
        %v1098 = vld [vmem:[%s197 + $0x1a40] sm:$0xff]
        %v1099 = vld [vmem:[%s197 + $0x1a48] sm:$0xff]
        %v1100 = vld [vmem:[%s197 + $0x1a50] sm:$0xff]
        %v1101 = vld [vmem:[%s197 + $0x1a58] sm:$0xff]
        %v1102 = vld [vmem:[%s197 + $0x1a60] sm:$0xff]
        %v1103 = vld [vmem:[%s197 + $0x1a68] sm:$0xff]
        %v1104 = vld [vmem:[%s197 + $0x1a70] sm:$0xff]
        %v1105 = vld [vmem:[%s197 + $0x1a78] sm:$0xff]
        %v1106 = vld [vmem:[%s197 + $0x1a80] sm:$0xff]
        %v1107 = vld [vmem:[%s197 + $0x1a88] sm:$0xff]
        %v1108 = vld [vmem:[%s197 + $0x1a90] sm:$0xff]
        %v1109 = vld [vmem:[%s197 + $0x1a98] sm:$0xff]
        %v1110 = vld [vmem:[%s197 + $0x1aa0] sm:$0xff]
        %v1111 = vld [vmem:[%s197 + $0x1aa8] sm:$0xff]
        %v1112 = vld [vmem:[%s197 + $0x1ab0] sm:$0xff]
        %v1113 = vld [vmem:[%s197 + $0x1ab8] sm:$0xff]
        %v1114 = vld [vmem:[%s197 + $0x1ac0] sm:$0xff]
        %v1115 = vld [vmem:[%s197 + $0x1ac8] sm:$0xff]
        %v1116 = vld [vmem:[%s197 + $0x1ad0] sm:$0xff]
        %v1117 = vld [vmem:[%s197 + $0x1ad8] sm:$0xff]
        %v1118 = vld [vmem:[%s197 + $0x1ae0] sm:$0xff]
        %v1119 = vld [vmem:[%s197 + $0x1ae8] sm:$0xff]
        %v1120 = vld [vmem:[%s197 + $0x1af0] sm:$0xff]
        %v1121 = vld [vmem:[%s197 + $0x1af8] sm:$0xff]
        %v1122 = vld [vmem:[%s197 + $0x1b00] sm:$0xff]
        %v1123 = vld [vmem:[%s197 + $0x1b08] sm:$0xff]
        %v1124 = vld [vmem:[%s197 + $0x1b10] sm:$0xff]
        %v1125 = vld [vmem:[%s197 + $0x1b18] sm:$0xff]
        %v1126 = vld [vmem:[%s197 + $0x1b20] sm:$0xff]
        %v1127 = vld [vmem:[%s197 + $0x1b28] sm:$0xff]
        %v1128 = vld [vmem:[%s197 + $0x1b30] sm:$0xff]
        %v1129 = vld [vmem:[%s197 + $0x1b38] sm:$0xff]
        %v1130 = vld [vmem:[%s197 + $0x1b40] sm:$0xff]
        %v1131 = vld [vmem:[%s197 + $0x1b48] sm:$0xff]
        %v1132 = vld [vmem:[%s197 + $0x1b50] sm:$0xff]
        %v1133 = vld [vmem:[%s197 + $0x1b58] sm:$0xff]
        %v1134 = vld [vmem:[%s197 + $0x1b60] sm:$0xff]
        %v1135 = vld [vmem:[%s197 + $0x1b68] sm:$0xff]
        %v1136 = vld [vmem:[%s197 + $0x1b70] sm:$0xff]
        %v1137 = vld [vmem:[%s197 + $0x1b78] sm:$0xff]
        %v1138 = vld [vmem:[%s197 + $0x1b80] sm:$0xff]
        %v1139 = vld [vmem:[%s197 + $0x1b88] sm:$0xff]
        %v1140 = vld [vmem:[%s197 + $0x1b90] sm:$0xff]
        %v1141 = vld [vmem:[%s197 + $0x1b98] sm:$0xff]
        %v1142 = vld [vmem:[%s197 + $0x1ba0] sm:$0xff]
        %v1143 = vld [vmem:[%s197 + $0x1ba8] sm:$0xff]
        %v1144 = vld [vmem:[%s197 + $0x1bb0] sm:$0xff]
        %v1145 = vld [vmem:[%s197 + $0x1bb8] sm:$0xff]
        %v1146 = vld [vmem:[%s197 + $0x1bc0] sm:$0xff]
        %v1147 = vld [vmem:[%s197 + $0x1bc8] sm:$0xff]
        %v1148 = vld [vmem:[%s197 + $0x1bd0] sm:$0xff]
        %v1149 = vld [vmem:[%s197 + $0x1bd8] sm:$0xff]
        %v1150 = vld [vmem:[%s197 + $0x1be0] sm:$0xff]
        %v1151 = vld [vmem:[%s197 + $0x1be8] sm:$0xff]
        %v1152 = vld [vmem:[%s197 + $0x1bf0] sm:$0xff]
        %v1153 = vld [vmem:[%s197 + $0x1bf8] sm:$0xff]
        %v1154 = vld [vmem:[%s197 + $0x1c00] sm:$0xff]
        %v1155 = vld [vmem:[%s197 + $0x1c08] sm:$0xff]
        %v1156 = vld [vmem:[%s197 + $0x1c10] sm:$0xff]
        %v1157 = vld [vmem:[%s197 + $0x1c18] sm:$0xff]
        %v1158 = vld [vmem:[%s197 + $0x1c20] sm:$0xff]
        %v1159 = vld [vmem:[%s197 + $0x1c28] sm:$0xff]
        %v1160 = vld [vmem:[%s197 + $0x1c30] sm:$0xff]
        %v1161 = vld [vmem:[%s197 + $0x1c38] sm:$0xff]
        %v1162 = vld [vmem:[%s197 + $0x1c40] sm:$0xff]
        %v1163 = vld [vmem:[%s197 + $0x1c48] sm:$0xff]
        %v1164 = vld [vmem:[%s197 + $0x1c50] sm:$0xff]
        %v1165 = vld [vmem:[%s197 + $0x1c58] sm:$0xff]
        %v1166 = vld [vmem:[%s197 + $0x1c60] sm:$0xff]
        %v1167 = vld [vmem:[%s197 + $0x1c68] sm:$0xff]
        %v1168 = vld [vmem:[%s197 + $0x1c70] sm:$0xff]
        %v1169 = vld [vmem:[%s197 + $0x1c78] sm:$0xff]
        %v1170 = vld [vmem:[%s197 + $0x1c80] sm:$0xff]
        %v1171 = vld [vmem:[%s197 + $0x1c88] sm:$0xff]
        %v1172 = vld [vmem:[%s197 + $0x1c90] sm:$0xff]
        %v1173 = vld [vmem:[%s197 + $0x1c98] sm:$0xff]
        %v1174 = vld [vmem:[%s197 + $0x1ca0] sm:$0xff]
        %v1175 = vld [vmem:[%s197 + $0x1ca8] sm:$0xff]
        %v1176 = vld [vmem:[%s197 + $0x1cb0] sm:$0xff]
        %v1177 = vld [vmem:[%s197 + $0x1cb8] sm:$0xff]
        %v1178 = vld [vmem:[%s197 + $0x1cc0] sm:$0xff]
        %v1179 = vld [vmem:[%s197 + $0x1cc8] sm:$0xff]
        %v1180 = vld [vmem:[%s197 + $0x1cd0] sm:$0xff]
        %v1181 = vld [vmem:[%s197 + $0x1cd8] sm:$0xff]
        %v1182 = vld [vmem:[%s197 + $0x1ce0] sm:$0xff]
        %v1183 = vld [vmem:[%s197 + $0x1ce8] sm:$0xff]
        %v1184 = vld [vmem:[%s197 + $0x1cf0] sm:$0xff]
        %v1185 = vld [vmem:[%s197 + $0x1cf8] sm:$0xff]
        %v1186 = vld [vmem:[%s197 + $0x1d00] sm:$0xff]
        %v1187 = vld [vmem:[%s197 + $0x1d08] sm:$0xff]
        %v1188 = vld [vmem:[%s197 + $0x1d10] sm:$0xff]
        %v1189 = vld [vmem:[%s197 + $0x1d18] sm:$0xff]
        %v1190 = vld [vmem:[%s197 + $0x1d20] sm:$0xff]
        %v1191 = vld [vmem:[%s197 + $0x1d28] sm:$0xff]
        %v1192 = vld [vmem:[%s197 + $0x1d30] sm:$0xff]
        %v1193 = vld [vmem:[%s197 + $0x1d38] sm:$0xff]
        %v1194 = vld [vmem:[%s197 + $0x1d40] sm:$0xff]
        %v1195 = vld [vmem:[%s197 + $0x1d48] sm:$0xff]
        %v1196 = vld [vmem:[%s197 + $0x1d50] sm:$0xff]
        %v1197 = vld [vmem:[%s197 + $0x1d58] sm:$0xff]
        %v1198 = vld [vmem:[%s197 + $0x1d60] sm:$0xff]
        %v1199 = vld [vmem:[%s197 + $0x1d68] sm:$0xff]
        %v1200 = vld [vmem:[%s197 + $0x1d70] sm:$0xff]
        %v1201 = vld [vmem:[%s197 + $0x1d78] sm:$0xff]
        %v1202 = vld [vmem:[%s197 + $0x1d80] sm:$0xff]
        %v1203 = vld [vmem:[%s197 + $0x1d88] sm:$0xff]
        %v1204 = vld [vmem:[%s197 + $0x1d90] sm:$0xff]
        %v1205 = vld [vmem:[%s197 + $0x1d98] sm:$0xff]
        %v1206 = vld [vmem:[%s197 + $0x1da0] sm:$0xff]
        %v1207 = vld [vmem:[%s197 + $0x1da8] sm:$0xff]
        %v1208 = vld [vmem:[%s197 + $0x1db0] sm:$0xff]
        %v1209 = vld [vmem:[%s197 + $0x1db8] sm:$0xff]
        %v1210 = vld [vmem:[%s197 + $0x1dc0] sm:$0xff]
        %v1211 = vld [vmem:[%s197 + $0x1dc8] sm:$0xff]
        %v1212 = vld [vmem:[%s197 + $0x1dd0] sm:$0xff]
        %v1213 = vld [vmem:[%s197 + $0x1dd8] sm:$0xff]
        %v1214 = vld [vmem:[%s197 + $0x1de0] sm:$0xff]
        %v1215 = vld [vmem:[%s197 + $0x1de8] sm:$0xff]
        %v1216 = vld [vmem:[%s197 + $0x1df0] sm:$0xff]
        %v1217 = vld [vmem:[%s197 + $0x1df8] sm:$0xff]
        %v1218 = vld [vmem:[%s197 + $0x1e00] sm:$0xff]
        %v1219 = vld [vmem:[%s197 + $0x1e08] sm:$0xff]
        %v1220 = vld [vmem:[%s197 + $0x1e10] sm:$0xff]
        %v1221 = vld [vmem:[%s197 + $0x1e18] sm:$0xff]
        %v1222 = vld [vmem:[%s197 + $0x1e20] sm:$0xff]
        %v1223 = vld [vmem:[%s197 + $0x1e28] sm:$0xff]
        %v1224 = vld [vmem:[%s197 + $0x1e30] sm:$0xff]
        %v1225 = vld [vmem:[%s197 + $0x1e38] sm:$0xff]
        %v1226 = vld [vmem:[%s197 + $0x1e40] sm:$0xff]
        %v1227 = vld [vmem:[%s197 + $0x1e48] sm:$0xff]
        %v1228 = vld [vmem:[%s197 + $0x1e50] sm:$0xff]
        %v1229 = vld [vmem:[%s197 + $0x1e58] sm:$0xff]
        %v1230 = vld [vmem:[%s197 + $0x1e60] sm:$0xff]
        %v1231 = vld [vmem:[%s197 + $0x1e68] sm:$0xff]
        %v1232 = vld [vmem:[%s197 + $0x1e70] sm:$0xff]
        %v1233 = vld [vmem:[%s197 + $0x1e78] sm:$0xff]
        %v1234 = vld [vmem:[%s197 + $0x1e80] sm:$0xff]
        %v1235 = vld [vmem:[%s197 + $0x1e88] sm:$0xff]
        %v1236 = vld [vmem:[%s197 + $0x1e90] sm:$0xff]
        %v1237 = vld [vmem:[%s197 + $0x1e98] sm:$0xff]
        %v1238 = vld [vmem:[%s197 + $0x1ea0] sm:$0xff]
        %v1239 = vld [vmem:[%s197 + $0x1ea8] sm:$0xff]
        %v1240 = vld [vmem:[%s197 + $0x1eb0] sm:$0xff]
        %v1241 = vld [vmem:[%s197 + $0x1eb8] sm:$0xff]
        %v1242 = vld [vmem:[%s197 + $0x1ec0] sm:$0xff]
        %v1243 = vld [vmem:[%s197 + $0x1ec8] sm:$0xff]
        %v1244 = vld [vmem:[%s197 + $0x1ed0] sm:$0xff]
        %v1245 = vld [vmem:[%s197 + $0x1ed8] sm:$0xff]
        %v1246 = vld [vmem:[%s197 + $0x1ee0] sm:$0xff]
        %v1247 = vld [vmem:[%s197 + $0x1ee8] sm:$0xff]
        %v1248 = vld [vmem:[%s197 + $0x1ef0] sm:$0xff]
        %v1249 = vld [vmem:[%s197 + $0x1ef8] sm:$0xff]
        %v1250 = vld [vmem:[%s197 + $0x1f00] sm:$0xff]
        %v1251 = vld [vmem:[%s197 + $0x1f08] sm:$0xff]
        %v1252 = vld [vmem:[%s197 + $0x1f10] sm:$0xff]
        %v1253 = vld [vmem:[%s197 + $0x1f18] sm:$0xff]
        %v1254 = vld [vmem:[%s197 + $0x1f20] sm:$0xff]
        %v1255 = vld [vmem:[%s197 + $0x1f28] sm:$0xff]
        %v1256 = vld [vmem:[%s197 + $0x1f30] sm:$0xff]
        %v1257 = vld [vmem:[%s197 + $0x1f38] sm:$0xff]
        %v1258 = vld [vmem:[%s197 + $0x1f40] sm:$0xff]
        %v1259 = vld [vmem:[%s197 + $0x1f48] sm:$0xff]
        %v1260 = vld [vmem:[%s197 + $0x1f50] sm:$0xff]
        %v1261 = vld [vmem:[%s197 + $0x1f58] sm:$0xff]
        %v1262 = vld [vmem:[%s197 + $0x1f60] sm:$0xff]
        %v1263 = vld [vmem:[%s197 + $0x1f68] sm:$0xff]
        %v1264 = vld [vmem:[%s197 + $0x1f70] sm:$0xff]
        %v1265 = vld [vmem:[%s197 + $0x1f78] sm:$0xff]
        %v1266 = vld [vmem:[%s197 + $0x1f80] sm:$0xff]
        %v1267 = vld [vmem:[%s197 + $0x1f88] sm:$0xff]
        %v1268 = vld [vmem:[%s197 + $0x1f90] sm:$0xff]
        %v1269 = vld [vmem:[%s197 + $0x1f98] sm:$0xff]
        %v1270 = vld [vmem:[%s197 + $0x1fa0] sm:$0xff]
        %v1271 = vld [vmem:[%s197 + $0x1fa8] sm:$0xff]
        %v1272 = vld [vmem:[%s197 + $0x1fb0] sm:$0xff]
        %v1273 = vld [vmem:[%s197 + $0x1fb8] sm:$0xff]
        %v1274 = vld [vmem:[%s197 + $0x1fc0] sm:$0xff]
        %v1275 = vld [vmem:[%s197 + $0x1fc8] sm:$0xff]
        %v1276 = vld [vmem:[%s197 + $0x1fd0] sm:$0xff]
        %v1277 = vld [vmem:[%s197 + $0x1fd8] sm:$0xff]
        %v1278 = vld [vmem:[%s197 + $0x1fe0] sm:$0xff]
        %v1279 = vld [vmem:[%s197 + $0x1fe8] sm:$0xff]
        %v1280 = vld [vmem:[%s197 + $0x1ff0] sm:$0xff]
        %v1281 = vld [vmem:[%s197 + $0x1ff8] sm:$0xff]
        %v1282 = vld [vmem:[%s206] sm:$0xf]
        %v1284 = vlaneseq
        %v1285 = vshrl.u32 %v1284, 7
        %v1286 = vsub.s32 0, %v1285
        %v1287 = vrot.slane %v1282, %v1286
        %v1288 = vlaneseq
        %v1289 = vshrl.u32 %v1288, 7
        %v1290 = vsub.s32 1, %v1289
        %v1291 = vrot.slane %v1282, %v1290
        %v1292 = vlaneseq
        %v1293 = vshrl.u32 %v1292, 7
        %v1294 = vsub.s32 2, %v1293
        %v1295 = vrot.slane %v1282, %v1294
        %v1296 = vlaneseq
        %v1297 = vshrl.u32 %v1296, 7
        %v1298 = vsub.s32 3, %v1297
        %v1299 = vrot.slane %v1282, %v1298
        %1304 = vmatprep.subr.mxu0 %v259
        %1305 = vmatpush1.msra.mxu0 %v258
        %1306 = vmatprep.subr.mxu0 %v263
        %1307 = vmatpush1.msra.mxu0 %v262
        %1308 = vmatprep.subr.mxu0 %v267
        %1309 = vmatpush1.msra.mxu0 %v266
        %1310 = vmatprep.subr.mxu0 %v271
        %1311 = vmatpush1.msra.mxu0 %v270
        %1312 = vmatprep.subr.mxu0 %v275
        %1313 = vmatpush1.msra.mxu0 %v274
        %1314 = vmatprep.subr.mxu0 %v279
        %1315 = vmatpush1.msra.mxu0 %v278
        %1316 = vmatprep.subr.mxu0 %v283
        %1317 = vmatpush1.msra.mxu0 %v282
        %1318 = vmatprep.subr.mxu0 %v287
        %1319 = vmatpush1.msra.mxu0 %v286
        %1320 = vmatprep.subr.mxu0 %v291
        %1321 = vmatpush1.msra.mxu0 %v290
        %1322 = vmatprep.subr.mxu0 %v295
        %1323 = vmatpush1.msra.mxu0 %v294
        %1324 = vmatprep.subr.mxu0 %v299
        %1325 = vmatpush1.msra.mxu0 %v298
        %1326 = vmatprep.subr.mxu0 %v303
        %1327 = vmatpush1.msra.mxu0 %v302
        %1328 = vmatprep.subr.mxu0 %v307
        %1329 = vmatpush1.msra.mxu0 %v306
        %1330 = vmatprep.subr.mxu0 %v311
        %1331 = vmatpush1.msra.mxu0 %v310
        %1332 = vmatprep.subr.mxu0 %v315
        %1333 = vmatpush1.msra.mxu0 %v314
        %1334 = vmatprep.subr.mxu0 %v319
        %1335 = vmatpush1.msra.mxu0 %v318
        %1336 = vmatprep.subr.mxu0 %v323
        %1337 = vmatpush1.msra.mxu0 %v322
        %1338 = vmatprep.subr.mxu0 %v327
        %1339 = vmatpush1.msra.mxu0 %v326
        %1340 = vmatprep.subr.mxu0 %v331
        %1341 = vmatpush1.msra.mxu0 %v330
        %1342 = vmatprep.subr.mxu0 %v335
        %1343 = vmatpush1.msra.mxu0 %v334
        %1344 = vmatprep.subr.mxu0 %v339
        %1345 = vmatpush1.msra.mxu0 %v338
        %1346 = vmatprep.subr.mxu0 %v343
        %1347 = vmatpush1.msra.mxu0 %v342
        %1348 = vmatprep.subr.mxu0 %v347
        %1349 = vmatpush1.msra.mxu0 %v346
        %1350 = vmatprep.subr.mxu0 %v351
        %1351 = vmatpush1.msra.mxu0 %v350
        %1352 = vmatprep.subr.mxu0 %v355
        %1353 = vmatpush1.msra.mxu0 %v354
        %1354 = vmatprep.subr.mxu0 %v359
        %1355 = vmatpush1.msra.mxu0 %v358
        %1356 = vmatprep.subr.mxu0 %v363
        %1357 = vmatpush1.msra.mxu0 %v362
        %1358 = vmatprep.subr.mxu0 %v367
        %1359 = vmatpush1.msra.mxu0 %v366
        %1360 = vmatprep.subr.mxu0 %v371
        %1361 = vmatpush1.msra.mxu0 %v370
        %1362 = vmatprep.subr.mxu0 %v375
        %1363 = vmatpush1.msra.mxu0 %v374
        %1364 = vmatprep.subr.mxu0 %v379
        %1365 = vmatpush1.msra.mxu0 %v378
        %1366 = vmatprep.subr.mxu0 %v383
        %1367 = vmatpush1.msra.mxu0 %v382
        %1368 = vmatprep.mubr.f32.mxu0 %v243
        %1369 = vmatmul.mubr.f32.gmra.mrb[0].mxu0 %v242
        %v1370 = vpop.f32.mrb[0].mxu0
        %v1371 = vadd.f32 %v1287, %v1370
        %v1372 = vpop.f32.mrb[0].mxu0
        %v1373 = vadd.f32 %v1291, %v1372
        %1374 = vdwg.mxu0
        %1375 = vmatprep.subr.mxu0 %v387
        %1376 = vmatpush1.msra.mxu0 %v386
        %1377 = vmatprep.subr.mxu0 %v391
        %1378 = vmatpush1.msra.mxu0 %v390
        %1379 = vmatprep.subr.mxu0 %v395
        %1380 = vmatpush1.msra.mxu0 %v394
        %1381 = vmatprep.subr.mxu0 %v399
        %1382 = vmatpush1.msra.mxu0 %v398
        %1383 = vmatprep.subr.mxu0 %v403
        %1384 = vmatpush1.msra.mxu0 %v402
        %1385 = vmatprep.subr.mxu0 %v407
        %1386 = vmatpush1.msra.mxu0 %v406
        %1387 = vmatprep.subr.mxu0 %v411
        %1388 = vmatpush1.msra.mxu0 %v410
        %1389 = vmatprep.subr.mxu0 %v415
        %1390 = vmatpush1.msra.mxu0 %v414
        %1391 = vmatprep.subr.mxu0 %v419
        %1392 = vmatpush1.msra.mxu0 %v418
        %1393 = vmatprep.subr.mxu0 %v423
        %1394 = vmatpush1.msra.mxu0 %v422
        %1395 = vmatprep.subr.mxu0 %v427
        %1396 = vmatpush1.msra.mxu0 %v426
        %1397 = vmatprep.subr.mxu0 %v431
        %1398 = vmatpush1.msra.mxu0 %v430
        %1399 = vmatprep.subr.mxu0 %v435
        %1400 = vmatpush1.msra.mxu0 %v434
        %1401 = vmatprep.subr.mxu0 %v439
        %1402 = vmatpush1.msra.mxu0 %v438
        %1403 = vmatprep.subr.mxu0 %v443
        %1404 = vmatpush1.msra.mxu0 %v442
        %1405 = vmatprep.subr.mxu0 %v447
        %1406 = vmatpush1.msra.mxu0 %v446
        %1407 = vmatprep.subr.mxu0 %v451
        %1408 = vmatpush1.msra.mxu0 %v450
        %1409 = vmatprep.subr.mxu0 %v455
        %1410 = vmatpush1.msra.mxu0 %v454
        %1411 = vmatprep.subr.mxu0 %v459
        %1412 = vmatpush1.msra.mxu0 %v458
        %1413 = vmatprep.subr.mxu0 %v463
        %1414 = vmatpush1.msra.mxu0 %v462
        %1415 = vmatprep.subr.mxu0 %v467
        %1416 = vmatpush1.msra.mxu0 %v466
        %1417 = vmatprep.subr.mxu0 %v471
        %1418 = vmatpush1.msra.mxu0 %v470
        %1419 = vmatprep.subr.mxu0 %v475
        %1420 = vmatpush1.msra.mxu0 %v474
        %1421 = vmatprep.subr.mxu0 %v479
        %1422 = vmatpush1.msra.mxu0 %v478
        %1423 = vmatprep.subr.mxu0 %v483
        %1424 = vmatpush1.msra.mxu0 %v482
        %1425 = vmatprep.subr.mxu0 %v487
        %1426 = vmatpush1.msra.mxu0 %v486
        %1427 = vmatprep.subr.mxu0 %v491
        %1428 = vmatpush1.msra.mxu0 %v490
        %1429 = vmatprep.subr.mxu0 %v495
        %1430 = vmatpush1.msra.mxu0 %v494
        %1431 = vmatprep.subr.mxu0 %v499
        %1432 = vmatpush1.msra.mxu0 %v498
        %1433 = vmatprep.subr.mxu0 %v503
        %1434 = vmatpush1.msra.mxu0 %v502
        %1435 = vmatprep.subr.mxu0 %v507
        %1436 = vmatpush1.msra.mxu0 %v506
        %1437 = vmatprep.subr.mxu0 %v511
        %1438 = vmatpush1.msra.mxu0 %v510
        %1439 = vmatprep.mubr.f32.mxu0 %v245
        %1440 = vmatmul.mubr.f32.gmra.mrb[0].mxu0 %v244
        %v1441 = vpop.f32.mrb[0].mxu0
        %v1442 = vadd.f32 %v1371, %v1441
        %v1443 = vpop.f32.mrb[0].mxu0
        %v1444 = vadd.f32 %v1373, %v1443
        %1445 = vdwg.mxu0
        %1446 = vmatprep.subr.mxu0 %v515
        %1447 = vmatpush1.msra.mxu0 %v514
        %1448 = vmatprep.subr.mxu0 %v519
        %1449 = vmatpush1.msra.mxu0 %v518
        %1450 = vmatprep.subr.mxu0 %v523
        %1451 = vmatpush1.msra.mxu0 %v522
        %1452 = vmatprep.subr.mxu0 %v527
        %1453 = vmatpush1.msra.mxu0 %v526
        %1454 = vmatprep.subr.mxu0 %v531
        %1455 = vmatpush1.msra.mxu0 %v530
        %1456 = vmatprep.subr.mxu0 %v535
        %1457 = vmatpush1.msra.mxu0 %v534
        %1458 = vmatprep.subr.mxu0 %v539
        %1459 = vmatpush1.msra.mxu0 %v538
        %1460 = vmatprep.subr.mxu0 %v543
        %1461 = vmatpush1.msra.mxu0 %v542
        %1462 = vmatprep.subr.mxu0 %v547
        %1463 = vmatpush1.msra.mxu0 %v546
        %1464 = vmatprep.subr.mxu0 %v551
        %1465 = vmatpush1.msra.mxu0 %v550
        %1466 = vmatprep.subr.mxu0 %v555
        %1467 = vmatpush1.msra.mxu0 %v554
        %1468 = vmatprep.subr.mxu0 %v559
        %1469 = vmatpush1.msra.mxu0 %v558
        %1470 = vmatprep.subr.mxu0 %v563
        %1471 = vmatpush1.msra.mxu0 %v562
        %1472 = vmatprep.subr.mxu0 %v567
        %1473 = vmatpush1.msra.mxu0 %v566
        %1474 = vmatprep.subr.mxu0 %v571
        %1475 = vmatpush1.msra.mxu0 %v570
        %1476 = vmatprep.subr.mxu0 %v575
        %1477 = vmatpush1.msra.mxu0 %v574
        %1478 = vmatprep.subr.mxu0 %v579
        %1479 = vmatpush1.msra.mxu0 %v578
        %1480 = vmatprep.subr.mxu0 %v583
        %1481 = vmatpush1.msra.mxu0 %v582
        %1482 = vmatprep.subr.mxu0 %v587
        %1483 = vmatpush1.msra.mxu0 %v586
        %1484 = vmatprep.subr.mxu0 %v591
        %1485 = vmatpush1.msra.mxu0 %v590
        %1486 = vmatprep.subr.mxu0 %v595
        %1487 = vmatpush1.msra.mxu0 %v594
        %1488 = vmatprep.subr.mxu0 %v599
        %1489 = vmatpush1.msra.mxu0 %v598
        %1490 = vmatprep.subr.mxu0 %v603
        %1491 = vmatpush1.msra.mxu0 %v602
        %1492 = vmatprep.subr.mxu0 %v607
        %1493 = vmatpush1.msra.mxu0 %v606
        %1494 = vmatprep.subr.mxu0 %v611
        %1495 = vmatpush1.msra.mxu0 %v610
        %1496 = vmatprep.subr.mxu0 %v615
        %1497 = vmatpush1.msra.mxu0 %v614
        %1498 = vmatprep.subr.mxu0 %v619
        %1499 = vmatpush1.msra.mxu0 %v618
        %1500 = vmatprep.subr.mxu0 %v623
        %1501 = vmatpush1.msra.mxu0 %v622
        %1502 = vmatprep.subr.mxu0 %v627
        %1503 = vmatpush1.msra.mxu0 %v626
        %1504 = vmatprep.subr.mxu0 %v631
        %1505 = vmatpush1.msra.mxu0 %v630
        %1506 = vmatprep.subr.mxu0 %v635
        %1507 = vmatpush1.msra.mxu0 %v634
        %1508 = vmatprep.subr.mxu0 %v639
        %1509 = vmatpush1.msra.mxu0 %v638
        %1510 = vmatprep.mubr.f32.mxu0 %v247
        %1511 = vmatmul.mubr.f32.gmra.mrb[0].mxu0 %v246
        %v1512 = vpop.f32.mrb[0].mxu0
        %v1513 = vadd.f32 %v1442, %v1512
        %v1514 = vpop.f32.mrb[0].mxu0
        %v1515 = vadd.f32 %v1444, %v1514
        %1516 = vdwg.mxu0
        %1517 = vmatprep.subr.mxu0 %v643
        %1518 = vmatpush1.msra.mxu0 %v642
        %1519 = vmatprep.subr.mxu0 %v647
        %1520 = vmatpush1.msra.mxu0 %v646
        %1521 = vmatprep.subr.mxu0 %v651
        %1522 = vmatpush1.msra.mxu0 %v650
        %1523 = vmatprep.subr.mxu0 %v655
        %1524 = vmatpush1.msra.mxu0 %v654
        %1525 = vmatprep.subr.mxu0 %v659
        %1526 = vmatpush1.msra.mxu0 %v658
        %1527 = vmatprep.subr.mxu0 %v663
        %1528 = vmatpush1.msra.mxu0 %v662
        %1529 = vmatprep.subr.mxu0 %v667
        %1530 = vmatpush1.msra.mxu0 %v666
        %1531 = vmatprep.subr.mxu0 %v671
        %1532 = vmatpush1.msra.mxu0 %v670
        %1533 = vmatprep.subr.mxu0 %v675
        %1534 = vmatpush1.msra.mxu0 %v674
        %1535 = vmatprep.subr.mxu0 %v679
        %1536 = vmatpush1.msra.mxu0 %v678
        %1537 = vmatprep.subr.mxu0 %v683
        %1538 = vmatpush1.msra.mxu0 %v682
        %1539 = vmatprep.subr.mxu0 %v687
        %1540 = vmatpush1.msra.mxu0 %v686
        %1541 = vmatprep.subr.mxu0 %v691
        %1542 = vmatpush1.msra.mxu0 %v690
        %1543 = vmatprep.subr.mxu0 %v695
        %1544 = vmatpush1.msra.mxu0 %v694
        %1545 = vmatprep.subr.mxu0 %v699
        %1546 = vmatpush1.msra.mxu0 %v698
        %1547 = vmatprep.subr.mxu0 %v703
        %1548 = vmatpush1.msra.mxu0 %v702
        %1549 = vmatprep.subr.mxu0 %v707
        %1550 = vmatpush1.msra.mxu0 %v706
        %1551 = vmatprep.subr.mxu0 %v711
        %1552 = vmatpush1.msra.mxu0 %v710
        %1553 = vmatprep.subr.mxu0 %v715
        %1554 = vmatpush1.msra.mxu0 %v714
        %1555 = vmatprep.subr.mxu0 %v719
        %1556 = vmatpush1.msra.mxu0 %v718
        %1557 = vmatprep.subr.mxu0 %v723
        %1558 = vmatpush1.msra.mxu0 %v722
        %1559 = vmatprep.subr.mxu0 %v727
        %1560 = vmatpush1.msra.mxu0 %v726
        %1561 = vmatprep.subr.mxu0 %v731
        %1562 = vmatpush1.msra.mxu0 %v730
        %1563 = vmatprep.subr.mxu0 %v735
        %1564 = vmatpush1.msra.mxu0 %v734
        %1565 = vmatprep.subr.mxu0 %v739
        %1566 = vmatpush1.msra.mxu0 %v738
        %1567 = vmatprep.subr.mxu0 %v743
        %1568 = vmatpush1.msra.mxu0 %v742
        %1569 = vmatprep.subr.mxu0 %v747
        %1570 = vmatpush1.msra.mxu0 %v746
        %1571 = vmatprep.subr.mxu0 %v751
        %1572 = vmatpush1.msra.mxu0 %v750
        %1573 = vmatprep.subr.mxu0 %v755
        %1574 = vmatpush1.msra.mxu0 %v754
        %1575 = vmatprep.subr.mxu0 %v759
        %1576 = vmatpush1.msra.mxu0 %v758
        %1577 = vmatprep.subr.mxu0 %v763
        %1578 = vmatpush1.msra.mxu0 %v762
        %1579 = vmatprep.subr.mxu0 %v767
        %1580 = vmatpush1.msra.mxu0 %v766
        %1581 = vmatprep.mubr.f32.mxu0 %v249
        %1582 = vmatmul.mubr.f32.gmra.mrb[0].mxu0 %v248
        %v1583 = vpop.f32.mrb[0].mxu0
        %v1584 = vadd.f32 %v1513, %v1583
        %v1585 = vpop.f32.mrb[0].mxu0
        %v1586 = vadd.f32 %v1515, %v1585
        %1587 = vdwg.mxu0
        %1588 = vmatprep.subr.mxu0 %v771
        %1589 = vmatpush1.msra.mxu0 %v770
        %1590 = vmatprep.subr.mxu0 %v775
        %1591 = vmatpush1.msra.mxu0 %v774
        %1592 = vmatprep.subr.mxu0 %v779
        %1593 = vmatpush1.msra.mxu0 %v778
        %1594 = vmatprep.subr.mxu0 %v783
        %1595 = vmatpush1.msra.mxu0 %v782
        %1596 = vmatprep.subr.mxu0 %v787
        %1597 = vmatpush1.msra.mxu0 %v786
        %1598 = vmatprep.subr.mxu0 %v791
        %1599 = vmatpush1.msra.mxu0 %v790
        %1600 = vmatprep.subr.mxu0 %v795
        %1601 = vmatpush1.msra.mxu0 %v794
        %1602 = vmatprep.subr.mxu0 %v799
        %1603 = vmatpush1.msra.mxu0 %v798
        %1604 = vmatprep.subr.mxu0 %v803
        %1605 = vmatpush1.msra.mxu0 %v802
        %1606 = vmatprep.subr.mxu0 %v807
        %1607 = vmatpush1.msra.mxu0 %v806
        %1608 = vmatprep.subr.mxu0 %v811
        %1609 = vmatpush1.msra.mxu0 %v810
        %1610 = vmatprep.subr.mxu0 %v815
        %1611 = vmatpush1.msra.mxu0 %v814
        %1612 = vmatprep.subr.mxu0 %v819
        %1613 = vmatpush1.msra.mxu0 %v818
        %1614 = vmatprep.subr.mxu0 %v823
        %1615 = vmatpush1.msra.mxu0 %v822
        %1616 = vmatprep.subr.mxu0 %v827
        %1617 = vmatpush1.msra.mxu0 %v826
        %1618 = vmatprep.subr.mxu0 %v831
        %1619 = vmatpush1.msra.mxu0 %v830
        %1620 = vmatprep.subr.mxu0 %v835
        %1621 = vmatpush1.msra.mxu0 %v834
        %1622 = vmatprep.subr.mxu0 %v839
        %1623 = vmatpush1.msra.mxu0 %v838
        %1624 = vmatprep.subr.mxu0 %v843
        %1625 = vmatpush1.msra.mxu0 %v842
        %1626 = vmatprep.subr.mxu0 %v847
        %1627 = vmatpush1.msra.mxu0 %v846
        %1628 = vmatprep.subr.mxu0 %v851
        %1629 = vmatpush1.msra.mxu0 %v850
        %1630 = vmatprep.subr.mxu0 %v855
        %1631 = vmatpush1.msra.mxu0 %v854
        %1632 = vmatprep.subr.mxu0 %v859
        %1633 = vmatpush1.msra.mxu0 %v858
        %1634 = vmatprep.subr.mxu0 %v863
        %1635 = vmatpush1.msra.mxu0 %v862
        %1636 = vmatprep.subr.mxu0 %v867
        %1637 = vmatpush1.msra.mxu0 %v866
        %1638 = vmatprep.subr.mxu0 %v871
        %1639 = vmatpush1.msra.mxu0 %v870
        %1640 = vmatprep.subr.mxu0 %v875
        %1641 = vmatpush1.msra.mxu0 %v874
        %1642 = vmatprep.subr.mxu0 %v879
        %1643 = vmatpush1.msra.mxu0 %v878
        %1644 = vmatprep.subr.mxu0 %v883
        %1645 = vmatpush1.msra.mxu0 %v882
        %1646 = vmatprep.subr.mxu0 %v887
        %1647 = vmatpush1.msra.mxu0 %v886
        %1648 = vmatprep.subr.mxu0 %v891
        %1649 = vmatpush1.msra.mxu0 %v890
        %1650 = vmatprep.subr.mxu0 %v895
        %1651 = vmatpush1.msra.mxu0 %v894
        %1652 = vmatprep.mubr.f32.mxu0 %v251
        %1653 = vmatmul.mubr.f32.gmra.mrb[0].mxu0 %v250
        %v1654 = vpop.f32.mrb[0].mxu0
        %v1655 = vadd.f32 %v1584, %v1654
        %v1656 = vpop.f32.mrb[0].mxu0
        %v1657 = vadd.f32 %v1586, %v1656
        %1658 = vdwg.mxu0
        %1659 = vmatprep.subr.mxu0 %v899
        %1660 = vmatpush1.msra.mxu0 %v898
        %1661 = vmatprep.subr.mxu0 %v903
        %1662 = vmatpush1.msra.mxu0 %v902
        %1663 = vmatprep.subr.mxu0 %v907
        %1664 = vmatpush1.msra.mxu0 %v906
        %1665 = vmatprep.subr.mxu0 %v911
        %1666 = vmatpush1.msra.mxu0 %v910
        %1667 = vmatprep.subr.mxu0 %v915
        %1668 = vmatpush1.msra.mxu0 %v914
        %1669 = vmatprep.subr.mxu0 %v919
        %1670 = vmatpush1.msra.mxu0 %v918
        %1671 = vmatprep.subr.mxu0 %v923
        %1672 = vmatpush1.msra.mxu0 %v922
        %1673 = vmatprep.subr.mxu0 %v927
        %1674 = vmatpush1.msra.mxu0 %v926
        %1675 = vmatprep.subr.mxu0 %v931
        %1676 = vmatpush1.msra.mxu0 %v930
        %1677 = vmatprep.subr.mxu0 %v935
        %1678 = vmatpush1.msra.mxu0 %v934
        %1679 = vmatprep.subr.mxu0 %v939
        %1680 = vmatpush1.msra.mxu0 %v938
        %1681 = vmatprep.subr.mxu0 %v943
        %1682 = vmatpush1.msra.mxu0 %v942
        %1683 = vmatprep.subr.mxu0 %v947
        %1684 = vmatpush1.msra.mxu0 %v946
        %1685 = vmatprep.subr.mxu0 %v951
        %1686 = vmatpush1.msra.mxu0 %v950
        %1687 = vmatprep.subr.mxu0 %v955
        %1688 = vmatpush1.msra.mxu0 %v954
        %1689 = vmatprep.subr.mxu0 %v959
        %1690 = vmatpush1.msra.mxu0 %v958
        %1691 = vmatprep.subr.mxu0 %v963
        %1692 = vmatpush1.msra.mxu0 %v962
        %1693 = vmatprep.subr.mxu0 %v967
        %1694 = vmatpush1.msra.mxu0 %v966
        %1695 = vmatprep.subr.mxu0 %v971
        %1696 = vmatpush1.msra.mxu0 %v970
        %1697 = vmatprep.subr.mxu0 %v975
        %1698 = vmatpush1.msra.mxu0 %v974
        %1699 = vmatprep.subr.mxu0 %v979
        %1700 = vmatpush1.msra.mxu0 %v978
        %1701 = vmatprep.subr.mxu0 %v983
        %1702 = vmatpush1.msra.mxu0 %v982
        %1703 = vmatprep.subr.mxu0 %v987
        %1704 = vmatpush1.msra.mxu0 %v986
        %1705 = vmatprep.subr.mxu0 %v991
        %1706 = vmatpush1.msra.mxu0 %v990
        %1707 = vmatprep.subr.mxu0 %v995
        %1708 = vmatpush1.msra.mxu0 %v994
        %1709 = vmatprep.subr.mxu0 %v999
        %1710 = vmatpush1.msra.mxu0 %v998
        %1711 = vmatprep.subr.mxu0 %v1003
        %1712 = vmatpush1.msra.mxu0 %v1002
        %1713 = vmatprep.subr.mxu0 %v1007
        %1714 = vmatpush1.msra.mxu0 %v1006
        %1715 = vmatprep.subr.mxu0 %v1011
        %1716 = vmatpush1.msra.mxu0 %v1010
        %1717 = vmatprep.subr.mxu0 %v1015
        %1718 = vmatpush1.msra.mxu0 %v1014
        %1719 = vmatprep.subr.mxu0 %v1019
        %1720 = vmatpush1.msra.mxu0 %v1018
        %1721 = vmatprep.subr.mxu0 %v1023
        %1722 = vmatpush1.msra.mxu0 %v1022
        %1723 = vmatprep.mubr.f32.mxu0 %v253
        %1724 = vmatmul.mubr.f32.gmra.mrb[0].mxu0 %v252
        %v1725 = vpop.f32.mrb[0].mxu0
        %v1726 = vadd.f32 %v1655, %v1725
        %v1727 = vpop.f32.mrb[0].mxu0
        %v1728 = vadd.f32 %v1657, %v1727
        %1729 = vdwg.mxu0
        %1730 = vmatprep.subr.mxu0 %v1027
        %1731 = vmatpush1.msra.mxu0 %v1026
        %1732 = vmatprep.subr.mxu0 %v1031
        %1733 = vmatpush1.msra.mxu0 %v1030
        %1734 = vmatprep.subr.mxu0 %v1035
        %1735 = vmatpush1.msra.mxu0 %v1034
        %1736 = vmatprep.subr.mxu0 %v1039
        %1737 = vmatpush1.msra.mxu0 %v1038
        %1738 = vmatprep.subr.mxu0 %v1043
        %1739 = vmatpush1.msra.mxu0 %v1042
        %1740 = vmatprep.subr.mxu0 %v1047
        %1741 = vmatpush1.msra.mxu0 %v1046
        %1742 = vmatprep.subr.mxu0 %v1051
        %1743 = vmatpush1.msra.mxu0 %v1050
        %1744 = vmatprep.subr.mxu0 %v1055
        %1745 = vmatpush1.msra.mxu0 %v1054
        %1746 = vmatprep.subr.mxu0 %v1059
        %1747 = vmatpush1.msra.mxu0 %v1058
        %1748 = vmatprep.subr.mxu0 %v1063
        %1749 = vmatpush1.msra.mxu0 %v1062
        %1750 = vmatprep.subr.mxu0 %v1067
        %1751 = vmatpush1.msra.mxu0 %v1066
        %1752 = vmatprep.subr.mxu0 %v1071
        %1753 = vmatpush1.msra.mxu0 %v1070
        %1754 = vmatprep.subr.mxu0 %v1075
        %1755 = vmatpush1.msra.mxu0 %v1074
        %1756 = vmatprep.subr.mxu0 %v1079
        %1757 = vmatpush1.msra.mxu0 %v1078
        %1758 = vmatprep.subr.mxu0 %v1083
        %1759 = vmatpush1.msra.mxu0 %v1082
        %1760 = vmatprep.subr.mxu0 %v1087
        %1761 = vmatpush1.msra.mxu0 %v1086
        %1762 = vmatprep.subr.mxu0 %v1091
        %1763 = vmatpush1.msra.mxu0 %v1090
        %1764 = vmatprep.subr.mxu0 %v1095
        %1765 = vmatpush1.msra.mxu0 %v1094
        %1766 = vmatprep.subr.mxu0 %v1099
        %1767 = vmatpush1.msra.mxu0 %v1098
        %1768 = vmatprep.subr.mxu0 %v1103
        %1769 = vmatpush1.msra.mxu0 %v1102
        %1770 = vmatprep.subr.mxu0 %v1107
        %1771 = vmatpush1.msra.mxu0 %v1106
        %1772 = vmatprep.subr.mxu0 %v1111
        %1773 = vmatpush1.msra.mxu0 %v1110
        %1774 = vmatprep.subr.mxu0 %v1115
        %1775 = vmatpush1.msra.mxu0 %v1114
        %1776 = vmatprep.subr.mxu0 %v1119
        %1777 = vmatpush1.msra.mxu0 %v1118
        %1778 = vmatprep.subr.mxu0 %v1123
        %1779 = vmatpush1.msra.mxu0 %v1122
        %1780 = vmatprep.subr.mxu0 %v1127
        %1781 = vmatpush1.msra.mxu0 %v1126
        %1782 = vmatprep.subr.mxu0 %v1131
        %1783 = vmatpush1.msra.mxu0 %v1130
        %1784 = vmatprep.subr.mxu0 %v1135
        %1785 = vmatpush1.msra.mxu0 %v1134
        %1786 = vmatprep.subr.mxu0 %v1139
        %1787 = vmatpush1.msra.mxu0 %v1138
        %1788 = vmatprep.subr.mxu0 %v1143
        %1789 = vmatpush1.msra.mxu0 %v1142
        %1790 = vmatprep.subr.mxu0 %v1147
        %1791 = vmatpush1.msra.mxu0 %v1146
        %1792 = vmatprep.subr.mxu0 %v1151
        %1793 = vmatpush1.msra.mxu0 %v1150
        %1794 = vmatprep.mubr.f32.mxu0 %v255
        %1795 = vmatmul.mubr.f32.gmra.mrb[0].mxu0 %v254
        %v1796 = vpop.f32.mrb[0].mxu0
        %v1797 = vadd.f32 %v1726, %v1796
        %v1798 = vpop.f32.mrb[0].mxu0
        %v1799 = vadd.f32 %v1728, %v1798
        %1800 = vdwg.mxu0
        %1801 = vmatprep.subr.mxu0 %v1155
        %1802 = vmatpush1.msra.mxu0 %v1154
        %1803 = vmatprep.subr.mxu0 %v1159
        %1804 = vmatpush1.msra.mxu0 %v1158
        %1805 = vmatprep.subr.mxu0 %v1163
        %1806 = vmatpush1.msra.mxu0 %v1162
        %1807 = vmatprep.subr.mxu0 %v1167
        %1808 = vmatpush1.msra.mxu0 %v1166
        %1809 = vmatprep.subr.mxu0 %v1171
        %1810 = vmatpush1.msra.mxu0 %v1170
        %1811 = vmatprep.subr.mxu0 %v1175
        %1812 = vmatpush1.msra.mxu0 %v1174
        %1813 = vmatprep.subr.mxu0 %v1179
        %1814 = vmatpush1.msra.mxu0 %v1178
        %1815 = vmatprep.subr.mxu0 %v1183
        %1816 = vmatpush1.msra.mxu0 %v1182
        %1817 = vmatprep.subr.mxu0 %v1187
        %1818 = vmatpush1.msra.mxu0 %v1186
        %1819 = vmatprep.subr.mxu0 %v1191
        %1820 = vmatpush1.msra.mxu0 %v1190
        %1821 = vmatprep.subr.mxu0 %v1195
        %1822 = vmatpush1.msra.mxu0 %v1194
        %1823 = vmatprep.subr.mxu0 %v1199
        %1824 = vmatpush1.msra.mxu0 %v1198
        %1825 = vmatprep.subr.mxu0 %v1203
        %1826 = vmatpush1.msra.mxu0 %v1202
        %1827 = vmatprep.subr.mxu0 %v1207
        %1828 = vmatpush1.msra.mxu0 %v1206
        %1829 = vmatprep.subr.mxu0 %v1211
        %1830 = vmatpush1.msra.mxu0 %v1210
        %1831 = vmatprep.subr.mxu0 %v1215
        %1832 = vmatpush1.msra.mxu0 %v1214
        %1833 = vmatprep.subr.mxu0 %v1219
        %1834 = vmatpush1.msra.mxu0 %v1218
        %1835 = vmatprep.subr.mxu0 %v1223
        %1836 = vmatpush1.msra.mxu0 %v1222
        %1837 = vmatprep.subr.mxu0 %v1227
        %1838 = vmatpush1.msra.mxu0 %v1226
        %1839 = vmatprep.subr.mxu0 %v1231
        %1840 = vmatpush1.msra.mxu0 %v1230
        %1841 = vmatprep.subr.mxu0 %v1235
        %1842 = vmatpush1.msra.mxu0 %v1234
        %1843 = vmatprep.subr.mxu0 %v1239
        %1844 = vmatpush1.msra.mxu0 %v1238
        %1845 = vmatprep.subr.mxu0 %v1243
        %1846 = vmatpush1.msra.mxu0 %v1242
        %1847 = vmatprep.subr.mxu0 %v1247
        %1848 = vmatpush1.msra.mxu0 %v1246
        %1849 = vmatprep.subr.mxu0 %v1251
        %1850 = vmatpush1.msra.mxu0 %v1250
        %1851 = vmatprep.subr.mxu0 %v1255
        %1852 = vmatpush1.msra.mxu0 %v1254
        %1853 = vmatprep.subr.mxu0 %v1259
        %1854 = vmatpush1.msra.mxu0 %v1258
        %1855 = vmatprep.subr.mxu0 %v1263
        %1856 = vmatpush1.msra.mxu0 %v1262
        %1857 = vmatprep.subr.mxu0 %v1267
        %1858 = vmatpush1.msra.mxu0 %v1266
        %1859 = vmatprep.subr.mxu0 %v1271
        %1860 = vmatpush1.msra.mxu0 %v1270
        %1861 = vmatprep.subr.mxu0 %v1275
        %1862 = vmatpush1.msra.mxu0 %v1274
        %1863 = vmatprep.subr.mxu0 %v1279
        %1864 = vmatpush1.msra.mxu0 %v1278
        %1865 = vmatprep.mubr.f32.mxu0 %v257
        %1866 = vmatmul.mubr.f32.gmra.mrb[0].mxu0 %v256
        %v1867 = vpop.f32.mrb[0].mxu0
        %v1868 = vadd.f32 %v1797, %v1867
        %v1869 = vpop.f32.mrb[0].mxu0
        %v1870 = vadd.f32 %v1799, %v1869
        %1871 = vdwg.mxu0
        %1872 = vmatprep.subr.mxu0 %v261
        %1873 = vmatpush1.msra.mxu0 %v260
        %1874 = vmatprep.subr.mxu0 %v265
        %1875 = vmatpush1.msra.mxu0 %v264
        %1876 = vmatprep.subr.mxu0 %v269
        %1877 = vmatpush1.msra.mxu0 %v268
        %1878 = vmatprep.subr.mxu0 %v273
        %1879 = vmatpush1.msra.mxu0 %v272
        %1880 = vmatprep.subr.mxu0 %v277
        %1881 = vmatpush1.msra.mxu0 %v276
        %1882 = vmatprep.subr.mxu0 %v281
        %1883 = vmatpush1.msra.mxu0 %v280
        %1884 = vmatprep.subr.mxu0 %v285
        %1885 = vmatpush1.msra.mxu0 %v284
        %1886 = vmatprep.subr.mxu0 %v289
        %1887 = vmatpush1.msra.mxu0 %v288
        %1888 = vmatprep.subr.mxu0 %v293
        %1889 = vmatpush1.msra.mxu0 %v292
        %1890 = vmatprep.subr.mxu0 %v297
        %1891 = vmatpush1.msra.mxu0 %v296
        %1892 = vmatprep.subr.mxu0 %v301
        %1893 = vmatpush1.msra.mxu0 %v300
        %1894 = vmatprep.subr.mxu0 %v305
        %1895 = vmatpush1.msra.mxu0 %v304
        %1896 = vmatprep.subr.mxu0 %v309
        %1897 = vmatpush1.msra.mxu0 %v308
        %1898 = vmatprep.subr.mxu0 %v313
        %1899 = vmatpush1.msra.mxu0 %v312
        %1900 = vmatprep.subr.mxu0 %v317
        %1901 = vmatpush1.msra.mxu0 %v316
        %1902 = vmatprep.subr.mxu0 %v321
        %1903 = vmatpush1.msra.mxu0 %v320
        %1904 = vmatprep.subr.mxu0 %v325
        %1905 = vmatpush1.msra.mxu0 %v324
        %1906 = vmatprep.subr.mxu0 %v329
        %1907 = vmatpush1.msra.mxu0 %v328
        %1908 = vmatprep.subr.mxu0 %v333
        %1909 = vmatpush1.msra.mxu0 %v332
        %1910 = vmatprep.subr.mxu0 %v337
        %1911 = vmatpush1.msra.mxu0 %v336
        %1912 = vmatprep.subr.mxu0 %v341
        %1913 = vmatpush1.msra.mxu0 %v340
        %1914 = vmatprep.subr.mxu0 %v345
        %1915 = vmatpush1.msra.mxu0 %v344
        %1916 = vmatprep.subr.mxu0 %v349
        %1917 = vmatpush1.msra.mxu0 %v348
        %1918 = vmatprep.subr.mxu0 %v353
        %1919 = vmatpush1.msra.mxu0 %v352
        %1920 = vmatprep.subr.mxu0 %v357
        %1921 = vmatpush1.msra.mxu0 %v356
        %1922 = vmatprep.subr.mxu0 %v361
        %1923 = vmatpush1.msra.mxu0 %v360
        %1924 = vmatprep.subr.mxu0 %v365
        %1925 = vmatpush1.msra.mxu0 %v364
        %1926 = vmatprep.subr.mxu0 %v369
        %1927 = vmatpush1.msra.mxu0 %v368
        %1928 = vmatprep.subr.mxu0 %v373
        %1929 = vmatpush1.msra.mxu0 %v372
        %1930 = vmatprep.subr.mxu0 %v377
        %1931 = vmatpush1.msra.mxu0 %v376
        %1932 = vmatprep.subr.mxu0 %v381
        %1933 = vmatpush1.msra.mxu0 %v380
        %1934 = vmatprep.subr.mxu0 %v385
        %1935 = vmatpush1.msra.mxu0 %v384
        %1936 = vmatprep.mubr.f32.mxu0 %v243
        %1937 = vmatmul.mubr.f32.gmra.mrb[0].mxu0 %v242
        %v1938 = vpop.f32.mrb[0].mxu0
        %v1939 = vadd.f32 %v1295, %v1938
        %v1940 = vpop.f32.mrb[0].mxu0
        %v1941 = vadd.f32 %v1299, %v1940
        %1942 = vdwg.mxu0
        %1943 = vmatprep.subr.mxu0 %v389
        %1944 = vmatpush1.msra.mxu0 %v388
        %1945 = vmatprep.subr.mxu0 %v393
        %1946 = vmatpush1.msra.mxu0 %v392
        %1947 = vmatprep.subr.mxu0 %v397
        %1948 = vmatpush1.msra.mxu0 %v396
        %1949 = vmatprep.subr.mxu0 %v401
        %1950 = vmatpush1.msra.mxu0 %v400
        %1951 = vmatprep.subr.mxu0 %v405
        %1952 = vmatpush1.msra.mxu0 %v404
        %1953 = vmatprep.subr.mxu0 %v409
        %1954 = vmatpush1.msra.mxu0 %v408
        %1955 = vmatprep.subr.mxu0 %v413
        %1956 = vmatpush1.msra.mxu0 %v412
        %1957 = vmatprep.subr.mxu0 %v417
        %1958 = vmatpush1.msra.mxu0 %v416
        %1959 = vmatprep.subr.mxu0 %v421
        %1960 = vmatpush1.msra.mxu0 %v420
        %1961 = vmatprep.subr.mxu0 %v425
        %1962 = vmatpush1.msra.mxu0 %v424
        %1963 = vmatprep.subr.mxu0 %v429
        %1964 = vmatpush1.msra.mxu0 %v428
        %1965 = vmatprep.subr.mxu0 %v433
        %1966 = vmatpush1.msra.mxu0 %v432
        %1967 = vmatprep.subr.mxu0 %v437
        %1968 = vmatpush1.msra.mxu0 %v436
        %1969 = vmatprep.subr.mxu0 %v441
        %1970 = vmatpush1.msra.mxu0 %v440
        %1971 = vmatprep.subr.mxu0 %v445
        %1972 = vmatpush1.msra.mxu0 %v444
        %1973 = vmatprep.subr.mxu0 %v449
        %1974 = vmatpush1.msra.mxu0 %v448
        %1975 = vmatprep.subr.mxu0 %v453
        %1976 = vmatpush1.msra.mxu0 %v452
        %1977 = vmatprep.subr.mxu0 %v457
        %1978 = vmatpush1.msra.mxu0 %v456
        %1979 = vmatprep.subr.mxu0 %v461
        %1980 = vmatpush1.msra.mxu0 %v460
        %1981 = vmatprep.subr.mxu0 %v465
        %1982 = vmatpush1.msra.mxu0 %v464
        %1983 = vmatprep.subr.mxu0 %v469
        %1984 = vmatpush1.msra.mxu0 %v468
        %1985 = vmatprep.subr.mxu0 %v473
        %1986 = vmatpush1.msra.mxu0 %v472
        %1987 = vmatprep.subr.mxu0 %v477
        %1988 = vmatpush1.msra.mxu0 %v476
        %1989 = vmatprep.subr.mxu0 %v481
        %1990 = vmatpush1.msra.mxu0 %v480
        %1991 = vmatprep.subr.mxu0 %v485
        %1992 = vmatpush1.msra.mxu0 %v484
        %1993 = vmatprep.subr.mxu0 %v489
        %1994 = vmatpush1.msra.mxu0 %v488
        %1995 = vmatprep.subr.mxu0 %v493
        %1996 = vmatpush1.msra.mxu0 %v492
        %1997 = vmatprep.subr.mxu0 %v497
        %1998 = vmatpush1.msra.mxu0 %v496
        %1999 = vmatprep.subr.mxu0 %v501
        %2000 = vmatpush1.msra.mxu0 %v500
        %2001 = vmatprep.subr.mxu0 %v505
        %2002 = vmatpush1.msra.mxu0 %v504
        %2003 = vmatprep.subr.mxu0 %v509
        %2004 = vmatpush1.msra.mxu0 %v508
        %2005 = vmatprep.subr.mxu0 %v513
        %2006 = vmatpush1.msra.mxu0 %v512
        %2007 = vmatprep.mubr.f32.mxu0 %v245
        %2008 = vmatmul.mubr.f32.gmra.mrb[0].mxu0 %v244
        %v2009 = vpop.f32.mrb[0].mxu0
        %v2010 = vadd.f32 %v1939, %v2009
        %v2011 = vpop.f32.mrb[0].mxu0
        %v2012 = vadd.f32 %v1941, %v2011
        %2013 = vdwg.mxu0
        %2014 = vmatprep.subr.mxu0 %v517
        %2015 = vmatpush1.msra.mxu0 %v516
        %2016 = vmatprep.subr.mxu0 %v521
        %2017 = vmatpush1.msra.mxu0 %v520
        %2018 = vmatprep.subr.mxu0 %v525
        %2019 = vmatpush1.msra.mxu0 %v524
        %2020 = vmatprep.subr.mxu0 %v529
        %2021 = vmatpush1.msra.mxu0 %v528
        %2022 = vmatprep.subr.mxu0 %v533
        %2023 = vmatpush1.msra.mxu0 %v532
        %2024 = vmatprep.subr.mxu0 %v537
        %2025 = vmatpush1.msra.mxu0 %v536
        %2026 = vmatprep.subr.mxu0 %v541
        %2027 = vmatpush1.msra.mxu0 %v540
        %2028 = vmatprep.subr.mxu0 %v545
        %2029 = vmatpush1.msra.mxu0 %v544
        %2030 = vmatprep.subr.mxu0 %v549
        %2031 = vmatpush1.msra.mxu0 %v548
        %2032 = vmatprep.subr.mxu0 %v553
        %2033 = vmatpush1.msra.mxu0 %v552
        %2034 = vmatprep.subr.mxu0 %v557
        %2035 = vmatpush1.msra.mxu0 %v556
        %2036 = vmatprep.subr.mxu0 %v561
        %2037 = vmatpush1.msra.mxu0 %v560
        %2038 = vmatprep.subr.mxu0 %v565
        %2039 = vmatpush1.msra.mxu0 %v564
        %2040 = vmatprep.subr.mxu0 %v569
        %2041 = vmatpush1.msra.mxu0 %v568
        %2042 = vmatprep.subr.mxu0 %v573
        %2043 = vmatpush1.msra.mxu0 %v572
        %2044 = vmatprep.subr.mxu0 %v577
        %2045 = vmatpush1.msra.mxu0 %v576
        %2046 = vmatprep.subr.mxu0 %v581
        %2047 = vmatpush1.msra.mxu0 %v580
        %2048 = vmatprep.subr.mxu0 %v585
        %2049 = vmatpush1.msra.mxu0 %v584
        %2050 = vmatprep.subr.mxu0 %v589
        %2051 = vmatpush1.msra.mxu0 %v588
        %2052 = vmatprep.subr.mxu0 %v593
        %2053 = vmatpush1.msra.mxu0 %v592
        %2054 = vmatprep.subr.mxu0 %v597
        %2055 = vmatpush1.msra.mxu0 %v596
        %2056 = vmatprep.subr.mxu0 %v601
        %2057 = vmatpush1.msra.mxu0 %v600
        %2058 = vmatprep.subr.mxu0 %v605
        %2059 = vmatpush1.msra.mxu0 %v604
        %2060 = vmatprep.subr.mxu0 %v609
        %2061 = vmatpush1.msra.mxu0 %v608
        %2062 = vmatprep.subr.mxu0 %v613
        %2063 = vmatpush1.msra.mxu0 %v612
        %2064 = vmatprep.subr.mxu0 %v617
        %2065 = vmatpush1.msra.mxu0 %v616
        %2066 = vmatprep.subr.mxu0 %v621
        %2067 = vmatpush1.msra.mxu0 %v620
        %2068 = vmatprep.subr.mxu0 %v625
        %2069 = vmatpush1.msra.mxu0 %v624
        %2070 = vmatprep.subr.mxu0 %v629
        %2071 = vmatpush1.msra.mxu0 %v628
        %2072 = vmatprep.subr.mxu0 %v633
        %2073 = vmatpush1.msra.mxu0 %v632
        %2074 = vmatprep.subr.mxu0 %v637
        %2075 = vmatpush1.msra.mxu0 %v636
        %2076 = vmatprep.subr.mxu0 %v641
        %2077 = vmatpush1.msra.mxu0 %v640
        %2078 = vmatprep.mubr.f32.mxu0 %v247
        %2079 = vmatmul.mubr.f32.gmra.mrb[0].mxu0 %v246
        %v2080 = vpop.f32.mrb[0].mxu0
        %v2081 = vadd.f32 %v2010, %v2080
        %v2082 = vpop.f32.mrb[0].mxu0
        %v2083 = vadd.f32 %v2012, %v2082
        %2084 = vdwg.mxu0
        %2085 = vmatprep.subr.mxu0 %v645
        %2086 = vmatpush1.msra.mxu0 %v644
        %2087 = vmatprep.subr.mxu0 %v649
        %2088 = vmatpush1.msra.mxu0 %v648
        %2089 = vmatprep.subr.mxu0 %v653
        %2090 = vmatpush1.msra.mxu0 %v652
        %2091 = vmatprep.subr.mxu0 %v657
        %2092 = vmatpush1.msra.mxu0 %v656
        %2093 = vmatprep.subr.mxu0 %v661
        %2094 = vmatpush1.msra.mxu0 %v660
        %2095 = vmatprep.subr.mxu0 %v665
        %2096 = vmatpush1.msra.mxu0 %v664
        %2097 = vmatprep.subr.mxu0 %v669
        %2098 = vmatpush1.msra.mxu0 %v668
        %2099 = vmatprep.subr.mxu0 %v673
        %2100 = vmatpush1.msra.mxu0 %v672
        %2101 = vmatprep.subr.mxu0 %v677
        %2102 = vmatpush1.msra.mxu0 %v676
        %2103 = vmatprep.subr.mxu0 %v681
        %2104 = vmatpush1.msra.mxu0 %v680
        %2105 = vmatprep.subr.mxu0 %v685
        %2106 = vmatpush1.msra.mxu0 %v684
        %2107 = vmatprep.subr.mxu0 %v689
        %2108 = vmatpush1.msra.mxu0 %v688
        %2109 = vmatprep.subr.mxu0 %v693
        %2110 = vmatpush1.msra.mxu0 %v692
        %2111 = vmatprep.subr.mxu0 %v697
        %2112 = vmatpush1.msra.mxu0 %v696
        %2113 = vmatprep.subr.mxu0 %v701
        %2114 = vmatpush1.msra.mxu0 %v700
        %2115 = vmatprep.subr.mxu0 %v705
        %2116 = vmatpush1.msra.mxu0 %v704
        %2117 = vmatprep.subr.mxu0 %v709
        %2118 = vmatpush1.msra.mxu0 %v708
        %2119 = vmatprep.subr.mxu0 %v713
        %2120 = vmatpush1.msra.mxu0 %v712
        %2121 = vmatprep.subr.mxu0 %v717
        %2122 = vmatpush1.msra.mxu0 %v716
        %2123 = vmatprep.subr.mxu0 %v721
        %2124 = vmatpush1.msra.mxu0 %v720
        %2125 = vmatprep.subr.mxu0 %v725
        %2126 = vmatpush1.msra.mxu0 %v724
        %2127 = vmatprep.subr.mxu0 %v729
        %2128 = vmatpush1.msra.mxu0 %v728
        %2129 = vmatprep.subr.mxu0 %v733
        %2130 = vmatpush1.msra.mxu0 %v732
        %2131 = vmatprep.subr.mxu0 %v737
        %2132 = vmatpush1.msra.mxu0 %v736
        %2133 = vmatprep.subr.mxu0 %v741
        %2134 = vmatpush1.msra.mxu0 %v740
        %2135 = vmatprep.subr.mxu0 %v745
        %2136 = vmatpush1.msra.mxu0 %v744
        %2137 = vmatprep.subr.mxu0 %v749
        %2138 = vmatpush1.msra.mxu0 %v748
        %2139 = vmatprep.subr.mxu0 %v753
        %2140 = vmatpush1.msra.mxu0 %v752
        %2141 = vmatprep.subr.mxu0 %v757
        %2142 = vmatpush1.msra.mxu0 %v756
        %2143 = vmatprep.subr.mxu0 %v761
        %2144 = vmatpush1.msra.mxu0 %v760
        %2145 = vmatprep.subr.mxu0 %v765
        %2146 = vmatpush1.msra.mxu0 %v764
        %2147 = vmatprep.subr.mxu0 %v769
        %2148 = vmatpush1.msra.mxu0 %v768
        %2149 = vmatprep.mubr.f32.mxu0 %v249
        %2150 = vmatmul.mubr.f32.gmra.mrb[0].mxu0 %v248
        %v2151 = vpop.f32.mrb[0].mxu0
        %v2152 = vadd.f32 %v2081, %v2151
        %v2153 = vpop.f32.mrb[0].mxu0
        %v2154 = vadd.f32 %v2083, %v2153
        %2155 = vdwg.mxu0
        %2156 = vmatprep.subr.mxu0 %v773
        %2157 = vmatpush1.msra.mxu0 %v772
        %2158 = vmatprep.subr.mxu0 %v777
        %2159 = vmatpush1.msra.mxu0 %v776
        %2160 = vmatprep.subr.mxu0 %v781
        %2161 = vmatpush1.msra.mxu0 %v780
        %2162 = vmatprep.subr.mxu0 %v785
        %2163 = vmatpush1.msra.mxu0 %v784
        %2164 = vmatprep.subr.mxu0 %v789
        %2165 = vmatpush1.msra.mxu0 %v788
        %2166 = vmatprep.subr.mxu0 %v793
        %2167 = vmatpush1.msra.mxu0 %v792
        %2168 = vmatprep.subr.mxu0 %v797
        %2169 = vmatpush1.msra.mxu0 %v796
        %2170 = vmatprep.subr.mxu0 %v801
        %2171 = vmatpush1.msra.mxu0 %v800
        %2172 = vmatprep.subr.mxu0 %v805
        %2173 = vmatpush1.msra.mxu0 %v804
        %2174 = vmatprep.subr.mxu0 %v809
        %2175 = vmatpush1.msra.mxu0 %v808
        %2176 = vmatprep.subr.mxu0 %v813
        %2177 = vmatpush1.msra.mxu0 %v812
        %2178 = vmatprep.subr.mxu0 %v817
        %2179 = vmatpush1.msra.mxu0 %v816
        %2180 = vmatprep.subr.mxu0 %v821
        %2181 = vmatpush1.msra.mxu0 %v820
        %2182 = vmatprep.subr.mxu0 %v825
        %2183 = vmatpush1.msra.mxu0 %v824
        %2184 = vmatprep.subr.mxu0 %v829
        %2185 = vmatpush1.msra.mxu0 %v828
        %2186 = vmatprep.subr.mxu0 %v833
        %2187 = vmatpush1.msra.mxu0 %v832
        %2188 = vmatprep.subr.mxu0 %v837
        %2189 = vmatpush1.msra.mxu0 %v836
        %2190 = vmatprep.subr.mxu0 %v841
        %2191 = vmatpush1.msra.mxu0 %v840
        %2192 = vmatprep.subr.mxu0 %v845
        %2193 = vmatpush1.msra.mxu0 %v844
        %2194 = vmatprep.subr.mxu0 %v849
        %2195 = vmatpush1.msra.mxu0 %v848
        %2196 = vmatprep.subr.mxu0 %v853
        %2197 = vmatpush1.msra.mxu0 %v852
        %2198 = vmatprep.subr.mxu0 %v857
        %2199 = vmatpush1.msra.mxu0 %v856
        %2200 = vmatprep.subr.mxu0 %v861
        %2201 = vmatpush1.msra.mxu0 %v860
        %2202 = vmatprep.subr.mxu0 %v865
        %2203 = vmatpush1.msra.mxu0 %v864
        %2204 = vmatprep.subr.mxu0 %v869
        %2205 = vmatpush1.msra.mxu0 %v868
        %2206 = vmatprep.subr.mxu0 %v873
        %2207 = vmatpush1.msra.mxu0 %v872
        %2208 = vmatprep.subr.mxu0 %v877
        %2209 = vmatpush1.msra.mxu0 %v876
        %2210 = vmatprep.subr.mxu0 %v881
        %2211 = vmatpush1.msra.mxu0 %v880
        %2212 = vmatprep.subr.mxu0 %v885
        %2213 = vmatpush1.msra.mxu0 %v884
        %2214 = vmatprep.subr.mxu0 %v889
        %2215 = vmatpush1.msra.mxu0 %v888
        %2216 = vmatprep.subr.mxu0 %v893
        %2217 = vmatpush1.msra.mxu0 %v892
        %2218 = vmatprep.subr.mxu0 %v897
        %2219 = vmatpush1.msra.mxu0 %v896
        %2220 = vmatprep.mubr.f32.mxu0 %v251
        %2221 = vmatmul.mubr.f32.gmra.mrb[0].mxu0 %v250
        %v2222 = vpop.f32.mrb[0].mxu0
        %v2223 = vadd.f32 %v2152, %v2222
        %v2224 = vpop.f32.mrb[0].mxu0
        %v2225 = vadd.f32 %v2154, %v2224
        %2226 = vdwg.mxu0
        %2227 = vmatprep.subr.mxu0 %v901
        %2228 = vmatpush1.msra.mxu0 %v900
        %2229 = vmatprep.subr.mxu0 %v905
        %2230 = vmatpush1.msra.mxu0 %v904
        %2231 = vmatprep.subr.mxu0 %v909
        %2232 = vmatpush1.msra.mxu0 %v908
        %2233 = vmatprep.subr.mxu0 %v913
        %2234 = vmatpush1.msra.mxu0 %v912
        %2235 = vmatprep.subr.mxu0 %v917
        %2236 = vmatpush1.msra.mxu0 %v916
        %2237 = vmatprep.subr.mxu0 %v921
        %2238 = vmatpush1.msra.mxu0 %v920
        %2239 = vmatprep.subr.mxu0 %v925
        %2240 = vmatpush1.msra.mxu0 %v924
        %2241 = vmatprep.subr.mxu0 %v929
        %2242 = vmatpush1.msra.mxu0 %v928
        %2243 = vmatprep.subr.mxu0 %v933
        %2244 = vmatpush1.msra.mxu0 %v932
        %2245 = vmatprep.subr.mxu0 %v937
        %2246 = vmatpush1.msra.mxu0 %v936
        %2247 = vmatprep.subr.mxu0 %v941
        %2248 = vmatpush1.msra.mxu0 %v940
        %2249 = vmatprep.subr.mxu0 %v945
        %2250 = vmatpush1.msra.mxu0 %v944
        %2251 = vmatprep.subr.mxu0 %v949
        %2252 = vmatpush1.msra.mxu0 %v948
        %2253 = vmatprep.subr.mxu0 %v953
        %2254 = vmatpush1.msra.mxu0 %v952
        %2255 = vmatprep.subr.mxu0 %v957
        %2256 = vmatpush1.msra.mxu0 %v956
        %2257 = vmatprep.subr.mxu0 %v961
        %2258 = vmatpush1.msra.mxu0 %v960
        %2259 = vmatprep.subr.mxu0 %v965
        %2260 = vmatpush1.msra.mxu0 %v964
        %2261 = vmatprep.subr.mxu0 %v969
        %2262 = vmatpush1.msra.mxu0 %v968
        %2263 = vmatprep.subr.mxu0 %v973
        %2264 = vmatpush1.msra.mxu0 %v972
        %2265 = vmatprep.subr.mxu0 %v977
        %2266 = vmatpush1.msra.mxu0 %v976
        %2267 = vmatprep.subr.mxu0 %v981
        %2268 = vmatpush1.msra.mxu0 %v980
        %2269 = vmatprep.subr.mxu0 %v985
        %2270 = vmatpush1.msra.mxu0 %v984
        %2271 = vmatprep.subr.mxu0 %v989
        %2272 = vmatpush1.msra.mxu0 %v988
        %2273 = vmatprep.subr.mxu0 %v993
        %2274 = vmatpush1.msra.mxu0 %v992
        %2275 = vmatprep.subr.mxu0 %v997
        %2276 = vmatpush1.msra.mxu0 %v996
        %2277 = vmatprep.subr.mxu0 %v1001
        %2278 = vmatpush1.msra.mxu0 %v1000
        %2279 = vmatprep.subr.mxu0 %v1005
        %2280 = vmatpush1.msra.mxu0 %v1004
        %2281 = vmatprep.subr.mxu0 %v1009
        %2282 = vmatpush1.msra.mxu0 %v1008
        %2283 = vmatprep.subr.mxu0 %v1013
        %2284 = vmatpush1.msra.mxu0 %v1012
        %2285 = vmatprep.subr.mxu0 %v1017
        %2286 = vmatpush1.msra.mxu0 %v1016
        %2287 = vmatprep.subr.mxu0 %v1021
        %2288 = vmatpush1.msra.mxu0 %v1020
        %2289 = vmatprep.subr.mxu0 %v1025
        %2290 = vmatpush1.msra.mxu0 %v1024
        %2291 = vmatprep.mubr.f32.mxu0 %v253
        %2292 = vmatmul.mubr.f32.gmra.mrb[0].mxu0 %v252
        %v2293 = vpop.f32.mrb[0].mxu0
        %v2294 = vadd.f32 %v2223, %v2293
        %v2295 = vpop.f32.mrb[0].mxu0
        %v2296 = vadd.f32 %v2225, %v2295
        %2297 = vdwg.mxu0
        %2298 = vmatprep.subr.mxu0 %v1029
        %2299 = vmatpush1.msra.mxu0 %v1028
        %2300 = vmatprep.subr.mxu0 %v1033
        %2301 = vmatpush1.msra.mxu0 %v1032
        %2302 = vmatprep.subr.mxu0 %v1037
        %2303 = vmatpush1.msra.mxu0 %v1036
        %2304 = vmatprep.subr.mxu0 %v1041
        %2305 = vmatpush1.msra.mxu0 %v1040
        %2306 = vmatprep.subr.mxu0 %v1045
        %2307 = vmatpush1.msra.mxu0 %v1044
        %2308 = vmatprep.subr.mxu0 %v1049
        %2309 = vmatpush1.msra.mxu0 %v1048
        %2310 = vmatprep.subr.mxu0 %v1053
        %2311 = vmatpush1.msra.mxu0 %v1052
        %2312 = vmatprep.subr.mxu0 %v1057
        %2313 = vmatpush1.msra.mxu0 %v1056
        %2314 = vmatprep.subr.mxu0 %v1061
        %2315 = vmatpush1.msra.mxu0 %v1060
        %2316 = vmatprep.subr.mxu0 %v1065
        %2317 = vmatpush1.msra.mxu0 %v1064
        %2318 = vmatprep.subr.mxu0 %v1069
        %2319 = vmatpush1.msra.mxu0 %v1068
        %2320 = vmatprep.subr.mxu0 %v1073
        %2321 = vmatpush1.msra.mxu0 %v1072
        %2322 = vmatprep.subr.mxu0 %v1077
        %2323 = vmatpush1.msra.mxu0 %v1076
        %2324 = vmatprep.subr.mxu0 %v1081
        %2325 = vmatpush1.msra.mxu0 %v1080
        %2326 = vmatprep.subr.mxu0 %v1085
        %2327 = vmatpush1.msra.mxu0 %v1084
        %2328 = vmatprep.subr.mxu0 %v1089
        %2329 = vmatpush1.msra.mxu0 %v1088
        %2330 = vmatprep.subr.mxu0 %v1093
        %2331 = vmatpush1.msra.mxu0 %v1092
        %2332 = vmatprep.subr.mxu0 %v1097
        %2333 = vmatpush1.msra.mxu0 %v1096
        %2334 = vmatprep.subr.mxu0 %v1101
        %2335 = vmatpush1.msra.mxu0 %v1100
        %2336 = vmatprep.subr.mxu0 %v1105
        %2337 = vmatpush1.msra.mxu0 %v1104
        %2338 = vmatprep.subr.mxu0 %v1109
        %2339 = vmatpush1.msra.mxu0 %v1108
        %2340 = vmatprep.subr.mxu0 %v1113
        %2341 = vmatpush1.msra.mxu0 %v1112
        %2342 = vmatprep.subr.mxu0 %v1117
        %2343 = vmatpush1.msra.mxu0 %v1116
        %2344 = vmatprep.subr.mxu0 %v1121
        %2345 = vmatpush1.msra.mxu0 %v1120
        %2346 = vmatprep.subr.mxu0 %v1125
        %2347 = vmatpush1.msra.mxu0 %v1124
        %2348 = vmatprep.subr.mxu0 %v1129
        %2349 = vmatpush1.msra.mxu0 %v1128
        %2350 = vmatprep.subr.mxu0 %v1133
        %2351 = vmatpush1.msra.mxu0 %v1132
        %2352 = vmatprep.subr.mxu0 %v1137
        %2353 = vmatpush1.msra.mxu0 %v1136
        %2354 = vmatprep.subr.mxu0 %v1141
        %2355 = vmatpush1.msra.mxu0 %v1140
        %2356 = vmatprep.subr.mxu0 %v1145
        %2357 = vmatpush1.msra.mxu0 %v1144
        %2358 = vmatprep.subr.mxu0 %v1149
        %2359 = vmatpush1.msra.mxu0 %v1148
        %2360 = vmatprep.subr.mxu0 %v1153
        %2361 = vmatpush1.msra.mxu0 %v1152
        %2362 = vmatprep.mubr.f32.mxu0 %v255
        %2363 = vmatmul.mubr.f32.gmra.mrb[0].mxu0 %v254
        %v2364 = vpop.f32.mrb[0].mxu0
        %v2365 = vadd.f32 %v2294, %v2364
        %v2366 = vpop.f32.mrb[0].mxu0
        %v2367 = vadd.f32 %v2296, %v2366
        %2368 = vdwg.mxu0
        %2369 = vmatprep.subr.mxu0 %v1157
        %2370 = vmatpush1.msra.mxu0 %v1156
        %2371 = vmatprep.subr.mxu0 %v1161
        %2372 = vmatpush1.msra.mxu0 %v1160
        %2373 = vmatprep.subr.mxu0 %v1165
        %2374 = vmatpush1.msra.mxu0 %v1164
        %2375 = vmatprep.subr.mxu0 %v1169
        %2376 = vmatpush1.msra.mxu0 %v1168
        %2377 = vmatprep.subr.mxu0 %v1173
        %2378 = vmatpush1.msra.mxu0 %v1172
        %2379 = vmatprep.subr.mxu0 %v1177
        %2380 = vmatpush1.msra.mxu0 %v1176
        %2381 = vmatprep.subr.mxu0 %v1181
        %2382 = vmatpush1.msra.mxu0 %v1180
        %2383 = vmatprep.subr.mxu0 %v1185
        %2384 = vmatpush1.msra.mxu0 %v1184
        %2385 = vmatprep.subr.mxu0 %v1189
        %2386 = vmatpush1.msra.mxu0 %v1188
        %2387 = vmatprep.subr.mxu0 %v1193
        %2388 = vmatpush1.msra.mxu0 %v1192
        %2389 = vmatprep.subr.mxu0 %v1197
        %2390 = vmatpush1.msra.mxu0 %v1196
        %2391 = vmatprep.subr.mxu0 %v1201
        %2392 = vmatpush1.msra.mxu0 %v1200
        %2393 = vmatprep.subr.mxu0 %v1205
        %2394 = vmatpush1.msra.mxu0 %v1204
        %2395 = vmatprep.subr.mxu0 %v1209
        %2396 = vmatpush1.msra.mxu0 %v1208
        %2397 = vmatprep.subr.mxu0 %v1213
        %2398 = vmatpush1.msra.mxu0 %v1212
        %2399 = vmatprep.subr.mxu0 %v1217
        %2400 = vmatpush1.msra.mxu0 %v1216
        %2401 = vmatprep.subr.mxu0 %v1221
        %2402 = vmatpush1.msra.mxu0 %v1220
        %2403 = vmatprep.subr.mxu0 %v1225
        %2404 = vmatpush1.msra.mxu0 %v1224
        %2405 = vmatprep.subr.mxu0 %v1229
        %2406 = vmatpush1.msra.mxu0 %v1228
        %2407 = vmatprep.subr.mxu0 %v1233
        %2408 = vmatpush1.msra.mxu0 %v1232
        %2409 = vmatprep.subr.mxu0 %v1237
        %2410 = vmatpush1.msra.mxu0 %v1236
        %2411 = vmatprep.subr.mxu0 %v1241
        %2412 = vmatpush1.msra.mxu0 %v1240
        %2413 = vmatprep.subr.mxu0 %v1245
        %2414 = vmatpush1.msra.mxu0 %v1244
        %2415 = vmatprep.subr.mxu0 %v1249
        %2416 = vmatpush1.msra.mxu0 %v1248
        %2417 = vmatprep.subr.mxu0 %v1253
        %2418 = vmatpush1.msra.mxu0 %v1252
        %2419 = vmatprep.subr.mxu0 %v1257
        %2420 = vmatpush1.msra.mxu0 %v1256
        %2421 = vmatprep.subr.mxu0 %v1261
        %2422 = vmatpush1.msra.mxu0 %v1260
        %2423 = vmatprep.subr.mxu0 %v1265
        %2424 = vmatpush1.msra.mxu0 %v1264
        %2425 = vmatprep.subr.mxu0 %v1269
        %2426 = vmatpush1.msra.mxu0 %v1268
        %2427 = vmatprep.subr.mxu0 %v1273
        %2428 = vmatpush1.msra.mxu0 %v1272
        %2429 = vmatprep.subr.mxu0 %v1277
        %2430 = vmatpush1.msra.mxu0 %v1276
        %2431 = vmatprep.subr.mxu0 %v1281
        %2432 = vmatpush1.msra.mxu0 %v1280
        %2433 = vmatprep.mubr.f32.mxu0 %v257
        %2434 = vmatmul.mubr.f32.gmra.mrb[0].mxu0 %v256
        %v2435 = vpop.f32.mrb[0].mxu0
        %v2436 = vadd.f32 %v2365, %v2435
        %v2437 = vpop.f32.mrb[0].mxu0
        %v2438 = vadd.f32 %v2367, %v2437
        %2439 = vdwg.mxu0
        %v2440 = vmax.f32 %v1868, 0.0
        %v2441 = vmax.f32 %v1870, 0.0
        %v2442 = vmax.f32 %v2436, 0.0
        %v2443 = vmax.f32 %v2438, 0.0
        %2444 = vst [vmem:[%s240] sm:$0xff] %v2440
        %2445 = vst [vmem:[%s240 + $0x8] sm:$0xff] %v2441
        %2446 = vst [vmem:[%s240 + $0x10] sm:$0xff] %v2442
        %2447 = vst [vmem:[%s240 + $0x18] sm:$0xff] %v2443
        %s2448 = smul.u32 4, %s18
        %p2449 = scmp.lt.s32.totalorder %s2448, 15
        %s2450 = scalar_select %p2449, %s2448, 15
        %s2451 = smul.addr %s2450, 8
        %s2452 = scalar_lea.vmem %s3, %s2451
        // Predicated region
        $region45: #{attribute_classifier_forward.2} parent=31 // pred_check
          %p2453 = pneg %p109
        $region46: #{attribute_classifier_forward.2} parent=31 // pred_check_branch
          %2455 = sbr.rel (%p2453) target = $region48
        $region47: #{attribute_classifier_forward.2} parent=31 // pred_region
          %s2456 = smul.u32 4, %s18
        $region48: #{attribute_classifier_forward.2} parent=31 // pred_fallthru
          _
      $region32: #{attribute_classifier_forward.2} parent=5 // pred_fallthru
        _
      %p2457 = scmp.le.s32.totalorder 2, %s13
      // Predicated region
      $region49: #{attribute_classifier_forward.2} parent=5 // pred_check
        %p2458 = pneg %p2457
      $region50: #{attribute_classifier_forward.2} parent=5 // pred_check_branch
        %2460 = sbr.rel (%p2458) target = $region52
      $region51: #{attribute_classifier_forward.2} parent=5 // pred_region
        %s2461 = ssub.s32 %s13, 2
        // Predicated region
        $region53: #{attribute_classifier_forward.2} parent=51 // pred_check
          %p2462 = pneg %p115
        $region54: #{attribute_classifier_forward.2} parent=51 // pred_check_branch
          %2464 = sbr.rel (%p2462) target = $region56
        $region55: #{attribute_classifier_forward.2} parent=51 // pred_region
          %s2465 = smul.u32 4, %s19
          %p2466 = scmp.lt.s32.totalorder %s2465, 15
          %s2467 = scalar_select %p2466, %s2465, 15
          %s2468 = smul.addr %s2467, 8
          %s2469 = scalar_lea.vmem %s3, %s2468
        $region56: #{attribute_classifier_forward.2} parent=51 // pred_fallthru
          _
      $region52: #{attribute_classifier_forward.2} parent=5 // pred_fallthru
        _
    $region6: #{attribute_classifier_forward.2} parent=1 // loop_footer
      %s17 = sadd.s32 1, %s13
    $region7: #{attribute_classifier_forward.2} parent=1 // loop_footer_branch
      %12 = sbr.rel target = $region3
    $region8: #{attribute_classifier_forward.2} parent=1 // loop_exit
      _
    %2470 = vsyncpa [#allocation3], 1
    %s2471 = scalar_lea.sflag [#allocation3], 1
    %2472 = vsyncpa %s2471, 1
    %2473 = vsyncpa [#allocation5], 1
    %s2474 = scalar_lea.sflag [#allocation5], 1
    %2475 = vsyncpa %s2474, 1

</llo_original>
